<compile_context>
chip_gen: v5e
topology: v5e:2x2
jax: 0.10.0
libtpu: 0.0.40
codegen_flags: <defaults>
</compile_context>

<pallas_src>
import functools

import jax
import jax.numpy as jnp
from jax.experimental import pallas as pl
from jax.experimental.pallas import tpu as pltpu


_VMEM_LIMIT = 48 * 1024 * 1024   # <= v7x 64 MiB physical; well inside v5e/v6e 128 MiB
_NEG_INF = -1e30                 # additive mask value (avoids inf-inf corner cases)


def _round_up(x, m):
    return (x + m - 1) // m * m


def _tile(dim, preferred, align):
    """Largest multiple of `align` that divides `dim` and is <= `preferred`;
    falls back to the full dim (a full-extent block is always legal)."""
    if dim <= preferred:
        return dim
    t = (preferred // align) * align
    while t >= align:
        if dim % t == 0:
            return t
        t -= align
    return dim


# ----------------------------------------------------------------------------
# Tiled linear: y = act(x @ W (+ b)) (+ residual) — bf16 operands, f32 accumulation.
# ----------------------------------------------------------------------------

def _make_linear_kernel(has_bias, has_residual, activation, single_k):
    def epilogue(y, b_ref, r_ref, o_ref):
        if b_ref is not None:
            y = y + b_ref[...]
        if activation == "gelu":
            # TODO(synk): tanh-approx GELU (exact-erf nn.GELU needs Mosaic erf lowering).
            y = jax.nn.gelu(y, approximate=True)
        if r_ref is not None:
            y = y + r_ref[...].astype(jnp.float32)
        o_ref[...] = y.astype(o_ref.dtype)

    if single_k:
        def kernel(x_ref, w_ref, *rest):
            idx = 0
            b_ref = rest[idx] if has_bias else None
            idx += 1 if has_bias else 0
            r_ref = rest[idx] if has_residual else None
            idx += 1 if has_residual else 0
            o_ref = rest[idx]
            y = jnp.dot(x_ref[...], w_ref[...], preferred_element_type=jnp.float32)
            epilogue(y, b_ref, r_ref, o_ref)
        return kernel

    def kernel(x_ref, w_ref, *rest):
        idx = 0
        b_ref = rest[idx] if has_bias else None
        idx += 1 if has_bias else 0
        r_ref = rest[idx] if has_residual else None
        idx += 1 if has_residual else 0
        o_ref = rest[idx]
        acc_ref = rest[idx + 1]

        k = pl.program_id(2)

        @pl.when(k == 0)
        def _():
            acc_ref[...] = jnp.zeros_like(acc_ref)

        acc_ref[...] += jnp.dot(x_ref[...], w_ref[...],
                                preferred_element_type=jnp.float32)

        @pl.when(k == pl.num_programs(2) - 1)
        def _():
            epilogue(acc_ref[...], b_ref, r_ref, o_ref)

    return kernel


def linear(x, w, b=None, *, residual=None, activation=None, out_dtype=jnp.bfloat16,
           bm=512, bn=512, bk=512, full_k_threshold=2048):
    """x: (M, K) bf16, w: (K, N) bf16, b: (N,) f32 or None, residual: (M, N) or None."""
    M, K = x.shape
    Kw, N = w.shape
    assert K == Kw

    # Zero-pad M to a sublane multiple and N to a lane-tile multiple, sliced off at the
    # end.  For wide outputs (vocab head) pad toward bn so lane tiles stay large.
    # TODO(synk): for production, pre-pad weights once outside the forward pass so the
    #             pad is not a per-call HBM copy.
    Mp = _round_up(M, 8)
    n_align = bn if N >= bn else 128
    Np = _round_up(N, n_align)

    x_p = x if Mp == M else jnp.pad(x, ((0, Mp - M), (0, 0)))
    w_p = w if Np == N else jnp.pad(w, ((0, 0), (0, Np - N)))
    b_p = None
    if b is not None:
        b_p = b.astype(jnp.float32).reshape(1, N)
        if Np != N:
            b_p = jnp.pad(b_p, ((0, 0), (0, Np - N)))
    r_p = None
    if residual is not None:
        r_p = residual
        if Mp != M or Np != N:
            r_p = jnp.pad(r_p, ((0, Mp - M), (0, Np - N)))

    tm = _tile(Mp, bm, 16)
    tn = _tile(Np, bn, 128)
    tk = K if K <= full_k_threshold else _tile(K, bk, 128)
    gm, gn, gk = Mp // tm, Np // tn, K // tk
    single_k = (gk == 1)

    in_specs = [
        pl.BlockSpec((tm, tk), lambda i, j, k: (i, k)),
        pl.BlockSpec((tk, tn), lambda i, j, k: (k, j)),
    ]
    args = [x_p, w_p]
    if b_p is not None:
        in_specs.append(pl.BlockSpec((1, tn), lambda i, j, k: (0, j)))
        args.append(b_p)
    if r_p is not None:
        in_specs.append(pl.BlockSpec((tm, tn), lambda i, j, k: (i, j)))
        args.append(r_p)

    scratch = [] if single_k else [pltpu.VMEM((tm, tn), jnp.float32)]

    out = pl.pallas_call(
        _make_linear_kernel(b_p is not None, r_p is not None, activation, single_k),
        out_shape=jax.ShapeDtypeStruct((Mp, Np), out_dtype),
        grid=(gm, gn, gk),
        in_specs=in_specs,
        out_specs=pl.BlockSpec((tm, tn), lambda i, j, k: (i, j)),
        scratch_shapes=scratch,
        compiler_params=pltpu.CompilerParams(
            dimension_semantics=("parallel", "parallel", "arbitrary"),
            vmem_limit_bytes=_VMEM_LIMIT),
    )(*args)

    if Mp != M or Np != N:
        out = out[:M, :N]
    return out


# ----------------------------------------------------------------------------
# Row-tiled LayerNorm (f32 math, one-pass variance, bf16 output for the next matmul).
# ----------------------------------------------------------------------------

def _layernorm_kernel(x_ref, g_ref, b_ref, o_ref, *, eps):
    x = x_ref[...].astype(jnp.float32)
    mean = jnp.mean(x, axis=-1, keepdims=True)
    var = jnp.mean(x * x, axis=-1, keepdims=True) - mean * mean
    y = (x - mean) * jax.lax.rsqrt(var + eps) * g_ref[...] + b_ref[...]
    o_ref[...] = y.astype(o_ref.dtype)


def layernorm(x, gamma, beta, *, eps=1e-5, out_dtype=jnp.bfloat16, bm=512):
    M, D = x.shape
    tm = _tile(M, bm, 8)
    return pl.pallas_call(
        functools.partial(_layernorm_kernel, eps=eps),
        out_shape=jax.ShapeDtypeStruct((M, D), out_dtype),
        grid=(M // tm,),
        in_specs=[
            pl.BlockSpec((tm, D), lambda i: (i, 0)),
            pl.BlockSpec((1, D), lambda i: (0, 0)),
            pl.BlockSpec((1, D), lambda i: (0, 0)),
        ],
        out_specs=pl.BlockSpec((tm, D), lambda i: (i, 0)),
        compiler_params=pltpu.CompilerParams(
            dimension_semantics=("parallel",),
            vmem_limit_bytes=_VMEM_LIMIT),
    )(x, gamma.reshape(1, D).astype(jnp.float32), beta.reshape(1, D).astype(jnp.float32))


# ----------------------------------------------------------------------------
# Flash attention: Tk-tiled online softmax.  Reads Q/K/V straight out of the fused
# projection buffers (column-block index maps) and writes a head-merged lane-dense
# (B, Tq, D) output.  Q-scale is pre-folded into the projection weights.
# ----------------------------------------------------------------------------

def _flash_attn_kernel(q_ref, k_ref, v_ref, o_ref, m_sc, l_sc, acc_sc,
                       *, n_head, dh, causal, kv_valid, tk):
    kv = pl.program_id(1)

    @pl.when(kv == 0)
    def _():
        m_sc[...] = jnp.full(m_sc.shape, -jnp.inf, m_sc.dtype)
        l_sc[...] = jnp.zeros(l_sc.shape, l_sc.dtype)
        acc_sc[...] = jnp.zeros(acc_sc.shape, acc_sc.dtype)

    q = q_ref[0]          # (Tq, D)  bf16
    k = k_ref[0]          # (tk, D)  bf16
    v = v_ref[0]          # (tk, D)  bf16
    Tq = q.shape[0]

    mask = None
    if causal or (kv_valid is not None):
        cols = jax.lax.broadcasted_iota(jnp.int32, (Tq, tk), 1) + kv * tk
        if causal:
            rows = jax.lax.broadcasted_iota(jnp.int32, (Tq, tk), 0)
            mask = cols > rows
            if kv_valid is not None:
                mask = mask | (cols >= kv_valid)
        else:
            mask = cols >= kv_valid

    for h in range(n_head):
        lo, hi = h * dh, (h + 1) * dh
        q_h = q[:, lo:hi]                                  # (Tq, dh)
        k_h = k[:, lo:hi]                                  # (tk, dh)
        v_h = v[:, lo:hi]                                  # (tk, dh)
        s = jax.lax.dot_general(q_h, k_h, (((1,), (1,)), ((), ())),
                                preferred_element_type=jnp.float32)   # (Tq, tk)
        if mask is not None:
            s = jnp.where(mask, _NEG_INF, s)
        m_prev = m_sc[h]                                   # (Tq, 1)
        m_new = jnp.maximum(m_prev, jnp.max(s, axis=-1, keepdims=True))
        alpha = jnp.exp(m_prev - m_new)
        p = jnp.exp(s - m_new)
        l_sc[h] = alpha * l_sc[h] + jnp.sum(p, axis=-1, keepdims=True)
        acc_sc[h] = alpha * acc_sc[h] + jnp.dot(p.astype(jnp.bfloat16), v_h,
                                                preferred_element_type=jnp.float32)
        m_sc[h] = m_new

    @pl.when(kv == pl.num_programs(1) - 1)
    def _():
        outs = []
        for h in range(n_head):
            inv_l = pl.reciprocal(l_sc[h], approx=True)
            outs.append(acc_sc[h] * inv_l)
        o_ref[0] = jnp.concatenate(outs, axis=-1).astype(o_ref.dtype)   # (Tq, D)


def flash_attention(q_src, kv_src, *, n_head, d_model, q_col, k_col, v_col,
                    causal, kv_valid=None, kv_block=512):
    """q_src: (B, Tq, nq*D) bf16, kv_src: (B, Tk, nk*D) bf16.

    q_col/k_col/v_col select which D-wide column block of the fused projection
    buffers holds Q/K/V.  Returns the head-merged attention output (B, Tq, D) bf16.
    kv_valid (static) masks padded key/value columns >= kv_valid.
    """
    B, Tq, _ = q_src.shape
    _, Tk, _ = kv_src.shape
    dh = d_model // n_head
    tk = _tile(Tk, kv_block, 128)
    nkv = Tk // tk
    valid = kv_valid if (kv_valid is not None and kv_valid < Tk) else None

    kernel = functools.partial(_flash_attn_kernel, n_head=n_head, dh=dh,
                               causal=causal, kv_valid=valid, tk=tk)
    return pl.pallas_call(
        kernel,
        out_shape=jax.ShapeDtypeStruct((B, Tq, d_model), jnp.bfloat16),
        grid=(B, nkv),
        in_specs=[
            pl.BlockSpec((1, Tq, d_model), lambda b, kv: (b, 0, q_col)),
            pl.BlockSpec((1, tk, d_model), lambda b, kv: (b, kv, k_col)),
            pl.BlockSpec((1, tk, d_model), lambda b, kv: (b, kv, v_col)),
        ],
        out_specs=pl.BlockSpec((1, Tq, d_model), lambda b, kv: (b, 0, 0)),
        scratch_shapes=[
            pltpu.VMEM((n_head, Tq, 1), jnp.float32),    # running max
            pltpu.VMEM((n_head, Tq, 1), jnp.float32),    # running denom
            pltpu.VMEM((n_head, Tq, dh), jnp.float32),   # running accumulator
        ],
        compiler_params=pltpu.CompilerParams(
            dimension_semantics=("parallel", "arbitrary"),
            vmem_limit_bytes=_VMEM_LIMIT),
    )(q_src, kv_src, kv_src)


# ----------------------------------------------------------------------------
# Model glue (plain JAX around the Pallas kernels)
# ----------------------------------------------------------------------------

def residual_attention_block(x2d, enc2d, p, B, T_pad, S_pad, S_valid, n_head):
    D = x2d.shape[-1]

    # --- causal self-attention: fused QKV projection, flash attention, fused residual ---
    h = layernorm(x2d, p["attn_ln_g"], p["attn_ln_b"])
    sa = p["attn"]
    qkv = linear(h, sa["w_qkv"], sa["b_qkv"]).reshape(B, T_pad, 3 * D)   # free view
    o = flash_attention(qkv, qkv, n_head=n_head, d_model=D,
                        q_col=0, k_col=1, v_col=2, causal=True)
    x2d = linear(o.reshape(B * T_pad, D), sa["w_out"], sa["b_out"],
                 residual=x2d, out_dtype=jnp.float32)

    # --- cross-attention over encoder output: fused K/V projection, no mask ---
    h = layernorm(x2d, p["cross_ln_g"], p["cross_ln_b"])
    ca = p["cross_attn"]
    q = linear(h, ca["w_q"], ca["b_q"]).reshape(B, T_pad, D)
    kv = linear(enc2d, ca["w_kv"], ca["b_kv"]).reshape(B, S_pad, 2 * D)
    o = flash_attention(q, kv, n_head=n_head, d_model=D,
                        q_col=0, k_col=0, v_col=1, causal=False, kv_valid=S_valid)
    x2d = linear(o.reshape(B * T_pad, D), ca["w_out"], ca["b_out"],
                 residual=x2d, out_dtype=jnp.float32)

    # --- MLP: Linear -> GELU (fused) -> Linear (+ fused residual) ---
    h = layernorm(x2d, p["mlp_ln_g"], p["mlp_ln_b"])
    h = linear(h, p["mlp_w1"], p["mlp_b1"], activation="gelu")
    x2d = linear(h, p["mlp_w2"], p["mlp_b2"], residual=x2d, out_dtype=jnp.float32)
    return x2d


def text_decoder_forward(tokens, encoder_out, params, n_head, padding_mask=None):
    """tokens: (B, T) int32, encoder_out: (B, S, D) f32 -> logits (B, T, n_vocab) f32."""
    if padding_mask is not None:
        # TODO(synk): padding-mask additive-bias path inside self-attention not implemented.
        raise NotImplementedError("padding_mask path not implemented")
    B, T = tokens.shape
    _, S, D = encoder_out.shape
    n_vocab = params["w_out"].shape[1]

    # Pad decoder length to a sublane multiple and encoder length to a lane-friendly
    # multiple ONCE up front; padded rows are masked (causal / kv_valid) and sliced off.
    T_pad = _round_up(T, 8)
    S_pad = _round_up(S, 128) if S > 128 else _round_up(S, 8)

    x = params["tok_emb"][tokens] + params["pos_emb"][:T, :]            # gather (glue)
    if T_pad != T:
        x = jnp.pad(x, ((0, 0), (0, T_pad - T), (0, 0)))
    x2d = x.reshape(B * T_pad, D).astype(jnp.float32)                   # f32 residual stream

    enc = encoder_out.astype(jnp.bfloat16)                              # cast once, reused
    if S_pad != S:
        enc = jnp.pad(enc, ((0, 0), (0, S_pad - S), (0, 0)))
    enc2d = enc.reshape(B * S_pad, D)

    for blk in params["blocks"]:
        x2d = residual_attention_block(x2d, enc2d, blk, B, T_pad, S_pad, S, n_head)

    h = layernorm(x2d, params["ln_g"], params["ln_b"])
    # Vocab head: bias-free, single K step (no acc scratch), large lane tiles.
    logits = linear(h, params["w_out"], None, out_dtype=jnp.float32, bn=1024)
    logits = logits.reshape(B, T_pad, n_vocab)
    if T_pad != T:
        logits = logits[:, :T, :]
    return logits


# ----------------------------------------------------------------------------
# Deterministic synthetic parameter init (weights stored bf16 for the MXU).
# The attention scale 1/sqrt(dh) is folded into the Q projection weights/bias here,
# so the attention kernel computes the already-scaled QK^T.
# ----------------------------------------------------------------------------

def init_params(key, n_vocab, n_ctx, n_state, n_head, n_layer):
    D = n_state
    dh = D // n_head
    q_scale = float(dh) ** -0.5
    wdt = jnp.bfloat16   # MXU operand dtype; all accumulation stays f32 in-kernel

    def nrm(k, shape, std=0.02):
        return std * jax.random.normal(k, shape, dtype=jnp.float32)

    keys = iter(jax.random.split(key, 8 + n_layer * 24))

    def self_attn():
        w_q = nrm(next(keys), (D, D)) * q_scale
        w_k = nrm(next(keys), (D, D))
        w_v = nrm(next(keys), (D, D))
        b_q = nrm(next(keys), (D,)) * q_scale
        b_v = nrm(next(keys), (D,))
        return {
            "w_qkv": jnp.concatenate([w_q, w_k, w_v], axis=1).astype(wdt),  # [Q | K | V]
            "b_qkv": jnp.concatenate([b_q, jnp.zeros((D,), jnp.float32), b_v]),  # K no bias
            "w_out": nrm(next(keys), (D, D)).astype(wdt),
            "b_out": nrm(next(keys), (D,)),
        }

    def cross_attn():
        w_k = nrm(next(keys), (D, D))
        w_v = nrm(next(keys), (D, D))
        b_v = nrm(next(keys), (D,))
        return {
            "w_q": (nrm(next(keys), (D, D)) * q_scale).astype(wdt),
            "b_q": nrm(next(keys), (D,)) * q_scale,
            "w_kv": jnp.concatenate([w_k, w_v], axis=1).astype(wdt),        # [K | V]
            "b_kv": jnp.concatenate([jnp.zeros((D,), jnp.float32), b_v]),   # K no bias
            "w_out": nrm(next(keys), (D, D)).astype(wdt),
            "b_out": nrm(next(keys), (D,)),
        }

    blocks = []
    for _ in range(n_layer):
        blocks.append({
            "attn_ln_g": jnp.ones((D,), jnp.float32),
            "attn_ln_b": jnp.zeros((D,), jnp.float32),
            "attn": self_attn(),
            "cross_ln_g": jnp.ones((D,), jnp.float32),
            "cross_ln_b": jnp.zeros((D,), jnp.float32),
            "cross_attn": cross_attn(),
            "mlp_ln_g": jnp.ones((D,), jnp.float32),
            "mlp_ln_b": jnp.zeros((D,), jnp.float32),
            "mlp_w1": nrm(next(keys), (D, 4 * D)).astype(wdt),
            "mlp_b1": nrm(next(keys), (4 * D,)),
            "mlp_w2": nrm(next(keys), (4 * D, D)).astype(wdt),
            "mlp_b2": nrm(next(keys), (D,)),
        })

    return {
        "tok_emb": nrm(next(keys), (n_vocab, D)),
        "pos_emb": jax.random.normal(next(keys), (n_ctx, D), dtype=jnp.float32),  # torch.randn
        "blocks": blocks,
        "ln_g": jnp.ones((D,), jnp.float32),
        "ln_b": jnp.zeros((D,), jnp.float32),
        # spec: self.output = nn.Linear(n_state, n_vocab, bias=False) (untied weight)
        "w_out": nrm(next(keys), (D, n_vocab)).astype(wdt),
    }


# ----------------------------------------------------------------------------
# Demo
# ----------------------------------------------------------------------------

if __name__ == "__main__":
    # Small but tiling-exercising shapes: the vocab head takes the single-K fast path,
    # attention exercises the fused-buffer column index maps and causal masking.
    n_vocab, n_ctx, n_state, n_head, n_layer = 1024, 64, 128, 4, 2
    B, T, S_enc = 2, 16, 32

    root = jax.random.PRNGKey(0)
    k_par, k_tok, k_enc = jax.random.split(root, 3)

    params = init_params(k_par, n_vocab, n_ctx, n_state, n_head, n_layer)
    tokens = jax.random.randint(k_tok, (B, T), 0, n_vocab, dtype=jnp.int32)
    encoder_out = jax.random.normal(k_enc, (B, S_enc, n_state), dtype=jnp.float32)

    fwd = jax.jit(functools.partial(text_decoder_forward, n_head=n_head))
    logits = fwd(tokens, encoder_out, params)
    jax.block_until_ready(logits)

    assert logits.shape == (B, T, n_vocab), logits.shape
    assert logits.dtype == jnp.float32
    assert bool(jnp.all(jnp.isfinite(logits)))
    print("KERNEL_OK")
</pallas_src>

<mosaic_0001>
module attributes {stable_mosaic.version = 11 : i64} {
  func.func @kernel(%arg0: i32, %arg1: i32, %arg2: i32, %arg3: memref<32x128xbf16, #tpu.memory_space<vmem>>, %arg4: memref<128x128xbf16, #tpu.memory_space<vmem>>, %arg5: memref<1x128xf32, #tpu.memory_space<vmem>>, %arg6: memref<32x128xf32, #tpu.memory_space<vmem>>, %arg7: memref<32x128xf32, #tpu.memory_space<vmem>>) attributes {dimension_semantics = [#tpu.dimension_semantics<parallel>, #tpu.dimension_semantics<parallel>, #tpu.dimension_semantics<arbitrary>], iteration_bounds = array<i64: 1, 1, 1>, scalar_prefetch = 0 : i64, scratch_operands = 0 : i64, tpu.core_type = #tpu.core_type<tc>, window_params = [{transform_indices = @transform_0, window_bounds = array<i64: 32, 128>}, {transform_indices = @transform_1, window_bounds = array<i64: 128, 128>}, {transform_indices = @transform_2, window_bounds = array<i64: 1, 128>}, {transform_indices = @transform_3, window_bounds = array<i64: 32, 128>}, {transform_indices = @transform_4, window_bounds = array<i64: 32, 128>}]} {
    %c0 = arith.constant 0 : index
    %c0_0 = arith.constant 0 : index
    %0 = vector.load %arg3[%c0, %c0_0] : memref<32x128xbf16, #tpu.memory_space<vmem>>, vector<32x128xbf16>
    %c0_1 = arith.constant 0 : index
    %c0_2 = arith.constant 0 : index
    %1 = vector.load %arg4[%c0_1, %c0_2] : memref<128x128xbf16, #tpu.memory_space<vmem>>, vector<128x128xbf16>
    %cst = arith.constant dense<0.000000e+00> : vector<32x128xf32>
    %2 = tpu.matmul %0, %1, %cst {dimension_numbers = #tpu.dot_dimension_numbers<[1], [0], [0], [1], [0, 0, 1, 1], [], []>} : vector<32x128xbf16>, vector<128x128xbf16>, vector<32x128xf32> -> vector<32x128xf32>
    %c0_3 = arith.constant 0 : index
    %c0_4 = arith.constant 0 : index
    %3 = vector.load %arg5[%c0_3, %c0_4] : memref<1x128xf32, #tpu.memory_space<vmem>>, vector<1x128xf32>
    %4 = vector.broadcast %3 : vector<1x128xf32> to vector<32x128xf32>
    %5 = arith.addf %2, %4 : vector<32x128xf32>
    %c0_5 = arith.constant 0 : index
    %c0_6 = arith.constant 0 : index
    %6 = vector.load %arg6[%c0_5, %c0_6] : memref<32x128xf32, #tpu.memory_space<vmem>>, vector<32x128xf32>
    %7 = arith.addf %5, %6 : vector<32x128xf32>
    %c0_7 = arith.constant 0 : index
    %c0_8 = arith.constant 0 : index
    %8 = vector.load %arg7[%c0_7, %c0_8] : memref<32x128xf32, #tpu.memory_space<vmem>>, vector<32x128xf32>
    tpu.vector_store %arg7[%c0_7, %c0_8], %7 {strides = array<i32>} : memref<32x128xf32, #tpu.memory_space<vmem>>, vector<32x128xf32>,
    return
  }
  func.func @transform_0(%arg0: i32, %arg1: i32, %arg2: i32) -> (i32, i32) {
    %c0_i32 = arith.constant 0 : i32
    return %arg0, %arg2 : i32, i32
  }
  func.func @transform_1(%arg0: i32, %arg1: i32, %arg2: i32) -> (i32, i32) {
    %c0_i32 = arith.constant 0 : i32
    return %arg2, %arg1 : i32, i32
  }
  func.func @transform_2(%arg0: i32, %arg1: i32, %arg2: i32) -> (i32, i32) {
    %c0_i32 = arith.constant 0 : i32
    %c0_i32_0 = arith.constant 0 : i32
    return %c0_i32, %arg1 : i32, i32
  }
  func.func @transform_3(%arg0: i32, %arg1: i32, %arg2: i32) -> (i32, i32) {
    %c0_i32 = arith.constant 0 : i32
    return %arg0, %arg1 : i32, i32
  }
  func.func @transform_4(%arg0: i32, %arg1: i32, %arg2: i32) -> (i32, i32) {
    %c0_i32 = arith.constant 0 : i32
    return %arg0, %arg1 : i32, i32
  }
}

module attributes {stable_mosaic.version = 11 : i64} {
  func.func @kernel(%arg0: i32, %arg1: i32, %arg2: i32, %arg3: memref<32x128xbf16, #tpu.memory_space<vmem>>, %arg4: memref<128x384xbf16, #tpu.memory_space<vmem>>, %arg5: memref<1x384xf32, #tpu.memory_space<vmem>>, %arg6: memref<32x384xbf16, #tpu.memory_space<vmem>>) attributes {dimension_semantics = [#tpu.dimension_semantics<parallel>, #tpu.dimension_semantics<parallel>, #tpu.dimension_semantics<arbitrary>], iteration_bounds = array<i64: 1, 1, 1>, scalar_prefetch = 0 : i64, scratch_operands = 0 : i64, tpu.core_type = #tpu.core_type<tc>, window_params = [{transform_indices = @transform_0, window_bounds = array<i64: 32, 128>}, {transform_indices = @transform_1, window_bounds = array<i64: 128, 384>}, {transform_indices = @transform_2, window_bounds = array<i64: 1, 384>}, {transform_indices = @transform_3, window_bounds = array<i64: 32, 384>}]} {
    %c0 = arith.constant 0 : index
    %c0_0 = arith.constant 0 : index
    %0 = vector.load %arg3[%c0, %c0_0] : memref<32x128xbf16, #tpu.memory_space<vmem>>, vector<32x128xbf16>
    %c0_1 = arith.constant 0 : index
    %c0_2 = arith.constant 0 : index
    %1 = vector.load %arg4[%c0_1, %c0_2] : memref<128x384xbf16, #tpu.memory_space<vmem>>, vector<128x384xbf16>
    %cst = arith.constant dense<0.000000e+00> : vector<32x384xf32>
    %2 = tpu.matmul %0, %1, %cst {dimension_numbers = #tpu.dot_dimension_numbers<[1], [0], [0], [1], [0, 0, 1, 1], [], []>} : vector<32x128xbf16>, vector<128x384xbf16>, vector<32x384xf32> -> vector<32x384xf32>
    %c0_3 = arith.constant 0 : index
    %c0_4 = arith.constant 0 : index
    %3 = vector.load %arg5[%c0_3, %c0_4] : memref<1x384xf32, #tpu.memory_space<vmem>>, vector<1x384xf32>
    %4 = vector.broadcast %3 : vector<1x384xf32> to vector<32x384xf32>
    %5 = arith.addf %2, %4 : vector<32x384xf32>
    %6 = arith.truncf %5 : vector<32x384xf32> to vector<32x384xbf16>
    %c0_5 = arith.constant 0 : index
    %c0_6 = arith.constant 0 : index
    %7 = vector.load %arg6[%c0_5, %c0_6] : memref<32x384xbf16, #tpu.memory_space<vmem>>, vector<32x384xbf16>
    tpu.vector_store %arg6[%c0_5, %c0_6], %6 {strides = array<i32>} : memref<32x384xbf16, #tpu.memory_space<vmem>>, vector<32x384xbf16>,
    return
  }
  func.func @transform_0(%arg0: i32, %arg1: i32, %arg2: i32) -> (i32, i32) {
    %c0_i32 = arith.constant 0 : i32
    return %arg0, %arg2 : i32, i32
  }
  func.func @transform_1(%arg0: i32, %arg1: i32, %arg2: i32) -> (i32, i32) {
    %c0_i32 = arith.constant 0 : i32
    return %arg2, %arg1 : i32, i32
  }
  func.func @transform_2(%arg0: i32, %arg1: i32, %arg2: i32) -> (i32, i32) {
    %c0_i32 = arith.constant 0 : i32
    %c0_i32_0 = arith.constant 0 : i32
    return %c0_i32, %arg1 : i32, i32
  }
  func.func @transform_3(%arg0: i32, %arg1: i32, %arg2: i32) -> (i32, i32) {
    %c0_i32 = arith.constant 0 : i32
    return %arg0, %arg1 : i32, i32
  }
}

module attributes {stable_mosaic.version = 11 : i64} {
  func.func @_layernorm_kernel(%arg0: i32, %arg1: memref<32x128xf32, #tpu.memory_space<vmem>>, %arg2: memref<1x128xf32, #tpu.memory_space<vmem>>, %arg3: memref<1x128xf32, #tpu.memory_space<vmem>>, %arg4: memref<32x128xbf16, #tpu.memory_space<vmem>>) attributes {dimension_semantics = [#tpu.dimension_semantics<parallel>], iteration_bounds = array<i64: 1>, scalar_prefetch = 0 : i64, scratch_operands = 0 : i64, tpu.core_type = #tpu.core_type<tc>, window_params = [{transform_indices = @transform_0, window_bounds = array<i64: 32, 128>}, {pipeline_mode = #tpu.pipeline_mode<synchronous>, transform_indices = @transform_1, window_bounds = array<i64: 1, 128>}, {pipeline_mode = #tpu.pipeline_mode<synchronous>, transform_indices = @transform_2, window_bounds = array<i64: 1, 128>}, {transform_indices = @transform_3, window_bounds = array<i64: 32, 128>}]} {
    %c0 = arith.constant 0 : index
    %c0_0 = arith.constant 0 : index
    %0 = vector.load %arg1[%c0, %c0_0] : memref<32x128xf32, #tpu.memory_space<vmem>>, vector<32x128xf32>
    %cst = arith.constant dense<0.000000e+00> : vector<32xf32>
    %1 = vector.multi_reduction <add>, %0, %cst [1] : vector<32x128xf32> to vector<32xf32>
    %2 = vector.shape_cast %1 : vector<32xf32> to vector<32x1xf32>
    %cst_1 = arith.constant 1.280000e+02 : f32
    %3 = vector.broadcast %cst_1 : f32 to vector<32x1xf32>
    %4 = arith.divf %2, %3 : vector<32x1xf32>
    %5 = arith.mulf %0, %0 : vector<32x128xf32>
    %cst_2 = arith.constant dense<0.000000e+00> : vector<32xf32>
    %6 = vector.multi_reduction <add>, %5, %cst_2 [1] : vector<32x128xf32> to vector<32xf32>
    %7 = vector.shape_cast %6 : vector<32xf32> to vector<32x1xf32>
    %cst_3 = arith.constant 1.280000e+02 : f32
    %8 = vector.broadcast %cst_3 : f32 to vector<32x1xf32>
    %9 = arith.divf %7, %8 : vector<32x1xf32>
    %10 = arith.mulf %4, %4 : vector<32x1xf32>
    %11 = arith.subf %9, %10 : vector<32x1xf32>
    %12 = vector.broadcast %4 : vector<32x1xf32> to vector<32x128xf32>
    %13 = arith.subf %0, %12 : vector<32x128xf32>
    %cst_4 = arith.constant 9.99999974E-6 : f32
    %14 = vector.broadcast %cst_4 : f32 to vector<32x1xf32>
    %15 = arith.addf %11, %14 : vector<32x1xf32>
    %16 = math.rsqrt %15 : vector<32x1xf32>
    %17 = vector.broadcast %16 : vector<32x1xf32> to vector<32x128xf32>
    %18 = arith.mulf %13, %17 : vector<32x128xf32>
    %c0_5 = arith.constant 0 : index
    %c0_6 = arith.constant 0 : index
    %19 = vector.load %arg2[%c0_5, %c0_6] : memref<1x128xf32, #tpu.memory_space<vmem>>, vector<1x128xf32>
    %20 = vector.broadcast %19 : vector<1x128xf32> to vector<32x128xf32>
    %21 = arith.mulf %18, %20 : vector<32x128xf32>
    %c0_7 = arith.constant 0 : index
    %c0_8 = arith.constant 0 : index
    %22 = vector.load %arg3[%c0_7, %c0_8] : memref<1x128xf32, #tpu.memory_space<vmem>>, vector<1x128xf32>
    %23 = vector.broadcast %22 : vector<1x128xf32> to vector<32x128xf32>
    %24 = arith.addf %21, %23 : vector<32x128xf32>
    %25 = arith.truncf %24 : vector<32x128xf32> to vector<32x128xbf16>
    %c0_9 = arith.constant 0 : index
    %c0_10 = arith.constant 0 : index
    %26 = vector.load %arg4[%c0_9, %c0_10] : memref<32x128xbf16, #tpu.memory_space<vmem>>, vector<32x128xbf16>
    tpu.vector_store %arg4[%c0_9, %c0_10], %25 {strides = array<i32>} : memref<32x128xbf16, #tpu.memory_space<vmem>>, vector<32x128xbf16>,
    return
  }
  func.func @transform_0(%arg0: i32) -> (i32, i32) {
    %c0_i32 = arith.constant 0 : i32
    %c0_i32_0 = arith.constant 0 : i32
    return %arg0, %c0_i32 : i32, i32
  }
  func.func @transform_1(%arg0: i32) -> (i32, i32) {
    %c0_i32 = arith.constant 0 : i32
    %c0_i32_0 = arith.constant 0 : i32
    %c0_i32_1 = arith.constant 0 : i32
    return %c0_i32, %c0_i32_0 : i32, i32
  }
  func.func @transform_2(%arg0: i32) -> (i32, i32) {
    %c0_i32 = arith.constant 0 : i32
    %c0_i32_0 = arith.constant 0 : i32
    %c0_i32_1 = arith.constant 0 : i32
    return %c0_i32, %c0_i32_0 : i32, i32
  }
  func.func @transform_3(%arg0: i32) -> (i32, i32) {
    %c0_i32 = arith.constant 0 : i32
    %c0_i32_0 = arith.constant 0 : i32
    return %arg0, %c0_i32 : i32, i32
  }
}

module attributes {stable_mosaic.version = 11 : i64} {
  func.func @_flash_attn_kernel(%arg0: i32, %arg1: i32, %arg2: memref<1x16x128xbf16, #tpu.memory_space<vmem>>, %arg3: memref<1x16x128xbf16, #tpu.memory_space<vmem>>, %arg4: memref<1x16x128xbf16, #tpu.memory_space<vmem>>, %arg5: memref<1x16x128xbf16, #tpu.memory_space<vmem>>, %arg6: memref<4x16x1xf32, #tpu.memory_space<vmem>>, %arg7: memref<4x16x1xf32, #tpu.memory_space<vmem>>, %arg8: memref<4x16x32xf32, #tpu.memory_space<vmem>>) attributes {dimension_semantics = [#tpu.dimension_semantics<parallel>, #tpu.dimension_semantics<arbitrary>], iteration_bounds = array<i64: 2, 1>, scalar_prefetch = 0 : i64, scratch_operands = 3 : i64, tpu.core_type = #tpu.core_type<tc>, window_params = [{transform_indices = @transform_0, window_bounds = array<i64: 1, 16, 128>}, {transform_indices = @transform_1, window_bounds = array<i64: 1, 16, 128>}, {transform_indices = @transform_2, window_bounds = array<i64: 1, 16, 128>}, {transform_indices = @transform_3, window_bounds = array<i64: 1, 16, 128>}]} {
    %c0_i32 = arith.constant 0 : i32
    %0 = arith.cmpi eq, %arg1, %c0_i32 : i32
    %1 = arith.extui %0 : i1 to i32
    %c0_i32_0 = arith.constant 0 : i32
    %2 = arith.cmpi ne, %1, %c0_i32_0 : i32
    scf.if %2 {
      %cst_99 = arith.constant 0xFF800000 : f32
      %170 = vector.broadcast %cst_99 : f32 to vector<4x16x1xf32>
      %c0_100 = arith.constant 0 : index
      %c0_101 = arith.constant 0 : index
      %c0_102 = arith.constant 0 : index
      %171 = vector.load %arg6[%c0_100, %c0_101, %c0_102] : memref<4x16x1xf32, #tpu.memory_space<vmem>>, vector<4x16x1xf32>
      tpu.vector_store %arg6[%c0_100, %c0_101, %c0_102], %170 {strides = array<i32>} : memref<4x16x1xf32, #tpu.memory_space<vmem>>, vector<4x16x1xf32>,
      %cst_103 = arith.constant 0.000000e+00 : f32
      %172 = vector.broadcast %cst_103 : f32 to vector<4x16x1xf32>
      %c0_104 = arith.constant 0 : index
      %c0_105 = arith.constant 0 : index
      %c0_106 = arith.constant 0 : index
      %173 = vector.load %arg7[%c0_104, %c0_105, %c0_106] : memref<4x16x1xf32, #tpu.memory_space<vmem>>, vector<4x16x1xf32>
      tpu.vector_store %arg7[%c0_104, %c0_105, %c0_106], %172 {strides = array<i32>} : memref<4x16x1xf32, #tpu.memory_space<vmem>>, vector<4x16x1xf32>,
      %cst_107 = arith.constant 0.000000e+00 : f32
      %174 = vector.broadcast %cst_107 : f32 to vector<4x16x32xf32>
      %c0_108 = arith.constant 0 : index
      %c0_109 = arith.constant 0 : index
      %c0_110 = arith.constant 0 : index
      %175 = vector.load %arg8[%c0_108, %c0_109, %c0_110] : memref<4x16x32xf32, #tpu.memory_space<vmem>>, vector<4x16x32xf32>
      tpu.vector_store %arg8[%c0_108, %c0_109, %c0_110], %174 {strides = array<i32>} : memref<4x16x32xf32, #tpu.memory_space<vmem>>, vector<4x16x32xf32>,
    } else {
    }
    %c0 = arith.constant 0 : index
    %c0_1 = arith.constant 0 : index
    %c0_2 = arith.constant 0 : index
    %3 = vector.load %arg2[%c0, %c0_1, %c0_2] : memref<1x16x128xbf16, #tpu.memory_space<vmem>>, vector<1x16x128xbf16>
    %4 = vector.shape_cast %3 : vector<1x16x128xbf16> to vector<16x128xbf16>
    %c0_3 = arith.constant 0 : index
    %c0_4 = arith.constant 0 : index
    %c0_5 = arith.constant 0 : index
    %5 = vector.load %arg3[%c0_3, %c0_4, %c0_5] : memref<1x16x128xbf16, #tpu.memory_space<vmem>>, vector<1x16x128xbf16>
    %6 = vector.shape_cast %5 : vector<1x16x128xbf16> to vector<16x128xbf16>
    %c0_6 = arith.constant 0 : index
    %c0_7 = arith.constant 0 : index
    %c0_8 = arith.constant 0 : index
    %7 = vector.load %arg4[%c0_6, %c0_7, %c0_8] : memref<1x16x128xbf16, #tpu.memory_space<vmem>>, vector<1x16x128xbf16>
    %8 = vector.shape_cast %7 : vector<1x16x128xbf16> to vector<16x128xbf16>
    %9 = tpu.iota {dimensions = array<i32: 1>} : vector<16x16xi32>
    %c16_i32 = arith.constant 16 : i32
    %10 = arith.muli %arg1, %c16_i32 : i32
    %11 = vector.broadcast %10 : i32 to vector<16x16xi32>
    %12 = arith.addi %9, %11 : vector<16x16xi32>
    %13 = tpu.iota {dimensions = array<i32: 0>} : vector<16x16xi32>
    %14 = arith.cmpi sgt, %12, %13 : vector<16x16xi32>
    %15 = vector.extract_strided_slice %4 {offsets = [0, 0], sizes = [16, 32], strides = [1, 1]} : vector<16x128xbf16> to vector<16x32xbf16>
    %16 = vector.extract_strided_slice %6 {offsets = [0, 0], sizes = [16, 32], strides = [1, 1]} : vector<16x128xbf16> to vector<16x32xbf16>
    %17 = vector.extract_strided_slice %8 {offsets = [0, 0], sizes = [16, 32], strides = [1, 1]} : vector<16x128xbf16> to vector<16x32xbf16>
    %cst = arith.constant dense<0.000000e+00> : vector<16x16xf32>
    %18 = tpu.matmul %15, %16, %cst {dimension_numbers = #tpu.dot_dimension_numbers<[1], [1], [0], [0], [0, 0, 1, 0], [], []>} : vector<16x32xbf16>, vector<16x32xbf16>, vector<16x16xf32> -> vector<16x16xf32>
    %cst_9 = arith.constant -1.000000e+30 : f32
    %19 = vector.broadcast %cst_9 : f32 to vector<16x16xf32>
    %20 = arith.select %14, %19, %18 : vector<16x16xi1>, vector<16x16xf32>
    %c0_10 = arith.constant 0 : index
    %c0_11 = arith.constant 0 : index
    %c0_12 = arith.constant 0 : index
    %21 = vector.load %arg6[%c0_10, %c0_11, %c0_12] : memref<4x16x1xf32, #tpu.memory_space<vmem>>, vector<1x16x1xf32>
    %22 = vector.shape_cast %21 : vector<1x16x1xf32> to vector<16x1xf32>
    %cst_13 = arith.constant dense<0xFF800000> : vector<16xf32>
    %23 = vector.multi_reduction <maximumf>, %20, %cst_13 [1] : vector<16x16xf32> to vector<16xf32>
    %24 = vector.shape_cast %23 : vector<16xf32> to vector<16x1xf32>
    %25 = arith.maximumf %22, %24 : vector<16x1xf32>
    %26 = arith.subf %22, %25 : vector<16x1xf32>
    %27 = math.exp %26 : vector<16x1xf32>
    %28 = vector.broadcast %25 : vector<16x1xf32> to vector<16x16xf32>
    %29 = arith.subf %20, %28 : vector<16x16xf32>
    %30 = math.exp %29 : vector<16x16xf32>
    %c0_14 = arith.constant 0 : index
    %c0_15 = arith.constant 0 : index
    %c0_16 = arith.constant 0 : index
    %31 = vector.load %arg7[%c0_14, %c0_15, %c0_16] : memref<4x16x1xf32, #tpu.memory_space<vmem>>, vector<1x16x1xf32>
    %32 = vector.shape_cast %31 : vector<1x16x1xf32> to vector<16x1xf32>
    %33 = arith.mulf %27, %32 : vector<16x1xf32>
    %cst_17 = arith.constant dense<0.000000e+00> : vector<16xf32>
    %34 = vector.multi_reduction <add>, %30, %cst_17 [1] : vector<16x16xf32> to vector<16xf32>
    %35 = vector.shape_cast %34 : vector<16xf32> to vector<16x1xf32>
    %36 = arith.addf %33, %35 : vector<16x1xf32>
    %c0_18 = arith.constant 0 : index
    %c0_19 = arith.constant 0 : index
    %c0_20 = arith.constant 0 : index
    %37 = vector.load %arg7[%c0_18, %c0_19, %c0_20] : memref<4x16x1xf32, #tpu.memory_space<vmem>>, vector<1x16x1xf32>
    %38 = vector.shape_cast %37 : vector<1x16x1xf32> to vector<16x1xf32>
    %39 = vector.shape_cast %36 : vector<16x1xf32> to vector<1x16x1xf32>
    tpu.vector_store %arg7[%c0_18, %c0_19, %c0_20], %39 {strides = array<i32>} : memref<4x16x1xf32, #tpu.memory_space<vmem>>, vector<1x16x1xf32>,
    %c0_21 = arith.constant 0 : index
    %c0_22 = arith.constant 0 : index
    %c0_23 = arith.constant 0 : index
    %40 = vector.load %arg8[%c0_21, %c0_22, %c0_23] : memref<4x16x32xf32, #tpu.memory_space<vmem>>, vector<1x16x32xf32>
    %41 = vector.shape_cast %40 : vector<1x16x32xf32> to vector<16x32xf32>
    %42 = vector.broadcast %27 : vector<16x1xf32> to vector<16x32xf32>
    %43 = arith.mulf %42, %41 : vector<16x32xf32>
    %44 = arith.truncf %30 : vector<16x16xf32> to vector<16x16xbf16>
    %cst_24 = arith.constant dense<0.000000e+00> : vector<16x32xf32>
    %45 = tpu.matmul %44, %17, %cst_24 {dimension_numbers = #tpu.dot_dimension_numbers<[1], [0], [0], [1], [0, 0, 1, 1], [], []>} : vector<16x16xbf16>, vector<16x32xbf16>, vector<16x32xf32> -> vector<16x32xf32>
    %46 = arith.addf %43, %45 : vector<16x32xf32>
    %c0_25 = arith.constant 0 : index
    %c0_26 = arith.constant 0 : index
    %c0_27 = arith.constant 0 : index
    %47 = vector.load %arg8[%c0_25, %c0_26, %c0_27] : memref<4x16x32xf32, #tpu.memory_space<vmem>>, vector<1x16x32xf32>
    %48 = vector.shape_cast %47 : vector<1x16x32xf32> to vector<16x32xf32>
    %49 = vector.shape_cast %46 : vector<16x32xf32> to vector<1x16x32xf32>
    tpu.vector_store %arg8[%c0_25, %c0_26, %c0_27], %49 {strides = array<i32>} : memref<4x16x32xf32, #tpu.memory_space<vmem>>, vector<1x16x32xf32>,
    %c0_28 = arith.constant 0 : index
    %c0_29 = arith.constant 0 : index
    %c0_30 = arith.constant 0 : index
    %50 = vector.load %arg6[%c0_28, %c0_29, %c0_30] : memref<4x16x1xf32, #tpu.memory_space<vmem>>, vector<1x16x1xf32>
    %51 = vector.shape_cast %50 : vector<1x16x1xf32> to vector<16x1xf32>
    %52 = vector.shape_cast %25 : vector<16x1xf32> to vector<1x16x1xf32>
    tpu.vector_store %arg6[%c0_28, %c0_29, %c0_30], %52 {strides = array<i32>} : memref<4x16x1xf32, #tpu.memory_space<vmem>>, vector<1x16x1xf32>,
    %53 = vector.extract_strided_slice %4 {offsets = [0, 32], sizes = [16, 32], strides = [1, 1]} : vector<16x128xbf16> to vector<16x32xbf16>
    %54 = vector.extract_strided_slice %6 {offsets = [0, 32], sizes = [16, 32], strides = [1, 1]} : vector<16x128xbf16> to vector<16x32xbf16>
    %55 = vector.extract_strided_slice %8 {offsets = [0, 32], sizes = [16, 32], strides = [1, 1]} : vector<16x128xbf16> to vector<16x32xbf16>
    %cst_31 = arith.constant dense<0.000000e+00> : vector<16x16xf32>
    %56 = tpu.matmul %53, %54, %cst_31 {dimension_numbers = #tpu.dot_dimension_numbers<[1], [1], [0], [0], [0, 0, 1, 0], [], []>} : vector<16x32xbf16>, vector<16x32xbf16>, vector<16x16xf32> -> vector<16x16xf32>
    %cst_32 = arith.constant -1.000000e+30 : f32
    %57 = vector.broadcast %cst_32 : f32 to vector<16x16xf32>
    %58 = arith.select %14, %57, %56 : vector<16x16xi1>, vector<16x16xf32>
    %c1 = arith.constant 1 : index
    %c0_33 = arith.constant 0 : index
    %c0_34 = arith.constant 0 : index
    %59 = vector.load %arg6[%c1, %c0_33, %c0_34] : memref<4x16x1xf32, #tpu.memory_space<vmem>>, vector<1x16x1xf32>
    %60 = vector.shape_cast %59 : vector<1x16x1xf32> to vector<16x1xf32>
    %cst_35 = arith.constant dense<0xFF800000> : vector<16xf32>
    %61 = vector.multi_reduction <maximumf>, %58, %cst_35 [1] : vector<16x16xf32> to vector<16xf32>
    %62 = vector.shape_cast %61 : vector<16xf32> to vector<16x1xf32>
    %63 = arith.maximumf %60, %62 : vector<16x1xf32>
    %64 = arith.subf %60, %63 : vector<16x1xf32>
    %65 = math.exp %64 : vector<16x1xf32>
    %66 = vector.broadcast %63 : vector<16x1xf32> to vector<16x16xf32>
    %67 = arith.subf %58, %66 : vector<16x16xf32>
    %68 = math.exp %67 : vector<16x16xf32>
    %c1_36 = arith.constant 1 : index
    %c0_37 = arith.constant 0 : index
    %c0_38 = arith.constant 0 : index
    %69 = vector.load %arg7[%c1_36, %c0_37, %c0_38] : memref<4x16x1xf32, #tpu.memory_space<vmem>>, vector<1x16x1xf32>
    %70 = vector.shape_cast %69 : vector<1x16x1xf32> to vector<16x1xf32>
    %71 = arith.mulf %65, %70 : vector<16x1xf32>
    %cst_39 = arith.constant dense<0.000000e+00> : vector<16xf32>
    %72 = vector.multi_reduction <add>, %68, %cst_39 [1] : vector<16x16xf32> to vector<16xf32>
    %73 = vector.shape_cast %72 : vector<16xf32> to vector<16x1xf32>
    %74 = arith.addf %71, %73 : vector<16x1xf32>
    %c1_40 = arith.constant 1 : index
    %c0_41 = arith.constant 0 : index
    %c0_42 = arith.constant 0 : index
    %75 = vector.load %arg7[%c1_40, %c0_41, %c0_42] : memref<4x16x1xf32, #tpu.memory_space<vmem>>, vector<1x16x1xf32>
    %76 = vector.shape_cast %75 : vector<1x16x1xf32> to vector<16x1xf32>
    %77 = vector.shape_cast %74 : vector<16x1xf32> to vector<1x16x1xf32>
    tpu.vector_store %arg7[%c1_40, %c0_41, %c0_42], %77 {strides = array<i32>} : memref<4x16x1xf32, #tpu.memory_space<vmem>>, vector<1x16x1xf32>,
    %c1_43 = arith.constant 1 : index
    %c0_44 = arith.constant 0 : index
    %c0_45 = arith.constant 0 : index
    %78 = vector.load %arg8[%c1_43, %c0_44, %c0_45] : memref<4x16x32xf32, #tpu.memory_space<vmem>>, vector<1x16x32xf32>
    %79 = vector.shape_cast %78 : vector<1x16x32xf32> to vector<16x32xf32>
    %80 = vector.broadcast %65 : vector<16x1xf32> to vector<16x32xf32>
    %81 = arith.mulf %80, %79 : vector<16x32xf32>
    %82 = arith.truncf %68 : vector<16x16xf32> to vector<16x16xbf16>
    %cst_46 = arith.constant dense<0.000000e+00> : vector<16x32xf32>
    %83 = tpu.matmul %82, %55, %cst_46 {dimension_numbers = #tpu.dot_dimension_numbers<[1], [0], [0], [1], [0, 0, 1, 1], [], []>} : vector<16x16xbf16>, vector<16x32xbf16>, vector<16x32xf32> -> vector<16x32xf32>
    %84 = arith.addf %81, %83 : vector<16x32xf32>
    %c1_47 = arith.constant 1 : index
    %c0_48 = arith.constant 0 : index
    %c0_49 = arith.constant 0 : index
    %85 = vector.load %arg8[%c1_47, %c0_48, %c0_49] : memref<4x16x32xf32, #tpu.memory_space<vmem>>, vector<1x16x32xf32>
    %86 = vector.shape_cast %85 : vector<1x16x32xf32> to vector<16x32xf32>
    %87 = vector.shape_cast %84 : vector<16x32xf32> to vector<1x16x32xf32>
    tpu.vector_store %arg8[%c1_47, %c0_48, %c0_49], %87 {strides = array<i32>} : memref<4x16x32xf32, #tpu.memory_space<vmem>>, vector<1x16x32xf32>,
    %c1_50 = arith.constant 1 : index
    %c0_51 = arith.constant 0 : index
    %c0_52 = arith.constant 0 : index
    %88 = vector.load %arg6[%c1_50, %c0_51, %c0_52] : memref<4x16x1xf32, #tpu.memory_space<vmem>>, vector<1x16x1xf32>
    %89 = vector.shape_cast %88 : vector<1x16x1xf32> to vector<16x1xf32>
    %90 = vector.shape_cast %63 : vector<16x1xf32> to vector<1x16x1xf32>
    tpu.vector_store %arg6[%c1_50, %c0_51, %c0_52], %90 {strides = array<i32>} : memref<4x16x1xf32, #tpu.memory_space<vmem>>, vector<1x16x1xf32>,
    %91 = vector.extract_strided_slice %4 {offsets = [0, 64], sizes = [16, 32], strides = [1, 1]} : vector<16x128xbf16> to vector<16x32xbf16>
    %92 = vector.extract_strided_slice %6 {offsets = [0, 64], sizes = [16, 32], strides = [1, 1]} : vector<16x128xbf16> to vector<16x32xbf16>
    %93 = vector.extract_strided_slice %8 {offsets = [0, 64], sizes = [16, 32], strides = [1, 1]} : vector<16x128xbf16> to vector<16x32xbf16>
    %cst_53 = arith.constant dense<0.000000e+00> : vector<16x16xf32>
    %94 = tpu.matmul %91, %92, %cst_53 {dimension_numbers = #tpu.dot_dimension_numbers<[1], [1], [0], [0], [0, 0, 1, 0], [], []>} : vector<16x32xbf16>, vector<16x32xbf16>, vector<16x16xf32> -> vector<16x16xf32>
    %cst_54 = arith.constant -1.000000e+30 : f32
    %95 = vector.broadcast %cst_54 : f32 to vector<16x16xf32>
    %96 = arith.select %14, %95, %94 : vector<16x16xi1>, vector<16x16xf32>
    %c2 = arith.constant 2 : index
    %c0_55 = arith.constant 0 : index
    %c0_56 = arith.constant 0 : index
    %97 = vector.load %arg6[%c2, %c0_55, %c0_56] : memref<4x16x1xf32, #tpu.memory_space<vmem>>, vector<1x16x1xf32>
    %98 = vector.shape_cast %97 : vector<1x16x1xf32> to vector<16x1xf32>
    %cst_57 = arith.constant dense<0xFF800000> : vector<16xf32>
    %99 = vector.multi_reduction <maximumf>, %96, %cst_57 [1] : vector<16x16xf32> to vector<16xf32>
    %100 = vector.shape_cast %99 : vector<16xf32> to vector<16x1xf32>
    %101 = arith.maximumf %98, %100 : vector<16x1xf32>
    %102 = arith.subf %98, %101 : vector<16x1xf32>
    %103 = math.exp %102 : vector<16x1xf32>
    %104 = vector.broadcast %101 : vector<16x1xf32> to vector<16x16xf32>
    %105 = arith.subf %96, %104 : vector<16x16xf32>
    %106 = math.exp %105 : vector<16x16xf32>
    %c2_58 = arith.constant 2 : index
    %c0_59 = arith.constant 0 : index
    %c0_60 = arith.constant 0 : index
    %107 = vector.load %arg7[%c2_58, %c0_59, %c0_60] : memref<4x16x1xf32, #tpu.memory_space<vmem>>, vector<1x16x1xf32>
    %108 = vector.shape_cast %107 : vector<1x16x1xf32> to vector<16x1xf32>
    %109 = arith.mulf %103, %108 : vector<16x1xf32>
    %cst_61 = arith.constant dense<0.000000e+00> : vector<16xf32>
    %110 = vector.multi_reduction <add>, %106, %cst_61 [1] : vector<16x16xf32> to vector<16xf32>
    %111 = vector.shape_cast %110 : vector<16xf32> to vector<16x1xf32>
    %112 = arith.addf %109, %111 : vector<16x1xf32>
    %c2_62 = arith.constant 2 : index
    %c0_63 = arith.constant 0 : index
    %c0_64 = arith.constant 0 : index
    %113 = vector.load %arg7[%c2_62, %c0_63, %c0_64] : memref<4x16x1xf32, #tpu.memory_space<vmem>>, vector<1x16x1xf32>
    %114 = vector.shape_cast %113 : vector<1x16x1xf32> to vector<16x1xf32>
    %115 = vector.shape_cast %112 : vector<16x1xf32> to vector<1x16x1xf32>
    tpu.vector_store %arg7[%c2_62, %c0_63, %c0_64], %115 {strides = array<i32>} : memref<4x16x1xf32, #tpu.memory_space<vmem>>, vector<1x16x1xf32>,
    %c2_65 = arith.constant 2 : index
    %c0_66 = arith.constant 0 : index
    %c0_67 = arith.constant 0 : index
    %116 = vector.load %arg8[%c2_65, %c0_66, %c0_67] : memref<4x16x32xf32, #tpu.memory_space<vmem>>, vector<1x16x32xf32>
    %117 = vector.shape_cast %116 : vector<1x16x32xf32> to vector<16x32xf32>
    %118 = vector.broadcast %103 : vector<16x1xf32> to vector<16x32xf32>
    %119 = arith.mulf %118, %117 : vector<16x32xf32>
    %120 = arith.truncf %106 : vector<16x16xf32> to vector<16x16xbf16>
    %cst_68 = arith.constant dense<0.000000e+00> : vector<16x32xf32>
    %121 = tpu.matmul %120, %93, %cst_68 {dimension_numbers = #tpu.dot_dimension_numbers<[1], [0], [0], [1], [0, 0, 1, 1], [], []>} : vector<16x16xbf16>, vector<16x32xbf16>, vector<16x32xf32> -> vector<16x32xf32>
    %122 = arith.addf %119, %121 : vector<16x32xf32>
    %c2_69 = arith.constant 2 : index
    %c0_70 = arith.constant 0 : index
    %c0_71 = arith.constant 0 : index
    %123 = vector.load %arg8[%c2_69, %c0_70, %c0_71] : memref<4x16x32xf32, #tpu.memory_space<vmem>>, vector<1x16x32xf32>
    %124 = vector.shape_cast %123 : vector<1x16x32xf32> to vector<16x32xf32>
    %125 = vector.shape_cast %122 : vector<16x32xf32> to vector<1x16x32xf32>
    tpu.vector_store %arg8[%c2_69, %c0_70, %c0_71], %125 {strides = array<i32>} : memref<4x16x32xf32, #tpu.memory_space<vmem>>, vector<1x16x32xf32>,
    %c2_72 = arith.constant 2 : index
    %c0_73 = arith.constant 0 : index
    %c0_74 = arith.constant 0 : index
    %126 = vector.load %arg6[%c2_72, %c0_73, %c0_74] : memref<4x16x1xf32, #tpu.memory_space<vmem>>, vector<1x16x1xf32>
    %127 = vector.shape_cast %126 : vector<1x16x1xf32> to vector<16x1xf32>
    %128 = vector.shape_cast %101 : vector<16x1xf32> to vector<1x16x1xf32>
    tpu.vector_store %arg6[%c2_72, %c0_73, %c0_74], %128 {strides = array<i32>} : memref<4x16x1xf32, #tpu.memory_space<vmem>>, vector<1x16x1xf32>,
    %129 = vector.extract_strided_slice %4 {offsets = [0, 96], sizes = [16, 32], strides = [1, 1]} : vector<16x128xbf16> to vector<16x32xbf16>
    %130 = vector.extract_strided_slice %6 {offsets = [0, 96], sizes = [16, 32], strides = [1, 1]} : vector<16x128xbf16> to vector<16x32xbf16>
    %131 = vector.extract_strided_slice %8 {offsets = [0, 96], sizes = [16, 32], strides = [1, 1]} : vector<16x128xbf16> to vector<16x32xbf16>
    %cst_75 = arith.constant dense<0.000000e+00> : vector<16x16xf32>
    %132 = tpu.matmul %129, %130, %cst_75 {dimension_numbers = #tpu.dot_dimension_numbers<[1], [1], [0], [0], [0, 0, 1, 0], [], []>} : vector<16x32xbf16>, vector<16x32xbf16>, vector<16x16xf32> -> vector<16x16xf32>
    %cst_76 = arith.constant -1.000000e+30 : f32
    %133 = vector.broadcast %cst_76 : f32 to vector<16x16xf32>
    %134 = arith.select %14, %133, %132 : vector<16x16xi1>, vector<16x16xf32>
    %c3 = arith.constant 3 : index
    %c0_77 = arith.constant 0 : index
    %c0_78 = arith.constant 0 : index
    %135 = vector.load %arg6[%c3, %c0_77, %c0_78] : memref<4x16x1xf32, #tpu.memory_space<vmem>>, vector<1x16x1xf32>
    %136 = vector.shape_cast %135 : vector<1x16x1xf32> to vector<16x1xf32>
    %cst_79 = arith.constant dense<0xFF800000> : vector<16xf32>
    %137 = vector.multi_reduction <maximumf>, %134, %cst_79 [1] : vector<16x16xf32> to vector<16xf32>
    %138 = vector.shape_cast %137 : vector<16xf32> to vector<16x1xf32>
    %139 = arith.maximumf %136, %138 : vector<16x1xf32>
    %140 = arith.subf %136, %139 : vector<16x1xf32>
    %141 = math.exp %140 : vector<16x1xf32>
    %142 = vector.broadcast %139 : vector<16x1xf32> to vector<16x16xf32>
    %143 = arith.subf %134, %142 : vector<16x16xf32>
    %144 = math.exp %143 : vector<16x16xf32>
    %c3_80 = arith.constant 3 : index
    %c0_81 = arith.constant 0 : index
    %c0_82 = arith.constant 0 : index
    %145 = vector.load %arg7[%c3_80, %c0_81, %c0_82] : memref<4x16x1xf32, #tpu.memory_space<vmem>>, vector<1x16x1xf32>
    %146 = vector.shape_cast %145 : vector<1x16x1xf32> to vector<16x1xf32>
    %147 = arith.mulf %141, %146 : vector<16x1xf32>
    %cst_83 = arith.constant dense<0.000000e+00> : vector<16xf32>
    %148 = vector.multi_reduction <add>, %144, %cst_83 [1] : vector<16x16xf32> to vector<16xf32>
    %149 = vector.shape_cast %148 : vector<16xf32> to vector<16x1xf32>
    %150 = arith.addf %147, %149 : vector<16x1xf32>
    %c3_84 = arith.constant 3 : index
    %c0_85 = arith.constant 0 : index
    %c0_86 = arith.constant 0 : index
    %151 = vector.load %arg7[%c3_84, %c0_85, %c0_86] : memref<4x16x1xf32, #tpu.memory_space<vmem>>, vector<1x16x1xf32>
    %152 = vector.shape_cast %151 : vector<1x16x1xf32> to vector<16x1xf32>
    %153 = vector.shape_cast %150 : vector<16x1xf32> to vector<1x16x1xf32>
    tpu.vector_store %arg7[%c3_84, %c0_85, %c0_86], %153 {strides = array<i32>} : memref<4x16x1xf32, #tpu.memory_space<vmem>>, vector<1x16x1xf32>,
    %c3_87 = arith.constant 3 : index
    %c0_88 = arith.constant 0 : index
    %c0_89 = arith.constant 0 : index
    %154 = vector.load %arg8[%c3_87, %c0_88, %c0_89] : memref<4x16x32xf32, #tpu.memory_space<vmem>>, vector<1x16x32xf32>
    %155 = vector.shape_cast %154 : vector<1x16x32xf32> to vector<16x32xf32>
    %156 = vector.broadcast %141 : vector<16x1xf32> to vector<16x32xf32>
    %157 = arith.mulf %156, %155 : vector<16x32xf32>
    %158 = arith.truncf %144 : vector<16x16xf32> to vector<16x16xbf16>
    %cst_90 = arith.constant dense<0.000000e+00> : vector<16x32xf32>
    %159 = tpu.matmul %158, %131, %cst_90 {dimension_numbers = #tpu.dot_dimension_numbers<[1], [0], [0], [1], [0, 0, 1, 1], [], []>} : vector<16x16xbf16>, vector<16x32xbf16>, vector<16x32xf32> -> vector<16x32xf32>
    %160 = arith.addf %157, %159 : vector<16x32xf32>
    %c3_91 = arith.constant 3 : index
    %c0_92 = arith.constant 0 : index
    %c0_93 = arith.constant 0 : index
    %161 = vector.load %arg8[%c3_91, %c0_92, %c0_93] : memref<4x16x32xf32, #tpu.memory_space<vmem>>, vector<1x16x32xf32>
    %162 = vector.shape_cast %161 : vector<1x16x32xf32> to vector<16x32xf32>
    %163 = vector.shape_cast %160 : vector<16x32xf32> to vector<1x16x32xf32>
    tpu.vector_store %arg8[%c3_91, %c0_92, %c0_93], %163 {strides = array<i32>} : memref<4x16x32xf32, #tpu.memory_space<vmem>>, vector<1x16x32xf32>,
    %c3_94 = arith.constant 3 : index
    %c0_95 = arith.constant 0 : index
    %c0_96 = arith.constant 0 : index
    %164 = vector.load %arg6[%c3_94, %c0_95, %c0_96] : memref<4x16x1xf32, #tpu.memory_space<vmem>>, vector<1x16x1xf32>
    %165 = vector.shape_cast %164 : vector<1x16x1xf32> to vector<16x1xf32>
    %166 = vector.shape_cast %139 : vector<16x1xf32> to vector<1x16x1xf32>
    tpu.vector_store %arg6[%c3_94, %c0_95, %c0_96], %166 {strides = array<i32>} : memref<4x16x1xf32, #tpu.memory_space<vmem>>, vector<1x16x1xf32>,
    %c0_i32_97 = arith.constant 0 : i32
    %167 = arith.cmpi eq, %arg1, %c0_i32_97 : i32
    %168 = arith.extui %167 : i1 to i32
    %c0_i32_98 = arith.constant 0 : i32
    %169 = arith.cmpi ne, %168, %c0_i32_98 : i32
    scf.if %169 {
      %c0_99 = arith.constant 0 : index
      %c0_100 = arith.constant 0 : index
      %c0_101 = arith.constant 0 : index
      %170 = vector.load %arg7[%c0_99, %c0_100, %c0_101] : memref<4x16x1xf32, #tpu.memory_space<vmem>>, vector<1x16x1xf32>
      %171 = vector.shape_cast %170 : vector<1x16x1xf32> to vector<16x1xf32>
      %172 = tpu.reciprocal %171 {approx = true} : vector<16x1xf32> -> vector<16x1xf32>
      %c0_102 = arith.constant 0 : index
      %c0_103 = arith.constant 0 : index
      %c0_104 = arith.constant 0 : index
      %173 = vector.load %arg8[%c0_102, %c0_103, %c0_104] : memref<4x16x32xf32, #tpu.memory_space<vmem>>, vector<1x16x32xf32>
      %174 = vector.shape_cast %173 : vector<1x16x32xf32> to vector<16x32xf32>
      %175 = vector.broadcast %172 : vector<16x1xf32> to vector<16x32xf32>
      %176 = arith.mulf %174, %175 : vector<16x32xf32>
      %c1_105 = arith.constant 1 : index
      %c0_106 = arith.constant 0 : index
      %c0_107 = arith.constant 0 : index
      %177 = vector.load %arg7[%c1_105, %c0_106, %c0_107] : memref<4x16x1xf32, #tpu.memory_space<vmem>>, vector<1x16x1xf32>
      %178 = vector.shape_cast %177 : vector<1x16x1xf32> to vector<16x1xf32>
      %179 = tpu.reciprocal %178 {approx = true} : vector<16x1xf32> -> vector<16x1xf32>
      %c1_108 = arith.constant 1 : index
      %c0_109 = arith.constant 0 : index
      %c0_110 = arith.constant 0 : index
      %180 = vector.load %arg8[%c1_108, %c0_109, %c0_110] : memref<4x16x32xf32, #tpu.memory_space<vmem>>, vector<1x16x32xf32>
      %181 = vector.shape_cast %180 : vector<1x16x32xf32> to vector<16x32xf32>
      %182 = vector.broadcast %179 : vector<16x1xf32> to vector<16x32xf32>
      %183 = arith.mulf %181, %182 : vector<16x32xf32>
      %c2_111 = arith.constant 2 : index
      %c0_112 = arith.constant 0 : index
      %c0_113 = arith.constant 0 : index
      %184 = vector.load %arg7[%c2_111, %c0_112, %c0_113] : memref<4x16x1xf32, #tpu.memory_space<vmem>>, vector<1x16x1xf32>
      %185 = vector.shape_cast %184 : vector<1x16x1xf32> to vector<16x1xf32>
      %186 = tpu.reciprocal %185 {approx = true} : vector<16x1xf32> -> vector<16x1xf32>
      %c2_114 = arith.constant 2 : index
      %c0_115 = arith.constant 0 : index
      %c0_116 = arith.constant 0 : index
      %187 = vector.load %arg8[%c2_114, %c0_115, %c0_116] : memref<4x16x32xf32, #tpu.memory_space<vmem>>, vector<1x16x32xf32>
      %188 = vector.shape_cast %187 : vector<1x16x32xf32> to vector<16x32xf32>
      %189 = vector.broadcast %186 : vector<16x1xf32> to vector<16x32xf32>
      %190 = arith.mulf %188, %189 : vector<16x32xf32>
      %c3_117 = arith.constant 3 : index
      %c0_118 = arith.constant 0 : index
      %c0_119 = arith.constant 0 : index
      %191 = vector.load %arg7[%c3_117, %c0_118, %c0_119] : memref<4x16x1xf32, #tpu.memory_space<vmem>>, vector<1x16x1xf32>
      %192 = vector.shape_cast %191 : vector<1x16x1xf32> to vector<16x1xf32>
      %193 = tpu.reciprocal %192 {approx = true} : vector<16x1xf32> -> vector<16x1xf32>
      %c3_120 = arith.constant 3 : index
      %c0_121 = arith.constant 0 : index
      %c0_122 = arith.constant 0 : index
      %194 = vector.load %arg8[%c3_120, %c0_121, %c0_122] : memref<4x16x32xf32, #tpu.memory_space<vmem>>, vector<1x16x32xf32>
      %195 = vector.shape_cast %194 : vector<1x16x32xf32> to vector<16x32xf32>
      %196 = vector.broadcast %193 : vector<16x1xf32> to vector<16x32xf32>
      %197 = arith.mulf %195, %196 : vector<16x32xf32>
      %198 = tpu.concatenate %176, %183, %190, %197 in 1 : vector<16x32xf32>, vector<16x32xf32>, vector<16x32xf32>, vector<16x32xf32> -> vector<16x128xf32>
      %199 = arith.truncf %198 : vector<16x128xf32> to vector<16x128xbf16>
      %c0_123 = arith.constant 0 : index
      %c0_124 = arith.constant 0 : index
      %c0_125 = arith.constant 0 : index
      %200 = vector.load %arg5[%c0_123, %c0_124, %c0_125] : memref<1x16x128xbf16, #tpu.memory_space<vmem>>, vector<1x16x128xbf16>
      %201 = vector.shape_cast %200 : vector<1x16x128xbf16> to vector<16x128xbf16>
      %202 = vector.shape_cast %199 : vector<16x128xbf16> to vector<1x16x128xbf16>
      tpu.vector_store %arg5[%c0_123, %c0_124, %c0_125], %202 {strides = array<i32>} : memref<1x16x128xbf16, #tpu.memory_space<vmem>>, vector<1x16x128xbf16>,
    } else {
    }
    return
  }
  func.func @transform_0(%arg0: i32, %arg1: i32) -> (i32, i32, i32) {
    %c0_i32 = arith.constant 0 : i32
    %c0_i32_0 = arith.constant 0 : i32
    %c0_i32_1 = arith.constant 0 : i32
    return %arg0, %c0_i32, %c0_i32_0 : i32, i32, i32
  }
  func.func @transform_1(%arg0: i32, %arg1: i32) -> (i32, i32, i32) {
    %c1_i32 = arith.constant 1 : i32
    %c0_i32 = arith.constant 0 : i32
    return %arg0, %arg1, %c1_i32 : i32, i32, i32
  }
  func.func @transform_2(%arg0: i32, %arg1: i32) -> (i32, i32, i32) {
    %c2_i32 = arith.constant 2 : i32
    %c0_i32 = arith.constant 0 : i32
    return %arg0, %arg1, %c2_i32 : i32, i32, i32
  }
  func.func @transform_3(%arg0: i32, %arg1: i32) -> (i32, i32, i32) {
    %c0_i32 = arith.constant 0 : i32
    %c0_i32_0 = arith.constant 0 : i32
    %c0_i32_1 = arith.constant 0 : i32
    return %arg0, %c0_i32, %c0_i32_0 : i32, i32, i32
  }
}

module attributes {stable_mosaic.version = 11 : i64} {
  func.func @kernel(%arg0: i32, %arg1: i32, %arg2: i32, %arg3: memref<32x128xbf16, #tpu.memory_space<vmem>>, %arg4: memref<128x128xbf16, #tpu.memory_space<vmem>>, %arg5: memref<1x128xf32, #tpu.memory_space<vmem>>, %arg6: memref<32x128xbf16, #tpu.memory_space<vmem>>) attributes {dimension_semantics = [#tpu.dimension_semantics<parallel>, #tpu.dimension_semantics<parallel>, #tpu.dimension_semantics<arbitrary>], iteration_bounds = array<i64: 1, 1, 1>, scalar_prefetch = 0 : i64, scratch_operands = 0 : i64, tpu.core_type = #tpu.core_type<tc>, window_params = [{transform_indices = @transform_0, window_bounds = array<i64: 32, 128>}, {transform_indices = @transform_1, window_bounds = array<i64: 128, 128>}, {transform_indices = @transform_2, window_bounds = array<i64: 1, 128>}, {transform_indices = @transform_3, window_bounds = array<i64: 32, 128>}]} {
    %c0 = arith.constant 0 : index
    %c0_0 = arith.constant 0 : index
    %0 = vector.load %arg3[%c0, %c0_0] : memref<32x128xbf16, #tpu.memory_space<vmem>>, vector<32x128xbf16>
    %c0_1 = arith.constant 0 : index
    %c0_2 = arith.constant 0 : index
    %1 = vector.load %arg4[%c0_1, %c0_2] : memref<128x128xbf16, #tpu.memory_space<vmem>>, vector<128x128xbf16>
    %cst = arith.constant dense<0.000000e+00> : vector<32x128xf32>
    %2 = tpu.matmul %0, %1, %cst {dimension_numbers = #tpu.dot_dimension_numbers<[1], [0], [0], [1], [0, 0, 1, 1], [], []>} : vector<32x128xbf16>, vector<128x128xbf16>, vector<32x128xf32> -> vector<32x128xf32>
    %c0_3 = arith.constant 0 : index
    %c0_4 = arith.constant 0 : index
    %3 = vector.load %arg5[%c0_3, %c0_4] : memref<1x128xf32, #tpu.memory_space<vmem>>, vector<1x128xf32>
    %4 = vector.broadcast %3 : vector<1x128xf32> to vector<32x128xf32>
    %5 = arith.addf %2, %4 : vector<32x128xf32>
    %6 = arith.truncf %5 : vector<32x128xf32> to vector<32x128xbf16>
    %c0_5 = arith.constant 0 : index
    %c0_6 = arith.constant 0 : index
    %7 = vector.load %arg6[%c0_5, %c0_6] : memref<32x128xbf16, #tpu.memory_space<vmem>>, vector<32x128xbf16>
    tpu.vector_store %arg6[%c0_5, %c0_6], %6 {strides = array<i32>} : memref<32x128xbf16, #tpu.memory_space<vmem>>, vector<32x128xbf16>,
    return
  }
  func.func @transform_0(%arg0: i32, %arg1: i32, %arg2: i32) -> (i32, i32) {
    %c0_i32 = arith.constant 0 : i32
    return %arg0, %arg2 : i32, i32
  }
  func.func @transform_1(%arg0: i32, %arg1: i32, %arg2: i32) -> (i32, i32) {
    %c0_i32 = arith.constant 0 : i32
    return %arg2, %arg1 : i32, i32
  }
  func.func @transform_2(%arg0: i32, %arg1: i32, %arg2: i32) -> (i32, i32) {
    %c0_i32 = arith.constant 0 : i32
    %c0_i32_0 = arith.constant 0 : i32
    return %c0_i32, %arg1 : i32, i32
  }
  func.func @transform_3(%arg0: i32, %arg1: i32, %arg2: i32) -> (i32, i32) {
    %c0_i32 = arith.constant 0 : i32
    return %arg0, %arg1 : i32, i32
  }
}

module attributes {stable_mosaic.version = 11 : i64} {
  func.func @kernel(%arg0: i32, %arg1: i32, %arg2: i32, %arg3: memref<64x128xbf16, #tpu.memory_space<vmem>>, %arg4: memref<128x256xbf16, #tpu.memory_space<vmem>>, %arg5: memref<1x256xf32, #tpu.memory_space<vmem>>, %arg6: memref<64x256xbf16, #tpu.memory_space<vmem>>) attributes {dimension_semantics = [#tpu.dimension_semantics<parallel>, #tpu.dimension_semantics<parallel>, #tpu.dimension_semantics<arbitrary>], iteration_bounds = array<i64: 1, 1, 1>, scalar_prefetch = 0 : i64, scratch_operands = 0 : i64, tpu.core_type = #tpu.core_type<tc>, window_params = [{transform_indices = @transform_0, window_bounds = array<i64: 64, 128>}, {transform_indices = @transform_1, window_bounds = array<i64: 128, 256>}, {transform_indices = @transform_2, window_bounds = array<i64: 1, 256>}, {transform_indices = @transform_3, window_bounds = array<i64: 64, 256>}]} {
    %c0 = arith.constant 0 : index
    %c0_0 = arith.constant 0 : index
    %0 = vector.load %arg3[%c0, %c0_0] : memref<64x128xbf16, #tpu.memory_space<vmem>>, vector<64x128xbf16>
    %c0_1 = arith.constant 0 : index
    %c0_2 = arith.constant 0 : index
    %1 = vector.load %arg4[%c0_1, %c0_2] : memref<128x256xbf16, #tpu.memory_space<vmem>>, vector<128x256xbf16>
    %cst = arith.constant dense<0.000000e+00> : vector<64x256xf32>
    %2 = tpu.matmul %0, %1, %cst {dimension_numbers = #tpu.dot_dimension_numbers<[1], [0], [0], [1], [0, 0, 1, 1], [], []>} : vector<64x128xbf16>, vector<128x256xbf16>, vector<64x256xf32> -> vector<64x256xf32>
    %c0_3 = arith.constant 0 : index
    %c0_4 = arith.constant 0 : index
    %3 = vector.load %arg5[%c0_3, %c0_4] : memref<1x256xf32, #tpu.memory_space<vmem>>, vector<1x256xf32>
    %4 = vector.broadcast %3 : vector<1x256xf32> to vector<64x256xf32>
    %5 = arith.addf %2, %4 : vector<64x256xf32>
    %6 = arith.truncf %5 : vector<64x256xf32> to vector<64x256xbf16>
    %c0_5 = arith.constant 0 : index
    %c0_6 = arith.constant 0 : index
    %7 = vector.load %arg6[%c0_5, %c0_6] : memref<64x256xbf16, #tpu.memory_space<vmem>>, vector<64x256xbf16>
    tpu.vector_store %arg6[%c0_5, %c0_6], %6 {strides = array<i32>} : memref<64x256xbf16, #tpu.memory_space<vmem>>, vector<64x256xbf16>,
    return
  }
  func.func @transform_0(%arg0: i32, %arg1: i32, %arg2: i32) -> (i32, i32) {
    %c0_i32 = arith.constant 0 : i32
    return %arg0, %arg2 : i32, i32
  }
  func.func @transform_1(%arg0: i32, %arg1: i32, %arg2: i32) -> (i32, i32) {
    %c0_i32 = arith.constant 0 : i32
    return %arg2, %arg1 : i32, i32
  }
  func.func @transform_2(%arg0: i32, %arg1: i32, %arg2: i32) -> (i32, i32) {
    %c0_i32 = arith.constant 0 : i32
    %c0_i32_0 = arith.constant 0 : i32
    return %c0_i32, %arg1 : i32, i32
  }
  func.func @transform_3(%arg0: i32, %arg1: i32, %arg2: i32) -> (i32, i32) {
    %c0_i32 = arith.constant 0 : i32
    return %arg0, %arg1 : i32, i32
  }
}

module attributes {stable_mosaic.version = 11 : i64} {
  func.func @_flash_attn_kernel(%arg0: i32, %arg1: i32, %arg2: memref<1x16x128xbf16, #tpu.memory_space<vmem>>, %arg3: memref<1x32x128xbf16, #tpu.memory_space<vmem>>, %arg4: memref<1x32x128xbf16, #tpu.memory_space<vmem>>, %arg5: memref<1x16x128xbf16, #tpu.memory_space<vmem>>, %arg6: memref<4x16x1xf32, #tpu.memory_space<vmem>>, %arg7: memref<4x16x1xf32, #tpu.memory_space<vmem>>, %arg8: memref<4x16x32xf32, #tpu.memory_space<vmem>>) attributes {dimension_semantics = [#tpu.dimension_semantics<parallel>, #tpu.dimension_semantics<arbitrary>], iteration_bounds = array<i64: 2, 1>, scalar_prefetch = 0 : i64, scratch_operands = 3 : i64, tpu.core_type = #tpu.core_type<tc>, window_params = [{transform_indices = @transform_0, window_bounds = array<i64: 1, 16, 128>}, {transform_indices = @transform_1, window_bounds = array<i64: 1, 32, 128>}, {transform_indices = @transform_2, window_bounds = array<i64: 1, 32, 128>}, {transform_indices = @transform_3, window_bounds = array<i64: 1, 16, 128>}]} {
    %c0_i32 = arith.constant 0 : i32
    %0 = arith.cmpi eq, %arg1, %c0_i32 : i32
    %1 = arith.extui %0 : i1 to i32
    %c0_i32_0 = arith.constant 0 : i32
    %2 = arith.cmpi ne, %1, %c0_i32_0 : i32
    scf.if %2 {
      %cst_95 = arith.constant 0xFF800000 : f32
      %156 = vector.broadcast %cst_95 : f32 to vector<4x16x1xf32>
      %c0_96 = arith.constant 0 : index
      %c0_97 = arith.constant 0 : index
      %c0_98 = arith.constant 0 : index
      %157 = vector.load %arg6[%c0_96, %c0_97, %c0_98] : memref<4x16x1xf32, #tpu.memory_space<vmem>>, vector<4x16x1xf32>
      tpu.vector_store %arg6[%c0_96, %c0_97, %c0_98], %156 {strides = array<i32>} : memref<4x16x1xf32, #tpu.memory_space<vmem>>, vector<4x16x1xf32>,
      %cst_99 = arith.constant 0.000000e+00 : f32
      %158 = vector.broadcast %cst_99 : f32 to vector<4x16x1xf32>
      %c0_100 = arith.constant 0 : index
      %c0_101 = arith.constant 0 : index
      %c0_102 = arith.constant 0 : index
      %159 = vector.load %arg7[%c0_100, %c0_101, %c0_102] : memref<4x16x1xf32, #tpu.memory_space<vmem>>, vector<4x16x1xf32>
      tpu.vector_store %arg7[%c0_100, %c0_101, %c0_102], %158 {strides = array<i32>} : memref<4x16x1xf32, #tpu.memory_space<vmem>>, vector<4x16x1xf32>,
      %cst_103 = arith.constant 0.000000e+00 : f32
      %160 = vector.broadcast %cst_103 : f32 to vector<4x16x32xf32>
      %c0_104 = arith.constant 0 : index
      %c0_105 = arith.constant 0 : index
      %c0_106 = arith.constant 0 : index
      %161 = vector.load %arg8[%c0_104, %c0_105, %c0_106] : memref<4x16x32xf32, #tpu.memory_space<vmem>>, vector<4x16x32xf32>
      tpu.vector_store %arg8[%c0_104, %c0_105, %c0_106], %160 {strides = array<i32>} : memref<4x16x32xf32, #tpu.memory_space<vmem>>, vector<4x16x32xf32>,
    } else {
    }
    %c0 = arith.constant 0 : index
    %c0_1 = arith.constant 0 : index
    %c0_2 = arith.constant 0 : index
    %3 = vector.load %arg2[%c0, %c0_1, %c0_2] : memref<1x16x128xbf16, #tpu.memory_space<vmem>>, vector<1x16x128xbf16>
    %4 = vector.shape_cast %3 : vector<1x16x128xbf16> to vector<16x128xbf16>
    %c0_3 = arith.constant 0 : index
    %c0_4 = arith.constant 0 : index
    %c0_5 = arith.constant 0 : index
    %5 = vector.load %arg3[%c0_3, %c0_4, %c0_5] : memref<1x32x128xbf16, #tpu.memory_space<vmem>>, vector<1x32x128xbf16>
    %6 = vector.shape_cast %5 : vector<1x32x128xbf16> to vector<32x128xbf16>
    %c0_6 = arith.constant 0 : index
    %c0_7 = arith.constant 0 : index
    %c0_8 = arith.constant 0 : index
    %7 = vector.load %arg4[%c0_6, %c0_7, %c0_8] : memref<1x32x128xbf16, #tpu.memory_space<vmem>>, vector<1x32x128xbf16>
    %8 = vector.shape_cast %7 : vector<1x32x128xbf16> to vector<32x128xbf16>
    %9 = vector.extract_strided_slice %4 {offsets = [0, 0], sizes = [16, 32], strides = [1, 1]} : vector<16x128xbf16> to vector<16x32xbf16>
    %10 = vector.extract_strided_slice %6 {offsets = [0, 0], sizes = [32, 32], strides = [1, 1]} : vector<32x128xbf16> to vector<32x32xbf16>
    %11 = vector.extract_strided_slice %8 {offsets = [0, 0], sizes = [32, 32], strides = [1, 1]} : vector<32x128xbf16> to vector<32x32xbf16>
    %cst = arith.constant dense<0.000000e+00> : vector<16x32xf32>
    %12 = tpu.matmul %9, %10, %cst {dimension_numbers = #tpu.dot_dimension_numbers<[1], [1], [0], [0], [0, 0, 1, 0], [], []>} : vector<16x32xbf16>, vector<32x32xbf16>, vector<16x32xf32> -> vector<16x32xf32>
    %c0_9 = arith.constant 0 : index
    %c0_10 = arith.constant 0 : index
    %c0_11 = arith.constant 0 : index
    %13 = vector.load %arg6[%c0_9, %c0_10, %c0_11] : memref<4x16x1xf32, #tpu.memory_space<vmem>>, vector<1x16x1xf32>
    %14 = vector.shape_cast %13 : vector<1x16x1xf32> to vector<16x1xf32>
    %cst_12 = arith.constant dense<0xFF800000> : vector<16xf32>
    %15 = vector.multi_reduction <maximumf>, %12, %cst_12 [1] : vector<16x32xf32> to vector<16xf32>
    %16 = vector.shape_cast %15 : vector<16xf32> to vector<16x1xf32>
    %17 = arith.maximumf %14, %16 : vector<16x1xf32>
    %18 = arith.subf %14, %17 : vector<16x1xf32>
    %19 = math.exp %18 : vector<16x1xf32>
    %20 = vector.broadcast %17 : vector<16x1xf32> to vector<16x32xf32>
    %21 = arith.subf %12, %20 : vector<16x32xf32>
    %22 = math.exp %21 : vector<16x32xf32>
    %c0_13 = arith.constant 0 : index
    %c0_14 = arith.constant 0 : index
    %c0_15 = arith.constant 0 : index
    %23 = vector.load %arg7[%c0_13, %c0_14, %c0_15] : memref<4x16x1xf32, #tpu.memory_space<vmem>>, vector<1x16x1xf32>
    %24 = vector.shape_cast %23 : vector<1x16x1xf32> to vector<16x1xf32>
    %25 = arith.mulf %19, %24 : vector<16x1xf32>
    %cst_16 = arith.constant dense<0.000000e+00> : vector<16xf32>
    %26 = vector.multi_reduction <add>, %22, %cst_16 [1] : vector<16x32xf32> to vector<16xf32>
    %27 = vector.shape_cast %26 : vector<16xf32> to vector<16x1xf32>
    %28 = arith.addf %25, %27 : vector<16x1xf32>
    %c0_17 = arith.constant 0 : index
    %c0_18 = arith.constant 0 : index
    %c0_19 = arith.constant 0 : index
    %29 = vector.load %arg7[%c0_17, %c0_18, %c0_19] : memref<4x16x1xf32, #tpu.memory_space<vmem>>, vector<1x16x1xf32>
    %30 = vector.shape_cast %29 : vector<1x16x1xf32> to vector<16x1xf32>
    %31 = vector.shape_cast %28 : vector<16x1xf32> to vector<1x16x1xf32>
    tpu.vector_store %arg7[%c0_17, %c0_18, %c0_19], %31 {strides = array<i32>} : memref<4x16x1xf32, #tpu.memory_space<vmem>>, vector<1x16x1xf32>,
    %c0_20 = arith.constant 0 : index
    %c0_21 = arith.constant 0 : index
    %c0_22 = arith.constant 0 : index
    %32 = vector.load %arg8[%c0_20, %c0_21, %c0_22] : memref<4x16x32xf32, #tpu.memory_space<vmem>>, vector<1x16x32xf32>
    %33 = vector.shape_cast %32 : vector<1x16x32xf32> to vector<16x32xf32>
    %34 = vector.broadcast %19 : vector<16x1xf32> to vector<16x32xf32>
    %35 = arith.mulf %34, %33 : vector<16x32xf32>
    %36 = arith.truncf %22 : vector<16x32xf32> to vector<16x32xbf16>
    %cst_23 = arith.constant dense<0.000000e+00> : vector<16x32xf32>
    %37 = tpu.matmul %36, %11, %cst_23 {dimension_numbers = #tpu.dot_dimension_numbers<[1], [0], [0], [1], [0, 0, 1, 1], [], []>} : vector<16x32xbf16>, vector<32x32xbf16>, vector<16x32xf32> -> vector<16x32xf32>
    %38 = arith.addf %35, %37 : vector<16x32xf32>
    %c0_24 = arith.constant 0 : index
    %c0_25 = arith.constant 0 : index
    %c0_26 = arith.constant 0 : index
    %39 = vector.load %arg8[%c0_24, %c0_25, %c0_26] : memref<4x16x32xf32, #tpu.memory_space<vmem>>, vector<1x16x32xf32>
    %40 = vector.shape_cast %39 : vector<1x16x32xf32> to vector<16x32xf32>
    %41 = vector.shape_cast %38 : vector<16x32xf32> to vector<1x16x32xf32>
    tpu.vector_store %arg8[%c0_24, %c0_25, %c0_26], %41 {strides = array<i32>} : memref<4x16x32xf32, #tpu.memory_space<vmem>>, vector<1x16x32xf32>,
    %c0_27 = arith.constant 0 : index
    %c0_28 = arith.constant 0 : index
    %c0_29 = arith.constant 0 : index
    %42 = vector.load %arg6[%c0_27, %c0_28, %c0_29] : memref<4x16x1xf32, #tpu.memory_space<vmem>>, vector<1x16x1xf32>
    %43 = vector.shape_cast %42 : vector<1x16x1xf32> to vector<16x1xf32>
    %44 = vector.shape_cast %17 : vector<16x1xf32> to vector<1x16x1xf32>
    tpu.vector_store %arg6[%c0_27, %c0_28, %c0_29], %44 {strides = array<i32>} : memref<4x16x1xf32, #tpu.memory_space<vmem>>, vector<1x16x1xf32>,
    %45 = vector.extract_strided_slice %4 {offsets = [0, 32], sizes = [16, 32], strides = [1, 1]} : vector<16x128xbf16> to vector<16x32xbf16>
    %46 = vector.extract_strided_slice %6 {offsets = [0, 32], sizes = [32, 32], strides = [1, 1]} : vector<32x128xbf16> to vector<32x32xbf16>
    %47 = vector.extract_strided_slice %8 {offsets = [0, 32], sizes = [32, 32], strides = [1, 1]} : vector<32x128xbf16> to vector<32x32xbf16>
    %cst_30 = arith.constant dense<0.000000e+00> : vector<16x32xf32>
    %48 = tpu.matmul %45, %46, %cst_30 {dimension_numbers = #tpu.dot_dimension_numbers<[1], [1], [0], [0], [0, 0, 1, 0], [], []>} : vector<16x32xbf16>, vector<32x32xbf16>, vector<16x32xf32> -> vector<16x32xf32>
    %c1 = arith.constant 1 : index
    %c0_31 = arith.constant 0 : index
    %c0_32 = arith.constant 0 : index
    %49 = vector.load %arg6[%c1, %c0_31, %c0_32] : memref<4x16x1xf32, #tpu.memory_space<vmem>>, vector<1x16x1xf32>
    %50 = vector.shape_cast %49 : vector<1x16x1xf32> to vector<16x1xf32>
    %cst_33 = arith.constant dense<0xFF800000> : vector<16xf32>
    %51 = vector.multi_reduction <maximumf>, %48, %cst_33 [1] : vector<16x32xf32> to vector<16xf32>
    %52 = vector.shape_cast %51 : vector<16xf32> to vector<16x1xf32>
    %53 = arith.maximumf %50, %52 : vector<16x1xf32>
    %54 = arith.subf %50, %53 : vector<16x1xf32>
    %55 = math.exp %54 : vector<16x1xf32>
    %56 = vector.broadcast %53 : vector<16x1xf32> to vector<16x32xf32>
    %57 = arith.subf %48, %56 : vector<16x32xf32>
    %58 = math.exp %57 : vector<16x32xf32>
    %c1_34 = arith.constant 1 : index
    %c0_35 = arith.constant 0 : index
    %c0_36 = arith.constant 0 : index
    %59 = vector.load %arg7[%c1_34, %c0_35, %c0_36] : memref<4x16x1xf32, #tpu.memory_space<vmem>>, vector<1x16x1xf32>
    %60 = vector.shape_cast %59 : vector<1x16x1xf32> to vector<16x1xf32>
    %61 = arith.mulf %55, %60 : vector<16x1xf32>
    %cst_37 = arith.constant dense<0.000000e+00> : vector<16xf32>
    %62 = vector.multi_reduction <add>, %58, %cst_37 [1] : vector<16x32xf32> to vector<16xf32>
    %63 = vector.shape_cast %62 : vector<16xf32> to vector<16x1xf32>
    %64 = arith.addf %61, %63 : vector<16x1xf32>
    %c1_38 = arith.constant 1 : index
    %c0_39 = arith.constant 0 : index
    %c0_40 = arith.constant 0 : index
    %65 = vector.load %arg7[%c1_38, %c0_39, %c0_40] : memref<4x16x1xf32, #tpu.memory_space<vmem>>, vector<1x16x1xf32>
    %66 = vector.shape_cast %65 : vector<1x16x1xf32> to vector<16x1xf32>
    %67 = vector.shape_cast %64 : vector<16x1xf32> to vector<1x16x1xf32>
    tpu.vector_store %arg7[%c1_38, %c0_39, %c0_40], %67 {strides = array<i32>} : memref<4x16x1xf32, #tpu.memory_space<vmem>>, vector<1x16x1xf32>,
    %c1_41 = arith.constant 1 : index
    %c0_42 = arith.constant 0 : index
    %c0_43 = arith.constant 0 : index
    %68 = vector.load %arg8[%c1_41, %c0_42, %c0_43] : memref<4x16x32xf32, #tpu.memory_space<vmem>>, vector<1x16x32xf32>
    %69 = vector.shape_cast %68 : vector<1x16x32xf32> to vector<16x32xf32>
    %70 = vector.broadcast %55 : vector<16x1xf32> to vector<16x32xf32>
    %71 = arith.mulf %70, %69 : vector<16x32xf32>
    %72 = arith.truncf %58 : vector<16x32xf32> to vector<16x32xbf16>
    %cst_44 = arith.constant dense<0.000000e+00> : vector<16x32xf32>
    %73 = tpu.matmul %72, %47, %cst_44 {dimension_numbers = #tpu.dot_dimension_numbers<[1], [0], [0], [1], [0, 0, 1, 1], [], []>} : vector<16x32xbf16>, vector<32x32xbf16>, vector<16x32xf32> -> vector<16x32xf32>
    %74 = arith.addf %71, %73 : vector<16x32xf32>
    %c1_45 = arith.constant 1 : index
    %c0_46 = arith.constant 0 : index
    %c0_47 = arith.constant 0 : index
    %75 = vector.load %arg8[%c1_45, %c0_46, %c0_47] : memref<4x16x32xf32, #tpu.memory_space<vmem>>, vector<1x16x32xf32>
    %76 = vector.shape_cast %75 : vector<1x16x32xf32> to vector<16x32xf32>
    %77 = vector.shape_cast %74 : vector<16x32xf32> to vector<1x16x32xf32>
    tpu.vector_store %arg8[%c1_45, %c0_46, %c0_47], %77 {strides = array<i32>} : memref<4x16x32xf32, #tpu.memory_space<vmem>>, vector<1x16x32xf32>,
    %c1_48 = arith.constant 1 : index
    %c0_49 = arith.constant 0 : index
    %c0_50 = arith.constant 0 : index
    %78 = vector.load %arg6[%c1_48, %c0_49, %c0_50] : memref<4x16x1xf32, #tpu.memory_space<vmem>>, vector<1x16x1xf32>
    %79 = vector.shape_cast %78 : vector<1x16x1xf32> to vector<16x1xf32>
    %80 = vector.shape_cast %53 : vector<16x1xf32> to vector<1x16x1xf32>
    tpu.vector_store %arg6[%c1_48, %c0_49, %c0_50], %80 {strides = array<i32>} : memref<4x16x1xf32, #tpu.memory_space<vmem>>, vector<1x16x1xf32>,
    %81 = vector.extract_strided_slice %4 {offsets = [0, 64], sizes = [16, 32], strides = [1, 1]} : vector<16x128xbf16> to vector<16x32xbf16>
    %82 = vector.extract_strided_slice %6 {offsets = [0, 64], sizes = [32, 32], strides = [1, 1]} : vector<32x128xbf16> to vector<32x32xbf16>
    %83 = vector.extract_strided_slice %8 {offsets = [0, 64], sizes = [32, 32], strides = [1, 1]} : vector<32x128xbf16> to vector<32x32xbf16>
    %cst_51 = arith.constant dense<0.000000e+00> : vector<16x32xf32>
    %84 = tpu.matmul %81, %82, %cst_51 {dimension_numbers = #tpu.dot_dimension_numbers<[1], [1], [0], [0], [0, 0, 1, 0], [], []>} : vector<16x32xbf16>, vector<32x32xbf16>, vector<16x32xf32> -> vector<16x32xf32>
    %c2 = arith.constant 2 : index
    %c0_52 = arith.constant 0 : index
    %c0_53 = arith.constant 0 : index
    %85 = vector.load %arg6[%c2, %c0_52, %c0_53] : memref<4x16x1xf32, #tpu.memory_space<vmem>>, vector<1x16x1xf32>
    %86 = vector.shape_cast %85 : vector<1x16x1xf32> to vector<16x1xf32>
    %cst_54 = arith.constant dense<0xFF800000> : vector<16xf32>
    %87 = vector.multi_reduction <maximumf>, %84, %cst_54 [1] : vector<16x32xf32> to vector<16xf32>
    %88 = vector.shape_cast %87 : vector<16xf32> to vector<16x1xf32>
    %89 = arith.maximumf %86, %88 : vector<16x1xf32>
    %90 = arith.subf %86, %89 : vector<16x1xf32>
    %91 = math.exp %90 : vector<16x1xf32>
    %92 = vector.broadcast %89 : vector<16x1xf32> to vector<16x32xf32>
    %93 = arith.subf %84, %92 : vector<16x32xf32>
    %94 = math.exp %93 : vector<16x32xf32>
    %c2_55 = arith.constant 2 : index
    %c0_56 = arith.constant 0 : index
    %c0_57 = arith.constant 0 : index
    %95 = vector.load %arg7[%c2_55, %c0_56, %c0_57] : memref<4x16x1xf32, #tpu.memory_space<vmem>>, vector<1x16x1xf32>
    %96 = vector.shape_cast %95 : vector<1x16x1xf32> to vector<16x1xf32>
    %97 = arith.mulf %91, %96 : vector<16x1xf32>
    %cst_58 = arith.constant dense<0.000000e+00> : vector<16xf32>
    %98 = vector.multi_reduction <add>, %94, %cst_58 [1] : vector<16x32xf32> to vector<16xf32>
    %99 = vector.shape_cast %98 : vector<16xf32> to vector<16x1xf32>
    %100 = arith.addf %97, %99 : vector<16x1xf32>
    %c2_59 = arith.constant 2 : index
    %c0_60 = arith.constant 0 : index
    %c0_61 = arith.constant 0 : index
    %101 = vector.load %arg7[%c2_59, %c0_60, %c0_61] : memref<4x16x1xf32, #tpu.memory_space<vmem>>, vector<1x16x1xf32>
    %102 = vector.shape_cast %101 : vector<1x16x1xf32> to vector<16x1xf32>
    %103 = vector.shape_cast %100 : vector<16x1xf32> to vector<1x16x1xf32>
    tpu.vector_store %arg7[%c2_59, %c0_60, %c0_61], %103 {strides = array<i32>} : memref<4x16x1xf32, #tpu.memory_space<vmem>>, vector<1x16x1xf32>,
    %c2_62 = arith.constant 2 : index
    %c0_63 = arith.constant 0 : index
    %c0_64 = arith.constant 0 : index
    %104 = vector.load %arg8[%c2_62, %c0_63, %c0_64] : memref<4x16x32xf32, #tpu.memory_space<vmem>>, vector<1x16x32xf32>
    %105 = vector.shape_cast %104 : vector<1x16x32xf32> to vector<16x32xf32>
    %106 = vector.broadcast %91 : vector<16x1xf32> to vector<16x32xf32>
    %107 = arith.mulf %106, %105 : vector<16x32xf32>
    %108 = arith.truncf %94 : vector<16x32xf32> to vector<16x32xbf16>
    %cst_65 = arith.constant dense<0.000000e+00> : vector<16x32xf32>
    %109 = tpu.matmul %108, %83, %cst_65 {dimension_numbers = #tpu.dot_dimension_numbers<[1], [0], [0], [1], [0, 0, 1, 1], [], []>} : vector<16x32xbf16>, vector<32x32xbf16>, vector<16x32xf32> -> vector<16x32xf32>
    %110 = arith.addf %107, %109 : vector<16x32xf32>
    %c2_66 = arith.constant 2 : index
    %c0_67 = arith.constant 0 : index
    %c0_68 = arith.constant 0 : index
    %111 = vector.load %arg8[%c2_66, %c0_67, %c0_68] : memref<4x16x32xf32, #tpu.memory_space<vmem>>, vector<1x16x32xf32>
    %112 = vector.shape_cast %111 : vector<1x16x32xf32> to vector<16x32xf32>
    %113 = vector.shape_cast %110 : vector<16x32xf32> to vector<1x16x32xf32>
    tpu.vector_store %arg8[%c2_66, %c0_67, %c0_68], %113 {strides = array<i32>} : memref<4x16x32xf32, #tpu.memory_space<vmem>>, vector<1x16x32xf32>,
    %c2_69 = arith.constant 2 : index
    %c0_70 = arith.constant 0 : index
    %c0_71 = arith.constant 0 : index
    %114 = vector.load %arg6[%c2_69, %c0_70, %c0_71] : memref<4x16x1xf32, #tpu.memory_space<vmem>>, vector<1x16x1xf32>
    %115 = vector.shape_cast %114 : vector<1x16x1xf32> to vector<16x1xf32>
    %116 = vector.shape_cast %89 : vector<16x1xf32> to vector<1x16x1xf32>
    tpu.vector_store %arg6[%c2_69, %c0_70, %c0_71], %116 {strides = array<i32>} : memref<4x16x1xf32, #tpu.memory_space<vmem>>, vector<1x16x1xf32>,
    %117 = vector.extract_strided_slice %4 {offsets = [0, 96], sizes = [16, 32], strides = [1, 1]} : vector<16x128xbf16> to vector<16x32xbf16>
    %118 = vector.extract_strided_slice %6 {offsets = [0, 96], sizes = [32, 32], strides = [1, 1]} : vector<32x128xbf16> to vector<32x32xbf16>
    %119 = vector.extract_strided_slice %8 {offsets = [0, 96], sizes = [32, 32], strides = [1, 1]} : vector<32x128xbf16> to vector<32x32xbf16>
    %cst_72 = arith.constant dense<0.000000e+00> : vector<16x32xf32>
    %120 = tpu.matmul %117, %118, %cst_72 {dimension_numbers = #tpu.dot_dimension_numbers<[1], [1], [0], [0], [0, 0, 1, 0], [], []>} : vector<16x32xbf16>, vector<32x32xbf16>, vector<16x32xf32> -> vector<16x32xf32>
    %c3 = arith.constant 3 : index
    %c0_73 = arith.constant 0 : index
    %c0_74 = arith.constant 0 : index
    %121 = vector.load %arg6[%c3, %c0_73, %c0_74] : memref<4x16x1xf32, #tpu.memory_space<vmem>>, vector<1x16x1xf32>
    %122 = vector.shape_cast %121 : vector<1x16x1xf32> to vector<16x1xf32>
    %cst_75 = arith.constant dense<0xFF800000> : vector<16xf32>
    %123 = vector.multi_reduction <maximumf>, %120, %cst_75 [1] : vector<16x32xf32> to vector<16xf32>
    %124 = vector.shape_cast %123 : vector<16xf32> to vector<16x1xf32>
    %125 = arith.maximumf %122, %124 : vector<16x1xf32>
    %126 = arith.subf %122, %125 : vector<16x1xf32>
    %127 = math.exp %126 : vector<16x1xf32>
    %128 = vector.broadcast %125 : vector<16x1xf32> to vector<16x32xf32>
    %129 = arith.subf %120, %128 : vector<16x32xf32>
    %130 = math.exp %129 : vector<16x32xf32>
    %c3_76 = arith.constant 3 : index
    %c0_77 = arith.constant 0 : index
    %c0_78 = arith.constant 0 : index
    %131 = vector.load %arg7[%c3_76, %c0_77, %c0_78] : memref<4x16x1xf32, #tpu.memory_space<vmem>>, vector<1x16x1xf32>
    %132 = vector.shape_cast %131 : vector<1x16x1xf32> to vector<16x1xf32>
    %133 = arith.mulf %127, %132 : vector<16x1xf32>
    %cst_79 = arith.constant dense<0.000000e+00> : vector<16xf32>
    %134 = vector.multi_reduction <add>, %130, %cst_79 [1] : vector<16x32xf32> to vector<16xf32>
    %135 = vector.shape_cast %134 : vector<16xf32> to vector<16x1xf32>
    %136 = arith.addf %133, %135 : vector<16x1xf32>
    %c3_80 = arith.constant 3 : index
    %c0_81 = arith.constant 0 : index
    %c0_82 = arith.constant 0 : index
    %137 = vector.load %arg7[%c3_80, %c0_81, %c0_82] : memref<4x16x1xf32, #tpu.memory_space<vmem>>, vector<1x16x1xf32>
    %138 = vector.shape_cast %137 : vector<1x16x1xf32> to vector<16x1xf32>
    %139 = vector.shape_cast %136 : vector<16x1xf32> to vector<1x16x1xf32>
    tpu.vector_store %arg7[%c3_80, %c0_81, %c0_82], %139 {strides = array<i32>} : memref<4x16x1xf32, #tpu.memory_space<vmem>>, vector<1x16x1xf32>,
    %c3_83 = arith.constant 3 : index
    %c0_84 = arith.constant 0 : index
    %c0_85 = arith.constant 0 : index
    %140 = vector.load %arg8[%c3_83, %c0_84, %c0_85] : memref<4x16x32xf32, #tpu.memory_space<vmem>>, vector<1x16x32xf32>
    %141 = vector.shape_cast %140 : vector<1x16x32xf32> to vector<16x32xf32>
    %142 = vector.broadcast %127 : vector<16x1xf32> to vector<16x32xf32>
    %143 = arith.mulf %142, %141 : vector<16x32xf32>
    %144 = arith.truncf %130 : vector<16x32xf32> to vector<16x32xbf16>
    %cst_86 = arith.constant dense<0.000000e+00> : vector<16x32xf32>
    %145 = tpu.matmul %144, %119, %cst_86 {dimension_numbers = #tpu.dot_dimension_numbers<[1], [0], [0], [1], [0, 0, 1, 1], [], []>} : vector<16x32xbf16>, vector<32x32xbf16>, vector<16x32xf32> -> vector<16x32xf32>
    %146 = arith.addf %143, %145 : vector<16x32xf32>
    %c3_87 = arith.constant 3 : index
    %c0_88 = arith.constant 0 : index
    %c0_89 = arith.constant 0 : index
    %147 = vector.load %arg8[%c3_87, %c0_88, %c0_89] : memref<4x16x32xf32, #tpu.memory_space<vmem>>, vector<1x16x32xf32>
    %148 = vector.shape_cast %147 : vector<1x16x32xf32> to vector<16x32xf32>
    %149 = vector.shape_cast %146 : vector<16x32xf32> to vector<1x16x32xf32>
    tpu.vector_store %arg8[%c3_87, %c0_88, %c0_89], %149 {strides = array<i32>} : memref<4x16x32xf32, #tpu.memory_space<vmem>>, vector<1x16x32xf32>,
    %c3_90 = arith.constant 3 : index
    %c0_91 = arith.constant 0 : index
    %c0_92 = arith.constant 0 : index
    %150 = vector.load %arg6[%c3_90, %c0_91, %c0_92] : memref<4x16x1xf32, #tpu.memory_space<vmem>>, vector<1x16x1xf32>
    %151 = vector.shape_cast %150 : vector<1x16x1xf32> to vector<16x1xf32>
    %152 = vector.shape_cast %125 : vector<16x1xf32> to vector<1x16x1xf32>
    tpu.vector_store %arg6[%c3_90, %c0_91, %c0_92], %152 {strides = array<i32>} : memref<4x16x1xf32, #tpu.memory_space<vmem>>, vector<1x16x1xf32>,
    %c0_i32_93 = arith.constant 0 : i32
    %153 = arith.cmpi eq, %arg1, %c0_i32_93 : i32
    %154 = arith.extui %153 : i1 to i32
    %c0_i32_94 = arith.constant 0 : i32
    %155 = arith.cmpi ne, %154, %c0_i32_94 : i32
    scf.if %155 {
      %c0_95 = arith.constant 0 : index
      %c0_96 = arith.constant 0 : index
      %c0_97 = arith.constant 0 : index
      %156 = vector.load %arg7[%c0_95, %c0_96, %c0_97] : memref<4x16x1xf32, #tpu.memory_space<vmem>>, vector<1x16x1xf32>
      %157 = vector.shape_cast %156 : vector<1x16x1xf32> to vector<16x1xf32>
      %158 = tpu.reciprocal %157 {approx = true} : vector<16x1xf32> -> vector<16x1xf32>
      %c0_98 = arith.constant 0 : index
      %c0_99 = arith.constant 0 : index
      %c0_100 = arith.constant 0 : index
      %159 = vector.load %arg8[%c0_98, %c0_99, %c0_100] : memref<4x16x32xf32, #tpu.memory_space<vmem>>, vector<1x16x32xf32>
      %160 = vector.shape_cast %159 : vector<1x16x32xf32> to vector<16x32xf32>
      %161 = vector.broadcast %158 : vector<16x1xf32> to vector<16x32xf32>
      %162 = arith.mulf %160, %161 : vector<16x32xf32>
      %c1_101 = arith.constant 1 : index
      %c0_102 = arith.constant 0 : index
      %c0_103 = arith.constant 0 : index
      %163 = vector.load %arg7[%c1_101, %c0_102, %c0_103] : memref<4x16x1xf32, #tpu.memory_space<vmem>>, vector<1x16x1xf32>
      %164 = vector.shape_cast %163 : vector<1x16x1xf32> to vector<16x1xf32>
      %165 = tpu.reciprocal %164 {approx = true} : vector<16x1xf32> -> vector<16x1xf32>
      %c1_104 = arith.constant 1 : index
      %c0_105 = arith.constant 0 : index
      %c0_106 = arith.constant 0 : index
      %166 = vector.load %arg8[%c1_104, %c0_105, %c0_106] : memref<4x16x32xf32, #tpu.memory_space<vmem>>, vector<1x16x32xf32>
      %167 = vector.shape_cast %166 : vector<1x16x32xf32> to vector<16x32xf32>
      %168 = vector.broadcast %165 : vector<16x1xf32> to vector<16x32xf32>
      %169 = arith.mulf %167, %168 : vector<16x32xf32>
      %c2_107 = arith.constant 2 : index
      %c0_108 = arith.constant 0 : index
      %c0_109 = arith.constant 0 : index
      %170 = vector.load %arg7[%c2_107, %c0_108, %c0_109] : memref<4x16x1xf32, #tpu.memory_space<vmem>>, vector<1x16x1xf32>
      %171 = vector.shape_cast %170 : vector<1x16x1xf32> to vector<16x1xf32>
      %172 = tpu.reciprocal %171 {approx = true} : vector<16x1xf32> -> vector<16x1xf32>
      %c2_110 = arith.constant 2 : index
      %c0_111 = arith.constant 0 : index
      %c0_112 = arith.constant 0 : index
      %173 = vector.load %arg8[%c2_110, %c0_111, %c0_112] : memref<4x16x32xf32, #tpu.memory_space<vmem>>, vector<1x16x32xf32>
      %174 = vector.shape_cast %173 : vector<1x16x32xf32> to vector<16x32xf32>
      %175 = vector.broadcast %172 : vector<16x1xf32> to vector<16x32xf32>
      %176 = arith.mulf %174, %175 : vector<16x32xf32>
      %c3_113 = arith.constant 3 : index
      %c0_114 = arith.constant 0 : index
      %c0_115 = arith.constant 0 : index
      %177 = vector.load %arg7[%c3_113, %c0_114, %c0_115] : memref<4x16x1xf32, #tpu.memory_space<vmem>>, vector<1x16x1xf32>
      %178 = vector.shape_cast %177 : vector<1x16x1xf32> to vector<16x1xf32>
      %179 = tpu.reciprocal %178 {approx = true} : vector<16x1xf32> -> vector<16x1xf32>
      %c3_116 = arith.constant 3 : index
      %c0_117 = arith.constant 0 : index
      %c0_118 = arith.constant 0 : index
      %180 = vector.load %arg8[%c3_116, %c0_117, %c0_118] : memref<4x16x32xf32, #tpu.memory_space<vmem>>, vector<1x16x32xf32>
      %181 = vector.shape_cast %180 : vector<1x16x32xf32> to vector<16x32xf32>
      %182 = vector.broadcast %179 : vector<16x1xf32> to vector<16x32xf32>
      %183 = arith.mulf %181, %182 : vector<16x32xf32>
      %184 = tpu.concatenate %162, %169, %176, %183 in 1 : vector<16x32xf32>, vector<16x32xf32>, vector<16x32xf32>, vector<16x32xf32> -> vector<16x128xf32>
      %185 = arith.truncf %184 : vector<16x128xf32> to vector<16x128xbf16>
      %c0_119 = arith.constant 0 : index
      %c0_120 = arith.constant 0 : index
      %c0_121 = arith.constant 0 : index
      %186 = vector.load %arg5[%c0_119, %c0_120, %c0_121] : memref<1x16x128xbf16, #tpu.memory_space<vmem>>, vector<1x16x128xbf16>
      %187 = vector.shape_cast %186 : vector<1x16x128xbf16> to vector<16x128xbf16>
      %188 = vector.shape_cast %185 : vector<16x128xbf16> to vector<1x16x128xbf16>
      tpu.vector_store %arg5[%c0_119, %c0_120, %c0_121], %188 {strides = array<i32>} : memref<1x16x128xbf16, #tpu.memory_space<vmem>>, vector<1x16x128xbf16>,
    } else {
    }
    return
  }
  func.func @transform_0(%arg0: i32, %arg1: i32) -> (i32, i32, i32) {
    %c0_i32 = arith.constant 0 : i32
    %c0_i32_0 = arith.constant 0 : i32
    %c0_i32_1 = arith.constant 0 : i32
    return %arg0, %c0_i32, %c0_i32_0 : i32, i32, i32
  }
  func.func @transform_1(%arg0: i32, %arg1: i32) -> (i32, i32, i32) {
    %c0_i32 = arith.constant 0 : i32
    %c0_i32_0 = arith.constant 0 : i32
    return %arg0, %arg1, %c0_i32 : i32, i32, i32
  }
  func.func @transform_2(%arg0: i32, %arg1: i32) -> (i32, i32, i32) {
    %c1_i32 = arith.constant 1 : i32
    %c0_i32 = arith.constant 0 : i32
    return %arg0, %arg1, %c1_i32 : i32, i32, i32
  }
  func.func @transform_3(%arg0: i32, %arg1: i32) -> (i32, i32, i32) {
    %c0_i32 = arith.constant 0 : i32
    %c0_i32_0 = arith.constant 0 : i32
    %c0_i32_1 = arith.constant 0 : i32
    return %arg0, %c0_i32, %c0_i32_0 : i32, i32, i32
  }
}

module attributes {stable_mosaic.version = 11 : i64} {
  func.func @kernel(%arg0: i32, %arg1: i32, %arg2: i32, %arg3: memref<32x128xbf16, #tpu.memory_space<vmem>>, %arg4: memref<128x512xbf16, #tpu.memory_space<vmem>>, %arg5: memref<1x512xf32, #tpu.memory_space<vmem>>, %arg6: memref<32x512xbf16, #tpu.memory_space<vmem>>) attributes {dimension_semantics = [#tpu.dimension_semantics<parallel>, #tpu.dimension_semantics<parallel>, #tpu.dimension_semantics<arbitrary>], iteration_bounds = array<i64: 1, 1, 1>, scalar_prefetch = 0 : i64, scratch_operands = 0 : i64, tpu.core_type = #tpu.core_type<tc>, window_params = [{transform_indices = @transform_0, window_bounds = array<i64: 32, 128>}, {transform_indices = @transform_1, window_bounds = array<i64: 128, 512>}, {transform_indices = @transform_2, window_bounds = array<i64: 1, 512>}, {transform_indices = @transform_3, window_bounds = array<i64: 32, 512>}]} {
    %c0 = arith.constant 0 : index
    %c0_0 = arith.constant 0 : index
    %0 = vector.load %arg3[%c0, %c0_0] : memref<32x128xbf16, #tpu.memory_space<vmem>>, vector<32x128xbf16>
    %c0_1 = arith.constant 0 : index
    %c0_2 = arith.constant 0 : index
    %1 = vector.load %arg4[%c0_1, %c0_2] : memref<128x512xbf16, #tpu.memory_space<vmem>>, vector<128x512xbf16>
    %cst = arith.constant dense<0.000000e+00> : vector<32x512xf32>
    %2 = tpu.matmul %0, %1, %cst {dimension_numbers = #tpu.dot_dimension_numbers<[1], [0], [0], [1], [0, 0, 1, 1], [], []>} : vector<32x128xbf16>, vector<128x512xbf16>, vector<32x512xf32> -> vector<32x512xf32>
    %c0_3 = arith.constant 0 : index
    %c0_4 = arith.constant 0 : index
    %3 = vector.load %arg5[%c0_3, %c0_4] : memref<1x512xf32, #tpu.memory_space<vmem>>, vector<1x512xf32>
    %4 = vector.broadcast %3 : vector<1x512xf32> to vector<32x512xf32>
    %5 = arith.addf %2, %4 : vector<32x512xf32>
    %6 = arith.mulf %5, %5 : vector<32x512xf32>
    %7 = arith.mulf %5, %6 : vector<32x512xf32>
    %cst_5 = arith.constant 4.471500e-02 : f32
    %8 = vector.broadcast %cst_5 : f32 to vector<32x512xf32>
    %9 = arith.mulf %8, %7 : vector<32x512xf32>
    %10 = arith.addf %5, %9 : vector<32x512xf32>
    %cst_6 = arith.constant 0.797884583 : f32
    %11 = vector.broadcast %cst_6 : f32 to vector<32x512xf32>
    %12 = arith.mulf %11, %10 : vector<32x512xf32>
    %13 = math.tanh %12 : vector<32x512xf32>
    %cst_7 = arith.constant 1.000000e+00 : f32
    %14 = vector.broadcast %cst_7 : f32 to vector<32x512xf32>
    %15 = arith.addf %14, %13 : vector<32x512xf32>
    %cst_8 = arith.constant 5.000000e-01 : f32
    %16 = vector.broadcast %cst_8 : f32 to vector<32x512xf32>
    %17 = arith.mulf %16, %15 : vector<32x512xf32>
    %18 = arith.mulf %5, %17 : vector<32x512xf32>
    %19 = arith.truncf %18 : vector<32x512xf32> to vector<32x512xbf16>
    %c0_9 = arith.constant 0 : index
    %c0_10 = arith.constant 0 : index
    %20 = vector.load %arg6[%c0_9, %c0_10] : memref<32x512xbf16, #tpu.memory_space<vmem>>, vector<32x512xbf16>
    tpu.vector_store %arg6[%c0_9, %c0_10], %19 {strides = array<i32>} : memref<32x512xbf16, #tpu.memory_space<vmem>>, vector<32x512xbf16>,
    return
  }
  func.func @transform_0(%arg0: i32, %arg1: i32, %arg2: i32) -> (i32, i32) {
    %c0_i32 = arith.constant 0 : i32
    return %arg0, %arg2 : i32, i32
  }
  func.func @transform_1(%arg0: i32, %arg1: i32, %arg2: i32) -> (i32, i32) {
    %c0_i32 = arith.constant 0 : i32
    return %arg2, %arg1 : i32, i32
  }
  func.func @transform_2(%arg0: i32, %arg1: i32, %arg2: i32) -> (i32, i32) {
    %c0_i32 = arith.constant 0 : i32
    %c0_i32_0 = arith.constant 0 : i32
    return %c0_i32, %arg1 : i32, i32
  }
  func.func @transform_3(%arg0: i32, %arg1: i32, %arg2: i32) -> (i32, i32) {
    %c0_i32 = arith.constant 0 : i32
    return %arg0, %arg1 : i32, i32
  }
}

module attributes {stable_mosaic.version = 11 : i64} {
  func.func @kernel(%arg0: i32, %arg1: i32, %arg2: i32, %arg3: memref<32x512xbf16, #tpu.memory_space<vmem>>, %arg4: memref<512x128xbf16, #tpu.memory_space<vmem>>, %arg5: memref<1x128xf32, #tpu.memory_space<vmem>>, %arg6: memref<32x128xf32, #tpu.memory_space<vmem>>, %arg7: memref<32x128xf32, #tpu.memory_space<vmem>>) attributes {dimension_semantics = [#tpu.dimension_semantics<parallel>, #tpu.dimension_semantics<parallel>, #tpu.dimension_semantics<arbitrary>], iteration_bounds = array<i64: 1, 1, 1>, scalar_prefetch = 0 : i64, scratch_operands = 0 : i64, tpu.core_type = #tpu.core_type<tc>, window_params = [{transform_indices = @transform_0, window_bounds = array<i64: 32, 512>}, {transform_indices = @transform_1, window_bounds = array<i64: 512, 128>}, {transform_indices = @transform_2, window_bounds = array<i64: 1, 128>}, {transform_indices = @transform_3, window_bounds = array<i64: 32, 128>}, {transform_indices = @transform_4, window_bounds = array<i64: 32, 128>}]} {
    %c0 = arith.constant 0 : index
    %c0_0 = arith.constant 0 : index
    %0 = vector.load %arg3[%c0, %c0_0] : memref<32x512xbf16, #tpu.memory_space<vmem>>, vector<32x512xbf16>
    %c0_1 = arith.constant 0 : index
    %c0_2 = arith.constant 0 : index
    %1 = vector.load %arg4[%c0_1, %c0_2] : memref<512x128xbf16, #tpu.memory_space<vmem>>, vector<512x128xbf16>
    %cst = arith.constant dense<0.000000e+00> : vector<32x128xf32>
    %2 = tpu.matmul %0, %1, %cst {dimension_numbers = #tpu.dot_dimension_numbers<[1], [0], [0], [1], [0, 0, 1, 1], [], []>} : vector<32x512xbf16>, vector<512x128xbf16>, vector<32x128xf32> -> vector<32x128xf32>
    %c0_3 = arith.constant 0 : index
    %c0_4 = arith.constant 0 : index
    %3 = vector.load %arg5[%c0_3, %c0_4] : memref<1x128xf32, #tpu.memory_space<vmem>>, vector<1x128xf32>
    %4 = vector.broadcast %3 : vector<1x128xf32> to vector<32x128xf32>
    %5 = arith.addf %2, %4 : vector<32x128xf32>
    %c0_5 = arith.constant 0 : index
    %c0_6 = arith.constant 0 : index
    %6 = vector.load %arg6[%c0_5, %c0_6] : memref<32x128xf32, #tpu.memory_space<vmem>>, vector<32x128xf32>
    %7 = arith.addf %5, %6 : vector<32x128xf32>
    %c0_7 = arith.constant 0 : index
    %c0_8 = arith.constant 0 : index
    %8 = vector.load %arg7[%c0_7, %c0_8] : memref<32x128xf32, #tpu.memory_space<vmem>>, vector<32x128xf32>
    tpu.vector_store %arg7[%c0_7, %c0_8], %7 {strides = array<i32>} : memref<32x128xf32, #tpu.memory_space<vmem>>, vector<32x128xf32>,
    return
  }
  func.func @transform_0(%arg0: i32, %arg1: i32, %arg2: i32) -> (i32, i32) {
    %c0_i32 = arith.constant 0 : i32
    return %arg0, %arg2 : i32, i32
  }
  func.func @transform_1(%arg0: i32, %arg1: i32, %arg2: i32) -> (i32, i32) {
    %c0_i32 = arith.constant 0 : i32
    return %arg2, %arg1 : i32, i32
  }
  func.func @transform_2(%arg0: i32, %arg1: i32, %arg2: i32) -> (i32, i32) {
    %c0_i32 = arith.constant 0 : i32
    %c0_i32_0 = arith.constant 0 : i32
    return %c0_i32, %arg1 : i32, i32
  }
  func.func @transform_3(%arg0: i32, %arg1: i32, %arg2: i32) -> (i32, i32) {
    %c0_i32 = arith.constant 0 : i32
    return %arg0, %arg1 : i32, i32
  }
  func.func @transform_4(%arg0: i32, %arg1: i32, %arg2: i32) -> (i32, i32) {
    %c0_i32 = arith.constant 0 : i32
    return %arg0, %arg1 : i32, i32
  }
}

module attributes {stable_mosaic.version = 11 : i64} {
  func.func @kernel(%arg0: i32, %arg1: i32, %arg2: i32, %arg3: memref<32x128xbf16, #tpu.memory_space<vmem>>, %arg4: memref<128x128xbf16, #tpu.memory_space<vmem>>, %arg5: memref<1x128xf32, #tpu.memory_space<vmem>>, %arg6: memref<32x128xf32, #tpu.memory_space<vmem>>, %arg7: memref<32x128xf32, #tpu.memory_space<vmem>>) attributes {dimension_semantics = [#tpu.dimension_semantics<parallel>, #tpu.dimension_semantics<parallel>, #tpu.dimension_semantics<arbitrary>], iteration_bounds = array<i64: 1, 1, 1>, scalar_prefetch = 0 : i64, scratch_operands = 0 : i64, tpu.core_type = #tpu.core_type<tc>, window_params = [{transform_indices = @transform_0, window_bounds = array<i64: 32, 128>}, {transform_indices = @transform_1, window_bounds = array<i64: 128, 128>}, {transform_indices = @transform_2, window_bounds = array<i64: 1, 128>}, {transform_indices = @transform_3, window_bounds = array<i64: 32, 128>}, {transform_indices = @transform_4, window_bounds = array<i64: 32, 128>}]} {
    %c0 = arith.constant 0 : index
    %c0_0 = arith.constant 0 : index
    %0 = vector.load %arg3[%c0, %c0_0] : memref<32x128xbf16, #tpu.memory_space<vmem>>, vector<32x128xbf16>
    %c0_1 = arith.constant 0 : index
    %c0_2 = arith.constant 0 : index
    %1 = vector.load %arg4[%c0_1, %c0_2] : memref<128x128xbf16, #tpu.memory_space<vmem>>, vector<128x128xbf16>
    %cst = arith.constant dense<0.000000e+00> : vector<32x128xf32>
    %2 = tpu.matmul %0, %1, %cst {dimension_numbers = #tpu.dot_dimension_numbers<[1], [0], [0], [1], [0, 0, 1, 1], [], []>} : vector<32x128xbf16>, vector<128x128xbf16>, vector<32x128xf32> -> vector<32x128xf32>
    %c0_3 = arith.constant 0 : index
    %c0_4 = arith.constant 0 : index
    %3 = vector.load %arg5[%c0_3, %c0_4] : memref<1x128xf32, #tpu.memory_space<vmem>>, vector<1x128xf32>
    %4 = vector.broadcast %3 : vector<1x128xf32> to vector<32x128xf32>
    %5 = arith.addf %2, %4 : vector<32x128xf32>
    %c0_5 = arith.constant 0 : index
    %c0_6 = arith.constant 0 : index
    %6 = vector.load %arg6[%c0_5, %c0_6] : memref<32x128xf32, #tpu.memory_space<vmem>>, vector<32x128xf32>
    %7 = arith.addf %5, %6 : vector<32x128xf32>
    %c0_7 = arith.constant 0 : index
    %c0_8 = arith.constant 0 : index
    %8 = vector.load %arg7[%c0_7, %c0_8] : memref<32x128xf32, #tpu.memory_space<vmem>>, vector<32x128xf32>
    tpu.vector_store %arg7[%c0_7, %c0_8], %7 {strides = array<i32>} : memref<32x128xf32, #tpu.memory_space<vmem>>, vector<32x128xf32>,
    return
  }
  func.func @transform_0(%arg0: i32, %arg1: i32, %arg2: i32) -> (i32, i32) {
    %c0_i32 = arith.constant 0 : i32
    return %arg0, %arg2 : i32, i32
  }
  func.func @transform_1(%arg0: i32, %arg1: i32, %arg2: i32) -> (i32, i32) {
    %c0_i32 = arith.constant 0 : i32
    return %arg2, %arg1 : i32, i32
  }
  func.func @transform_2(%arg0: i32, %arg1: i32, %arg2: i32) -> (i32, i32) {
    %c0_i32 = arith.constant 0 : i32
    %c0_i32_0 = arith.constant 0 : i32
    return %c0_i32, %arg1 : i32, i32
  }
  func.func @transform_3(%arg0: i32, %arg1: i32, %arg2: i32) -> (i32, i32) {
    %c0_i32 = arith.constant 0 : i32
    return %arg0, %arg1 : i32, i32
  }
  func.func @transform_4(%arg0: i32, %arg1: i32, %arg2: i32) -> (i32, i32) {
    %c0_i32 = arith.constant 0 : i32
    return %arg0, %arg1 : i32, i32
  }
}

module attributes {stable_mosaic.version = 11 : i64} {
  func.func @kernel(%arg0: i32, %arg1: i32, %arg2: i32, %arg3: memref<32x128xbf16, #tpu.memory_space<vmem>>, %arg4: memref<128x512xbf16, #tpu.memory_space<vmem>>, %arg5: memref<1x512xf32, #tpu.memory_space<vmem>>, %arg6: memref<32x512xbf16, #tpu.memory_space<vmem>>) attributes {dimension_semantics = [#tpu.dimension_semantics<parallel>, #tpu.dimension_semantics<parallel>, #tpu.dimension_semantics<arbitrary>], iteration_bounds = array<i64: 1, 1, 1>, scalar_prefetch = 0 : i64, scratch_operands = 0 : i64, tpu.core_type = #tpu.core_type<tc>, window_params = [{transform_indices = @transform_0, window_bounds = array<i64: 32, 128>}, {transform_indices = @transform_1, window_bounds = array<i64: 128, 512>}, {transform_indices = @transform_2, window_bounds = array<i64: 1, 512>}, {transform_indices = @transform_3, window_bounds = array<i64: 32, 512>}]} {
    %c0 = arith.constant 0 : index
    %c0_0 = arith.constant 0 : index
    %0 = vector.load %arg3[%c0, %c0_0] : memref<32x128xbf16, #tpu.memory_space<vmem>>, vector<32x128xbf16>
    %c0_1 = arith.constant 0 : index
    %c0_2 = arith.constant 0 : index
    %1 = vector.load %arg4[%c0_1, %c0_2] : memref<128x512xbf16, #tpu.memory_space<vmem>>, vector<128x512xbf16>
    %cst = arith.constant dense<0.000000e+00> : vector<32x512xf32>
    %2 = tpu.matmul %0, %1, %cst {dimension_numbers = #tpu.dot_dimension_numbers<[1], [0], [0], [1], [0, 0, 1, 1], [], []>} : vector<32x128xbf16>, vector<128x512xbf16>, vector<32x512xf32> -> vector<32x512xf32>
    %c0_3 = arith.constant 0 : index
    %c0_4 = arith.constant 0 : index
    %3 = vector.load %arg5[%c0_3, %c0_4] : memref<1x512xf32, #tpu.memory_space<vmem>>, vector<1x512xf32>
    %4 = vector.broadcast %3 : vector<1x512xf32> to vector<32x512xf32>
    %5 = arith.addf %2, %4 : vector<32x512xf32>
    %6 = arith.mulf %5, %5 : vector<32x512xf32>
    %7 = arith.mulf %5, %6 : vector<32x512xf32>
    %cst_5 = arith.constant 4.471500e-02 : f32
    %8 = vector.broadcast %cst_5 : f32 to vector<32x512xf32>
    %9 = arith.mulf %8, %7 : vector<32x512xf32>
    %10 = arith.addf %5, %9 : vector<32x512xf32>
    %cst_6 = arith.constant 0.797884583 : f32
    %11 = vector.broadcast %cst_6 : f32 to vector<32x512xf32>
    %12 = arith.mulf %11, %10 : vector<32x512xf32>
    %13 = math.tanh %12 : vector<32x512xf32>
    %cst_7 = arith.constant 1.000000e+00 : f32
    %14 = vector.broadcast %cst_7 : f32 to vector<32x512xf32>
    %15 = arith.addf %14, %13 : vector<32x512xf32>
    %cst_8 = arith.constant 5.000000e-01 : f32
    %16 = vector.broadcast %cst_8 : f32 to vector<32x512xf32>
    %17 = arith.mulf %16, %15 : vector<32x512xf32>
    %18 = arith.mulf %5, %17 : vector<32x512xf32>
    %19 = arith.truncf %18 : vector<32x512xf32> to vector<32x512xbf16>
    %c0_9 = arith.constant 0 : index
    %c0_10 = arith.constant 0 : index
    %20 = vector.load %arg6[%c0_9, %c0_10] : memref<32x512xbf16, #tpu.memory_space<vmem>>, vector<32x512xbf16>
    tpu.vector_store %arg6[%c0_9, %c0_10], %19 {strides = array<i32>} : memref<32x512xbf16, #tpu.memory_space<vmem>>, vector<32x512xbf16>,
    return
  }
  func.func @transform_0(%arg0: i32, %arg1: i32, %arg2: i32) -> (i32, i32) {
    %c0_i32 = arith.constant 0 : i32
    return %arg0, %arg2 : i32, i32
  }
  func.func @transform_1(%arg0: i32, %arg1: i32, %arg2: i32) -> (i32, i32) {
    %c0_i32 = arith.constant 0 : i32
    return %arg2, %arg1 : i32, i32
  }
  func.func @transform_2(%arg0: i32, %arg1: i32, %arg2: i32) -> (i32, i32) {
    %c0_i32 = arith.constant 0 : i32
    %c0_i32_0 = arith.constant 0 : i32
    return %c0_i32, %arg1 : i32, i32
  }
  func.func @transform_3(%arg0: i32, %arg1: i32, %arg2: i32) -> (i32, i32) {
    %c0_i32 = arith.constant 0 : i32
    return %arg0, %arg1 : i32, i32
  }
}

module attributes {stable_mosaic.version = 11 : i64} {
  func.func @kernel(%arg0: i32, %arg1: i32, %arg2: i32, %arg3: memref<32x128xbf16, #tpu.memory_space<vmem>>, %arg4: memref<128x1024xbf16, #tpu.memory_space<vmem>>, %arg5: memref<32x1024xf32, #tpu.memory_space<vmem>>) attributes {dimension_semantics = [#tpu.dimension_semantics<parallel>, #tpu.dimension_semantics<parallel>, #tpu.dimension_semantics<arbitrary>], iteration_bounds = array<i64: 1, 1, 1>, scalar_prefetch = 0 : i64, scratch_operands = 0 : i64, tpu.core_type = #tpu.core_type<tc>, window_params = [{transform_indices = @transform_0, window_bounds = array<i64: 32, 128>}, {transform_indices = @transform_1, window_bounds = array<i64: 128, 1024>}, {transform_indices = @transform_2, window_bounds = array<i64: 32, 1024>}]} {
    %c0 = arith.constant 0 : index
    %c0_0 = arith.constant 0 : index
    %0 = vector.load %arg3[%c0, %c0_0] : memref<32x128xbf16, #tpu.memory_space<vmem>>, vector<32x128xbf16>
    %c0_1 = arith.constant 0 : index
    %c0_2 = arith.constant 0 : index
    %1 = vector.load %arg4[%c0_1, %c0_2] : memref<128x1024xbf16, #tpu.memory_space<vmem>>, vector<128x1024xbf16>
    %cst = arith.constant dense<0.000000e+00> : vector<32x1024xf32>
    %2 = tpu.matmul %0, %1, %cst {dimension_numbers = #tpu.dot_dimension_numbers<[1], [0], [0], [1], [0, 0, 1, 1], [], []>} : vector<32x128xbf16>, vector<128x1024xbf16>, vector<32x1024xf32> -> vector<32x1024xf32>
    %c0_3 = arith.constant 0 : index
    %c0_4 = arith.constant 0 : index
    %3 = vector.load %arg5[%c0_3, %c0_4] : memref<32x1024xf32, #tpu.memory_space<vmem>>, vector<32x1024xf32>
    tpu.vector_store %arg5[%c0_3, %c0_4], %2 {strides = array<i32>} : memref<32x1024xf32, #tpu.memory_space<vmem>>, vector<32x1024xf32>,
    return
  }
  func.func @transform_0(%arg0: i32, %arg1: i32, %arg2: i32) -> (i32, i32) {
    %c0_i32 = arith.constant 0 : i32
    return %arg0, %arg2 : i32, i32
  }
  func.func @transform_1(%arg0: i32, %arg1: i32, %arg2: i32) -> (i32, i32) {
    %c0_i32 = arith.constant 0 : i32
    return %arg2, %arg1 : i32, i32
  }
  func.func @transform_2(%arg0: i32, %arg1: i32, %arg2: i32) -> (i32, i32) {
    %c0_i32 = arith.constant 0 : i32
    return %arg0, %arg1 : i32, i32
  }
}

</mosaic_0001>

<llo_original>
// kernel: text_decoder_forward.29
$region0: #{text_decoder_forward.29}
  #allocation0 [shape = 'u32[]', space=smem, size = 0x4, offset = 0x4, fixed_abs, tag = 'smem constant byte address 0x4 - core index']
  #allocation1 [shape = 'u32[72,128]{1,0:T(1,128)}', space=vmem, size = 0x9000, scoped, tag = 'internal scratch']
  %s0 = inlined_call_operand.vmem [shape: bf16[32,128], index: 0, kind: input, shape index: {}]
  %s1 = inlined_call_operand.vmem [shape: bf16[128,128], index: 1, kind: input, shape index: {}]
  %s2 = inlined_call_operand.vmem [shape: f32[1,128], index: 2, kind: input, shape index: {}]
  %s3 = inlined_call_operand.vmem [shape: f32[32,128], index: 3, kind: input, shape index: {}]
  %s4 = inlined_call_operand.vmem [shape: f32[32,128], index: 4, kind: output, shape index: {}]
  %s5 = sld [smem:[#allocation0]]
  $region26: #{text_decoder_forward.29} parent=0
    _
  %s7 = ssub.s32 1, %s5
  %s8 = scalar_select 0, %s7, %s5
  // Predicated region
  $region2: #{text_decoder_forward.29} parent=0 // pred_check
    _
  $region3: #{text_decoder_forward.29} parent=0 // pred_check_branch
    %10 = sbr.rel (0) target = $region5
  $region4: #{text_decoder_forward.29} parent=0 // pred_region
    _
  $region5: #{text_decoder_forward.29} parent=0 // pred_fallthru
    _
  // Predicated region
  $region6: #{text_decoder_forward.29} parent=0 // pred_check
    _
  $region7: #{text_decoder_forward.29} parent=0 // pred_check_branch
    %12 = sbr.rel (0) target = $region9
  $region8: #{text_decoder_forward.29} parent=0 // pred_region
    _
  $region9: #{text_decoder_forward.29} parent=0 // pred_fallthru
    _
  // Predicated region
  $region10: #{text_decoder_forward.29} parent=0 // pred_check
    _
  $region11: #{text_decoder_forward.29} parent=0 // pred_check_branch
    %14 = sbr.rel (0) target = $region13
  $region12: #{text_decoder_forward.29} parent=0 // pred_region
    _
  $region13: #{text_decoder_forward.29} parent=0 // pred_fallthru
    _
  // Predicated region
  $region14: #{text_decoder_forward.29} parent=0 // pred_check
    _
  $region15: #{text_decoder_forward.29} parent=0 // pred_check_branch
    %16 = sbr.rel (0) target = $region17
  $region16: #{text_decoder_forward.29} parent=0 // pred_region
    _
  $region17: #{text_decoder_forward.29} parent=0 // pred_fallthru
    _
  %v17 = vld [vmem:[%s0] sm:$0xf]
  %v18 = vld [vmem:[%s0 + $0x4] sm:$0xf]
  %v19 = vld [vmem:[%s0 + $0x8] sm:$0xf]
  %v20 = vld [vmem:[%s0 + $0xc] sm:$0xf]
  %v21 = vld [vmem:[%s1] sm:$0xf]
  %v22 = vld [vmem:[%s1 + $0x4] sm:$0xf]
  %v23 = vld [vmem:[%s1 + $0x8] sm:$0xf]
  %v24 = vld [vmem:[%s1 + $0xc] sm:$0xf]
  %v25 = vld [vmem:[%s1 + $0x10] sm:$0xf]
  %v26 = vld [vmem:[%s1 + $0x14] sm:$0xf]
  %v27 = vld [vmem:[%s1 + $0x18] sm:$0xf]
  %v28 = vld [vmem:[%s1 + $0x1c] sm:$0xf]
  %v29 = vld [vmem:[%s1 + $0x20] sm:$0xf]
  %v30 = vld [vmem:[%s1 + $0x24] sm:$0xf]
  %v31 = vld [vmem:[%s1 + $0x28] sm:$0xf]
  %v32 = vld [vmem:[%s1 + $0x2c] sm:$0xf]
  %v33 = vld [vmem:[%s1 + $0x30] sm:$0xf]
  %v34 = vld [vmem:[%s1 + $0x34] sm:$0xf]
  %v35 = vld [vmem:[%s1 + $0x38] sm:$0xf]
  %v36 = vld [vmem:[%s1 + $0x3c] sm:$0xf]
  %v37 = vld [vmem:[%s2] sm:$0x1]
  %v39 = vperm.slane %v37, 0
  %v45 = vunpack.c.l.b16 %v17
  %v46 = vunpack.c.l.b16 %v18
  %v47 = vunpack.c.l.b16 %v19
  %v48 = vunpack.c.l.b16 %v20
  %v49 = vpack.c.b16 %v46, %v45
  %v50 = vpack.c.b16 %v48, %v47
  %v69 = vunpack.c.l.b16 %v21
  %v70 = vunpack.c.l.b16 %v22
  %v71 = vunpack.c.l.b16 %v23
  %v72 = vunpack.c.l.b16 %v24
  %v73 = vunpack.c.l.b16 %v25
  %v74 = vunpack.c.l.b16 %v26
  %v75 = vunpack.c.l.b16 %v27
  %v76 = vunpack.c.l.b16 %v28
  %v77 = vunpack.c.l.b16 %v29
  %v78 = vunpack.c.l.b16 %v30
  %v79 = vunpack.c.l.b16 %v31
  %v80 = vunpack.c.l.b16 %v32
  %v81 = vunpack.c.l.b16 %v33
  %v82 = vunpack.c.l.b16 %v34
  %v83 = vunpack.c.l.b16 %v35
  %v84 = vunpack.c.l.b16 %v36
  %v85 = vpack.c.b16 %v70, %v69
  %v86 = vpack.c.b16 %v72, %v71
  %v87 = vpack.c.b16 %v74, %v73
  %v88 = vpack.c.b16 %v76, %v75
  %v89 = vpack.c.b16 %v78, %v77
  %v90 = vpack.c.b16 %v80, %v79
  %v91 = vpack.c.b16 %v82, %v81
  %v92 = vpack.c.b16 %v84, %v83
  %101 = vmatpush.bf16.msra.mxu0 %v92
  %102 = vmatpush.bf16.msra.mxu0 %v91
  %103 = vmatpush.bf16.msra.mxu0 %v90
  %104 = vmatpush.bf16.msra.mxu0 %v89
  %105 = vmatpush.bf16.msra.mxu0 %v88
  %106 = vmatpush.bf16.msra.mxu0 %v87
  %107 = vmatpush.bf16.msra.mxu0 %v86
  %108 = vmatpush.bf16.msra.mxu0 %v85
  %109 = vmatmul.bf16.gmra.mxu0 %v49
  %v110 = vpop.f32.mrf.mxu0
  %v111 = vadd.f32 %v39, %v110
  %v112 = vpop.f32.mrf.mxu0
  %v113 = vadd.f32 %v39, %v112
  %114 = vmatmul.bf16.gmra.mxu0 %v50
  %v115 = vpop.f32.mrf.mxu0
  %v116 = vadd.f32 %v39, %v115
  %v117 = vpop.f32.mrf.mxu0
  %v118 = vadd.f32 %v39, %v117
  %119 = vdwg.mxu0
  %v120 = vld [vmem:[%s3] sm:$0xff]
  %v121 = vld [vmem:[%s3 + $0x8] sm:$0xff]
  %v122 = vld [vmem:[%s3 + $0x10] sm:$0xff]
  %v123 = vld [vmem:[%s3 + $0x18] sm:$0xff]
  %v124 = vadd.f32 %v111, %v120
  %v125 = vadd.f32 %v113, %v121
  %v126 = vadd.f32 %v116, %v122
  %v127 = vadd.f32 %v118, %v123
  %128 = vst [vmem:[%s4] sm:$0xff] %v124
  %129 = vst [vmem:[%s4 + $0x8] sm:$0xff] %v125
  %130 = vst [vmem:[%s4 + $0x10] sm:$0xff] %v126
  %131 = vst [vmem:[%s4 + $0x18] sm:$0xff] %v127
  // Predicated region
  $region18: #{text_decoder_forward.29} parent=0 // pred_check
    _
  $region19: #{text_decoder_forward.29} parent=0 // pred_check_branch
    %133 = sbr.rel (0) target = $region21
  $region20: #{text_decoder_forward.29} parent=0 // pred_region
    _
  $region21: #{text_decoder_forward.29} parent=0 // pred_fallthru
    _
  // Predicated region
  $region22: #{text_decoder_forward.29} parent=0 // pred_check
    _
  $region23: #{text_decoder_forward.29} parent=0 // pred_check_branch
    %135 = sbr.rel (0) target = $region25
  $region24: #{text_decoder_forward.29} parent=0 // pred_region
    _
  $region25: #{text_decoder_forward.29} parent=0 // pred_fallthru
    _

// kernel: text_decoder_forward.26
$region0: #{text_decoder_forward.26}
  #allocation0 [shape = 'u32[]', space=smem, size = 0x4, offset = 0x4, fixed_abs, tag = 'smem constant byte address 0x4 - core index']
  #allocation1 [shape = 'u32[72,128]{1,0:T(1,128)}', space=vmem, size = 0x9000, scoped, tag = 'internal scratch']
  %s0 = inlined_call_operand.vmem [shape: f32[32,128], index: 0, kind: input, shape index: {}]
  %s1 = inlined_call_operand.vmem [shape: f32[1,128], index: 1, kind: input, shape index: {}]
  %s2 = inlined_call_operand.vmem [shape: f32[1,128], index: 2, kind: input, shape index: {}]
  %s3 = inlined_call_operand.vmem [shape: bf16[32,128], index: 3, kind: output, shape index: {}]
  %s4 = sld [smem:[#allocation0]]
  $region22: #{text_decoder_forward.26} parent=0
    _
  %s6 = ssub.s32 1, %s4
  %s7 = scalar_select 0, %s6, %s4
  // Predicated region
  $region2: #{text_decoder_forward.26} parent=0 // pred_check
    _
  $region3: #{text_decoder_forward.26} parent=0 // pred_check_branch
    %9 = sbr.rel (0) target = $region5
  $region4: #{text_decoder_forward.26} parent=0 // pred_region
    _
  $region5: #{text_decoder_forward.26} parent=0 // pred_fallthru
    _
  // Predicated region
  $region6: #{text_decoder_forward.26} parent=0 // pred_check
    _
  $region7: #{text_decoder_forward.26} parent=0 // pred_check_branch
    %11 = sbr.rel (0) target = $region9
  $region8: #{text_decoder_forward.26} parent=0 // pred_region
    _
  $region9: #{text_decoder_forward.26} parent=0 // pred_fallthru
    _
  // Predicated region
  $region10: #{text_decoder_forward.26} parent=0 // pred_check
    _
  $region11: #{text_decoder_forward.26} parent=0 // pred_check_branch
    %13 = sbr.rel (0) target = $region13
  $region12: #{text_decoder_forward.26} parent=0 // pred_region
    _
  $region13: #{text_decoder_forward.26} parent=0 // pred_fallthru
    _
  %v14 = vld [vmem:[%s0] sm:$0xff]
  %v15 = vld [vmem:[%s0 + $0x8] sm:$0xff]
  %v16 = vld [vmem:[%s0 + $0x10] sm:$0xff]
  %v17 = vld [vmem:[%s0 + $0x18] sm:$0xff]
  %18 = vadd.xlane.f32.xlu0 %v14
  %v19 = vpop.xlane.xlu0 %18
  %20 = vadd.xlane.f32.xlu0 %v15
  %v21 = vpop.xlane.xlu0 %20
  %22 = vadd.xlane.f32.xlu0 %v16
  %v23 = vpop.xlane.xlu0 %22
  %24 = vadd.xlane.f32.xlu0 %v17
  %v25 = vpop.xlane.xlu0 %24
  %v26 = vrcp.pop 128.0
  %v27 = vmul.f32 128.0, %v26
  %v28 = vsub.f32 1.0, %v27
  %v29 = vmul.f32 %v26, %v28
  %v30 = vadd.f32 %v26, %v29
  %vm31 = vweird.f32 %v26
  %v32 = vsel %vm31, %v26, %v30
  %v33 = vmul.f32 %v19, %v32
  %v34 = vmul.f32 %v21, %v32
  %v35 = vmul.f32 %v23, %v32
  %v36 = vmul.f32 %v25, %v32
  %v37 = vmul.f32 %v14, %v14
  %v38 = vmul.f32 %v15, %v15
  %v39 = vmul.f32 %v16, %v16
  %v40 = vmul.f32 %v17, %v17
  %41 = vadd.xlane.f32.xlu0 %v37
  %v42 = vpop.xlane.xlu0 %41
  %43 = vadd.xlane.f32.xlu0 %v38
  %v44 = vpop.xlane.xlu0 %43
  %45 = vadd.xlane.f32.xlu0 %v39
  %v46 = vpop.xlane.xlu0 %45
  %47 = vadd.xlane.f32.xlu0 %v40
  %v48 = vpop.xlane.xlu0 %47
  %v49 = vmul.f32 %v42, %v32
  %v50 = vmul.f32 %v44, %v32
  %v51 = vmul.f32 %v46, %v32
  %v52 = vmul.f32 %v48, %v32
  %v53 = vmul.f32 %v33, %v33
  %v54 = vmul.f32 %v34, %v34
  %v55 = vmul.f32 %v35, %v35
  %v56 = vmul.f32 %v36, %v36
  %v57 = vsub.f32 %v49, %v53
  %v58 = vsub.f32 %v50, %v54
  %v59 = vsub.f32 %v51, %v55
  %v60 = vsub.f32 %v52, %v56
  %v61 = vsub.f32 %v14, %v33
  %v62 = vsub.f32 %v15, %v34
  %v63 = vsub.f32 %v16, %v35
  %v64 = vsub.f32 %v17, %v36
  %v65 = vadd.f32 %v57, 1e-05
  %v66 = vadd.f32 %v58, 1e-05
  %v67 = vadd.f32 %v59, 1e-05
  %v68 = vadd.f32 %v60, 1e-05
  %v69 = vrsqrt.pop %v65
  %v70 = vmul.f32 %v69, %v65
  %v71 = vmul.f32 %v70, %v69
  %v72 = vmul.f32 0.5, %v71
  %v73 = vsub.f32 1.5, %v72
  %v74 = vmul.f32 %v69, %v73
  %vm75 = vweird.f32 %v65
  %vm76 = vweird.f32 %v69
  %vm77 = vmor %vm75, %vm76
  %v78 = vsel %vm77, %v69, %v74
  %v79 = vrsqrt.pop %v66
  %v80 = vmul.f32 %v79, %v66
  %v81 = vmul.f32 %v80, %v79
  %v82 = vmul.f32 0.5, %v81
  %v83 = vsub.f32 1.5, %v82
  %v84 = vmul.f32 %v79, %v83
  %vm85 = vweird.f32 %v66
  %vm86 = vweird.f32 %v79
  %vm87 = vmor %vm85, %vm86
  %v88 = vsel %vm87, %v79, %v84
  %v89 = vrsqrt.pop %v67
  %v90 = vmul.f32 %v89, %v67
  %v91 = vmul.f32 %v90, %v89
  %v92 = vmul.f32 0.5, %v91
  %v93 = vsub.f32 1.5, %v92
  %v94 = vmul.f32 %v89, %v93
  %vm95 = vweird.f32 %v67
  %vm96 = vweird.f32 %v89
  %vm97 = vmor %vm95, %vm96
  %v98 = vsel %vm97, %v89, %v94
  %v99 = vrsqrt.pop %v68
  %v100 = vmul.f32 %v99, %v68
  %v101 = vmul.f32 %v100, %v99
  %v102 = vmul.f32 0.5, %v101
  %v103 = vsub.f32 1.5, %v102
  %v104 = vmul.f32 %v99, %v103
  %vm105 = vweird.f32 %v68
  %vm106 = vweird.f32 %v99
  %vm107 = vmor %vm105, %vm106
  %v108 = vsel %vm107, %v99, %v104
  %v109 = vmul.f32 %v61, %v78
  %v110 = vmul.f32 %v62, %v88
  %v111 = vmul.f32 %v63, %v98
  %v112 = vmul.f32 %v64, %v108
  %v113 = vld [vmem:[%s1] sm:$0x1]
  %v115 = vperm.slane %v113, 0
  %v117 = vmul.f32 %v109, %v115
  %v118 = vmul.f32 %v110, %v115
  %v119 = vmul.f32 %v111, %v115
  %v120 = vmul.f32 %v112, %v115
  %v121 = vld [vmem:[%s2] sm:$0x1]
  %v123 = vperm.slane %v121, 0
  %v125 = vadd.f32 %v117, %v123
  %v126 = vadd.f32 %v118, %v123
  %v127 = vadd.f32 %v119, %v123
  %v128 = vadd.f32 %v120, %v123
  %v129 = vpack.c.bf16 %v125, %v125
  %v130 = vpack.c.bf16 %v126, %v126
  %v131 = vpack.c.bf16 %v127, %v127
  %v132 = vpack.c.bf16 %v128, %v128
  %133 = vst [vmem:[%s3] sm:$0xf] %v129
  %134 = vst [vmem:[%s3 + $0x4] sm:$0xf] %v130
  %135 = vst [vmem:[%s3 + $0x8] sm:$0xf] %v131
  %136 = vst [vmem:[%s3 + $0xc] sm:$0xf] %v132
  // Predicated region
  $region14: #{text_decoder_forward.26} parent=0 // pred_check
    _
  $region15: #{text_decoder_forward.26} parent=0 // pred_check_branch
    %138 = sbr.rel (0) target = $region17
  $region16: #{text_decoder_forward.26} parent=0 // pred_region
    _
  $region17: #{text_decoder_forward.26} parent=0 // pred_fallthru
    _
  // Predicated region
  $region18: #{text_decoder_forward.26} parent=0 // pred_check
    _
  $region19: #{text_decoder_forward.26} parent=0 // pred_check_branch
    %140 = sbr.rel (0) target = $region21
  $region20: #{text_decoder_forward.26} parent=0 // pred_region
    _
  $region21: #{text_decoder_forward.26} parent=0 // pred_fallthru
    _

// kernel: text_decoder_forward.27
$region0: #{text_decoder_forward.27}
  #allocation0 [shape = 'u32[]', space=smem, size = 0x4, offset = 0x4, fixed_abs, tag = 'smem constant byte address 0x4 - core index']
  #allocation1 [shape = 'u32[72,128]{1,0:T(1,128)}', space=vmem, size = 0x9000, scoped, tag = 'internal scratch']
  %s0 = inlined_call_operand.vmem [shape: bf16[32,128], index: 0, kind: input, shape index: {}]
  %s1 = inlined_call_operand.hbm [shape: bf16[128,384], index: 1, kind: input, shape index: {}]
  %s2 = inlined_call_operand.vmem [shape: f32[1,384], index: 2, kind: input, shape index: {}]
  %s3 = inlined_call_operand.vmem [shape: bf16[32,384], index: 3, kind: output, shape index: {}]
  %s4 = sld [smem:[#allocation0]]
  $region26: #{text_decoder_forward.27} parent=0
    _
  %s6 = ssub.s32 1, %s4
  %s7 = scalar_select 0, %s6, %s4
  $region1: #{text_decoder_forward.27} parent=0
    #allocation2 [shape = 'u8[98304]{0}', space=vmem, size = 0x18000, scoped, tag = 'input window, operand 1, single buffered']
    #allocation3 [shape = 's32[1]{0}', space=sflag, size = 0x4, scoped, tag = 'scoped memory for text_decoder_forward.27']
    %8 = vsyncpa [#allocation3], 0
    // Predicated region
    $region2: #{text_decoder_forward.27} parent=1 // pred_check
      _
    $region3: #{text_decoder_forward.27} parent=1 // pred_check_branch
      %10 = sbr.rel (0) target = $region5
    $region4: #{text_decoder_forward.27} parent=1 // pred_region
      _
    $region5: #{text_decoder_forward.27} parent=1 // pred_fallthru
      _
    // Predicated region
    $region6: #{text_decoder_forward.27} parent=1 // pred_check
      _
    $region7: #{text_decoder_forward.27} parent=1 // pred_check_branch
      %12 = sbr.rel (0) target = $region9
    $region8: #{text_decoder_forward.27} parent=1 // pred_region
      %14 = vsyncadd [#allocation3], 0
      %s15 = sshll.u32 %s1, 4
      %s16 = int_to_ptr.hbm [resolvable:$true] %s15
      %s17 = sshll.u32 [#allocation2], 4
      %s18 = int_to_ptr.vmem [resolvable:$true] %s17
      %23 = dma.hbm_to_vmem [thread:$0]  %s16, 3072, %s18, [#allocation3], 192, 192, 12
    $region9: #{text_decoder_forward.27} parent=1 // pred_fallthru
      _
    // Predicated region
    $region10: #{text_decoder_forward.27} parent=1 // pred_check
      _
    $region11: #{text_decoder_forward.27} parent=1 // pred_check_branch
      %25 = sbr.rel (0) target = $region13
    $region12: #{text_decoder_forward.27} parent=1 // pred_region
      _
    $region13: #{text_decoder_forward.27} parent=1 // pred_fallthru
      _
    // Predicated region
    $region14: #{text_decoder_forward.27} parent=1 // pred_check
      _
    $region15: #{text_decoder_forward.27} parent=1 // pred_check_branch
      %27 = sbr.rel (0) target = $region17
    $region16: #{text_decoder_forward.27} parent=1 // pred_region
      %29 = dma.done [#allocation3], 3072
    $region17: #{text_decoder_forward.27} parent=1 // pred_fallthru
      _
    %v30 = vld [vmem:[%s0] sm:$0xf]
    %v31 = vld [vmem:[%s0 + $0x4] sm:$0xf]
    %v32 = vld [vmem:[%s0 + $0x8] sm:$0xf]
    %v33 = vld [vmem:[%s0 + $0xc] sm:$0xf]
    %v34 = vld [vmem:[#allocation2] sm:$0xff]
    %v35 = vld [vmem:[#allocation2 + $0x8] sm:$0xf]
    %v36 = vld [vmem:[#allocation2 + $0xc] sm:$0xff]
    %v37 = vld [vmem:[#allocation2 + $0x14] sm:$0xf]
    %v38 = vld [vmem:[#allocation2 + $0x18] sm:$0xff]
    %v39 = vld [vmem:[#allocation2 + $0x20] sm:$0xf]
    %v40 = vld [vmem:[#allocation2 + $0x24] sm:$0xff]
    %v41 = vld [vmem:[#allocation2 + $0x2c] sm:$0xf]
    %v42 = vld [vmem:[#allocation2 + $0x30] sm:$0xff]
    %v43 = vld [vmem:[#allocation2 + $0x38] sm:$0xf]
    %v44 = vld [vmem:[#allocation2 + $0x3c] sm:$0xff]
    %v45 = vld [vmem:[#allocation2 + $0x44] sm:$0xf]
    %v46 = vld [vmem:[#allocation2 + $0x48] sm:$0xff]
    %v47 = vld [vmem:[#allocation2 + $0x50] sm:$0xf]
    %v48 = vld [vmem:[#allocation2 + $0x54] sm:$0xff]
    %v49 = vld [vmem:[#allocation2 + $0x5c] sm:$0xf]
    %v50 = vld [vmem:[#allocation2 + $0x60] sm:$0xff]
    %v51 = vld [vmem:[#allocation2 + $0x68] sm:$0xf]
    %v52 = vld [vmem:[#allocation2 + $0x6c] sm:$0xff]
    %v53 = vld [vmem:[#allocation2 + $0x74] sm:$0xf]
    %v54 = vld [vmem:[#allocation2 + $0x78] sm:$0xff]
    %v55 = vld [vmem:[#allocation2 + $0x80] sm:$0xf]
    %v56 = vld [vmem:[#allocation2 + $0x84] sm:$0xff]
    %v57 = vld [vmem:[#allocation2 + $0x8c] sm:$0xf]
    %v58 = vld [vmem:[#allocation2 + $0x90] sm:$0xff]
    %v59 = vld [vmem:[#allocation2 + $0x98] sm:$0xf]
    %v60 = vld [vmem:[#allocation2 + $0x9c] sm:$0xff]
    %v61 = vld [vmem:[#allocation2 + $0xa4] sm:$0xf]
    %v62 = vld [vmem:[#allocation2 + $0xa8] sm:$0xff]
    %v63 = vld [vmem:[#allocation2 + $0xb0] sm:$0xf]
    %v64 = vld [vmem:[#allocation2 + $0xb4] sm:$0xff]
    %v65 = vld [vmem:[#allocation2 + $0xbc] sm:$0xf]
    %v66 = vld [vmem:[%s2] sm:$0x7]
    %v68 = vperm.slane %v66, 0
    %v69 = vperm.slane %v66, 1
    %v70 = vperm.slane %v66, 2
    %v78 = vunpack.c.l.b16 %v30
    %v79 = vunpack.c.l.b16 %v31
    %v80 = vunpack.c.l.b16 %v32
    %v81 = vunpack.c.l.b16 %v33
    %v82 = vpack.c.b16 %v79, %v78
    %v83 = vpack.c.b16 %v81, %v80
    %v118 = vunpack.c.l.b16 %v34
    %v119 = vunpack.c.h.b16 %v34
    %v120 = vunpack.c.l.b16 %v35
    %v121 = vunpack.c.l.b16 %v36
    %v122 = vunpack.c.h.b16 %v36
    %v123 = vunpack.c.l.b16 %v37
    %v124 = vunpack.c.l.b16 %v38
    %v125 = vunpack.c.h.b16 %v38
    %v126 = vunpack.c.l.b16 %v39
    %v127 = vunpack.c.l.b16 %v40
    %v128 = vunpack.c.h.b16 %v40
    %v129 = vunpack.c.l.b16 %v41
    %v130 = vunpack.c.l.b16 %v42
    %v131 = vunpack.c.h.b16 %v42
    %v132 = vunpack.c.l.b16 %v43
    %v133 = vunpack.c.l.b16 %v44
    %v134 = vunpack.c.h.b16 %v44
    %v135 = vunpack.c.l.b16 %v45
    %v136 = vunpack.c.l.b16 %v46
    %v137 = vunpack.c.h.b16 %v46
    %v138 = vunpack.c.l.b16 %v47
    %v139 = vunpack.c.l.b16 %v48
    %v140 = vunpack.c.h.b16 %v48
    %v141 = vunpack.c.l.b16 %v49
    %v142 = vunpack.c.l.b16 %v50
    %v143 = vunpack.c.h.b16 %v50
    %v144 = vunpack.c.l.b16 %v51
    %v145 = vunpack.c.l.b16 %v52
    %v146 = vunpack.c.h.b16 %v52
    %v147 = vunpack.c.l.b16 %v53
    %v148 = vunpack.c.l.b16 %v54
    %v149 = vunpack.c.h.b16 %v54
    %v150 = vunpack.c.l.b16 %v55
    %v151 = vunpack.c.l.b16 %v56
    %v152 = vunpack.c.h.b16 %v56
    %v153 = vunpack.c.l.b16 %v57
    %v154 = vunpack.c.l.b16 %v58
    %v155 = vunpack.c.h.b16 %v58
    %v156 = vunpack.c.l.b16 %v59
    %v157 = vunpack.c.l.b16 %v60
    %v158 = vunpack.c.h.b16 %v60
    %v159 = vunpack.c.l.b16 %v61
    %v160 = vunpack.c.l.b16 %v62
    %v161 = vunpack.c.h.b16 %v62
    %v162 = vunpack.c.l.b16 %v63
    %v163 = vunpack.c.l.b16 %v64
    %v164 = vunpack.c.h.b16 %v64
    %v165 = vunpack.c.l.b16 %v65
    %v166 = vpack.c.b16 %v121, %v118
    %v167 = vpack.c.b16 %v122, %v119
    %v168 = vpack.c.b16 %v123, %v120
    %v169 = vpack.c.b16 %v127, %v124
    %v170 = vpack.c.b16 %v128, %v125
    %v171 = vpack.c.b16 %v129, %v126
    %v172 = vpack.c.b16 %v133, %v130
    %v173 = vpack.c.b16 %v134, %v131
    %v174 = vpack.c.b16 %v135, %v132
    %v175 = vpack.c.b16 %v139, %v136
    %v176 = vpack.c.b16 %v140, %v137
    %v177 = vpack.c.b16 %v141, %v138
    %v178 = vpack.c.b16 %v145, %v142
    %v179 = vpack.c.b16 %v146, %v143
    %v180 = vpack.c.b16 %v147, %v144
    %v181 = vpack.c.b16 %v151, %v148
    %v182 = vpack.c.b16 %v152, %v149
    %v183 = vpack.c.b16 %v153, %v150
    %v184 = vpack.c.b16 %v157, %v154
    %v185 = vpack.c.b16 %v158, %v155
    %v186 = vpack.c.b16 %v159, %v156
    %v187 = vpack.c.b16 %v163, %v160
    %v188 = vpack.c.b16 %v164, %v161
    %v189 = vpack.c.b16 %v165, %v162
    %214 = vmatpush.bf16.msra.mxu0 %v187
    %215 = vmatpush.bf16.msra.mxu0 %v184
    %216 = vmatpush.bf16.msra.mxu0 %v181
    %217 = vmatpush.bf16.msra.mxu0 %v178
    %218 = vmatpush.bf16.msra.mxu0 %v175
    %219 = vmatpush.bf16.msra.mxu0 %v172
    %220 = vmatpush.bf16.msra.mxu0 %v169
    %221 = vmatpush.bf16.msra.mxu0 %v166
    %222 = vmatmul.bf16.gmra.mxu0 %v82
    %v223 = vpop.f32.mrf.mxu0
    %v224 = vadd.f32 %v68, %v223
    %v225 = vpop.f32.mrf.mxu0
    %v226 = vadd.f32 %v68, %v225
    %227 = vmatmul.bf16.gmra.mxu0 %v83
    %v228 = vpop.f32.mrf.mxu0
    %v229 = vadd.f32 %v68, %v228
    %v230 = vpop.f32.mrf.mxu0
    %v231 = vadd.f32 %v68, %v230
    %232 = vdwg.mxu0
    %233 = vmatpush.bf16.msra.mxu0 %v188
    %234 = vmatpush.bf16.msra.mxu0 %v185
    %235 = vmatpush.bf16.msra.mxu0 %v182
    %236 = vmatpush.bf16.msra.mxu0 %v179
    %237 = vmatpush.bf16.msra.mxu0 %v176
    %238 = vmatpush.bf16.msra.mxu0 %v173
    %239 = vmatpush.bf16.msra.mxu0 %v170
    %240 = vmatpush.bf16.msra.mxu0 %v167
    %241 = vmatmul.bf16.gmra.mxu0 %v82
    %v242 = vpop.f32.mrf.mxu0
    %v243 = vadd.f32 %v69, %v242
    %v244 = vpop.f32.mrf.mxu0
    %v245 = vadd.f32 %v69, %v244
    %246 = vmatmul.bf16.gmra.mxu0 %v83
    %v247 = vpop.f32.mrf.mxu0
    %v248 = vadd.f32 %v69, %v247
    %v249 = vpop.f32.mrf.mxu0
    %v250 = vadd.f32 %v69, %v249
    %251 = vdwg.mxu0
    %252 = vmatpush.bf16.msra.mxu0 %v189
    %253 = vmatpush.bf16.msra.mxu0 %v186
    %254 = vmatpush.bf16.msra.mxu0 %v183
    %255 = vmatpush.bf16.msra.mxu0 %v180
    %256 = vmatpush.bf16.msra.mxu0 %v177
    %257 = vmatpush.bf16.msra.mxu0 %v174
    %258 = vmatpush.bf16.msra.mxu0 %v171
    %259 = vmatpush.bf16.msra.mxu0 %v168
    %260 = vmatmul.bf16.gmra.mxu0 %v82
    %v261 = vpop.f32.mrf.mxu0
    %v262 = vadd.f32 %v70, %v261
    %v263 = vpop.f32.mrf.mxu0
    %v264 = vadd.f32 %v70, %v263
    %265 = vmatmul.bf16.gmra.mxu0 %v83
    %v266 = vpop.f32.mrf.mxu0
    %v267 = vadd.f32 %v70, %v266
    %v268 = vpop.f32.mrf.mxu0
    %v269 = vadd.f32 %v70, %v268
    %270 = vdwg.mxu0
    %v271 = vpack.c.bf16 %v243, %v224
    %v272 = vpack.c.bf16 %v262, %v262
    %v273 = vpack.c.bf16 %v245, %v226
    %v274 = vpack.c.bf16 %v264, %v264
    %v275 = vpack.c.bf16 %v248, %v229
    %v276 = vpack.c.bf16 %v267, %v267
    %v277 = vpack.c.bf16 %v250, %v231
    %v278 = vpack.c.bf16 %v269, %v269
    %279 = vst [vmem:[%s3] sm:$0xff] %v271
    %280 = vst [vmem:[%s3 + $0x8] sm:$0xf] %v272
    %281 = vst [vmem:[%s3 + $0xc] sm:$0xff] %v273
    %282 = vst [vmem:[%s3 + $0x14] sm:$0xf] %v274
    %283 = vst [vmem:[%s3 + $0x18] sm:$0xff] %v275
    %284 = vst [vmem:[%s3 + $0x20] sm:$0xf] %v276
    %285 = vst [vmem:[%s3 + $0x24] sm:$0xff] %v277
    %286 = vst [vmem:[%s3 + $0x2c] sm:$0xf] %v278
    // Predicated region
    $region18: #{text_decoder_forward.27} parent=1 // pred_check
      _
    $region19: #{text_decoder_forward.27} parent=1 // pred_check_branch
      %288 = sbr.rel (0) target = $region21
    $region20: #{text_decoder_forward.27} parent=1 // pred_region
      _
    $region21: #{text_decoder_forward.27} parent=1 // pred_fallthru
      _
    // Predicated region
    $region22: #{text_decoder_forward.27} parent=1 // pred_check
      _
    $region23: #{text_decoder_forward.27} parent=1 // pred_check_branch
      %290 = sbr.rel (0) target = $region25
    $region24: #{text_decoder_forward.27} parent=1 // pred_region
      _
    $region25: #{text_decoder_forward.27} parent=1 // pred_fallthru
      _
    %291 = vsyncpa [#allocation3], 1

// kernel: text_decoder_forward.28
$region0: #{text_decoder_forward.28}
  #allocation0 [shape = 'u32[]', space=smem, size = 0x4, offset = 0x4, fixed_abs, tag = 'smem constant byte address 0x4 - core index']
  #allocation1 [shape = 'u32[72,128]{1,0:T(1,128)}', space=vmem, size = 0x9000, scoped, tag = 'internal scratch']
  #allocation2 [shape = 'f32[4,16,1]{2,1,0:T(8,128)}', space=vmem, size = 0x8000, scoped, tag = 'scratch operand']
  #allocation3 [shape = 'f32[4,16,1]{2,1,0:T(8,128)}', space=vmem, size = 0x8000, scoped, tag = 'scratch operand']
  #allocation4 [shape = 'f32[4,16,32]{2,1,0:T(8,128)}', space=vmem, size = 0x8000, scoped, tag = 'scratch operand']
  %s0 = inlined_call_operand.vmem [shape: bf16[2,16,384], index: 0, kind: input, shape index: {}, may-alias: {0,1,2}]
  %s1 = inlined_call_operand.vmem [shape: bf16[2,16,384], index: 1, kind: input, shape index: {}, may-alias: {0,1,2}]
  %s2 = inlined_call_operand.vmem [shape: bf16[2,16,384], index: 2, kind: input, shape index: {}, may-alias: {0,1,2}]
  %s3 = inlined_call_operand.vmem [shape: bf16[2,16,128], index: 3, kind: output, shape index: {}]
  %s4 = sld [smem:[#allocation0]]
  $region176: #{text_decoder_forward.28} parent=0
    _
  %s6 = ssub.s32 1, %s4
  %s7 = scalar_select 0, %s6, %s4
  $region1: #{text_decoder_forward.28} parent=0
    #allocation5 [shape = 'u8[8192]{0}', space=vmem, size = 0x2000, scoped, tag = 'input window, operand 0']
    #allocation6 [shape = 'u8[8192]{0}', space=vmem, size = 0x2000, scoped, tag = 'input window, operand 1']
    #allocation7 [shape = 'u8[8192]{0}', space=vmem, size = 0x2000, scoped, tag = 'input window, operand 2']
    loop: start=0, step=1, limit=4
    $region2: #{text_decoder_forward.28} parent=1 // loop_pre_header
      _
    $region3: #{text_decoder_forward.28} parent=1 // loop_header
      %s9 = sphi 0, %s13
      %p10 = scmp.ge.s32.totalorder %s9, 4
      %s16 = sphi 0, %s28
      %s17 = sphi 0, %s24
      %s18 = sphi 0, %s16
      %s19 = sphi 0, %s17
      %s20 = sphi 0, %s18
      %s21 = sphi 0, %s19
      %s31 = sphi 0, %s33
      %s34 = sphi 0, %s31
      %s35 = sphi 0, %s34
      %s51 = sphi 0, %s35
      %s59 = sphi 0, %s61
      %s62 = sphi 0, %s59
      %s63 = sphi 0, %s62
      %s79 = sphi 0, %s63
      %s87 = sphi 0, %s89
      %s90 = sphi 0, %s87
      %s91 = sphi 0, %s90
      %s107 = sphi 0, %s91
      %s113 = sphi 0, %s115
      %s116 = sphi 0, %s113
      %s117 = sphi 0, %s116
      %s133 = sphi 0, %s117
    $region4: #{text_decoder_forward.28} parent=1 // loop_header_branch
      %12 = sbr.rel (%p10) target = $region8
    $region5: #{text_decoder_forward.28} parent=1 // loop_body
      %s14 = ssub.s32 %s9, 1
      %s15 = ssub.s32 %s9, 2
      %s22 = sadd.s32 1, %s17
      %p23 = scmp.ge.s32.totalorder %s22, 1
      %s24 = scalar_select %p23, 0, %s22
      %s25 = sadd.s32 1, %s16
      %s26 = scalar_select %p23, %s25, %s16
      %p27 = scmp.ge.s32.totalorder %s26, 2
      %s28 = scalar_select %p27, 0, %s26
      %s29 = ssub.s32 %s16, %s28
      %p30 = scmp.eq.s32.totalorder %s29, 0
      %s32 = sadd.s32 %s31, 1
      %s33 = scalar_select %p30, %s31, %s32
      %p36 = pneg %p30
      %p37 = scmp.eq.s32.totalorder %s9, 1
      %p38 = por %p36, %p37
      %p39 = scmp.ne.s32.totalorder %s31, %s34
      %p40 = scmp.eq.s32.totalorder %s9, 0
      %p41 = por %p39, %p40
      %p42 = scmp.ne.s32.totalorder %s31, %s34
      %p43 = scmp.eq.s32.totalorder %s14, 1
      %p44 = por %p42, %p43
      %p45 = scmp.ne.s32.totalorder %s34, %s35
      %p46 = scmp.eq.s32.totalorder %s14, 0
      %p47 = por %p45, %p46
      %p48 = scmp.ne.s32.totalorder %s34, %s35
      %p49 = scmp.eq.s32.totalorder %s15, 1
      %p50 = por %p48, %p49
      %p52 = scmp.ne.s32.totalorder %s35, %s51
      %p53 = scmp.eq.s32.totalorder %s15, 0
      %p54 = por %p52, %p53
      %s55 = ssub.s32 %s16, %s28
      %s56 = ssub.s32 %s17, %s24
      %s57 = sor.u32 %s55, %s56
      %p58 = scmp.eq.s32.totalorder %s57, 0
      %s60 = sadd.s32 %s59, 1
      %s61 = scalar_select %p58, %s59, %s60
      %p64 = pneg %p58
      %p65 = scmp.eq.s32.totalorder %s9, 1
      %p66 = por %p64, %p65
      %p67 = scmp.ne.s32.totalorder %s59, %s62
      %p68 = scmp.eq.s32.totalorder %s9, 0
      %p69 = por %p67, %p68
      %p70 = scmp.ne.s32.totalorder %s59, %s62
      %p71 = scmp.eq.s32.totalorder %s14, 1
      %p72 = por %p70, %p71
      %p73 = scmp.ne.s32.totalorder %s62, %s63
      %p74 = scmp.eq.s32.totalorder %s14, 0
      %p75 = por %p73, %p74
      %p76 = scmp.ne.s32.totalorder %s62, %s63
      %p77 = scmp.eq.s32.totalorder %s15, 1
      %p78 = por %p76, %p77
      %p80 = scmp.ne.s32.totalorder %s63, %s79
      %p81 = scmp.eq.s32.totalorder %s15, 0
      %p82 = por %p80, %p81
      %s83 = ssub.s32 %s16, %s28
      %s84 = ssub.s32 %s17, %s24
      %s85 = sor.u32 %s83, %s84
      %p86 = scmp.eq.s32.totalorder %s85, 0
      %s88 = sadd.s32 %s87, 1
      %s89 = scalar_select %p86, %s87, %s88
      %p92 = pneg %p86
      %p93 = scmp.eq.s32.totalorder %s9, 1
      %p94 = por %p92, %p93
      %p95 = scmp.ne.s32.totalorder %s87, %s90
      %p96 = scmp.eq.s32.totalorder %s9, 0
      %p97 = por %p95, %p96
      %p98 = scmp.ne.s32.totalorder %s87, %s90
      %p99 = scmp.eq.s32.totalorder %s14, 1
      %p100 = por %p98, %p99
      %p101 = scmp.ne.s32.totalorder %s90, %s91
      %p102 = scmp.eq.s32.totalorder %s14, 0
      %p103 = por %p101, %p102
      %p104 = scmp.ne.s32.totalorder %s90, %s91
      %p105 = scmp.eq.s32.totalorder %s15, 1
      %p106 = por %p104, %p105
      %p108 = scmp.ne.s32.totalorder %s91, %s107
      %p109 = scmp.eq.s32.totalorder %s15, 0
      %p110 = por %p108, %p109
      %s111 = ssub.s32 %s16, %s28
      %p112 = scmp.eq.s32.totalorder %s111, 0
      %s114 = sadd.s32 %s113, 1
      %s115 = scalar_select %p112, %s113, %s114
      %p118 = pneg %p112
      %p119 = scmp.eq.s32.totalorder %s9, 1
      %p120 = por %p118, %p119
      %p121 = scmp.ne.s32.totalorder %s113, %s116
      %p122 = scmp.eq.s32.totalorder %s9, 0
      %p123 = por %p121, %p122
      %p124 = scmp.ne.s32.totalorder %s113, %s116
      %p125 = scmp.eq.s32.totalorder %s14, 1
      %p126 = por %p124, %p125
      %p127 = scmp.ne.s32.totalorder %s116, %s117
      %p128 = scmp.eq.s32.totalorder %s14, 0
      %p129 = por %p127, %p128
      %p130 = scmp.ne.s32.totalorder %s116, %s117
      %p131 = scmp.eq.s32.totalorder %s15, 1
      %p132 = por %p130, %p131
      %p134 = scmp.ne.s32.totalorder %s117, %s133
      %p135 = scmp.eq.s32.totalorder %s15, 0
      %p136 = por %p134, %p135
      %p137 = scmp.le.s32.totalorder 1, %s9
      %p138 = scmp.lt.s32.totalorder %s9, 3
      %p139 = pnand %p137, %p138
      %p140 = pneg %p139
      // Predicated region
      $region9: #{text_decoder_forward.28} parent=5 // pred_check
        _
      $region10: #{text_decoder_forward.28} parent=5 // pred_check_branch
        %142 = sbr.rel (%p139) target = $region12
      $region11: #{text_decoder_forward.28} parent=5 // pred_region
        %s143 = ssub.s32 %s9, 1
      $region12: #{text_decoder_forward.28} parent=5 // pred_fallthru
        _
      %p144 = scmp.lt.s32.totalorder %s9, 2
      // Predicated region
      $region13: #{text_decoder_forward.28} parent=5 // pred_check
        %p145 = pneg %p144
      $region14: #{text_decoder_forward.28} parent=5 // pred_check_branch
        %147 = sbr.rel (%p145) target = $region16
      $region15: #{text_decoder_forward.28} parent=5 // pred_region
        // Predicated region
        $region17: #{text_decoder_forward.28} parent=15 // pred_check
          %p148 = pneg %p41
        $region18: #{text_decoder_forward.28} parent=15 // pred_check_branch
          %150 = sbr.rel (%p148) target = $region20
        $region19: #{text_decoder_forward.28} parent=15 // pred_region
          %s151 = sand.u32 %s31, 1
          %s152 = sand.u32 %s31, 1
          %s153 = smul.addr %s152, 8
          %s154 = scalar_lea.vmem [#allocation5], %s153
          %s155 = smul.addr %s16, 6
          %s156 = smul.addr %s155, 4
          %s157 = scalar_lea.vmem %s0, %s156
          // Predicated region
          $region21: #{text_decoder_forward.28} parent=19 // pred_check
            _
          $region22: #{text_decoder_forward.28} parent=19 // pred_check_branch
            %159 = sbr.rel (0) target = $region24
          $region23: #{text_decoder_forward.28} parent=19 // pred_region
            // Predicated region
            $region25: #{text_decoder_forward.28} parent=23 // pred_check
              _
            $region26: #{text_decoder_forward.28} parent=23 // pred_check_branch
              %161 = sbr.rel target = $region28
            $region27: #{text_decoder_forward.28} parent=23 // pred_region
              // Predicated region
              $region40: #{text_decoder_forward.28} parent=27 // pred_check
                _
              $region41: #{text_decoder_forward.28} parent=27 // pred_check_branch
                %179 = sbr.rel (0) target = $region43
              $region42: #{text_decoder_forward.28} parent=27 // pred_region
                loop: start=0, step=1, limit=1
                $region44: #{text_decoder_forward.28} parent=42 // loop_pre_header
                  _
                $region45: #{text_decoder_forward.28} parent=42 // loop_header
                  %s181 = sphi 0, %s185
                  %p182 = scmp.ge.s32.totalorder %s181, 1
                  %s186 = sphi %s157, %s157
                  %s187 = sphi %s154, %s154
                $region46: #{text_decoder_forward.28} parent=42 // loop_header_branch
                  %184 = sbr.rel (%p182) target = $region50
                $region47: #{text_decoder_forward.28} parent=42 // loop_body
                  _
                $region48: #{text_decoder_forward.28} parent=42 // loop_footer
                  %s185 = sadd.s32 1, %s181
                $region49: #{text_decoder_forward.28} parent=42 // loop_footer_branch
                  %180 = sbr.rel target = $region45
                $region50: #{text_decoder_forward.28} parent=42 // loop_exit
                  _
                %s189 = ssub.s32 16, 1
                loop: start=0, step=1, limit=1
                $region51: #{text_decoder_forward.28} parent=42 // loop_pre_header
                  _
                $region52: #{text_decoder_forward.28} parent=42 // loop_header
                  %s191 = sphi 0, %s195
                  %p192 = scmp.ge.s32.totalorder %s191, 1
                  %s196 = sphi %s157, %s157
                  %s197 = sphi %s154, %s154
                $region53: #{text_decoder_forward.28} parent=42 // loop_header_branch
                  %194 = sbr.rel (%p192) target = $region57
                $region54: #{text_decoder_forward.28} parent=42 // loop_body
                  %v198 = vld [vmem:[%s196] sm:%s189]
                  %199 = vst [vmem:[%s197] sm:%s189] %v198
                  %v200 = vld [vmem:[%s196 + $0xc] sm:%s189]
                  %201 = vst [vmem:[%s197 + $0x4] sm:%s189] %v200
                $region55: #{text_decoder_forward.28} parent=42 // loop_footer
                  %s195 = sadd.s32 1, %s191
                $region56: #{text_decoder_forward.28} parent=42 // loop_footer_branch
                  %190 = sbr.rel target = $region52
                $region57: #{text_decoder_forward.28} parent=42 // loop_exit
                  _
              $region43: #{text_decoder_forward.28} parent=27 // pred_fallthru
                _
            $region28: #{text_decoder_forward.28} parent=23 // pred_fallthru
              _
            // Predicated region
            $region29: #{text_decoder_forward.28} parent=23 // pred_check
              _
            $region30: #{text_decoder_forward.28} parent=23 // pred_check_branch
              %163 = sbr.rel (0) target = $region32
            $region31: #{text_decoder_forward.28} parent=23 // pred_region
              %s165 = ssub.s32 16, 1
              loop: start=0, step=1, limit=1
              $region33: #{text_decoder_forward.28} parent=31 // loop_pre_header
                _
              $region34: #{text_decoder_forward.28} parent=31 // loop_header
                %s167 = sphi 0, %s171
                %p168 = scmp.ge.s32.totalorder %s167, 1
                %s172 = sphi %s157, %s157
                %s173 = sphi %s154, %s154
              $region35: #{text_decoder_forward.28} parent=31 // loop_header_branch
                %170 = sbr.rel (%p168) target = $region39
              $region36: #{text_decoder_forward.28} parent=31 // loop_body
                %v174 = vld [vmem:[%s172] sm:%s165]
                %175 = vst [vmem:[%s173] sm:%s165] %v174
                %v176 = vld [vmem:[%s172 + $0xc] sm:%s165]
                %177 = vst [vmem:[%s173 + $0x4] sm:%s165] %v176
              $region37: #{text_decoder_forward.28} parent=31 // loop_footer
                %s171 = sadd.s32 1, %s167
              $region38: #{text_decoder_forward.28} parent=31 // loop_footer_branch
                %166 = sbr.rel target = $region34
              $region39: #{text_decoder_forward.28} parent=31 // loop_exit
                _
            $region32: #{text_decoder_forward.28} parent=23 // pred_fallthru
              _
          $region24: #{text_decoder_forward.28} parent=19 // pred_fallthru
            _
          %202 = vnop
        $region20: #{text_decoder_forward.28} parent=15 // pred_fallthru
          _
        // Predicated region
        $region58: #{text_decoder_forward.28} parent=15 // pred_check
          %p203 = pneg %p69
        $region59: #{text_decoder_forward.28} parent=15 // pred_check_branch
          %205 = sbr.rel (%p203) target = $region61
        $region60: #{text_decoder_forward.28} parent=15 // pred_region
          %s206 = sand.u32 %s59, 1
          %s207 = sand.u32 %s59, 1
          %s208 = smul.addr %s207, 8
          %s209 = scalar_lea.vmem [#allocation6], %s208
          %s210 = smul.u32 2, %s17
          %s211 = smul.addr %s210, 3
          %s212 = sadd.s32 1, %s211
          %s213 = smul.addr %s16, 6
          %s214 = sadd.s32 %s212, %s213
          %s215 = smul.addr %s214, 4
          %s216 = scalar_lea.vmem %s1, %s215
          // Predicated region
          $region62: #{text_decoder_forward.28} parent=60 // pred_check
            _
          $region63: #{text_decoder_forward.28} parent=60 // pred_check_branch
            %218 = sbr.rel (0) target = $region65
          $region64: #{text_decoder_forward.28} parent=60 // pred_region
            // Predicated region
            $region66: #{text_decoder_forward.28} parent=64 // pred_check
              _
            $region67: #{text_decoder_forward.28} parent=64 // pred_check_branch
              %220 = sbr.rel target = $region69
            $region68: #{text_decoder_forward.28} parent=64 // pred_region
              // Predicated region
              $region81: #{text_decoder_forward.28} parent=68 // pred_check
                _
              $region82: #{text_decoder_forward.28} parent=68 // pred_check_branch
                %238 = sbr.rel (0) target = $region84
              $region83: #{text_decoder_forward.28} parent=68 // pred_region
                loop: start=0, step=1, limit=1
                $region85: #{text_decoder_forward.28} parent=83 // loop_pre_header
                  _
                $region86: #{text_decoder_forward.28} parent=83 // loop_header
                  %s240 = sphi 0, %s244
                  %p241 = scmp.ge.s32.totalorder %s240, 1
                  %s245 = sphi %s216, %s216
                  %s246 = sphi %s209, %s209
                $region87: #{text_decoder_forward.28} parent=83 // loop_header_branch
                  %243 = sbr.rel (%p241) target = $region91
                $region88: #{text_decoder_forward.28} parent=83 // loop_body
                  _
                $region89: #{text_decoder_forward.28} parent=83 // loop_footer
                  %s244 = sadd.s32 1, %s240
                $region90: #{text_decoder_forward.28} parent=83 // loop_footer_branch
                  %239 = sbr.rel target = $region86
                $region91: #{text_decoder_forward.28} parent=83 // loop_exit
                  _
                %s248 = ssub.s32 16, 1
                loop: start=0, step=1, limit=1
                $region92: #{text_decoder_forward.28} parent=83 // loop_pre_header
                  _
                $region93: #{text_decoder_forward.28} parent=83 // loop_header
                  %s250 = sphi 0, %s254
                  %p251 = scmp.ge.s32.totalorder %s250, 1
                  %s255 = sphi %s216, %s216
                  %s256 = sphi %s209, %s209
                $region94: #{text_decoder_forward.28} parent=83 // loop_header_branch
                  %253 = sbr.rel (%p251) target = $region98
                $region95: #{text_decoder_forward.28} parent=83 // loop_body
                  %v257 = vld [vmem:[%s255] sm:%s248]
                  %258 = vst [vmem:[%s256] sm:%s248] %v257
                  %v259 = vld [vmem:[%s255 + $0xc] sm:%s248]
                  %260 = vst [vmem:[%s256 + $0x4] sm:%s248] %v259
                $region96: #{text_decoder_forward.28} parent=83 // loop_footer
                  %s254 = sadd.s32 1, %s250
                $region97: #{text_decoder_forward.28} parent=83 // loop_footer_branch
                  %249 = sbr.rel target = $region93
                $region98: #{text_decoder_forward.28} parent=83 // loop_exit
                  _
              $region84: #{text_decoder_forward.28} parent=68 // pred_fallthru
                _
            $region69: #{text_decoder_forward.28} parent=64 // pred_fallthru
              _
            // Predicated region
            $region70: #{text_decoder_forward.28} parent=64 // pred_check
              _
            $region71: #{text_decoder_forward.28} parent=64 // pred_check_branch
              %222 = sbr.rel (0) target = $region73
            $region72: #{text_decoder_forward.28} parent=64 // pred_region
              %s224 = ssub.s32 16, 1
              loop: start=0, step=1, limit=1
              $region74: #{text_decoder_forward.28} parent=72 // loop_pre_header
                _
              $region75: #{text_decoder_forward.28} parent=72 // loop_header
                %s226 = sphi 0, %s230
                %p227 = scmp.ge.s32.totalorder %s226, 1
                %s231 = sphi %s216, %s216
                %s232 = sphi %s209, %s209
              $region76: #{text_decoder_forward.28} parent=72 // loop_header_branch
                %229 = sbr.rel (%p227) target = $region80
              $region77: #{text_decoder_forward.28} parent=72 // loop_body
                %v233 = vld [vmem:[%s231] sm:%s224]
                %234 = vst [vmem:[%s232] sm:%s224] %v233
                %v235 = vld [vmem:[%s231 + $0xc] sm:%s224]
                %236 = vst [vmem:[%s232 + $0x4] sm:%s224] %v235
              $region78: #{text_decoder_forward.28} parent=72 // loop_footer
                %s230 = sadd.s32 1, %s226
              $region79: #{text_decoder_forward.28} parent=72 // loop_footer_branch
                %225 = sbr.rel target = $region75
              $region80: #{text_decoder_forward.28} parent=72 // loop_exit
                _
            $region73: #{text_decoder_forward.28} parent=64 // pred_fallthru
              _
          $region65: #{text_decoder_forward.28} parent=60 // pred_fallthru
            _
          %261 = vnop
        $region61: #{text_decoder_forward.28} parent=15 // pred_fallthru
          _
        // Predicated region
        $region99: #{text_decoder_forward.28} parent=15 // pred_check
          %p262 = pneg %p97
        $region100: #{text_decoder_forward.28} parent=15 // pred_check_branch
          %264 = sbr.rel (%p262) target = $region102
        $region101: #{text_decoder_forward.28} parent=15 // pred_region
          %s265 = sand.u32 %s87, 1
          %s266 = sand.u32 %s87, 1
          %s267 = smul.addr %s266, 8
          %s268 = scalar_lea.vmem [#allocation7], %s267
          %s269 = smul.u32 2, %s17
          %s270 = smul.addr %s269, 3
          %s271 = sadd.s32 2, %s270
          %s272 = smul.addr %s16, 6
          %s273 = sadd.s32 %s271, %s272
          %s274 = smul.addr %s273, 4
          %s275 = scalar_lea.vmem %s2, %s274
          // Predicated region
          $region103: #{text_decoder_forward.28} parent=101 // pred_check
            _
          $region104: #{text_decoder_forward.28} parent=101 // pred_check_branch
            %277 = sbr.rel (0) target = $region106
          $region105: #{text_decoder_forward.28} parent=101 // pred_region
            // Predicated region
            $region107: #{text_decoder_forward.28} parent=105 // pred_check
              _
            $region108: #{text_decoder_forward.28} parent=105 // pred_check_branch
              %279 = sbr.rel target = $region110
            $region109: #{text_decoder_forward.28} parent=105 // pred_region
              // Predicated region
              $region122: #{text_decoder_forward.28} parent=109 // pred_check
                _
              $region123: #{text_decoder_forward.28} parent=109 // pred_check_branch
                %297 = sbr.rel (0) target = $region125
              $region124: #{text_decoder_forward.28} parent=109 // pred_region
                loop: start=0, step=1, limit=1
                $region126: #{text_decoder_forward.28} parent=124 // loop_pre_header
                  _
                $region127: #{text_decoder_forward.28} parent=124 // loop_header
                  %s299 = sphi 0, %s303
                  %p300 = scmp.ge.s32.totalorder %s299, 1
                  %s304 = sphi %s275, %s275
                  %s305 = sphi %s268, %s268
                $region128: #{text_decoder_forward.28} parent=124 // loop_header_branch
                  %302 = sbr.rel (%p300) target = $region132
                $region129: #{text_decoder_forward.28} parent=124 // loop_body
                  _
                $region130: #{text_decoder_forward.28} parent=124 // loop_footer
                  %s303 = sadd.s32 1, %s299
                $region131: #{text_decoder_forward.28} parent=124 // loop_footer_branch
                  %298 = sbr.rel target = $region127
                $region132: #{text_decoder_forward.28} parent=124 // loop_exit
                  _
                %s307 = ssub.s32 16, 1
                loop: start=0, step=1, limit=1
                $region133: #{text_decoder_forward.28} parent=124 // loop_pre_header
                  _
                $region134: #{text_decoder_forward.28} parent=124 // loop_header
                  %s309 = sphi 0, %s313
                  %p310 = scmp.ge.s32.totalorder %s309, 1
                  %s314 = sphi %s275, %s275
                  %s315 = sphi %s268, %s268
                $region135: #{text_decoder_forward.28} parent=124 // loop_header_branch
                  %312 = sbr.rel (%p310) target = $region139
                $region136: #{text_decoder_forward.28} parent=124 // loop_body
                  %v316 = vld [vmem:[%s314] sm:%s307]
                  %317 = vst [vmem:[%s315] sm:%s307] %v316
                  %v318 = vld [vmem:[%s314 + $0xc] sm:%s307]
                  %319 = vst [vmem:[%s315 + $0x4] sm:%s307] %v318
                $region137: #{text_decoder_forward.28} parent=124 // loop_footer
                  %s313 = sadd.s32 1, %s309
                $region138: #{text_decoder_forward.28} parent=124 // loop_footer_branch
                  %308 = sbr.rel target = $region134
                $region139: #{text_decoder_forward.28} parent=124 // loop_exit
                  _
              $region125: #{text_decoder_forward.28} parent=109 // pred_fallthru
                _
            $region110: #{text_decoder_forward.28} parent=105 // pred_fallthru
              _
            // Predicated region
            $region111: #{text_decoder_forward.28} parent=105 // pred_check
              _
            $region112: #{text_decoder_forward.28} parent=105 // pred_check_branch
              %281 = sbr.rel (0) target = $region114
            $region113: #{text_decoder_forward.28} parent=105 // pred_region
              %s283 = ssub.s32 16, 1
              loop: start=0, step=1, limit=1
              $region115: #{text_decoder_forward.28} parent=113 // loop_pre_header
                _
              $region116: #{text_decoder_forward.28} parent=113 // loop_header
                %s285 = sphi 0, %s289
                %p286 = scmp.ge.s32.totalorder %s285, 1
                %s290 = sphi %s275, %s275
                %s291 = sphi %s268, %s268
              $region117: #{text_decoder_forward.28} parent=113 // loop_header_branch
                %288 = sbr.rel (%p286) target = $region121
              $region118: #{text_decoder_forward.28} parent=113 // loop_body
                %v292 = vld [vmem:[%s290] sm:%s283]
                %293 = vst [vmem:[%s291] sm:%s283] %v292
                %v294 = vld [vmem:[%s290 + $0xc] sm:%s283]
                %295 = vst [vmem:[%s291 + $0x4] sm:%s283] %v294
              $region119: #{text_decoder_forward.28} parent=113 // loop_footer
                %s289 = sadd.s32 1, %s285
              $region120: #{text_decoder_forward.28} parent=113 // loop_footer_branch
                %284 = sbr.rel target = $region116
              $region121: #{text_decoder_forward.28} parent=113 // loop_exit
                _
            $region114: #{text_decoder_forward.28} parent=105 // pred_fallthru
              _
          $region106: #{text_decoder_forward.28} parent=101 // pred_fallthru
            _
          %320 = vnop
        $region102: #{text_decoder_forward.28} parent=15 // pred_fallthru
          _
      $region16: #{text_decoder_forward.28} parent=5 // pred_fallthru
        _
      %p321 = scmp.le.s32.totalorder 1, %s9
      %p322 = scmp.lt.s32.totalorder %s9, 3
      %p323 = pnand %p321, %p322
      %p324 = pneg %p323
      // Predicated region
      $region140: #{text_decoder_forward.28} parent=5 // pred_check
        _
      $region141: #{text_decoder_forward.28} parent=5 // pred_check_branch
        %326 = sbr.rel (%p323) target = $region143
      $region142: #{text_decoder_forward.28} parent=5 // pred_region
        %s327 = ssub.s32 %s9, 1
        %s328 = sand.u32 %s34, 1
        %s329 = sand.u32 %s34, 1
        %s330 = smul.addr %s329, 8
        %s331 = scalar_lea.vmem [#allocation5], %s330
        // Predicated region
        $region144: #{text_decoder_forward.28} parent=142 // pred_check
          %p332 = pneg %p47
        $region145: #{text_decoder_forward.28} parent=142 // pred_check_branch
          %334 = sbr.rel (%p332) target = $region147
        $region146: #{text_decoder_forward.28} parent=142 // pred_region
          _
        $region147: #{text_decoder_forward.28} parent=142 // pred_fallthru
          _
        %s335 = sand.u32 %s62, 1
        %s336 = sand.u32 %s62, 1
        %s337 = smul.addr %s336, 8
        %s338 = scalar_lea.vmem [#allocation6], %s337
        // Predicated region
        $region148: #{text_decoder_forward.28} parent=142 // pred_check
          %p339 = pneg %p75
        $region149: #{text_decoder_forward.28} parent=142 // pred_check_branch
          %341 = sbr.rel (%p339) target = $region151
        $region150: #{text_decoder_forward.28} parent=142 // pred_region
          _
        $region151: #{text_decoder_forward.28} parent=142 // pred_fallthru
          _
        %s342 = sand.u32 %s90, 1
        %s343 = sand.u32 %s90, 1
        %s344 = smul.addr %s343, 8
        %s345 = scalar_lea.vmem [#allocation7], %s344
        // Predicated region
        $region152: #{text_decoder_forward.28} parent=142 // pred_check
          %p346 = pneg %p103
        $region153: #{text_decoder_forward.28} parent=142 // pred_check_branch
          %348 = sbr.rel (%p346) target = $region155
        $region154: #{text_decoder_forward.28} parent=142 // pred_region
          _
        $region155: #{text_decoder_forward.28} parent=142 // pred_fallthru
          _
        %s349 = sand.u32 %s34, 1
        %s350 = sand.u32 %s34, 1
        %s351 = smul.addr %s350, 8
        %s352 = scalar_lea.vmem [#allocation5], %s351
        %p353 = pneg %p47
        %p354 = pneg %p44
        %s355 = sand.u32 %s62, 1
        %s356 = sand.u32 %s62, 1
        %s357 = smul.addr %s356, 8
        %s358 = scalar_lea.vmem [#allocation6], %s357
        %p359 = pneg %p75
        %p360 = pneg %p72
        %s361 = sand.u32 %s90, 1
        %s362 = sand.u32 %s90, 1
        %s363 = smul.addr %s362, 8
        %s364 = scalar_lea.vmem [#allocation7], %s363
        %p365 = pneg %p103
        %p366 = pneg %p100
        %p367 = pneg %p129
        %p368 = pneg %p126
        %p369 = scmp.lt.s32.totalorder %s18, 1
        %s370 = scalar_select %p369, %s18, 1
        %s371 = smul.addr %s370, 2
        %s372 = smul.addr %s371, 4
        %s373 = scalar_lea.vmem %s3, %s372
        %s374 = smul.u32 2, %s19
        %s375 = smul.u32 2, %s19
        %p376 = scmp.lt.s32.totalorder %s18, 1
        %s377 = scalar_select %p376, %s18, 1
        %s378 = smul.addr %s377, 2
        %s379 = smul.addr %s378, 4
        %s380 = scalar_lea.vmem %s3, %s379
        %p382 = scmp.eq.s32.totalorder %s19, 0
        // Predicated region
        $region156: #{text_decoder_forward.28} parent=142 // pred_check
          %p383 = pneg %p382
        $region157: #{text_decoder_forward.28} parent=142 // pred_check_branch
          %385 = sbr.rel (%p383) target = $region159
        $region158: #{text_decoder_forward.28} parent=142 // pred_region
          %vm386 = vcmask 7168
          %387 = vst.msk [vmem:[#allocation2] sm:$0xff] %vm386, -inf
          %388 = vst.msk [vmem:[#allocation2 + $0x8] sm:$0xff] %vm386, -inf
          %389 = vst.msk [vmem:[#allocation2 + $0x10] sm:$0xff] %vm386, -inf
          %390 = vst.msk [vmem:[#allocation2 + $0x18] sm:$0xff] %vm386, -inf
          %391 = vst.msk [vmem:[#allocation2 + $0x20] sm:$0xff] %vm386, -inf
          %392 = vst.msk [vmem:[#allocation2 + $0x28] sm:$0xff] %vm386, -inf
          %393 = vst.msk [vmem:[#allocation2 + $0x30] sm:$0xff] %vm386, -inf
          %394 = vst.msk [vmem:[#allocation2 + $0x38] sm:$0xff] %vm386, -inf
          %395 = vst.msk [vmem:[#allocation3] sm:$0xff] %vm386, 0.0
          %396 = vst.msk [vmem:[#allocation3 + $0x8] sm:$0xff] %vm386, 0.0
          %397 = vst.msk [vmem:[#allocation3 + $0x10] sm:$0xff] %vm386, 0.0
          %398 = vst.msk [vmem:[#allocation3 + $0x18] sm:$0xff] %vm386, 0.0
          %399 = vst.msk [vmem:[#allocation3 + $0x20] sm:$0xff] %vm386, 0.0
          %400 = vst.msk [vmem:[#allocation3 + $0x28] sm:$0xff] %vm386, 0.0
          %401 = vst.msk [vmem:[#allocation3 + $0x30] sm:$0xff] %vm386, 0.0
          %402 = vst.msk [vmem:[#allocation3 + $0x38] sm:$0xff] %vm386, 0.0
          %vm403 = vcmask 261120
          %404 = vst.msk [vmem:[#allocation4] sm:$0xff] %vm403, 0.0
          %405 = vst.msk [vmem:[#allocation4 + $0x8] sm:$0xff] %vm403, 0.0
          %406 = vst.msk [vmem:[#allocation4 + $0x10] sm:$0xff] %vm403, 0.0
          %407 = vst.msk [vmem:[#allocation4 + $0x18] sm:$0xff] %vm403, 0.0
          %408 = vst.msk [vmem:[#allocation4 + $0x20] sm:$0xff] %vm403, 0.0
          %409 = vst.msk [vmem:[#allocation4 + $0x28] sm:$0xff] %vm403, 0.0
          %410 = vst.msk [vmem:[#allocation4 + $0x30] sm:$0xff] %vm403, 0.0
          %411 = vst.msk [vmem:[#allocation4 + $0x38] sm:$0xff] %vm403, 0.0
        $region159: #{text_decoder_forward.28} parent=142 // pred_fallthru
          _
        %v412 = vld [vmem:[%s331] sm:$0xf]
        %v413 = vld [vmem:[%s331 + $0x4] sm:$0xf]
        %v414 = vld [vmem:[%s338] sm:$0xf]
        %v415 = vld [vmem:[%s338 + $0x4] sm:$0xf]
        %v416 = vld [vmem:[%s345] sm:$0xf]
        %v417 = vld [vmem:[%s345 + $0x4] sm:$0xf]
        %v418 = vlaneseq
        %v419 = vand.u32 %v418, 127
        %s420 = smul.u32 %s19, 16
        %v421 = vstv %s420
        %v422 = vadd.s32 %v419, %v421
        %v423 = vlaneseq
        %v424 = vshrl.u32 %v423, 7
        %v425 = vadd.s32 %v424, 8
        %vm426 = vcmp.gt.s32.totalorder %v422, %v424
        %vm427 = vcmp.gt.s32.totalorder %v422, %v425
        %v430 = vunpack.c.l.b16 %v412
        %v431 = vunpack.c.l.b16 %v413
        %v432 = vpack.c.b16 %v431, %v430
        %v435 = vunpack.c.l.b16 %v414
        %v436 = vunpack.c.l.b16 %v415
        %v437 = vpack.c.b16 %v436, %v435
        %vm438 = vcmask 261120
        %v440 = vsel %vm438, %v432, 0
        %v443 = vsel %vm438, %v437, 0
        %445 = vmatpush.bf16.xpose.msra.mxu0 0
        %446 = vmatpush.bf16.xpose.msra.mxu0 0
        %447 = vmatpush.bf16.xpose.msra.mxu0 0
        %448 = vmatpush.bf16.xpose.msra.mxu0 0
        %449 = vmatpush.bf16.xpose.msra.mxu0 0
        %450 = vmatpush.bf16.xpose.msra.mxu0 0
        %451 = vmatpush.bf16.xpose.msra.mxu0 0
        %452 = vmatpush.bf16.xpose.msra.mxu0 %v443
        %453 = vmatmul.bf16.gmra.mxu0 %v440
        %v454 = vpop.f32.mrf.mxu0
        %v455 = vadd.f32 0.0, %v454
        %v456 = vpop.f32.mrf.mxu0
        %v457 = vadd.f32 0.0, %v456
        %458 = vdwg.mxu0
        %v459 = vsel %vm426, -1e+30, %v455
        %v460 = vsel %vm427, -1e+30, %v457
        %v461 = vld [vmem:[#allocation2] sm:$0xff]
        %v462 = vld [vmem:[#allocation2 + $0x8] sm:$0xff]
        %vm463 = vcmask 130048
        %v464 = vsel %vm463, %v459, -inf
        %465 = vmax.xlane.f32.xlu0 %v464
        %v466 = vpop.xlane.xlu0 %465
        %v467 = vsel %vm463, %v460, -inf
        %468 = vmax.xlane.f32.xlu0 %v467
        %v469 = vpop.xlane.xlu0 %468
        %v470 = vmax.f32 %v461, %v466
        %v471 = vmax.f32 %v462, %v469
        %v472 = vsub.f32 %v461, %v470
        %v473 = vsub.f32 %v462, %v471
        %v474 = vmul.f32 %v472, 1.442695
        %v475 = vpow.pop %v474
        %v476 = vmul.f32 %v473, 1.442695
        %v477 = vpow.pop %v476
        %479 = vset.pattern.permute.xlu0 0
        %480 = vperm.xlu0 %479, %v470
        %v481 = vpop.permute.xlu0 %480
        %484 = vset.pattern.permute.xlu0 0
        %485 = vperm.xlu0 %484, %v471
        %v486 = vpop.permute.xlu0 %485
        %v488 = vsub.f32 %v459, %v481
        %v489 = vsub.f32 %v460, %v486
        %v490 = vmul.f32 %v488, 1.442695
        %v491 = vpow.pop %v490
        %v492 = vmul.f32 %v489, 1.442695
        %v493 = vpow.pop %v492
        %v494 = vld [vmem:[#allocation3] sm:$0xff]
        %v495 = vld [vmem:[#allocation3 + $0x8] sm:$0xff]
        %v496 = vmul.f32 %v475, %v494
        %v497 = vmul.f32 %v477, %v495
        %v498 = vsel %vm463, %v491, 0.0
        %499 = vadd.xlane.f32.xlu0 %v498
        %v500 = vpop.xlane.xlu0 %499
        %v501 = vsel %vm463, %v493, 0.0
        %502 = vadd.xlane.f32.xlu0 %v501
        %v503 = vpop.xlane.xlu0 %502
        %v504 = vadd.f32 %v496, %v500
        %v505 = vadd.f32 %v497, %v503
        %vm506 = vcmask 7168
        %507 = vst.msk [vmem:[#allocation3] sm:$0xff] %vm506, %v504
        %508 = vst.msk [vmem:[#allocation3 + $0x8] sm:$0xff] %vm506, %v505
        %v509 = vld [vmem:[#allocation4] sm:$0xff]
        %v510 = vld [vmem:[#allocation4 + $0x8] sm:$0xff]
        %512 = vset.pattern.permute.xlu0 0
        %513 = vperm.xlu0 %512, %v475
        %v514 = vpop.permute.xlu0 %513
        %517 = vset.pattern.permute.xlu0 0
        %518 = vperm.xlu0 %517, %v477
        %v519 = vpop.permute.xlu0 %518
        %v521 = vmul.f32 %v514, %v509
        %v522 = vmul.f32 %v519, %v510
        %v523 = vpack.c.bf16 %v493, %v491
        %v526 = vunpack.c.l.b16 %v416
        %v527 = vunpack.c.l.b16 %v417
        %v528 = vpack.c.b16 %v527, %v526
        %v531 = vsel %vm463, %v523, 0
        %533 = vmatpush.bf16.msra.mxu0 0
        %534 = vmatpush.bf16.msra.mxu0 0
        %535 = vmatpush.bf16.msra.mxu0 0
        %536 = vmatpush.bf16.msra.mxu0 0
        %537 = vmatpush.bf16.msra.mxu0 0
        %538 = vmatpush.bf16.msra.mxu0 0
        %539 = vmatpush.bf16.msra.mxu0 0
        %540 = vmatpush.bf16.msra.mxu0 %v528
        %541 = vmatmul.bf16.gmra.mxu0 %v531
        %v542 = vpop.f32.mrf.mxu0
        %v543 = vadd.f32 0.0, %v542
        %v544 = vpop.f32.mrf.mxu0
        %v545 = vadd.f32 0.0, %v544
        %546 = vdwg.mxu0
        %v547 = vadd.f32 %v521, %v543
        %v548 = vadd.f32 %v522, %v545
        %549 = vst.msk [vmem:[#allocation4] sm:$0xff] %vm438, %v547
        %550 = vst.msk [vmem:[#allocation4 + $0x8] sm:$0xff] %vm438, %v548
        %551 = vst.msk [vmem:[#allocation2] sm:$0xff] %vm506, %v470
        %552 = vst.msk [vmem:[#allocation2 + $0x8] sm:$0xff] %vm506, %v471
        %553 = vrot.lane.b32.xlu0 %v432, 96
        %v554 = vpop.permute.xlu0 %553
        %555 = vrot.lane.b32.xlu0 %v437, 96
        %v556 = vpop.permute.xlu0 %555
        %v558 = vsel %vm438, %v554, 0
        %v561 = vsel %vm438, %v556, 0
        %563 = vmatpush.bf16.xpose.msra.mxu0 0
        %564 = vmatpush.bf16.xpose.msra.mxu0 0
        %565 = vmatpush.bf16.xpose.msra.mxu0 0
        %566 = vmatpush.bf16.xpose.msra.mxu0 0
        %567 = vmatpush.bf16.xpose.msra.mxu0 0
        %568 = vmatpush.bf16.xpose.msra.mxu0 0
        %569 = vmatpush.bf16.xpose.msra.mxu0 0
        %570 = vmatpush.bf16.xpose.msra.mxu0 %v561
        %571 = vmatmul.bf16.gmra.mxu0 %v558
        %v572 = vpop.f32.mrf.mxu0
        %v573 = vadd.f32 0.0, %v572
        %v574 = vpop.f32.mrf.mxu0
        %v575 = vadd.f32 0.0, %v574
        %576 = vdwg.mxu0
        %v577 = vsel %vm426, -1e+30, %v573
        %v578 = vsel %vm427, -1e+30, %v575
        %s579 = scalar_lea.vmem [#allocation2], 16
        %v580 = vld [vmem:[%s579] sm:$0xff]
        %v581 = vld [vmem:[%s579 + $0x8] sm:$0xff]
        %v582 = vsel %vm463, %v577, -inf
        %583 = vmax.xlane.f32.xlu0 %v582
        %v584 = vpop.xlane.xlu0 %583
        %v585 = vsel %vm463, %v578, -inf
        %586 = vmax.xlane.f32.xlu0 %v585
        %v587 = vpop.xlane.xlu0 %586
        %v588 = vmax.f32 %v580, %v584
        %v589 = vmax.f32 %v581, %v587
        %v590 = vsub.f32 %v580, %v588
        %v591 = vsub.f32 %v581, %v589
        %v592 = vmul.f32 %v590, 1.442695
        %v593 = vpow.pop %v592
        %v594 = vmul.f32 %v591, 1.442695
        %v595 = vpow.pop %v594
        %597 = vset.pattern.permute.xlu0 0
        %598 = vperm.xlu0 %597, %v588
        %v599 = vpop.permute.xlu0 %598
        %602 = vset.pattern.permute.xlu0 0
        %603 = vperm.xlu0 %602, %v589
        %v604 = vpop.permute.xlu0 %603
        %v606 = vsub.f32 %v577, %v599
        %v607 = vsub.f32 %v578, %v604
        %v608 = vmul.f32 %v606, 1.442695
        %v609 = vpow.pop %v608
        %v610 = vmul.f32 %v607, 1.442695
        %v611 = vpow.pop %v610
        %s612 = scalar_lea.vmem [#allocation3], 16
        %v613 = vld [vmem:[%s612] sm:$0xff]
        %v614 = vld [vmem:[%s612 + $0x8] sm:$0xff]
        %v615 = vmul.f32 %v593, %v613
        %v616 = vmul.f32 %v595, %v614
        %v617 = vsel %vm463, %v609, 0.0
        %618 = vadd.xlane.f32.xlu0 %v617
        %v619 = vpop.xlane.xlu0 %618
        %v620 = vsel %vm463, %v611, 0.0
        %621 = vadd.xlane.f32.xlu0 %v620
        %v622 = vpop.xlane.xlu0 %621
        %v623 = vadd.f32 %v615, %v619
        %v624 = vadd.f32 %v616, %v622
        %625 = vst.msk [vmem:[%s612] sm:$0xff] %vm506, %v623
        %626 = vst.msk [vmem:[%s612 + $0x8] sm:$0xff] %vm506, %v624
        %s627 = scalar_lea.vmem [#allocation4], 16
        %v628 = vld [vmem:[%s627] sm:$0xff]
        %v629 = vld [vmem:[%s627 + $0x8] sm:$0xff]
        %631 = vset.pattern.permute.xlu0 0
        %632 = vperm.xlu0 %631, %v593
        %v633 = vpop.permute.xlu0 %632
        %636 = vset.pattern.permute.xlu0 0
        %637 = vperm.xlu0 %636, %v595
        %v638 = vpop.permute.xlu0 %637
        %v640 = vmul.f32 %v633, %v628
        %v641 = vmul.f32 %v638, %v629
        %v642 = vpack.c.bf16 %v611, %v609
        %643 = vrot.lane.b32.xlu0 %v528, 96
        %v644 = vpop.permute.xlu0 %643
        %v647 = vsel %vm463, %v642, 0
        %649 = vmatpush.bf16.msra.mxu0 0
        %650 = vmatpush.bf16.msra.mxu0 0
        %651 = vmatpush.bf16.msra.mxu0 0
        %652 = vmatpush.bf16.msra.mxu0 0
        %653 = vmatpush.bf16.msra.mxu0 0
        %654 = vmatpush.bf16.msra.mxu0 0
        %655 = vmatpush.bf16.msra.mxu0 0
        %656 = vmatpush.bf16.msra.mxu0 %v644
        %657 = vmatmul.bf16.gmra.mxu0 %v647
        %v658 = vpop.f32.mrf.mxu0
        %v659 = vadd.f32 0.0, %v658
        %v660 = vpop.f32.mrf.mxu0
        %v661 = vadd.f32 0.0, %v660
        %662 = vdwg.mxu0
        %v663 = vadd.f32 %v640, %v659
        %v664 = vadd.f32 %v641, %v661
        %665 = vst.msk [vmem:[%s627] sm:$0xff] %vm438, %v663
        %666 = vst.msk [vmem:[%s627 + $0x8] sm:$0xff] %vm438, %v664
        %667 = vst.msk [vmem:[%s579] sm:$0xff] %vm506, %v588
        %668 = vst.msk [vmem:[%s579 + $0x8] sm:$0xff] %vm506, %v589
        %669 = vrot.lane.b32.xlu0 %v432, 64
        %v670 = vpop.permute.xlu0 %669
        %671 = vrot.lane.b32.xlu0 %v437, 64
        %v672 = vpop.permute.xlu0 %671
        %v674 = vsel %vm438, %v670, 0
        %v677 = vsel %vm438, %v672, 0
        %679 = vmatpush.bf16.xpose.msra.mxu0 0
        %680 = vmatpush.bf16.xpose.msra.mxu0 0
        %681 = vmatpush.bf16.xpose.msra.mxu0 0
        %682 = vmatpush.bf16.xpose.msra.mxu0 0
        %683 = vmatpush.bf16.xpose.msra.mxu0 0
        %684 = vmatpush.bf16.xpose.msra.mxu0 0
        %685 = vmatpush.bf16.xpose.msra.mxu0 0
        %686 = vmatpush.bf16.xpose.msra.mxu0 %v677
        %687 = vmatmul.bf16.gmra.mxu0 %v674
        %v688 = vpop.f32.mrf.mxu0
        %v689 = vadd.f32 0.0, %v688
        %v690 = vpop.f32.mrf.mxu0
        %v691 = vadd.f32 0.0, %v690
        %692 = vdwg.mxu0
        %v693 = vsel %vm426, -1e+30, %v689
        %v694 = vsel %vm427, -1e+30, %v691
        %s695 = scalar_lea.vmem [#allocation2], 32
        %v696 = vld [vmem:[%s695] sm:$0xff]
        %v697 = vld [vmem:[%s695 + $0x8] sm:$0xff]
        %v698 = vsel %vm463, %v693, -inf
        %699 = vmax.xlane.f32.xlu0 %v698
        %v700 = vpop.xlane.xlu0 %699
        %v701 = vsel %vm463, %v694, -inf
        %702 = vmax.xlane.f32.xlu0 %v701
        %v703 = vpop.xlane.xlu0 %702
        %v704 = vmax.f32 %v696, %v700
        %v705 = vmax.f32 %v697, %v703
        %v706 = vsub.f32 %v696, %v704
        %v707 = vsub.f32 %v697, %v705
        %v708 = vmul.f32 %v706, 1.442695
        %v709 = vpow.pop %v708
        %v710 = vmul.f32 %v707, 1.442695
        %v711 = vpow.pop %v710
        %713 = vset.pattern.permute.xlu0 0
        %714 = vperm.xlu0 %713, %v704
        %v715 = vpop.permute.xlu0 %714
        %718 = vset.pattern.permute.xlu0 0
        %719 = vperm.xlu0 %718, %v705
        %v720 = vpop.permute.xlu0 %719
        %v722 = vsub.f32 %v693, %v715
        %v723 = vsub.f32 %v694, %v720
        %v724 = vmul.f32 %v722, 1.442695
        %v725 = vpow.pop %v724
        %v726 = vmul.f32 %v723, 1.442695
        %v727 = vpow.pop %v726
        %s728 = scalar_lea.vmem [#allocation3], 32
        %v729 = vld [vmem:[%s728] sm:$0xff]
        %v730 = vld [vmem:[%s728 + $0x8] sm:$0xff]
        %v731 = vmul.f32 %v709, %v729
        %v732 = vmul.f32 %v711, %v730
        %v733 = vsel %vm463, %v725, 0.0
        %734 = vadd.xlane.f32.xlu0 %v733
        %v735 = vpop.xlane.xlu0 %734
        %v736 = vsel %vm463, %v727, 0.0
        %737 = vadd.xlane.f32.xlu0 %v736
        %v738 = vpop.xlane.xlu0 %737
        %v739 = vadd.f32 %v731, %v735
        %v740 = vadd.f32 %v732, %v738
        %741 = vst.msk [vmem:[%s728] sm:$0xff] %vm506, %v739
        %742 = vst.msk [vmem:[%s728 + $0x8] sm:$0xff] %vm506, %v740
        %s743 = scalar_lea.vmem [#allocation4], 32
        %v744 = vld [vmem:[%s743] sm:$0xff]
        %v745 = vld [vmem:[%s743 + $0x8] sm:$0xff]
        %747 = vset.pattern.permute.xlu0 0
        %748 = vperm.xlu0 %747, %v709
        %v749 = vpop.permute.xlu0 %748
        %752 = vset.pattern.permute.xlu0 0
        %753 = vperm.xlu0 %752, %v711
        %v754 = vpop.permute.xlu0 %753
        %v756 = vmul.f32 %v749, %v744
        %v757 = vmul.f32 %v754, %v745
        %v758 = vpack.c.bf16 %v727, %v725
        %759 = vrot.lane.b32.xlu0 %v528, 64
        %v760 = vpop.permute.xlu0 %759
        %v763 = vsel %vm463, %v758, 0
        %765 = vmatpush.bf16.msra.mxu0 0
        %766 = vmatpush.bf16.msra.mxu0 0
        %767 = vmatpush.bf16.msra.mxu0 0
        %768 = vmatpush.bf16.msra.mxu0 0
        %769 = vmatpush.bf16.msra.mxu0 0
        %770 = vmatpush.bf16.msra.mxu0 0
        %771 = vmatpush.bf16.msra.mxu0 0
        %772 = vmatpush.bf16.msra.mxu0 %v760
        %773 = vmatmul.bf16.gmra.mxu0 %v763
        %v774 = vpop.f32.mrf.mxu0
        %v775 = vadd.f32 0.0, %v774
        %v776 = vpop.f32.mrf.mxu0
        %v777 = vadd.f32 0.0, %v776
        %778 = vdwg.mxu0
        %v779 = vadd.f32 %v756, %v775
        %v780 = vadd.f32 %v757, %v777
        %781 = vst.msk [vmem:[%s743] sm:$0xff] %vm438, %v779
        %782 = vst.msk [vmem:[%s743 + $0x8] sm:$0xff] %vm438, %v780
        %783 = vst.msk [vmem:[%s695] sm:$0xff] %vm506, %v704
        %784 = vst.msk [vmem:[%s695 + $0x8] sm:$0xff] %vm506, %v705
        %785 = vrot.lane.b32.xlu0 %v432, 32
        %v786 = vpop.permute.xlu0 %785
        %787 = vrot.lane.b32.xlu0 %v437, 32
        %v788 = vpop.permute.xlu0 %787
        %v790 = vsel %vm438, %v786, 0
        %v793 = vsel %vm438, %v788, 0
        %795 = vmatpush.bf16.xpose.msra.mxu0 0
        %796 = vmatpush.bf16.xpose.msra.mxu0 0
        %797 = vmatpush.bf16.xpose.msra.mxu0 0
        %798 = vmatpush.bf16.xpose.msra.mxu0 0
        %799 = vmatpush.bf16.xpose.msra.mxu0 0
        %800 = vmatpush.bf16.xpose.msra.mxu0 0
        %801 = vmatpush.bf16.xpose.msra.mxu0 0
        %802 = vmatpush.bf16.xpose.msra.mxu0 %v793
        %803 = vmatmul.bf16.gmra.mxu0 %v790
        %v804 = vpop.f32.mrf.mxu0
        %v805 = vadd.f32 0.0, %v804
        %v806 = vpop.f32.mrf.mxu0
        %v807 = vadd.f32 0.0, %v806
        %808 = vdwg.mxu0
        %v809 = vsel %vm426, -1e+30, %v805
        %v810 = vsel %vm427, -1e+30, %v807
        %s811 = scalar_lea.vmem [#allocation2], 48
        %v812 = vld [vmem:[%s811] sm:$0xff]
        %v813 = vld [vmem:[%s811 + $0x8] sm:$0xff]
        %v814 = vsel %vm463, %v809, -inf
        %815 = vmax.xlane.f32.xlu0 %v814
        %v816 = vpop.xlane.xlu0 %815
        %v817 = vsel %vm463, %v810, -inf
        %818 = vmax.xlane.f32.xlu0 %v817
        %v819 = vpop.xlane.xlu0 %818
        %v820 = vmax.f32 %v812, %v816
        %v821 = vmax.f32 %v813, %v819
        %v822 = vsub.f32 %v812, %v820
        %v823 = vsub.f32 %v813, %v821
        %v824 = vmul.f32 %v822, 1.442695
        %v825 = vpow.pop %v824
        %v826 = vmul.f32 %v823, 1.442695
        %v827 = vpow.pop %v826
        %829 = vset.pattern.permute.xlu0 0
        %830 = vperm.xlu0 %829, %v820
        %v831 = vpop.permute.xlu0 %830
        %834 = vset.pattern.permute.xlu0 0
        %835 = vperm.xlu0 %834, %v821
        %v836 = vpop.permute.xlu0 %835
        %v838 = vsub.f32 %v809, %v831
        %v839 = vsub.f32 %v810, %v836
        %v840 = vmul.f32 %v838, 1.442695
        %v841 = vpow.pop %v840
        %v842 = vmul.f32 %v839, 1.442695
        %v843 = vpow.pop %v842
        %s844 = scalar_lea.vmem [#allocation3], 48
        %v845 = vld [vmem:[%s844] sm:$0xff]
        %v846 = vld [vmem:[%s844 + $0x8] sm:$0xff]
        %v847 = vmul.f32 %v825, %v845
        %v848 = vmul.f32 %v827, %v846
        %v849 = vsel %vm463, %v841, 0.0
        %850 = vadd.xlane.f32.xlu0 %v849
        %v851 = vpop.xlane.xlu0 %850
        %v852 = vsel %vm463, %v843, 0.0
        %853 = vadd.xlane.f32.xlu0 %v852
        %v854 = vpop.xlane.xlu0 %853
        %v855 = vadd.f32 %v847, %v851
        %v856 = vadd.f32 %v848, %v854
        %857 = vst.msk [vmem:[%s844] sm:$0xff] %vm506, %v855
        %858 = vst.msk [vmem:[%s844 + $0x8] sm:$0xff] %vm506, %v856
        %s859 = scalar_lea.vmem [#allocation4], 48
        %v860 = vld [vmem:[%s859] sm:$0xff]
        %v861 = vld [vmem:[%s859 + $0x8] sm:$0xff]
        %863 = vset.pattern.permute.xlu0 0
        %864 = vperm.xlu0 %863, %v825
        %v865 = vpop.permute.xlu0 %864
        %868 = vset.pattern.permute.xlu0 0
        %869 = vperm.xlu0 %868, %v827
        %v870 = vpop.permute.xlu0 %869
        %v872 = vmul.f32 %v865, %v860
        %v873 = vmul.f32 %v870, %v861
        %v874 = vpack.c.bf16 %v843, %v841
        %875 = vrot.lane.b32.xlu0 %v528, 32
        %v876 = vpop.permute.xlu0 %875
        %v879 = vsel %vm463, %v874, 0
        %881 = vmatpush.bf16.msra.mxu0 0
        %882 = vmatpush.bf16.msra.mxu0 0
        %883 = vmatpush.bf16.msra.mxu0 0
        %884 = vmatpush.bf16.msra.mxu0 0
        %885 = vmatpush.bf16.msra.mxu0 0
        %886 = vmatpush.bf16.msra.mxu0 0
        %887 = vmatpush.bf16.msra.mxu0 0
        %888 = vmatpush.bf16.msra.mxu0 %v876
        %889 = vmatmul.bf16.gmra.mxu0 %v879
        %v890 = vpop.f32.mrf.mxu0
        %v891 = vadd.f32 0.0, %v890
        %v892 = vpop.f32.mrf.mxu0
        %v893 = vadd.f32 0.0, %v892
        %894 = vdwg.mxu0
        %v895 = vadd.f32 %v872, %v891
        %v896 = vadd.f32 %v873, %v893
        %897 = vst.msk [vmem:[%s859] sm:$0xff] %vm438, %v895
        %898 = vst.msk [vmem:[%s859 + $0x8] sm:$0xff] %vm438, %v896
        %899 = vst.msk [vmem:[%s811] sm:$0xff] %vm506, %v820
        %900 = vst.msk [vmem:[%s811 + $0x8] sm:$0xff] %vm506, %v821
        // Predicated region
        $region160: #{text_decoder_forward.28} parent=142 // pred_check
          %p901 = pneg %p382
        $region161: #{text_decoder_forward.28} parent=142 // pred_check_branch
          %903 = sbr.rel (%p901) target = $region163
        $region162: #{text_decoder_forward.28} parent=142 // pred_region
          %v904 = vld [vmem:[#allocation3] sm:$0xff]
          %v905 = vld [vmem:[#allocation3 + $0x8] sm:$0xff]
          %v906 = vrcp.pop %v904
          %v907 = vrcp.pop %v905
          %v908 = vld [vmem:[#allocation4] sm:$0xff]
          %v909 = vld [vmem:[#allocation4 + $0x8] sm:$0xff]
          %911 = vset.pattern.permute.xlu0 0
          %912 = vperm.xlu0 %911, %v906
          %v913 = vpop.permute.xlu0 %912
          %916 = vset.pattern.permute.xlu0 0
          %917 = vperm.xlu0 %916, %v907
          %v918 = vpop.permute.xlu0 %917
          %v920 = vmul.f32 %v908, %v913
          %v921 = vmul.f32 %v909, %v918
          %v922 = vld [vmem:[%s612] sm:$0xff]
          %v923 = vld [vmem:[%s612 + $0x8] sm:$0xff]
          %v924 = vrcp.pop %v922
          %v925 = vrcp.pop %v923
          %v926 = vld [vmem:[%s627] sm:$0xff]
          %v927 = vld [vmem:[%s627 + $0x8] sm:$0xff]
          %929 = vset.pattern.permute.xlu0 0
          %930 = vperm.xlu0 %929, %v924
          %v931 = vpop.permute.xlu0 %930
          %934 = vset.pattern.permute.xlu0 0
          %935 = vperm.xlu0 %934, %v925
          %v936 = vpop.permute.xlu0 %935
          %v938 = vmul.f32 %v926, %v931
          %v939 = vmul.f32 %v927, %v936
          %v940 = vld [vmem:[%s728] sm:$0xff]
          %v941 = vld [vmem:[%s728 + $0x8] sm:$0xff]
          %v942 = vrcp.pop %v940
          %v943 = vrcp.pop %v941
          %v944 = vld [vmem:[%s743] sm:$0xff]
          %v945 = vld [vmem:[%s743 + $0x8] sm:$0xff]
          %947 = vset.pattern.permute.xlu0 0
          %948 = vperm.xlu0 %947, %v942
          %v949 = vpop.permute.xlu0 %948
          %952 = vset.pattern.permute.xlu0 0
          %953 = vperm.xlu0 %952, %v943
          %v954 = vpop.permute.xlu0 %953
          %v956 = vmul.f32 %v944, %v949
          %v957 = vmul.f32 %v945, %v954
          %v958 = vld [vmem:[%s844] sm:$0xff]
          %v959 = vld [vmem:[%s844 + $0x8] sm:$0xff]
          %v960 = vrcp.pop %v958
          %v961 = vrcp.pop %v959
          %v962 = vld [vmem:[%s859] sm:$0xff]
          %v963 = vld [vmem:[%s859 + $0x8] sm:$0xff]
          %965 = vset.pattern.permute.xlu0 0
          %966 = vperm.xlu0 %965, %v960
          %v967 = vpop.permute.xlu0 %966
          %970 = vset.pattern.permute.xlu0 0
          %971 = vperm.xlu0 %970, %v961
          %v972 = vpop.permute.xlu0 %971
          %v974 = vmul.f32 %v962, %v967
          %v975 = vmul.f32 %v963, %v972
          %978 = vrot.lane.b32.xlu0 %v938, 32
          %v979 = vpop.permute.xlu0 %978
          %980 = vrot.lane.b32.xlu0 %v939, 32
          %v981 = vpop.permute.xlu0 %980
          %986 = vrot.lane.b32.xlu0 %v956, 64
          %v987 = vpop.permute.xlu0 %986
          %988 = vrot.lane.b32.xlu0 %v957, 64
          %v989 = vpop.permute.xlu0 %988
          %994 = vrot.lane.b32.xlu0 %v974, 96
          %v995 = vpop.permute.xlu0 %994
          %996 = vrot.lane.b32.xlu0 %v975, 96
          %v997 = vpop.permute.xlu0 %996
          %v1000 = vsel %vm438, %v920, %v979
          %v1001 = vsel %vm438, %v921, %v981
          %vm1002 = vcmask 523264
          %v1003 = vsel %vm1002, %v1000, %v987
          %v1004 = vsel %vm1002, %v1001, %v989
          %vm1005 = vcmask 785408
          %v1006 = vsel %vm1005, %v1003, %v995
          %v1007 = vsel %vm1005, %v1004, %v997
          %v1008 = vpack.c.bf16 %v1006, %v1006
          %v1009 = vpack.c.bf16 %v1007, %v1007
          %1010 = vst [vmem:[%s380] sm:$0xf] %v1008
          %1011 = vst [vmem:[%s380 + $0x4] sm:$0xf] %v1009
        $region163: #{text_decoder_forward.28} parent=142 // pred_fallthru
          _
        %p1012 = scmp.lt.s32.totalorder %s18, 1
        %s1013 = scalar_select %p1012, %s18, 1
        %s1014 = smul.addr %s1013, 2
        %s1015 = smul.addr %s1014, 4
        %s1016 = scalar_lea.vmem %s3, %s1015
        // Predicated region
        $region164: #{text_decoder_forward.28} parent=142 // pred_check
          %p1017 = pneg %p126
        $region165: #{text_decoder_forward.28} parent=142 // pred_check_branch
          %1019 = sbr.rel (%p1017) target = $region167
        $region166: #{text_decoder_forward.28} parent=142 // pred_region
          _
        $region167: #{text_decoder_forward.28} parent=142 // pred_fallthru
          _
      $region143: #{text_decoder_forward.28} parent=5 // pred_fallthru
        _
      %p1020 = scmp.le.s32.totalorder 2, %s9
      // Predicated region
      $region168: #{text_decoder_forward.28} parent=5 // pred_check
        %p1021 = pneg %p1020
      $region169: #{text_decoder_forward.28} parent=5 // pred_check_branch
        %1023 = sbr.rel (%p1021) target = $region171
      $region170: #{text_decoder_forward.28} parent=5 // pred_region
        %s1024 = ssub.s32 %s9, 2
        // Predicated region
        $region172: #{text_decoder_forward.28} parent=170 // pred_check
          %p1025 = pneg %p132
        $region173: #{text_decoder_forward.28} parent=170 // pred_check_branch
          %1027 = sbr.rel (%p1025) target = $region175
        $region174: #{text_decoder_forward.28} parent=170 // pred_region
          %p1028 = scmp.lt.s32.totalorder %s20, 1
          %s1029 = scalar_select %p1028, %s20, 1
          %s1030 = smul.addr %s1029, 2
          %s1031 = smul.addr %s1030, 4
          %s1032 = scalar_lea.vmem %s3, %s1031
        $region175: #{text_decoder_forward.28} parent=170 // pred_fallthru
          _
      $region171: #{text_decoder_forward.28} parent=5 // pred_fallthru
        _
    $region6: #{text_decoder_forward.28} parent=1 // loop_footer
      %s13 = sadd.s32 1, %s9
    $region7: #{text_decoder_forward.28} parent=1 // loop_footer_branch
      %8 = sbr.rel target = $region3
    $region8: #{text_decoder_forward.28} parent=1 // loop_exit
      _

// kernel: text_decoder_forward.31
$region0: #{text_decoder_forward.31}
  #allocation0 [shape = 'u32[]', space=smem, size = 0x4, offset = 0x4, fixed_abs, tag = 'smem constant byte address 0x4 - core index']
  #allocation1 [shape = 'u32[72,128]{1,0:T(1,128)}', space=vmem, size = 0x9000, scoped, tag = 'internal scratch']
  %s0 = inlined_call_operand.vmem [shape: bf16[32,128], index: 0, kind: input, shape index: {}]
  %s1 = inlined_call_operand.hbm [shape: bf16[128,128], index: 1, kind: input, shape index: {}]
  %s2 = inlined_call_operand.vmem [shape: f32[1,128], index: 2, kind: input, shape index: {}]
  %s3 = inlined_call_operand.vmem [shape: bf16[32,128], index: 3, kind: output, shape index: {}]
  %s4 = sld [smem:[#allocation0]]
  $region26: #{text_decoder_forward.31} parent=0
    _
  %s6 = ssub.s32 1, %s4
  %s7 = scalar_select 0, %s6, %s4
  $region1: #{text_decoder_forward.31} parent=0
    #allocation2 [shape = 'u8[32768]{0}', space=vmem, size = 0x8000, scoped, tag = 'input window, operand 1, single buffered']
    #allocation3 [shape = 's32[1]{0}', space=sflag, size = 0x4, scoped, tag = 'scoped memory for text_decoder_forward.31']
    %8 = vsyncpa [#allocation3], 0
    // Predicated region
    $region2: #{text_decoder_forward.31} parent=1 // pred_check
      _
    $region3: #{text_decoder_forward.31} parent=1 // pred_check_branch
      %10 = sbr.rel (0) target = $region5
    $region4: #{text_decoder_forward.31} parent=1 // pred_region
      _
    $region5: #{text_decoder_forward.31} parent=1 // pred_fallthru
      _
    // Predicated region
    $region6: #{text_decoder_forward.31} parent=1 // pred_check
      _
    $region7: #{text_decoder_forward.31} parent=1 // pred_check_branch
      %12 = sbr.rel (0) target = $region9
    $region8: #{text_decoder_forward.31} parent=1 // pred_region
      %14 = vsyncadd [#allocation3], 0
      %s15 = sshll.u32 %s1, 4
      %s16 = int_to_ptr.hbm [resolvable:$true] %s15
      %s17 = sshll.u32 [#allocation2], 4
      %s18 = int_to_ptr.vmem [resolvable:$true] %s17
      %23 = dma.hbm_to_vmem [thread:$0]  %s16, 1024, %s18, [#allocation3], 64, 64, 4
    $region9: #{text_decoder_forward.31} parent=1 // pred_fallthru
      _
    // Predicated region
    $region10: #{text_decoder_forward.31} parent=1 // pred_check
      _
    $region11: #{text_decoder_forward.31} parent=1 // pred_check_branch
      %25 = sbr.rel (0) target = $region13
    $region12: #{text_decoder_forward.31} parent=1 // pred_region
      _
    $region13: #{text_decoder_forward.31} parent=1 // pred_fallthru
      _
    // Predicated region
    $region14: #{text_decoder_forward.31} parent=1 // pred_check
      _
    $region15: #{text_decoder_forward.31} parent=1 // pred_check_branch
      %27 = sbr.rel (0) target = $region17
    $region16: #{text_decoder_forward.31} parent=1 // pred_region
      %29 = dma.done [#allocation3], 1024
    $region17: #{text_decoder_forward.31} parent=1 // pred_fallthru
      _
    %v30 = vld [vmem:[%s0] sm:$0xf]
    %v31 = vld [vmem:[%s0 + $0x4] sm:$0xf]
    %v32 = vld [vmem:[%s0 + $0x8] sm:$0xf]
    %v33 = vld [vmem:[%s0 + $0xc] sm:$0xf]
    %v34 = vld [vmem:[#allocation2] sm:$0xf]
    %v35 = vld [vmem:[#allocation2 + $0x4] sm:$0xf]
    %v36 = vld [vmem:[#allocation2 + $0x8] sm:$0xf]
    %v37 = vld [vmem:[#allocation2 + $0xc] sm:$0xf]
    %v38 = vld [vmem:[#allocation2 + $0x10] sm:$0xf]
    %v39 = vld [vmem:[#allocation2 + $0x14] sm:$0xf]
    %v40 = vld [vmem:[#allocation2 + $0x18] sm:$0xf]
    %v41 = vld [vmem:[#allocation2 + $0x1c] sm:$0xf]
    %v42 = vld [vmem:[#allocation2 + $0x20] sm:$0xf]
    %v43 = vld [vmem:[#allocation2 + $0x24] sm:$0xf]
    %v44 = vld [vmem:[#allocation2 + $0x28] sm:$0xf]
    %v45 = vld [vmem:[#allocation2 + $0x2c] sm:$0xf]
    %v46 = vld [vmem:[#allocation2 + $0x30] sm:$0xf]
    %v47 = vld [vmem:[#allocation2 + $0x34] sm:$0xf]
    %v48 = vld [vmem:[#allocation2 + $0x38] sm:$0xf]
    %v49 = vld [vmem:[#allocation2 + $0x3c] sm:$0xf]
    %v50 = vld [vmem:[%s2] sm:$0x1]
    %v52 = vperm.slane %v50, 0
    %v58 = vunpack.c.l.b16 %v30
    %v59 = vunpack.c.l.b16 %v31
    %v60 = vunpack.c.l.b16 %v32
    %v61 = vunpack.c.l.b16 %v33
    %v62 = vpack.c.b16 %v59, %v58
    %v63 = vpack.c.b16 %v61, %v60
    %v82 = vunpack.c.l.b16 %v34
    %v83 = vunpack.c.l.b16 %v35
    %v84 = vunpack.c.l.b16 %v36
    %v85 = vunpack.c.l.b16 %v37
    %v86 = vunpack.c.l.b16 %v38
    %v87 = vunpack.c.l.b16 %v39
    %v88 = vunpack.c.l.b16 %v40
    %v89 = vunpack.c.l.b16 %v41
    %v90 = vunpack.c.l.b16 %v42
    %v91 = vunpack.c.l.b16 %v43
    %v92 = vunpack.c.l.b16 %v44
    %v93 = vunpack.c.l.b16 %v45
    %v94 = vunpack.c.l.b16 %v46
    %v95 = vunpack.c.l.b16 %v47
    %v96 = vunpack.c.l.b16 %v48
    %v97 = vunpack.c.l.b16 %v49
    %v98 = vpack.c.b16 %v83, %v82
    %v99 = vpack.c.b16 %v85, %v84
    %v100 = vpack.c.b16 %v87, %v86
    %v101 = vpack.c.b16 %v89, %v88
    %v102 = vpack.c.b16 %v91, %v90
    %v103 = vpack.c.b16 %v93, %v92
    %v104 = vpack.c.b16 %v95, %v94
    %v105 = vpack.c.b16 %v97, %v96
    %114 = vmatpush.bf16.msra.mxu0 %v105
    %115 = vmatpush.bf16.msra.mxu0 %v104
    %116 = vmatpush.bf16.msra.mxu0 %v103
    %117 = vmatpush.bf16.msra.mxu0 %v102
    %118 = vmatpush.bf16.msra.mxu0 %v101
    %119 = vmatpush.bf16.msra.mxu0 %v100
    %120 = vmatpush.bf16.msra.mxu0 %v99
    %121 = vmatpush.bf16.msra.mxu0 %v98
    %122 = vmatmul.bf16.gmra.mxu0 %v62
    %v123 = vpop.f32.mrf.mxu0
    %v124 = vadd.f32 %v52, %v123
    %v125 = vpop.f32.mrf.mxu0
    %v126 = vadd.f32 %v52, %v125
    %127 = vmatmul.bf16.gmra.mxu0 %v63
    %v128 = vpop.f32.mrf.mxu0
    %v129 = vadd.f32 %v52, %v128
    %v130 = vpop.f32.mrf.mxu0
    %v131 = vadd.f32 %v52, %v130
    %132 = vdwg.mxu0
    %v133 = vpack.c.bf16 %v124, %v124
    %v134 = vpack.c.bf16 %v126, %v126
    %v135 = vpack.c.bf16 %v129, %v129
    %v136 = vpack.c.bf16 %v131, %v131
    %137 = vst [vmem:[%s3] sm:$0xf] %v133
    %138 = vst [vmem:[%s3 + $0x4] sm:$0xf] %v134
    %139 = vst [vmem:[%s3 + $0x8] sm:$0xf] %v135
    %140 = vst [vmem:[%s3 + $0xc] sm:$0xf] %v136
    // Predicated region
    $region18: #{text_decoder_forward.31} parent=1 // pred_check
      _
    $region19: #{text_decoder_forward.31} parent=1 // pred_check_branch
      %142 = sbr.rel (0) target = $region21
    $region20: #{text_decoder_forward.31} parent=1 // pred_region
      _
    $region21: #{text_decoder_forward.31} parent=1 // pred_fallthru
      _
    // Predicated region
    $region22: #{text_decoder_forward.31} parent=1 // pred_check
      _
    $region23: #{text_decoder_forward.31} parent=1 // pred_check_branch
      %144 = sbr.rel (0) target = $region25
    $region24: #{text_decoder_forward.31} parent=1 // pred_region
      _
    $region25: #{text_decoder_forward.31} parent=1 // pred_fallthru
      _
    %145 = vsyncpa [#allocation3], 1

// kernel: text_decoder_forward.44
$region0: #{text_decoder_forward.44}
  #allocation0 [shape = 'u32[]', space=smem, size = 0x4, offset = 0x4, fixed_abs, tag = 'smem constant byte address 0x4 - core index']
  #allocation1 [shape = 'u32[72,128]{1,0:T(1,128)}', space=vmem, size = 0x9000, scoped, tag = 'internal scratch']
  %s0 = inlined_call_operand.vmem [shape: bf16[64,128], index: 0, kind: input, shape index: {}]
  %s1 = inlined_call_operand.hbm [shape: bf16[128,256], index: 1, kind: input, shape index: {}]
  %s2 = inlined_call_operand.vmem [shape: f32[1,256], index: 2, kind: input, shape index: {}]
  %s3 = inlined_call_operand.vmem [shape: bf16[64,256], index: 3, kind: output, shape index: {}]
  %s4 = sld [smem:[#allocation0]]
  $region26: #{text_decoder_forward.44} parent=0
    _
  %s6 = ssub.s32 1, %s4
  %s7 = scalar_select 0, %s6, %s4
  $region1: #{text_decoder_forward.44} parent=0
    #allocation2 [shape = 'u8[65536]{0}', space=vmem, size = 0x10000, scoped, tag = 'input window, operand 1, single buffered']
    #allocation3 [shape = 's32[1]{0}', space=sflag, size = 0x4, scoped, tag = 'scoped memory for text_decoder_forward.44']
    %8 = vsyncpa [#allocation3], 0
    // Predicated region
    $region2: #{text_decoder_forward.44} parent=1 // pred_check
      _
    $region3: #{text_decoder_forward.44} parent=1 // pred_check_branch
      %10 = sbr.rel (0) target = $region5
    $region4: #{text_decoder_forward.44} parent=1 // pred_region
      _
    $region5: #{text_decoder_forward.44} parent=1 // pred_fallthru
      _
    // Predicated region
    $region6: #{text_decoder_forward.44} parent=1 // pred_check
      _
    $region7: #{text_decoder_forward.44} parent=1 // pred_check_branch
      %12 = sbr.rel (0) target = $region9
    $region8: #{text_decoder_forward.44} parent=1 // pred_region
      %14 = vsyncadd [#allocation3], 0
      %s15 = sshll.u32 %s1, 4
      %s16 = int_to_ptr.hbm [resolvable:$true] %s15
      %s17 = sshll.u32 [#allocation2], 4
      %s18 = int_to_ptr.vmem [resolvable:$true] %s17
      %23 = dma.hbm_to_vmem [thread:$0]  %s16, 2048, %s18, [#allocation3], 128, 128, 8
    $region9: #{text_decoder_forward.44} parent=1 // pred_fallthru
      _
    // Predicated region
    $region10: #{text_decoder_forward.44} parent=1 // pred_check
      _
    $region11: #{text_decoder_forward.44} parent=1 // pred_check_branch
      %25 = sbr.rel (0) target = $region13
    $region12: #{text_decoder_forward.44} parent=1 // pred_region
      _
    $region13: #{text_decoder_forward.44} parent=1 // pred_fallthru
      _
    // Predicated region
    $region14: #{text_decoder_forward.44} parent=1 // pred_check
      _
    $region15: #{text_decoder_forward.44} parent=1 // pred_check_branch
      %27 = sbr.rel (0) target = $region17
    $region16: #{text_decoder_forward.44} parent=1 // pred_region
      %29 = dma.done [#allocation3], 2048
    $region17: #{text_decoder_forward.44} parent=1 // pred_fallthru
      _
    %v30 = vld [vmem:[%s0] sm:$0xf]
    %v31 = vld [vmem:[%s0 + $0x4] sm:$0xf]
    %v32 = vld [vmem:[%s0 + $0x8] sm:$0xf]
    %v33 = vld [vmem:[%s0 + $0xc] sm:$0xf]
    %v34 = vld [vmem:[%s0 + $0x10] sm:$0xf]
    %v35 = vld [vmem:[%s0 + $0x14] sm:$0xf]
    %v36 = vld [vmem:[%s0 + $0x18] sm:$0xf]
    %v37 = vld [vmem:[%s0 + $0x1c] sm:$0xf]
    %v38 = vld [vmem:[#allocation2] sm:$0xff]
    %v39 = vld [vmem:[#allocation2 + $0x8] sm:$0xff]
    %v40 = vld [vmem:[#allocation2 + $0x10] sm:$0xff]
    %v41 = vld [vmem:[#allocation2 + $0x18] sm:$0xff]
    %v42 = vld [vmem:[#allocation2 + $0x20] sm:$0xff]
    %v43 = vld [vmem:[#allocation2 + $0x28] sm:$0xff]
    %v44 = vld [vmem:[#allocation2 + $0x30] sm:$0xff]
    %v45 = vld [vmem:[#allocation2 + $0x38] sm:$0xff]
    %v46 = vld [vmem:[#allocation2 + $0x40] sm:$0xff]
    %v47 = vld [vmem:[#allocation2 + $0x48] sm:$0xff]
    %v48 = vld [vmem:[#allocation2 + $0x50] sm:$0xff]
    %v49 = vld [vmem:[#allocation2 + $0x58] sm:$0xff]
    %v50 = vld [vmem:[#allocation2 + $0x60] sm:$0xff]
    %v51 = vld [vmem:[#allocation2 + $0x68] sm:$0xff]
    %v52 = vld [vmem:[#allocation2 + $0x70] sm:$0xff]
    %v53 = vld [vmem:[#allocation2 + $0x78] sm:$0xff]
    %v54 = vld [vmem:[%s2] sm:$0x3]
    %v56 = vperm.slane %v54, 0
    %v57 = vperm.slane %v54, 1
    %v68 = vunpack.c.l.b16 %v30
    %v69 = vunpack.c.l.b16 %v31
    %v70 = vunpack.c.l.b16 %v32
    %v71 = vunpack.c.l.b16 %v33
    %v72 = vunpack.c.l.b16 %v34
    %v73 = vunpack.c.l.b16 %v35
    %v74 = vunpack.c.l.b16 %v36
    %v75 = vunpack.c.l.b16 %v37
    %v76 = vpack.c.b16 %v69, %v68
    %v77 = vpack.c.b16 %v71, %v70
    %v78 = vpack.c.b16 %v73, %v72
    %v79 = vpack.c.b16 %v75, %v74
    %v100 = vunpack.c.l.b16 %v38
    %v101 = vunpack.c.h.b16 %v38
    %v102 = vunpack.c.l.b16 %v39
    %v103 = vunpack.c.h.b16 %v39
    %v104 = vunpack.c.l.b16 %v40
    %v105 = vunpack.c.h.b16 %v40
    %v106 = vunpack.c.l.b16 %v41
    %v107 = vunpack.c.h.b16 %v41
    %v108 = vunpack.c.l.b16 %v42
    %v109 = vunpack.c.h.b16 %v42
    %v110 = vunpack.c.l.b16 %v43
    %v111 = vunpack.c.h.b16 %v43
    %v112 = vunpack.c.l.b16 %v44
    %v113 = vunpack.c.h.b16 %v44
    %v114 = vunpack.c.l.b16 %v45
    %v115 = vunpack.c.h.b16 %v45
    %v116 = vunpack.c.l.b16 %v46
    %v117 = vunpack.c.h.b16 %v46
    %v118 = vunpack.c.l.b16 %v47
    %v119 = vunpack.c.h.b16 %v47
    %v120 = vunpack.c.l.b16 %v48
    %v121 = vunpack.c.h.b16 %v48
    %v122 = vunpack.c.l.b16 %v49
    %v123 = vunpack.c.h.b16 %v49
    %v124 = vunpack.c.l.b16 %v50
    %v125 = vunpack.c.h.b16 %v50
    %v126 = vunpack.c.l.b16 %v51
    %v127 = vunpack.c.h.b16 %v51
    %v128 = vunpack.c.l.b16 %v52
    %v129 = vunpack.c.h.b16 %v52
    %v130 = vunpack.c.l.b16 %v53
    %v131 = vunpack.c.h.b16 %v53
    %v132 = vpack.c.b16 %v102, %v100
    %v133 = vpack.c.b16 %v103, %v101
    %v134 = vpack.c.b16 %v106, %v104
    %v135 = vpack.c.b16 %v107, %v105
    %v136 = vpack.c.b16 %v110, %v108
    %v137 = vpack.c.b16 %v111, %v109
    %v138 = vpack.c.b16 %v114, %v112
    %v139 = vpack.c.b16 %v115, %v113
    %v140 = vpack.c.b16 %v118, %v116
    %v141 = vpack.c.b16 %v119, %v117
    %v142 = vpack.c.b16 %v122, %v120
    %v143 = vpack.c.b16 %v123, %v121
    %v144 = vpack.c.b16 %v126, %v124
    %v145 = vpack.c.b16 %v127, %v125
    %v146 = vpack.c.b16 %v130, %v128
    %v147 = vpack.c.b16 %v131, %v129
    %164 = vmatpush.bf16.msra.mxu0 %v146
    %165 = vmatpush.bf16.msra.mxu0 %v144
    %166 = vmatpush.bf16.msra.mxu0 %v142
    %167 = vmatpush.bf16.msra.mxu0 %v140
    %168 = vmatpush.bf16.msra.mxu0 %v138
    %169 = vmatpush.bf16.msra.mxu0 %v136
    %170 = vmatpush.bf16.msra.mxu0 %v134
    %171 = vmatpush.bf16.msra.mxu0 %v132
    %172 = vmatmul.bf16.gmra.mxu0 %v76
    %v173 = vpop.f32.mrf.mxu0
    %v174 = vadd.f32 %v56, %v173
    %v175 = vpop.f32.mrf.mxu0
    %v176 = vadd.f32 %v56, %v175
    %177 = vmatmul.bf16.gmra.mxu0 %v77
    %v178 = vpop.f32.mrf.mxu0
    %v179 = vadd.f32 %v56, %v178
    %v180 = vpop.f32.mrf.mxu0
    %v181 = vadd.f32 %v56, %v180
    %182 = vmatmul.bf16.gmra.mxu0 %v78
    %v183 = vpop.f32.mrf.mxu0
    %v184 = vadd.f32 %v56, %v183
    %v185 = vpop.f32.mrf.mxu0
    %v186 = vadd.f32 %v56, %v185
    %187 = vmatmul.bf16.gmra.mxu0 %v79
    %v188 = vpop.f32.mrf.mxu0
    %v189 = vadd.f32 %v56, %v188
    %v190 = vpop.f32.mrf.mxu0
    %v191 = vadd.f32 %v56, %v190
    %192 = vdwg.mxu0
    %193 = vmatpush.bf16.msra.mxu0 %v147
    %194 = vmatpush.bf16.msra.mxu0 %v145
    %195 = vmatpush.bf16.msra.mxu0 %v143
    %196 = vmatpush.bf16.msra.mxu0 %v141
    %197 = vmatpush.bf16.msra.mxu0 %v139
    %198 = vmatpush.bf16.msra.mxu0 %v137
    %199 = vmatpush.bf16.msra.mxu0 %v135
    %200 = vmatpush.bf16.msra.mxu0 %v133
    %201 = vmatmul.bf16.gmra.mxu0 %v76
    %v202 = vpop.f32.mrf.mxu0
    %v203 = vadd.f32 %v57, %v202
    %v204 = vpop.f32.mrf.mxu0
    %v205 = vadd.f32 %v57, %v204
    %206 = vmatmul.bf16.gmra.mxu0 %v77
    %v207 = vpop.f32.mrf.mxu0
    %v208 = vadd.f32 %v57, %v207
    %v209 = vpop.f32.mrf.mxu0
    %v210 = vadd.f32 %v57, %v209
    %211 = vmatmul.bf16.gmra.mxu0 %v78
    %v212 = vpop.f32.mrf.mxu0
    %v213 = vadd.f32 %v57, %v212
    %v214 = vpop.f32.mrf.mxu0
    %v215 = vadd.f32 %v57, %v214
    %216 = vmatmul.bf16.gmra.mxu0 %v79
    %v217 = vpop.f32.mrf.mxu0
    %v218 = vadd.f32 %v57, %v217
    %v219 = vpop.f32.mrf.mxu0
    %v220 = vadd.f32 %v57, %v219
    %221 = vdwg.mxu0
    %v222 = vpack.c.bf16 %v203, %v174
    %v223 = vpack.c.bf16 %v205, %v176
    %v224 = vpack.c.bf16 %v208, %v179
    %v225 = vpack.c.bf16 %v210, %v181
    %v226 = vpack.c.bf16 %v213, %v184
    %v227 = vpack.c.bf16 %v215, %v186
    %v228 = vpack.c.bf16 %v218, %v189
    %v229 = vpack.c.bf16 %v220, %v191
    %230 = vst [vmem:[%s3] sm:$0xff] %v222
    %231 = vst [vmem:[%s3 + $0x8] sm:$0xff] %v223
    %232 = vst [vmem:[%s3 + $0x10] sm:$0xff] %v224
    %233 = vst [vmem:[%s3 + $0x18] sm:$0xff] %v225
    %234 = vst [vmem:[%s3 + $0x20] sm:$0xff] %v226
    %235 = vst [vmem:[%s3 + $0x28] sm:$0xff] %v227
    %236 = vst [vmem:[%s3 + $0x30] sm:$0xff] %v228
    %237 = vst [vmem:[%s3 + $0x38] sm:$0xff] %v229
    // Predicated region
    $region18: #{text_decoder_forward.44} parent=1 // pred_check
      _
    $region19: #{text_decoder_forward.44} parent=1 // pred_check_branch
      %239 = sbr.rel (0) target = $region21
    $region20: #{text_decoder_forward.44} parent=1 // pred_region
      _
    $region21: #{text_decoder_forward.44} parent=1 // pred_fallthru
      _
    // Predicated region
    $region22: #{text_decoder_forward.44} parent=1 // pred_check
      _
    $region23: #{text_decoder_forward.44} parent=1 // pred_check_branch
      %241 = sbr.rel (0) target = $region25
    $region24: #{text_decoder_forward.44} parent=1 // pred_region
      _
    $region25: #{text_decoder_forward.44} parent=1 // pred_fallthru
      _
    %242 = vsyncpa [#allocation3], 1

// kernel: text_decoder_forward.33
$region0: #{text_decoder_forward.33}
  #allocation0 [shape = 'u32[]', space=smem, size = 0x4, offset = 0x4, fixed_abs, tag = 'smem constant byte address 0x4 - core index']
  #allocation1 [shape = 'u32[72,128]{1,0:T(1,128)}', space=vmem, size = 0x9000, scoped, tag = 'internal scratch']
  #allocation2 [shape = 'f32[4,16,1]{2,1,0:T(8,128)}', space=vmem, size = 0x8000, scoped, tag = 'scratch operand']
  #allocation3 [shape = 'f32[4,16,1]{2,1,0:T(8,128)}', space=vmem, size = 0x8000, scoped, tag = 'scratch operand']
  #allocation4 [shape = 'f32[4,16,32]{2,1,0:T(8,128)}', space=vmem, size = 0x8000, scoped, tag = 'scratch operand']
  %s0 = inlined_call_operand.vmem [shape: bf16[2,16,128], index: 0, kind: input, shape index: {}]
  %s1 = inlined_call_operand.vmem [shape: bf16[2,32,256], index: 1, kind: input, shape index: {}, may-alias: {1,2}]
  %s2 = inlined_call_operand.vmem [shape: bf16[2,32,256], index: 2, kind: input, shape index: {}, may-alias: {1,2}]
  %s3 = inlined_call_operand.vmem [shape: bf16[2,16,128], index: 3, kind: output, shape index: {}]
  %s4 = sld [smem:[#allocation0]]
  $region135: #{text_decoder_forward.33} parent=0
    _
  %s6 = ssub.s32 1, %s4
  %s7 = scalar_select 0, %s6, %s4
  $region1: #{text_decoder_forward.33} parent=0
    #allocation5 [shape = 'u8[16384]{0}', space=vmem, size = 0x4000, scoped, tag = 'input window, operand 1']
    #allocation6 [shape = 'u8[16384]{0}', space=vmem, size = 0x4000, scoped, tag = 'input window, operand 2']
    loop: start=0, step=1, limit=4
    $region2: #{text_decoder_forward.33} parent=1 // loop_pre_header
      _
    $region3: #{text_decoder_forward.33} parent=1 // loop_header
      %s9 = sphi 0, %s13
      %p10 = scmp.ge.s32.totalorder %s9, 4
      %s16 = sphi 0, %s28
      %s17 = sphi 0, %s24
      %s18 = sphi 0, %s16
      %s19 = sphi 0, %s17
      %s20 = sphi 0, %s18
      %s21 = sphi 0, %s19
      %s31 = sphi 0, %s33
      %s34 = sphi 0, %s31
      %s35 = sphi 0, %s34
      %s51 = sphi 0, %s35
      %s59 = sphi 0, %s61
      %s62 = sphi 0, %s59
      %s63 = sphi 0, %s62
      %s79 = sphi 0, %s63
      %s87 = sphi 0, %s89
      %s90 = sphi 0, %s87
      %s91 = sphi 0, %s90
      %s107 = sphi 0, %s91
      %s113 = sphi 0, %s115
      %s116 = sphi 0, %s113
      %s117 = sphi 0, %s116
      %s133 = sphi 0, %s117
    $region4: #{text_decoder_forward.33} parent=1 // loop_header_branch
      %12 = sbr.rel (%p10) target = $region8
    $region5: #{text_decoder_forward.33} parent=1 // loop_body
      %s14 = ssub.s32 %s9, 1
      %s15 = ssub.s32 %s9, 2
      %s22 = sadd.s32 1, %s17
      %p23 = scmp.ge.s32.totalorder %s22, 1
      %s24 = scalar_select %p23, 0, %s22
      %s25 = sadd.s32 1, %s16
      %s26 = scalar_select %p23, %s25, %s16
      %p27 = scmp.ge.s32.totalorder %s26, 2
      %s28 = scalar_select %p27, 0, %s26
      %s29 = ssub.s32 %s16, %s28
      %p30 = scmp.eq.s32.totalorder %s29, 0
      %s32 = sadd.s32 %s31, 1
      %s33 = scalar_select %p30, %s31, %s32
      %p36 = pneg %p30
      %p37 = scmp.eq.s32.totalorder %s9, 1
      %p38 = por %p36, %p37
      %p39 = scmp.ne.s32.totalorder %s31, %s34
      %p40 = scmp.eq.s32.totalorder %s9, 0
      %p41 = por %p39, %p40
      %p42 = scmp.ne.s32.totalorder %s31, %s34
      %p43 = scmp.eq.s32.totalorder %s14, 1
      %p44 = por %p42, %p43
      %p45 = scmp.ne.s32.totalorder %s34, %s35
      %p46 = scmp.eq.s32.totalorder %s14, 0
      %p47 = por %p45, %p46
      %p48 = scmp.ne.s32.totalorder %s34, %s35
      %p49 = scmp.eq.s32.totalorder %s15, 1
      %p50 = por %p48, %p49
      %p52 = scmp.ne.s32.totalorder %s35, %s51
      %p53 = scmp.eq.s32.totalorder %s15, 0
      %p54 = por %p52, %p53
      %s55 = ssub.s32 %s16, %s28
      %s56 = ssub.s32 %s17, %s24
      %s57 = sor.u32 %s55, %s56
      %p58 = scmp.eq.s32.totalorder %s57, 0
      %s60 = sadd.s32 %s59, 1
      %s61 = scalar_select %p58, %s59, %s60
      %p64 = pneg %p58
      %p65 = scmp.eq.s32.totalorder %s9, 1
      %p66 = por %p64, %p65
      %p67 = scmp.ne.s32.totalorder %s59, %s62
      %p68 = scmp.eq.s32.totalorder %s9, 0
      %p69 = por %p67, %p68
      %p70 = scmp.ne.s32.totalorder %s59, %s62
      %p71 = scmp.eq.s32.totalorder %s14, 1
      %p72 = por %p70, %p71
      %p73 = scmp.ne.s32.totalorder %s62, %s63
      %p74 = scmp.eq.s32.totalorder %s14, 0
      %p75 = por %p73, %p74
      %p76 = scmp.ne.s32.totalorder %s62, %s63
      %p77 = scmp.eq.s32.totalorder %s15, 1
      %p78 = por %p76, %p77
      %p80 = scmp.ne.s32.totalorder %s63, %s79
      %p81 = scmp.eq.s32.totalorder %s15, 0
      %p82 = por %p80, %p81
      %s83 = ssub.s32 %s16, %s28
      %s84 = ssub.s32 %s17, %s24
      %s85 = sor.u32 %s83, %s84
      %p86 = scmp.eq.s32.totalorder %s85, 0
      %s88 = sadd.s32 %s87, 1
      %s89 = scalar_select %p86, %s87, %s88
      %p92 = pneg %p86
      %p93 = scmp.eq.s32.totalorder %s9, 1
      %p94 = por %p92, %p93
      %p95 = scmp.ne.s32.totalorder %s87, %s90
      %p96 = scmp.eq.s32.totalorder %s9, 0
      %p97 = por %p95, %p96
      %p98 = scmp.ne.s32.totalorder %s87, %s90
      %p99 = scmp.eq.s32.totalorder %s14, 1
      %p100 = por %p98, %p99
      %p101 = scmp.ne.s32.totalorder %s90, %s91
      %p102 = scmp.eq.s32.totalorder %s14, 0
      %p103 = por %p101, %p102
      %p104 = scmp.ne.s32.totalorder %s90, %s91
      %p105 = scmp.eq.s32.totalorder %s15, 1
      %p106 = por %p104, %p105
      %p108 = scmp.ne.s32.totalorder %s91, %s107
      %p109 = scmp.eq.s32.totalorder %s15, 0
      %p110 = por %p108, %p109
      %s111 = ssub.s32 %s16, %s28
      %p112 = scmp.eq.s32.totalorder %s111, 0
      %s114 = sadd.s32 %s113, 1
      %s115 = scalar_select %p112, %s113, %s114
      %p118 = pneg %p112
      %p119 = scmp.eq.s32.totalorder %s9, 1
      %p120 = por %p118, %p119
      %p121 = scmp.ne.s32.totalorder %s113, %s116
      %p122 = scmp.eq.s32.totalorder %s9, 0
      %p123 = por %p121, %p122
      %p124 = scmp.ne.s32.totalorder %s113, %s116
      %p125 = scmp.eq.s32.totalorder %s14, 1
      %p126 = por %p124, %p125
      %p127 = scmp.ne.s32.totalorder %s116, %s117
      %p128 = scmp.eq.s32.totalorder %s14, 0
      %p129 = por %p127, %p128
      %p130 = scmp.ne.s32.totalorder %s116, %s117
      %p131 = scmp.eq.s32.totalorder %s15, 1
      %p132 = por %p130, %p131
      %p134 = scmp.ne.s32.totalorder %s117, %s133
      %p135 = scmp.eq.s32.totalorder %s15, 0
      %p136 = por %p134, %p135
      %p137 = scmp.le.s32.totalorder 1, %s9
      %p138 = scmp.lt.s32.totalorder %s9, 3
      %p139 = pnand %p137, %p138
      %p140 = pneg %p139
      // Predicated region
      $region9: #{text_decoder_forward.33} parent=5 // pred_check
        _
      $region10: #{text_decoder_forward.33} parent=5 // pred_check_branch
        %142 = sbr.rel (%p139) target = $region12
      $region11: #{text_decoder_forward.33} parent=5 // pred_region
        %s143 = ssub.s32 %s9, 1
      $region12: #{text_decoder_forward.33} parent=5 // pred_fallthru
        _
      %p144 = scmp.lt.s32.totalorder %s9, 2
      // Predicated region
      $region13: #{text_decoder_forward.33} parent=5 // pred_check
        %p145 = pneg %p144
      $region14: #{text_decoder_forward.33} parent=5 // pred_check_branch
        %147 = sbr.rel (%p145) target = $region16
      $region15: #{text_decoder_forward.33} parent=5 // pred_region
        // Predicated region
        $region17: #{text_decoder_forward.33} parent=15 // pred_check
          %p148 = pneg %p41
        $region18: #{text_decoder_forward.33} parent=15 // pred_check_branch
          %150 = sbr.rel (%p148) target = $region20
        $region19: #{text_decoder_forward.33} parent=15 // pred_region
          %p151 = scmp.lt.s32.totalorder %s16, 1
          %s152 = scalar_select %p151, %s16, 1
          %s153 = smul.addr %s152, 2
          %s154 = smul.addr %s153, 4
          %s155 = scalar_lea.vmem %s0, %s154
        $region20: #{text_decoder_forward.33} parent=15 // pred_fallthru
          _
        // Predicated region
        $region21: #{text_decoder_forward.33} parent=15 // pred_check
          %p156 = pneg %p69
        $region22: #{text_decoder_forward.33} parent=15 // pred_check_branch
          %158 = sbr.rel (%p156) target = $region24
        $region23: #{text_decoder_forward.33} parent=15 // pred_region
          %s159 = sand.u32 %s59, 1
          %s160 = sand.u32 %s59, 1
          %s161 = smul.addr %s160, 16
          %s162 = scalar_lea.vmem [#allocation5], %s161
          %s163 = smul.u32 4, %s17
          %s164 = smul.addr %s163, 2
          %s165 = smul.addr %s16, 8
          %s166 = sadd.s32 %s164, %s165
          %s167 = smul.addr %s166, 4
          %s168 = scalar_lea.vmem %s1, %s167
          // Predicated region
          $region25: #{text_decoder_forward.33} parent=23 // pred_check
            _
          $region26: #{text_decoder_forward.33} parent=23 // pred_check_branch
            %170 = sbr.rel (0) target = $region28
          $region27: #{text_decoder_forward.33} parent=23 // pred_region
            // Predicated region
            $region29: #{text_decoder_forward.33} parent=27 // pred_check
              _
            $region30: #{text_decoder_forward.33} parent=27 // pred_check_branch
              %172 = sbr.rel target = $region32
            $region31: #{text_decoder_forward.33} parent=27 // pred_region
              // Predicated region
              $region44: #{text_decoder_forward.33} parent=31 // pred_check
                _
              $region45: #{text_decoder_forward.33} parent=31 // pred_check_branch
                %194 = sbr.rel (0) target = $region47
              $region46: #{text_decoder_forward.33} parent=31 // pred_region
                loop: start=0, step=1, limit=1
                $region48: #{text_decoder_forward.33} parent=46 // loop_pre_header
                  _
                $region49: #{text_decoder_forward.33} parent=46 // loop_header
                  %s196 = sphi 0, %s200
                  %p197 = scmp.ge.s32.totalorder %s196, 1
                  %s201 = sphi %s168, %s168
                  %s202 = sphi %s162, %s162
                $region50: #{text_decoder_forward.33} parent=46 // loop_header_branch
                  %199 = sbr.rel (%p197) target = $region54
                $region51: #{text_decoder_forward.33} parent=46 // loop_body
                  _
                $region52: #{text_decoder_forward.33} parent=46 // loop_footer
                  %s200 = sadd.s32 1, %s196
                $region53: #{text_decoder_forward.33} parent=46 // loop_footer_branch
                  %195 = sbr.rel target = $region49
                $region54: #{text_decoder_forward.33} parent=46 // loop_exit
                  _
                %s204 = ssub.s32 16, 1
                loop: start=0, step=1, limit=1
                $region55: #{text_decoder_forward.33} parent=46 // loop_pre_header
                  _
                $region56: #{text_decoder_forward.33} parent=46 // loop_header
                  %s206 = sphi 0, %s210
                  %p207 = scmp.ge.s32.totalorder %s206, 1
                  %s211 = sphi %s168, %s168
                  %s212 = sphi %s162, %s162
                $region57: #{text_decoder_forward.33} parent=46 // loop_header_branch
                  %209 = sbr.rel (%p207) target = $region61
                $region58: #{text_decoder_forward.33} parent=46 // loop_body
                  %v213 = vld [vmem:[%s211] sm:%s204]
                  %214 = vst [vmem:[%s212] sm:%s204] %v213
                  %v215 = vld [vmem:[%s211 + $0x8] sm:%s204]
                  %216 = vst [vmem:[%s212 + $0x4] sm:%s204] %v215
                  %v217 = vld [vmem:[%s211 + $0x10] sm:%s204]
                  %218 = vst [vmem:[%s212 + $0x8] sm:%s204] %v217
                  %v219 = vld [vmem:[%s211 + $0x18] sm:%s204]
                  %220 = vst [vmem:[%s212 + $0xc] sm:%s204] %v219
                $region59: #{text_decoder_forward.33} parent=46 // loop_footer
                  %s210 = sadd.s32 1, %s206
                $region60: #{text_decoder_forward.33} parent=46 // loop_footer_branch
                  %205 = sbr.rel target = $region56
                $region61: #{text_decoder_forward.33} parent=46 // loop_exit
                  _
              $region47: #{text_decoder_forward.33} parent=31 // pred_fallthru
                _
            $region32: #{text_decoder_forward.33} parent=27 // pred_fallthru
              _
            // Predicated region
            $region33: #{text_decoder_forward.33} parent=27 // pred_check
              _
            $region34: #{text_decoder_forward.33} parent=27 // pred_check_branch
              %174 = sbr.rel (0) target = $region36
            $region35: #{text_decoder_forward.33} parent=27 // pred_region
              %s176 = ssub.s32 16, 1
              loop: start=0, step=1, limit=1
              $region37: #{text_decoder_forward.33} parent=35 // loop_pre_header
                _
              $region38: #{text_decoder_forward.33} parent=35 // loop_header
                %s178 = sphi 0, %s182
                %p179 = scmp.ge.s32.totalorder %s178, 1
                %s183 = sphi %s168, %s168
                %s184 = sphi %s162, %s162
              $region39: #{text_decoder_forward.33} parent=35 // loop_header_branch
                %181 = sbr.rel (%p179) target = $region43
              $region40: #{text_decoder_forward.33} parent=35 // loop_body
                %v185 = vld [vmem:[%s183] sm:%s176]
                %186 = vst [vmem:[%s184] sm:%s176] %v185
                %v187 = vld [vmem:[%s183 + $0x8] sm:%s176]
                %188 = vst [vmem:[%s184 + $0x4] sm:%s176] %v187
                %v189 = vld [vmem:[%s183 + $0x10] sm:%s176]
                %190 = vst [vmem:[%s184 + $0x8] sm:%s176] %v189
                %v191 = vld [vmem:[%s183 + $0x18] sm:%s176]
                %192 = vst [vmem:[%s184 + $0xc] sm:%s176] %v191
              $region41: #{text_decoder_forward.33} parent=35 // loop_footer
                %s182 = sadd.s32 1, %s178
              $region42: #{text_decoder_forward.33} parent=35 // loop_footer_branch
                %177 = sbr.rel target = $region38
              $region43: #{text_decoder_forward.33} parent=35 // loop_exit
                _
            $region36: #{text_decoder_forward.33} parent=27 // pred_fallthru
              _
          $region28: #{text_decoder_forward.33} parent=23 // pred_fallthru
            _
          %221 = vnop
        $region24: #{text_decoder_forward.33} parent=15 // pred_fallthru
          _
        // Predicated region
        $region62: #{text_decoder_forward.33} parent=15 // pred_check
          %p222 = pneg %p97
        $region63: #{text_decoder_forward.33} parent=15 // pred_check_branch
          %224 = sbr.rel (%p222) target = $region65
        $region64: #{text_decoder_forward.33} parent=15 // pred_region
          %s225 = sand.u32 %s87, 1
          %s226 = sand.u32 %s87, 1
          %s227 = smul.addr %s226, 16
          %s228 = scalar_lea.vmem [#allocation6], %s227
          %s229 = smul.u32 4, %s17
          %s230 = smul.addr %s229, 2
          %s231 = sadd.s32 1, %s230
          %s232 = smul.addr %s16, 8
          %s233 = sadd.s32 %s231, %s232
          %s234 = smul.addr %s233, 4
          %s235 = scalar_lea.vmem %s2, %s234
          // Predicated region
          $region66: #{text_decoder_forward.33} parent=64 // pred_check
            _
          $region67: #{text_decoder_forward.33} parent=64 // pred_check_branch
            %237 = sbr.rel (0) target = $region69
          $region68: #{text_decoder_forward.33} parent=64 // pred_region
            // Predicated region
            $region70: #{text_decoder_forward.33} parent=68 // pred_check
              _
            $region71: #{text_decoder_forward.33} parent=68 // pred_check_branch
              %239 = sbr.rel target = $region73
            $region72: #{text_decoder_forward.33} parent=68 // pred_region
              // Predicated region
              $region85: #{text_decoder_forward.33} parent=72 // pred_check
                _
              $region86: #{text_decoder_forward.33} parent=72 // pred_check_branch
                %261 = sbr.rel (0) target = $region88
              $region87: #{text_decoder_forward.33} parent=72 // pred_region
                loop: start=0, step=1, limit=1
                $region89: #{text_decoder_forward.33} parent=87 // loop_pre_header
                  _
                $region90: #{text_decoder_forward.33} parent=87 // loop_header
                  %s263 = sphi 0, %s267
                  %p264 = scmp.ge.s32.totalorder %s263, 1
                  %s268 = sphi %s235, %s235
                  %s269 = sphi %s228, %s228
                $region91: #{text_decoder_forward.33} parent=87 // loop_header_branch
                  %266 = sbr.rel (%p264) target = $region95
                $region92: #{text_decoder_forward.33} parent=87 // loop_body
                  _
                $region93: #{text_decoder_forward.33} parent=87 // loop_footer
                  %s267 = sadd.s32 1, %s263
                $region94: #{text_decoder_forward.33} parent=87 // loop_footer_branch
                  %262 = sbr.rel target = $region90
                $region95: #{text_decoder_forward.33} parent=87 // loop_exit
                  _
                %s271 = ssub.s32 16, 1
                loop: start=0, step=1, limit=1
                $region96: #{text_decoder_forward.33} parent=87 // loop_pre_header
                  _
                $region97: #{text_decoder_forward.33} parent=87 // loop_header
                  %s273 = sphi 0, %s277
                  %p274 = scmp.ge.s32.totalorder %s273, 1
                  %s278 = sphi %s235, %s235
                  %s279 = sphi %s228, %s228
                $region98: #{text_decoder_forward.33} parent=87 // loop_header_branch
                  %276 = sbr.rel (%p274) target = $region102
                $region99: #{text_decoder_forward.33} parent=87 // loop_body
                  %v280 = vld [vmem:[%s278] sm:%s271]
                  %281 = vst [vmem:[%s279] sm:%s271] %v280
                  %v282 = vld [vmem:[%s278 + $0x8] sm:%s271]
                  %283 = vst [vmem:[%s279 + $0x4] sm:%s271] %v282
                  %v284 = vld [vmem:[%s278 + $0x10] sm:%s271]
                  %285 = vst [vmem:[%s279 + $0x8] sm:%s271] %v284
                  %v286 = vld [vmem:[%s278 + $0x18] sm:%s271]
                  %287 = vst [vmem:[%s279 + $0xc] sm:%s271] %v286
                $region100: #{text_decoder_forward.33} parent=87 // loop_footer
                  %s277 = sadd.s32 1, %s273
                $region101: #{text_decoder_forward.33} parent=87 // loop_footer_branch
                  %272 = sbr.rel target = $region97
                $region102: #{text_decoder_forward.33} parent=87 // loop_exit
                  _
              $region88: #{text_decoder_forward.33} parent=72 // pred_fallthru
                _
            $region73: #{text_decoder_forward.33} parent=68 // pred_fallthru
              _
            // Predicated region
            $region74: #{text_decoder_forward.33} parent=68 // pred_check
              _
            $region75: #{text_decoder_forward.33} parent=68 // pred_check_branch
              %241 = sbr.rel (0) target = $region77
            $region76: #{text_decoder_forward.33} parent=68 // pred_region
              %s243 = ssub.s32 16, 1
              loop: start=0, step=1, limit=1
              $region78: #{text_decoder_forward.33} parent=76 // loop_pre_header
                _
              $region79: #{text_decoder_forward.33} parent=76 // loop_header
                %s245 = sphi 0, %s249
                %p246 = scmp.ge.s32.totalorder %s245, 1
                %s250 = sphi %s235, %s235
                %s251 = sphi %s228, %s228
              $region80: #{text_decoder_forward.33} parent=76 // loop_header_branch
                %248 = sbr.rel (%p246) target = $region84
              $region81: #{text_decoder_forward.33} parent=76 // loop_body
                %v252 = vld [vmem:[%s250] sm:%s243]
                %253 = vst [vmem:[%s251] sm:%s243] %v252
                %v254 = vld [vmem:[%s250 + $0x8] sm:%s243]
                %255 = vst [vmem:[%s251 + $0x4] sm:%s243] %v254
                %v256 = vld [vmem:[%s250 + $0x10] sm:%s243]
                %257 = vst [vmem:[%s251 + $0x8] sm:%s243] %v256
                %v258 = vld [vmem:[%s250 + $0x18] sm:%s243]
                %259 = vst [vmem:[%s251 + $0xc] sm:%s243] %v258
              $region82: #{text_decoder_forward.33} parent=76 // loop_footer
                %s249 = sadd.s32 1, %s245
              $region83: #{text_decoder_forward.33} parent=76 // loop_footer_branch
                %244 = sbr.rel target = $region79
              $region84: #{text_decoder_forward.33} parent=76 // loop_exit
                _
            $region77: #{text_decoder_forward.33} parent=68 // pred_fallthru
              _
          $region69: #{text_decoder_forward.33} parent=64 // pred_fallthru
            _
          %288 = vnop
        $region65: #{text_decoder_forward.33} parent=15 // pred_fallthru
          _
      $region16: #{text_decoder_forward.33} parent=5 // pred_fallthru
        _
      %p289 = scmp.le.s32.totalorder 1, %s9
      %p290 = scmp.lt.s32.totalorder %s9, 3
      %p291 = pnand %p289, %p290
      %p292 = pneg %p291
      // Predicated region
      $region103: #{text_decoder_forward.33} parent=5 // pred_check
        _
      $region104: #{text_decoder_forward.33} parent=5 // pred_check_branch
        %294 = sbr.rel (%p291) target = $region106
      $region105: #{text_decoder_forward.33} parent=5 // pred_region
        %s295 = ssub.s32 %s9, 1
        %s296 = sand.u32 %s62, 1
        %s297 = sand.u32 %s62, 1
        %s298 = smul.addr %s297, 16
        %s299 = scalar_lea.vmem [#allocation5], %s298
        // Predicated region
        $region107: #{text_decoder_forward.33} parent=105 // pred_check
          %p300 = pneg %p75
        $region108: #{text_decoder_forward.33} parent=105 // pred_check_branch
          %302 = sbr.rel (%p300) target = $region110
        $region109: #{text_decoder_forward.33} parent=105 // pred_region
          _
        $region110: #{text_decoder_forward.33} parent=105 // pred_fallthru
          _
        %s303 = sand.u32 %s90, 1
        %s304 = sand.u32 %s90, 1
        %s305 = smul.addr %s304, 16
        %s306 = scalar_lea.vmem [#allocation6], %s305
        // Predicated region
        $region111: #{text_decoder_forward.33} parent=105 // pred_check
          %p307 = pneg %p103
        $region112: #{text_decoder_forward.33} parent=105 // pred_check_branch
          %309 = sbr.rel (%p307) target = $region114
        $region113: #{text_decoder_forward.33} parent=105 // pred_region
          _
        $region114: #{text_decoder_forward.33} parent=105 // pred_fallthru
          _
        %p310 = scmp.lt.s32.totalorder %s18, 1
        %s311 = scalar_select %p310, %s18, 1
        %s312 = smul.addr %s311, 2
        %s313 = smul.addr %s312, 4
        %s314 = scalar_lea.vmem %s0, %s313
        %p315 = pneg %p47
        %p316 = pneg %p44
        %s317 = sand.u32 %s62, 1
        %s318 = sand.u32 %s62, 1
        %s319 = smul.addr %s318, 16
        %s320 = scalar_lea.vmem [#allocation5], %s319
        %p321 = pneg %p75
        %p322 = pneg %p72
        %s323 = sand.u32 %s90, 1
        %s324 = sand.u32 %s90, 1
        %s325 = smul.addr %s324, 16
        %s326 = scalar_lea.vmem [#allocation6], %s325
        %p327 = pneg %p103
        %p328 = pneg %p100
        %p329 = pneg %p129
        %p330 = pneg %p126
        %p331 = scmp.lt.s32.totalorder %s18, 1
        %s332 = scalar_select %p331, %s18, 1
        %s333 = smul.addr %s332, 2
        %s334 = smul.addr %s333, 4
        %s335 = scalar_lea.vmem %s3, %s334
        %p336 = scmp.lt.s32.totalorder %s18, 1
        %s337 = scalar_select %p336, %s18, 1
        %s338 = smul.addr %s337, 2
        %s339 = smul.addr %s338, 4
        %s340 = scalar_lea.vmem %s0, %s339
        %s341 = smul.u32 4, %s19
        %s342 = smul.u32 4, %s19
        %p343 = scmp.lt.s32.totalorder %s18, 1
        %s344 = scalar_select %p343, %s18, 1
        %s345 = smul.addr %s344, 2
        %s346 = smul.addr %s345, 4
        %s347 = scalar_lea.vmem %s3, %s346
        %p349 = scmp.eq.s32.totalorder %s19, 0
        // Predicated region
        $region115: #{text_decoder_forward.33} parent=105 // pred_check
          %p350 = pneg %p349
        $region116: #{text_decoder_forward.33} parent=105 // pred_check_branch
          %352 = sbr.rel (%p350) target = $region118
        $region117: #{text_decoder_forward.33} parent=105 // pred_region
          %vm353 = vcmask 7168
          %354 = vst.msk [vmem:[#allocation2] sm:$0xff] %vm353, -inf
          %355 = vst.msk [vmem:[#allocation2 + $0x8] sm:$0xff] %vm353, -inf
          %356 = vst.msk [vmem:[#allocation2 + $0x10] sm:$0xff] %vm353, -inf
          %357 = vst.msk [vmem:[#allocation2 + $0x18] sm:$0xff] %vm353, -inf
          %358 = vst.msk [vmem:[#allocation2 + $0x20] sm:$0xff] %vm353, -inf
          %359 = vst.msk [vmem:[#allocation2 + $0x28] sm:$0xff] %vm353, -inf
          %360 = vst.msk [vmem:[#allocation2 + $0x30] sm:$0xff] %vm353, -inf
          %361 = vst.msk [vmem:[#allocation2 + $0x38] sm:$0xff] %vm353, -inf
          %362 = vst.msk [vmem:[#allocation3] sm:$0xff] %vm353, 0.0
          %363 = vst.msk [vmem:[#allocation3 + $0x8] sm:$0xff] %vm353, 0.0
          %364 = vst.msk [vmem:[#allocation3 + $0x10] sm:$0xff] %vm353, 0.0
          %365 = vst.msk [vmem:[#allocation3 + $0x18] sm:$0xff] %vm353, 0.0
          %366 = vst.msk [vmem:[#allocation3 + $0x20] sm:$0xff] %vm353, 0.0
          %367 = vst.msk [vmem:[#allocation3 + $0x28] sm:$0xff] %vm353, 0.0
          %368 = vst.msk [vmem:[#allocation3 + $0x30] sm:$0xff] %vm353, 0.0
          %369 = vst.msk [vmem:[#allocation3 + $0x38] sm:$0xff] %vm353, 0.0
          %vm370 = vcmask 261120
          %371 = vst.msk [vmem:[#allocation4] sm:$0xff] %vm370, 0.0
          %372 = vst.msk [vmem:[#allocation4 + $0x8] sm:$0xff] %vm370, 0.0
          %373 = vst.msk [vmem:[#allocation4 + $0x10] sm:$0xff] %vm370, 0.0
          %374 = vst.msk [vmem:[#allocation4 + $0x18] sm:$0xff] %vm370, 0.0
          %375 = vst.msk [vmem:[#allocation4 + $0x20] sm:$0xff] %vm370, 0.0
          %376 = vst.msk [vmem:[#allocation4 + $0x28] sm:$0xff] %vm370, 0.0
          %377 = vst.msk [vmem:[#allocation4 + $0x30] sm:$0xff] %vm370, 0.0
          %378 = vst.msk [vmem:[#allocation4 + $0x38] sm:$0xff] %vm370, 0.0
        $region118: #{text_decoder_forward.33} parent=105 // pred_fallthru
          _
        %v379 = vld [vmem:[%s340] sm:$0xf]
        %v380 = vld [vmem:[%s340 + $0x4] sm:$0xf]
        %v381 = vld [vmem:[%s299] sm:$0xf]
        %v382 = vld [vmem:[%s299 + $0x4] sm:$0xf]
        %v383 = vld [vmem:[%s299 + $0x8] sm:$0xf]
        %v384 = vld [vmem:[%s299 + $0xc] sm:$0xf]
        %v385 = vld [vmem:[%s306] sm:$0xf]
        %v386 = vld [vmem:[%s306 + $0x4] sm:$0xf]
        %v387 = vld [vmem:[%s306 + $0x8] sm:$0xf]
        %v388 = vld [vmem:[%s306 + $0xc] sm:$0xf]
        %v391 = vunpack.c.l.b16 %v379
        %v392 = vunpack.c.l.b16 %v380
        %v393 = vpack.c.b16 %v392, %v391
        %v398 = vunpack.c.l.b16 %v381
        %v399 = vunpack.c.l.b16 %v382
        %v400 = vunpack.c.l.b16 %v383
        %v401 = vunpack.c.l.b16 %v384
        %v402 = vpack.c.b16 %v399, %v398
        %v403 = vpack.c.b16 %v401, %v400
        %vm404 = vcmask 261120
        %v406 = vsel %vm404, %v393, 0
        %v409 = vsel %vm404, %v402, 0
        %v412 = vsel %vm404, %v403, 0
        %414 = vmatpush.bf16.xpose.msra.mxu0 0
        %415 = vmatpush.bf16.xpose.msra.mxu0 0
        %416 = vmatpush.bf16.xpose.msra.mxu0 0
        %417 = vmatpush.bf16.xpose.msra.mxu0 0
        %418 = vmatpush.bf16.xpose.msra.mxu0 0
        %419 = vmatpush.bf16.xpose.msra.mxu0 0
        %420 = vmatpush.bf16.xpose.msra.mxu0 %v412
        %421 = vmatpush.bf16.xpose.msra.mxu0 %v409
        %422 = vmatmul.bf16.gmra.mxu0 %v406
        %v423 = vpop.f32.mrf.mxu0
        %v424 = vadd.f32 0.0, %v423
        %v425 = vpop.f32.mrf.mxu0
        %v426 = vadd.f32 0.0, %v425
        %427 = vdwg.mxu0
        %v428 = vld [vmem:[#allocation2] sm:$0xff]
        %v429 = vld [vmem:[#allocation2 + $0x8] sm:$0xff]
        %v430 = vsel %vm404, %v424, -inf
        %431 = vmax.xlane.f32.xlu0 %v430
        %v432 = vpop.xlane.xlu0 %431
        %v433 = vsel %vm404, %v426, -inf
        %434 = vmax.xlane.f32.xlu0 %v433
        %v435 = vpop.xlane.xlu0 %434
        %v436 = vmax.f32 %v428, %v432
        %v437 = vmax.f32 %v429, %v435
        %v438 = vsub.f32 %v428, %v436
        %v439 = vsub.f32 %v429, %v437
        %v440 = vmul.f32 %v438, 1.442695
        %v441 = vpow.pop %v440
        %v442 = vmul.f32 %v439, 1.442695
        %v443 = vpow.pop %v442
        %445 = vset.pattern.permute.xlu0 0
        %446 = vperm.xlu0 %445, %v436
        %v447 = vpop.permute.xlu0 %446
        %450 = vset.pattern.permute.xlu0 0
        %451 = vperm.xlu0 %450, %v437
        %v452 = vpop.permute.xlu0 %451
        %v454 = vsub.f32 %v424, %v447
        %v455 = vsub.f32 %v426, %v452
        %v456 = vmul.f32 %v454, 1.442695
        %v457 = vpow.pop %v456
        %v458 = vmul.f32 %v455, 1.442695
        %v459 = vpow.pop %v458
        %v460 = vld [vmem:[#allocation3] sm:$0xff]
        %v461 = vld [vmem:[#allocation3 + $0x8] sm:$0xff]
        %v462 = vmul.f32 %v441, %v460
        %v463 = vmul.f32 %v443, %v461
        %v464 = vsel %vm404, %v457, 0.0
        %465 = vadd.xlane.f32.xlu0 %v464
        %v466 = vpop.xlane.xlu0 %465
        %v467 = vsel %vm404, %v459, 0.0
        %468 = vadd.xlane.f32.xlu0 %v467
        %v469 = vpop.xlane.xlu0 %468
        %v470 = vadd.f32 %v462, %v466
        %v471 = vadd.f32 %v463, %v469
        %vm472 = vcmask 7168
        %473 = vst.msk [vmem:[#allocation3] sm:$0xff] %vm472, %v470
        %474 = vst.msk [vmem:[#allocation3 + $0x8] sm:$0xff] %vm472, %v471
        %v475 = vld [vmem:[#allocation4] sm:$0xff]
        %v476 = vld [vmem:[#allocation4 + $0x8] sm:$0xff]
        %478 = vset.pattern.permute.xlu0 0
        %479 = vperm.xlu0 %478, %v441
        %v480 = vpop.permute.xlu0 %479
        %483 = vset.pattern.permute.xlu0 0
        %484 = vperm.xlu0 %483, %v443
        %v485 = vpop.permute.xlu0 %484
        %v487 = vmul.f32 %v480, %v475
        %v488 = vmul.f32 %v485, %v476
        %v489 = vpack.c.bf16 %v459, %v457
        %v494 = vunpack.c.l.b16 %v385
        %v495 = vunpack.c.l.b16 %v386
        %v496 = vunpack.c.l.b16 %v387
        %v497 = vunpack.c.l.b16 %v388
        %v498 = vpack.c.b16 %v495, %v494
        %v499 = vpack.c.b16 %v497, %v496
        %v503 = vsel %vm404, %v489, 0
        %505 = vmatpush.bf16.msra.mxu0 0
        %506 = vmatpush.bf16.msra.mxu0 0
        %507 = vmatpush.bf16.msra.mxu0 0
        %508 = vmatpush.bf16.msra.mxu0 0
        %509 = vmatpush.bf16.msra.mxu0 0
        %510 = vmatpush.bf16.msra.mxu0 0
        %511 = vmatpush.bf16.msra.mxu0 %v499
        %512 = vmatpush.bf16.msra.mxu0 %v498
        %513 = vmatmul.bf16.gmra.mxu0 %v503
        %v514 = vpop.f32.mrf.mxu0
        %v515 = vadd.f32 0.0, %v514
        %v516 = vpop.f32.mrf.mxu0
        %v517 = vadd.f32 0.0, %v516
        %518 = vdwg.mxu0
        %v519 = vadd.f32 %v487, %v515
        %v520 = vadd.f32 %v488, %v517
        %521 = vst.msk [vmem:[#allocation4] sm:$0xff] %vm404, %v519
        %522 = vst.msk [vmem:[#allocation4 + $0x8] sm:$0xff] %vm404, %v520
        %523 = vst.msk [vmem:[#allocation2] sm:$0xff] %vm472, %v436
        %524 = vst.msk [vmem:[#allocation2 + $0x8] sm:$0xff] %vm472, %v437
        %525 = vrot.lane.b32.xlu0 %v393, 96
        %v526 = vpop.permute.xlu0 %525
        %527 = vrot.lane.b32.xlu0 %v402, 96
        %v528 = vpop.permute.xlu0 %527
        %529 = vrot.lane.b32.xlu0 %v403, 96
        %v530 = vpop.permute.xlu0 %529
        %v532 = vsel %vm404, %v526, 0
        %v535 = vsel %vm404, %v528, 0
        %v538 = vsel %vm404, %v530, 0
        %540 = vmatpush.bf16.xpose.msra.mxu0 0
        %541 = vmatpush.bf16.xpose.msra.mxu0 0
        %542 = vmatpush.bf16.xpose.msra.mxu0 0
        %543 = vmatpush.bf16.xpose.msra.mxu0 0
        %544 = vmatpush.bf16.xpose.msra.mxu0 0
        %545 = vmatpush.bf16.xpose.msra.mxu0 0
        %546 = vmatpush.bf16.xpose.msra.mxu0 %v538
        %547 = vmatpush.bf16.xpose.msra.mxu0 %v535
        %548 = vmatmul.bf16.gmra.mxu0 %v532
        %v549 = vpop.f32.mrf.mxu0
        %v550 = vadd.f32 0.0, %v549
        %v551 = vpop.f32.mrf.mxu0
        %v552 = vadd.f32 0.0, %v551
        %553 = vdwg.mxu0
        %s554 = scalar_lea.vmem [#allocation2], 16
        %v555 = vld [vmem:[%s554] sm:$0xff]
        %v556 = vld [vmem:[%s554 + $0x8] sm:$0xff]
        %v557 = vsel %vm404, %v550, -inf
        %558 = vmax.xlane.f32.xlu0 %v557
        %v559 = vpop.xlane.xlu0 %558
        %v560 = vsel %vm404, %v552, -inf
        %561 = vmax.xlane.f32.xlu0 %v560
        %v562 = vpop.xlane.xlu0 %561
        %v563 = vmax.f32 %v555, %v559
        %v564 = vmax.f32 %v556, %v562
        %v565 = vsub.f32 %v555, %v563
        %v566 = vsub.f32 %v556, %v564
        %v567 = vmul.f32 %v565, 1.442695
        %v568 = vpow.pop %v567
        %v569 = vmul.f32 %v566, 1.442695
        %v570 = vpow.pop %v569
        %572 = vset.pattern.permute.xlu0 0
        %573 = vperm.xlu0 %572, %v563
        %v574 = vpop.permute.xlu0 %573
        %577 = vset.pattern.permute.xlu0 0
        %578 = vperm.xlu0 %577, %v564
        %v579 = vpop.permute.xlu0 %578
        %v581 = vsub.f32 %v550, %v574
        %v582 = vsub.f32 %v552, %v579
        %v583 = vmul.f32 %v581, 1.442695
        %v584 = vpow.pop %v583
        %v585 = vmul.f32 %v582, 1.442695
        %v586 = vpow.pop %v585
        %s587 = scalar_lea.vmem [#allocation3], 16
        %v588 = vld [vmem:[%s587] sm:$0xff]
        %v589 = vld [vmem:[%s587 + $0x8] sm:$0xff]
        %v590 = vmul.f32 %v568, %v588
        %v591 = vmul.f32 %v570, %v589
        %v592 = vsel %vm404, %v584, 0.0
        %593 = vadd.xlane.f32.xlu0 %v592
        %v594 = vpop.xlane.xlu0 %593
        %v595 = vsel %vm404, %v586, 0.0
        %596 = vadd.xlane.f32.xlu0 %v595
        %v597 = vpop.xlane.xlu0 %596
        %v598 = vadd.f32 %v590, %v594
        %v599 = vadd.f32 %v591, %v597
        %600 = vst.msk [vmem:[%s587] sm:$0xff] %vm472, %v598
        %601 = vst.msk [vmem:[%s587 + $0x8] sm:$0xff] %vm472, %v599
        %s602 = scalar_lea.vmem [#allocation4], 16
        %v603 = vld [vmem:[%s602] sm:$0xff]
        %v604 = vld [vmem:[%s602 + $0x8] sm:$0xff]
        %606 = vset.pattern.permute.xlu0 0
        %607 = vperm.xlu0 %606, %v568
        %v608 = vpop.permute.xlu0 %607
        %611 = vset.pattern.permute.xlu0 0
        %612 = vperm.xlu0 %611, %v570
        %v613 = vpop.permute.xlu0 %612
        %v615 = vmul.f32 %v608, %v603
        %v616 = vmul.f32 %v613, %v604
        %v617 = vpack.c.bf16 %v586, %v584
        %618 = vrot.lane.b32.xlu0 %v498, 96
        %v619 = vpop.permute.xlu0 %618
        %620 = vrot.lane.b32.xlu0 %v499, 96
        %v621 = vpop.permute.xlu0 %620
        %v625 = vsel %vm404, %v617, 0
        %627 = vmatpush.bf16.msra.mxu0 0
        %628 = vmatpush.bf16.msra.mxu0 0
        %629 = vmatpush.bf16.msra.mxu0 0
        %630 = vmatpush.bf16.msra.mxu0 0
        %631 = vmatpush.bf16.msra.mxu0 0
        %632 = vmatpush.bf16.msra.mxu0 0
        %633 = vmatpush.bf16.msra.mxu0 %v621
        %634 = vmatpush.bf16.msra.mxu0 %v619
        %635 = vmatmul.bf16.gmra.mxu0 %v625
        %v636 = vpop.f32.mrf.mxu0
        %v637 = vadd.f32 0.0, %v636
        %v638 = vpop.f32.mrf.mxu0
        %v639 = vadd.f32 0.0, %v638
        %640 = vdwg.mxu0
        %v641 = vadd.f32 %v615, %v637
        %v642 = vadd.f32 %v616, %v639
        %643 = vst.msk [vmem:[%s602] sm:$0xff] %vm404, %v641
        %644 = vst.msk [vmem:[%s602 + $0x8] sm:$0xff] %vm404, %v642
        %645 = vst.msk [vmem:[%s554] sm:$0xff] %vm472, %v563
        %646 = vst.msk [vmem:[%s554 + $0x8] sm:$0xff] %vm472, %v564
        %647 = vrot.lane.b32.xlu0 %v393, 64
        %v648 = vpop.permute.xlu0 %647
        %649 = vrot.lane.b32.xlu0 %v402, 64
        %v650 = vpop.permute.xlu0 %649
        %651 = vrot.lane.b32.xlu0 %v403, 64
        %v652 = vpop.permute.xlu0 %651
        %v654 = vsel %vm404, %v648, 0
        %v657 = vsel %vm404, %v650, 0
        %v660 = vsel %vm404, %v652, 0
        %662 = vmatpush.bf16.xpose.msra.mxu0 0
        %663 = vmatpush.bf16.xpose.msra.mxu0 0
        %664 = vmatpush.bf16.xpose.msra.mxu0 0
        %665 = vmatpush.bf16.xpose.msra.mxu0 0
        %666 = vmatpush.bf16.xpose.msra.mxu0 0
        %667 = vmatpush.bf16.xpose.msra.mxu0 0
        %668 = vmatpush.bf16.xpose.msra.mxu0 %v660
        %669 = vmatpush.bf16.xpose.msra.mxu0 %v657
        %670 = vmatmul.bf16.gmra.mxu0 %v654
        %v671 = vpop.f32.mrf.mxu0
        %v672 = vadd.f32 0.0, %v671
        %v673 = vpop.f32.mrf.mxu0
        %v674 = vadd.f32 0.0, %v673
        %675 = vdwg.mxu0
        %s676 = scalar_lea.vmem [#allocation2], 32
        %v677 = vld [vmem:[%s676] sm:$0xff]
        %v678 = vld [vmem:[%s676 + $0x8] sm:$0xff]
        %v679 = vsel %vm404, %v672, -inf
        %680 = vmax.xlane.f32.xlu0 %v679
        %v681 = vpop.xlane.xlu0 %680
        %v682 = vsel %vm404, %v674, -inf
        %683 = vmax.xlane.f32.xlu0 %v682
        %v684 = vpop.xlane.xlu0 %683
        %v685 = vmax.f32 %v677, %v681
        %v686 = vmax.f32 %v678, %v684
        %v687 = vsub.f32 %v677, %v685
        %v688 = vsub.f32 %v678, %v686
        %v689 = vmul.f32 %v687, 1.442695
        %v690 = vpow.pop %v689
        %v691 = vmul.f32 %v688, 1.442695
        %v692 = vpow.pop %v691
        %694 = vset.pattern.permute.xlu0 0
        %695 = vperm.xlu0 %694, %v685
        %v696 = vpop.permute.xlu0 %695
        %699 = vset.pattern.permute.xlu0 0
        %700 = vperm.xlu0 %699, %v686
        %v701 = vpop.permute.xlu0 %700
        %v703 = vsub.f32 %v672, %v696
        %v704 = vsub.f32 %v674, %v701
        %v705 = vmul.f32 %v703, 1.442695
        %v706 = vpow.pop %v705
        %v707 = vmul.f32 %v704, 1.442695
        %v708 = vpow.pop %v707
        %s709 = scalar_lea.vmem [#allocation3], 32
        %v710 = vld [vmem:[%s709] sm:$0xff]
        %v711 = vld [vmem:[%s709 + $0x8] sm:$0xff]
        %v712 = vmul.f32 %v690, %v710
        %v713 = vmul.f32 %v692, %v711
        %v714 = vsel %vm404, %v706, 0.0
        %715 = vadd.xlane.f32.xlu0 %v714
        %v716 = vpop.xlane.xlu0 %715
        %v717 = vsel %vm404, %v708, 0.0
        %718 = vadd.xlane.f32.xlu0 %v717
        %v719 = vpop.xlane.xlu0 %718
        %v720 = vadd.f32 %v712, %v716
        %v721 = vadd.f32 %v713, %v719
        %722 = vst.msk [vmem:[%s709] sm:$0xff] %vm472, %v720
        %723 = vst.msk [vmem:[%s709 + $0x8] sm:$0xff] %vm472, %v721
        %s724 = scalar_lea.vmem [#allocation4], 32
        %v725 = vld [vmem:[%s724] sm:$0xff]
        %v726 = vld [vmem:[%s724 + $0x8] sm:$0xff]
        %728 = vset.pattern.permute.xlu0 0
        %729 = vperm.xlu0 %728, %v690
        %v730 = vpop.permute.xlu0 %729
        %733 = vset.pattern.permute.xlu0 0
        %734 = vperm.xlu0 %733, %v692
        %v735 = vpop.permute.xlu0 %734
        %v737 = vmul.f32 %v730, %v725
        %v738 = vmul.f32 %v735, %v726
        %v739 = vpack.c.bf16 %v708, %v706
        %740 = vrot.lane.b32.xlu0 %v498, 64
        %v741 = vpop.permute.xlu0 %740
        %742 = vrot.lane.b32.xlu0 %v499, 64
        %v743 = vpop.permute.xlu0 %742
        %v747 = vsel %vm404, %v739, 0
        %749 = vmatpush.bf16.msra.mxu0 0
        %750 = vmatpush.bf16.msra.mxu0 0
        %751 = vmatpush.bf16.msra.mxu0 0
        %752 = vmatpush.bf16.msra.mxu0 0
        %753 = vmatpush.bf16.msra.mxu0 0
        %754 = vmatpush.bf16.msra.mxu0 0
        %755 = vmatpush.bf16.msra.mxu0 %v743
        %756 = vmatpush.bf16.msra.mxu0 %v741
        %757 = vmatmul.bf16.gmra.mxu0 %v747
        %v758 = vpop.f32.mrf.mxu0
        %v759 = vadd.f32 0.0, %v758
        %v760 = vpop.f32.mrf.mxu0
        %v761 = vadd.f32 0.0, %v760
        %762 = vdwg.mxu0
        %v763 = vadd.f32 %v737, %v759
        %v764 = vadd.f32 %v738, %v761
        %765 = vst.msk [vmem:[%s724] sm:$0xff] %vm404, %v763
        %766 = vst.msk [vmem:[%s724 + $0x8] sm:$0xff] %vm404, %v764
        %767 = vst.msk [vmem:[%s676] sm:$0xff] %vm472, %v685
        %768 = vst.msk [vmem:[%s676 + $0x8] sm:$0xff] %vm472, %v686
        %769 = vrot.lane.b32.xlu0 %v393, 32
        %v770 = vpop.permute.xlu0 %769
        %771 = vrot.lane.b32.xlu0 %v402, 32
        %v772 = vpop.permute.xlu0 %771
        %773 = vrot.lane.b32.xlu0 %v403, 32
        %v774 = vpop.permute.xlu0 %773
        %v776 = vsel %vm404, %v770, 0
        %v779 = vsel %vm404, %v772, 0
        %v782 = vsel %vm404, %v774, 0
        %784 = vmatpush.bf16.xpose.msra.mxu0 0
        %785 = vmatpush.bf16.xpose.msra.mxu0 0
        %786 = vmatpush.bf16.xpose.msra.mxu0 0
        %787 = vmatpush.bf16.xpose.msra.mxu0 0
        %788 = vmatpush.bf16.xpose.msra.mxu0 0
        %789 = vmatpush.bf16.xpose.msra.mxu0 0
        %790 = vmatpush.bf16.xpose.msra.mxu0 %v782
        %791 = vmatpush.bf16.xpose.msra.mxu0 %v779
        %792 = vmatmul.bf16.gmra.mxu0 %v776
        %v793 = vpop.f32.mrf.mxu0
        %v794 = vadd.f32 0.0, %v793
        %v795 = vpop.f32.mrf.mxu0
        %v796 = vadd.f32 0.0, %v795
        %797 = vdwg.mxu0
        %s798 = scalar_lea.vmem [#allocation2], 48
        %v799 = vld [vmem:[%s798] sm:$0xff]
        %v800 = vld [vmem:[%s798 + $0x8] sm:$0xff]
        %v801 = vsel %vm404, %v794, -inf
        %802 = vmax.xlane.f32.xlu0 %v801
        %v803 = vpop.xlane.xlu0 %802
        %v804 = vsel %vm404, %v796, -inf
        %805 = vmax.xlane.f32.xlu0 %v804
        %v806 = vpop.xlane.xlu0 %805
        %v807 = vmax.f32 %v799, %v803
        %v808 = vmax.f32 %v800, %v806
        %v809 = vsub.f32 %v799, %v807
        %v810 = vsub.f32 %v800, %v808
        %v811 = vmul.f32 %v809, 1.442695
        %v812 = vpow.pop %v811
        %v813 = vmul.f32 %v810, 1.442695
        %v814 = vpow.pop %v813
        %816 = vset.pattern.permute.xlu0 0
        %817 = vperm.xlu0 %816, %v807
        %v818 = vpop.permute.xlu0 %817
        %821 = vset.pattern.permute.xlu0 0
        %822 = vperm.xlu0 %821, %v808
        %v823 = vpop.permute.xlu0 %822
        %v825 = vsub.f32 %v794, %v818
        %v826 = vsub.f32 %v796, %v823
        %v827 = vmul.f32 %v825, 1.442695
        %v828 = vpow.pop %v827
        %v829 = vmul.f32 %v826, 1.442695
        %v830 = vpow.pop %v829
        %s831 = scalar_lea.vmem [#allocation3], 48
        %v832 = vld [vmem:[%s831] sm:$0xff]
        %v833 = vld [vmem:[%s831 + $0x8] sm:$0xff]
        %v834 = vmul.f32 %v812, %v832
        %v835 = vmul.f32 %v814, %v833
        %v836 = vsel %vm404, %v828, 0.0
        %837 = vadd.xlane.f32.xlu0 %v836
        %v838 = vpop.xlane.xlu0 %837
        %v839 = vsel %vm404, %v830, 0.0
        %840 = vadd.xlane.f32.xlu0 %v839
        %v841 = vpop.xlane.xlu0 %840
        %v842 = vadd.f32 %v834, %v838
        %v843 = vadd.f32 %v835, %v841
        %844 = vst.msk [vmem:[%s831] sm:$0xff] %vm472, %v842
        %845 = vst.msk [vmem:[%s831 + $0x8] sm:$0xff] %vm472, %v843
        %s846 = scalar_lea.vmem [#allocation4], 48
        %v847 = vld [vmem:[%s846] sm:$0xff]
        %v848 = vld [vmem:[%s846 + $0x8] sm:$0xff]
        %850 = vset.pattern.permute.xlu0 0
        %851 = vperm.xlu0 %850, %v812
        %v852 = vpop.permute.xlu0 %851
        %855 = vset.pattern.permute.xlu0 0
        %856 = vperm.xlu0 %855, %v814
        %v857 = vpop.permute.xlu0 %856
        %v859 = vmul.f32 %v852, %v847
        %v860 = vmul.f32 %v857, %v848
        %v861 = vpack.c.bf16 %v830, %v828
        %862 = vrot.lane.b32.xlu0 %v498, 32
        %v863 = vpop.permute.xlu0 %862
        %864 = vrot.lane.b32.xlu0 %v499, 32
        %v865 = vpop.permute.xlu0 %864
        %v869 = vsel %vm404, %v861, 0
        %871 = vmatpush.bf16.msra.mxu0 0
        %872 = vmatpush.bf16.msra.mxu0 0
        %873 = vmatpush.bf16.msra.mxu0 0
        %874 = vmatpush.bf16.msra.mxu0 0
        %875 = vmatpush.bf16.msra.mxu0 0
        %876 = vmatpush.bf16.msra.mxu0 0
        %877 = vmatpush.bf16.msra.mxu0 %v865
        %878 = vmatpush.bf16.msra.mxu0 %v863
        %879 = vmatmul.bf16.gmra.mxu0 %v869
        %v880 = vpop.f32.mrf.mxu0
        %v881 = vadd.f32 0.0, %v880
        %v882 = vpop.f32.mrf.mxu0
        %v883 = vadd.f32 0.0, %v882
        %884 = vdwg.mxu0
        %v885 = vadd.f32 %v859, %v881
        %v886 = vadd.f32 %v860, %v883
        %887 = vst.msk [vmem:[%s846] sm:$0xff] %vm404, %v885
        %888 = vst.msk [vmem:[%s846 + $0x8] sm:$0xff] %vm404, %v886
        %889 = vst.msk [vmem:[%s798] sm:$0xff] %vm472, %v807
        %890 = vst.msk [vmem:[%s798 + $0x8] sm:$0xff] %vm472, %v808
        // Predicated region
        $region119: #{text_decoder_forward.33} parent=105 // pred_check
          %p891 = pneg %p349
        $region120: #{text_decoder_forward.33} parent=105 // pred_check_branch
          %893 = sbr.rel (%p891) target = $region122
        $region121: #{text_decoder_forward.33} parent=105 // pred_region
          %v894 = vld [vmem:[#allocation3] sm:$0xff]
          %v895 = vld [vmem:[#allocation3 + $0x8] sm:$0xff]
          %v896 = vrcp.pop %v894
          %v897 = vrcp.pop %v895
          %v898 = vld [vmem:[#allocation4] sm:$0xff]
          %v899 = vld [vmem:[#allocation4 + $0x8] sm:$0xff]
          %901 = vset.pattern.permute.xlu0 0
          %902 = vperm.xlu0 %901, %v896
          %v903 = vpop.permute.xlu0 %902
          %906 = vset.pattern.permute.xlu0 0
          %907 = vperm.xlu0 %906, %v897
          %v908 = vpop.permute.xlu0 %907
          %v910 = vmul.f32 %v898, %v903
          %v911 = vmul.f32 %v899, %v908
          %v912 = vld [vmem:[%s587] sm:$0xff]
          %v913 = vld [vmem:[%s587 + $0x8] sm:$0xff]
          %v914 = vrcp.pop %v912
          %v915 = vrcp.pop %v913
          %v916 = vld [vmem:[%s602] sm:$0xff]
          %v917 = vld [vmem:[%s602 + $0x8] sm:$0xff]
          %919 = vset.pattern.permute.xlu0 0
          %920 = vperm.xlu0 %919, %v914
          %v921 = vpop.permute.xlu0 %920
          %924 = vset.pattern.permute.xlu0 0
          %925 = vperm.xlu0 %924, %v915
          %v926 = vpop.permute.xlu0 %925
          %v928 = vmul.f32 %v916, %v921
          %v929 = vmul.f32 %v917, %v926
          %v930 = vld [vmem:[%s709] sm:$0xff]
          %v931 = vld [vmem:[%s709 + $0x8] sm:$0xff]
          %v932 = vrcp.pop %v930
          %v933 = vrcp.pop %v931
          %v934 = vld [vmem:[%s724] sm:$0xff]
          %v935 = vld [vmem:[%s724 + $0x8] sm:$0xff]
          %937 = vset.pattern.permute.xlu0 0
          %938 = vperm.xlu0 %937, %v932
          %v939 = vpop.permute.xlu0 %938
          %942 = vset.pattern.permute.xlu0 0
          %943 = vperm.xlu0 %942, %v933
          %v944 = vpop.permute.xlu0 %943
          %v946 = vmul.f32 %v934, %v939
          %v947 = vmul.f32 %v935, %v944
          %v948 = vld [vmem:[%s831] sm:$0xff]
          %v949 = vld [vmem:[%s831 + $0x8] sm:$0xff]
          %v950 = vrcp.pop %v948
          %v951 = vrcp.pop %v949
          %v952 = vld [vmem:[%s846] sm:$0xff]
          %v953 = vld [vmem:[%s846 + $0x8] sm:$0xff]
          %955 = vset.pattern.permute.xlu0 0
          %956 = vperm.xlu0 %955, %v950
          %v957 = vpop.permute.xlu0 %956
          %960 = vset.pattern.permute.xlu0 0
          %961 = vperm.xlu0 %960, %v951
          %v962 = vpop.permute.xlu0 %961
          %v964 = vmul.f32 %v952, %v957
          %v965 = vmul.f32 %v953, %v962
          %968 = vrot.lane.b32.xlu0 %v928, 32
          %v969 = vpop.permute.xlu0 %968
          %970 = vrot.lane.b32.xlu0 %v929, 32
          %v971 = vpop.permute.xlu0 %970
          %976 = vrot.lane.b32.xlu0 %v946, 64
          %v977 = vpop.permute.xlu0 %976
          %978 = vrot.lane.b32.xlu0 %v947, 64
          %v979 = vpop.permute.xlu0 %978
          %984 = vrot.lane.b32.xlu0 %v964, 96
          %v985 = vpop.permute.xlu0 %984
          %986 = vrot.lane.b32.xlu0 %v965, 96
          %v987 = vpop.permute.xlu0 %986
          %v990 = vsel %vm404, %v910, %v969
          %v991 = vsel %vm404, %v911, %v971
          %vm992 = vcmask 523264
          %v993 = vsel %vm992, %v990, %v977
          %v994 = vsel %vm992, %v991, %v979
          %vm995 = vcmask 785408
          %v996 = vsel %vm995, %v993, %v985
          %v997 = vsel %vm995, %v994, %v987
          %v998 = vpack.c.bf16 %v996, %v996
          %v999 = vpack.c.bf16 %v997, %v997
          %1000 = vst [vmem:[%s347] sm:$0xf] %v998
          %1001 = vst [vmem:[%s347 + $0x4] sm:$0xf] %v999
        $region122: #{text_decoder_forward.33} parent=105 // pred_fallthru
          _
        %p1002 = scmp.lt.s32.totalorder %s18, 1
        %s1003 = scalar_select %p1002, %s18, 1
        %s1004 = smul.addr %s1003, 2
        %s1005 = smul.addr %s1004, 4
        %s1006 = scalar_lea.vmem %s3, %s1005
        // Predicated region
        $region123: #{text_decoder_forward.33} parent=105 // pred_check
          %p1007 = pneg %p126
        $region124: #{text_decoder_forward.33} parent=105 // pred_check_branch
          %1009 = sbr.rel (%p1007) target = $region126
        $region125: #{text_decoder_forward.33} parent=105 // pred_region
          _
        $region126: #{text_decoder_forward.33} parent=105 // pred_fallthru
          _
      $region106: #{text_decoder_forward.33} parent=5 // pred_fallthru
        _
      %p1010 = scmp.le.s32.totalorder 2, %s9
      // Predicated region
      $region127: #{text_decoder_forward.33} parent=5 // pred_check
        %p1011 = pneg %p1010
      $region128: #{text_decoder_forward.33} parent=5 // pred_check_branch
        %1013 = sbr.rel (%p1011) target = $region130
      $region129: #{text_decoder_forward.33} parent=5 // pred_region
        %s1014 = ssub.s32 %s9, 2
        // Predicated region
        $region131: #{text_decoder_forward.33} parent=129 // pred_check
          %p1015 = pneg %p132
        $region132: #{text_decoder_forward.33} parent=129 // pred_check_branch
          %1017 = sbr.rel (%p1015) target = $region134
        $region133: #{text_decoder_forward.33} parent=129 // pred_region
          %p1018 = scmp.lt.s32.totalorder %s20, 1
          %s1019 = scalar_select %p1018, %s20, 1
          %s1020 = smul.addr %s1019, 2
          %s1021 = smul.addr %s1020, 4
          %s1022 = scalar_lea.vmem %s3, %s1021
        $region134: #{text_decoder_forward.33} parent=129 // pred_fallthru
          _
      $region130: #{text_decoder_forward.33} parent=5 // pred_fallthru
        _
    $region6: #{text_decoder_forward.33} parent=1 // loop_footer
      %s13 = sadd.s32 1, %s9
    $region7: #{text_decoder_forward.33} parent=1 // loop_footer_branch
      %8 = sbr.rel target = $region3
    $region8: #{text_decoder_forward.33} parent=1 // loop_exit
      _

// kernel: text_decoder_forward.36
$region0: #{text_decoder_forward.36}
  #allocation0 [shape = 'u32[]', space=smem, size = 0x4, offset = 0x4, fixed_abs, tag = 'smem constant byte address 0x4 - core index']
  #allocation1 [shape = 'u32[72,128]{1,0:T(1,128)}', space=vmem, size = 0x9000, scoped, tag = 'internal scratch']
  %s0 = inlined_call_operand.vmem [shape: bf16[32,128], index: 0, kind: input, shape index: {}]
  %s1 = inlined_call_operand.vmem [shape: bf16[128,512], index: 1, kind: input, shape index: {}]
  %s2 = inlined_call_operand.vmem [shape: f32[1,512], index: 2, kind: input, shape index: {}]
  %s3 = inlined_call_operand.vmem [shape: bf16[32,512], index: 3, kind: output, shape index: {}]
  %s4 = sld [smem:[#allocation0]]
  $region22: #{text_decoder_forward.36} parent=0
    _
  %s6 = ssub.s32 1, %s4
  %s7 = scalar_select 0, %s6, %s4
  // Predicated region
  $region2: #{text_decoder_forward.36} parent=0 // pred_check
    _
  $region3: #{text_decoder_forward.36} parent=0 // pred_check_branch
    %9 = sbr.rel (0) target = $region5
  $region4: #{text_decoder_forward.36} parent=0 // pred_region
    _
  $region5: #{text_decoder_forward.36} parent=0 // pred_fallthru
    _
  // Predicated region
  $region6: #{text_decoder_forward.36} parent=0 // pred_check
    _
  $region7: #{text_decoder_forward.36} parent=0 // pred_check_branch
    %11 = sbr.rel (0) target = $region9
  $region8: #{text_decoder_forward.36} parent=0 // pred_region
    _
  $region9: #{text_decoder_forward.36} parent=0 // pred_fallthru
    _
  // Predicated region
  $region10: #{text_decoder_forward.36} parent=0 // pred_check
    _
  $region11: #{text_decoder_forward.36} parent=0 // pred_check_branch
    %13 = sbr.rel (0) target = $region13
  $region12: #{text_decoder_forward.36} parent=0 // pred_region
    _
  $region13: #{text_decoder_forward.36} parent=0 // pred_fallthru
    _
  %v14 = vld [vmem:[%s0] sm:$0xf]
  %v15 = vld [vmem:[%s0 + $0x4] sm:$0xf]
  %v16 = vld [vmem:[%s0 + $0x8] sm:$0xf]
  %v17 = vld [vmem:[%s0 + $0xc] sm:$0xf]
  %v18 = vld [vmem:[%s1] sm:$0xff]
  %v19 = vld [vmem:[%s1 + $0x8] sm:$0xff]
  %v20 = vld [vmem:[%s1 + $0x10] sm:$0xff]
  %v21 = vld [vmem:[%s1 + $0x18] sm:$0xff]
  %v22 = vld [vmem:[%s1 + $0x20] sm:$0xff]
  %v23 = vld [vmem:[%s1 + $0x28] sm:$0xff]
  %v24 = vld [vmem:[%s1 + $0x30] sm:$0xff]
  %v25 = vld [vmem:[%s1 + $0x38] sm:$0xff]
  %v26 = vld [vmem:[%s1 + $0x40] sm:$0xff]
  %v27 = vld [vmem:[%s1 + $0x48] sm:$0xff]
  %v28 = vld [vmem:[%s1 + $0x50] sm:$0xff]
  %v29 = vld [vmem:[%s1 + $0x58] sm:$0xff]
  %v30 = vld [vmem:[%s1 + $0x60] sm:$0xff]
  %v31 = vld [vmem:[%s1 + $0x68] sm:$0xff]
  %v32 = vld [vmem:[%s1 + $0x70] sm:$0xff]
  %v33 = vld [vmem:[%s1 + $0x78] sm:$0xff]
  %v34 = vld [vmem:[%s1 + $0x80] sm:$0xff]
  %v35 = vld [vmem:[%s1 + $0x88] sm:$0xff]
  %v36 = vld [vmem:[%s1 + $0x90] sm:$0xff]
  %v37 = vld [vmem:[%s1 + $0x98] sm:$0xff]
  %v38 = vld [vmem:[%s1 + $0xa0] sm:$0xff]
  %v39 = vld [vmem:[%s1 + $0xa8] sm:$0xff]
  %v40 = vld [vmem:[%s1 + $0xb0] sm:$0xff]
  %v41 = vld [vmem:[%s1 + $0xb8] sm:$0xff]
  %v42 = vld [vmem:[%s1 + $0xc0] sm:$0xff]
  %v43 = vld [vmem:[%s1 + $0xc8] sm:$0xff]
  %v44 = vld [vmem:[%s1 + $0xd0] sm:$0xff]
  %v45 = vld [vmem:[%s1 + $0xd8] sm:$0xff]
  %v46 = vld [vmem:[%s1 + $0xe0] sm:$0xff]
  %v47 = vld [vmem:[%s1 + $0xe8] sm:$0xff]
  %v48 = vld [vmem:[%s1 + $0xf0] sm:$0xff]
  %v49 = vld [vmem:[%s1 + $0xf8] sm:$0xff]
  %v50 = vld [vmem:[%s2] sm:$0xf]
  %v52 = vperm.slane %v50, 0
  %v53 = vperm.slane %v50, 1
  %v54 = vperm.slane %v50, 2
  %v55 = vperm.slane %v50, 3
  %v64 = vunpack.c.l.b16 %v14
  %v65 = vunpack.c.l.b16 %v15
  %v66 = vunpack.c.l.b16 %v16
  %v67 = vunpack.c.l.b16 %v17
  %v68 = vpack.c.b16 %v65, %v64
  %v69 = vpack.c.b16 %v67, %v66
  %v104 = vunpack.c.l.b16 %v18
  %v105 = vunpack.c.h.b16 %v18
  %v106 = vunpack.c.l.b16 %v19
  %v107 = vunpack.c.h.b16 %v19
  %v108 = vunpack.c.l.b16 %v20
  %v109 = vunpack.c.h.b16 %v20
  %v110 = vunpack.c.l.b16 %v21
  %v111 = vunpack.c.h.b16 %v21
  %v112 = vunpack.c.l.b16 %v22
  %v113 = vunpack.c.h.b16 %v22
  %v114 = vunpack.c.l.b16 %v23
  %v115 = vunpack.c.h.b16 %v23
  %v116 = vunpack.c.l.b16 %v24
  %v117 = vunpack.c.h.b16 %v24
  %v118 = vunpack.c.l.b16 %v25
  %v119 = vunpack.c.h.b16 %v25
  %v120 = vunpack.c.l.b16 %v26
  %v121 = vunpack.c.h.b16 %v26
  %v122 = vunpack.c.l.b16 %v27
  %v123 = vunpack.c.h.b16 %v27
  %v124 = vunpack.c.l.b16 %v28
  %v125 = vunpack.c.h.b16 %v28
  %v126 = vunpack.c.l.b16 %v29
  %v127 = vunpack.c.h.b16 %v29
  %v128 = vunpack.c.l.b16 %v30
  %v129 = vunpack.c.h.b16 %v30
  %v130 = vunpack.c.l.b16 %v31
  %v131 = vunpack.c.h.b16 %v31
  %v132 = vunpack.c.l.b16 %v32
  %v133 = vunpack.c.h.b16 %v32
  %v134 = vunpack.c.l.b16 %v33
  %v135 = vunpack.c.h.b16 %v33
  %v136 = vunpack.c.l.b16 %v34
  %v137 = vunpack.c.h.b16 %v34
  %v138 = vunpack.c.l.b16 %v35
  %v139 = vunpack.c.h.b16 %v35
  %v140 = vunpack.c.l.b16 %v36
  %v141 = vunpack.c.h.b16 %v36
  %v142 = vunpack.c.l.b16 %v37
  %v143 = vunpack.c.h.b16 %v37
  %v144 = vunpack.c.l.b16 %v38
  %v145 = vunpack.c.h.b16 %v38
  %v146 = vunpack.c.l.b16 %v39
  %v147 = vunpack.c.h.b16 %v39
  %v148 = vunpack.c.l.b16 %v40
  %v149 = vunpack.c.h.b16 %v40
  %v150 = vunpack.c.l.b16 %v41
  %v151 = vunpack.c.h.b16 %v41
  %v152 = vunpack.c.l.b16 %v42
  %v153 = vunpack.c.h.b16 %v42
  %v154 = vunpack.c.l.b16 %v43
  %v155 = vunpack.c.h.b16 %v43
  %v156 = vunpack.c.l.b16 %v44
  %v157 = vunpack.c.h.b16 %v44
  %v158 = vunpack.c.l.b16 %v45
  %v159 = vunpack.c.h.b16 %v45
  %v160 = vunpack.c.l.b16 %v46
  %v161 = vunpack.c.h.b16 %v46
  %v162 = vunpack.c.l.b16 %v47
  %v163 = vunpack.c.h.b16 %v47
  %v164 = vunpack.c.l.b16 %v48
  %v165 = vunpack.c.h.b16 %v48
  %v166 = vunpack.c.l.b16 %v49
  %v167 = vunpack.c.h.b16 %v49
  %v168 = vpack.c.b16 %v108, %v104
  %v169 = vpack.c.b16 %v109, %v105
  %v170 = vpack.c.b16 %v110, %v106
  %v171 = vpack.c.b16 %v111, %v107
  %v172 = vpack.c.b16 %v116, %v112
  %v173 = vpack.c.b16 %v117, %v113
  %v174 = vpack.c.b16 %v118, %v114
  %v175 = vpack.c.b16 %v119, %v115
  %v176 = vpack.c.b16 %v124, %v120
  %v177 = vpack.c.b16 %v125, %v121
  %v178 = vpack.c.b16 %v126, %v122
  %v179 = vpack.c.b16 %v127, %v123
  %v180 = vpack.c.b16 %v132, %v128
  %v181 = vpack.c.b16 %v133, %v129
  %v182 = vpack.c.b16 %v134, %v130
  %v183 = vpack.c.b16 %v135, %v131
  %v184 = vpack.c.b16 %v140, %v136
  %v185 = vpack.c.b16 %v141, %v137
  %v186 = vpack.c.b16 %v142, %v138
  %v187 = vpack.c.b16 %v143, %v139
  %v188 = vpack.c.b16 %v148, %v144
  %v189 = vpack.c.b16 %v149, %v145
  %v190 = vpack.c.b16 %v150, %v146
  %v191 = vpack.c.b16 %v151, %v147
  %v192 = vpack.c.b16 %v156, %v152
  %v193 = vpack.c.b16 %v157, %v153
  %v194 = vpack.c.b16 %v158, %v154
  %v195 = vpack.c.b16 %v159, %v155
  %v196 = vpack.c.b16 %v164, %v160
  %v197 = vpack.c.b16 %v165, %v161
  %v198 = vpack.c.b16 %v166, %v162
  %v199 = vpack.c.b16 %v167, %v163
  %232 = vmatpush.bf16.msra.mxu0 %v196
  %233 = vmatpush.bf16.msra.mxu0 %v192
  %234 = vmatpush.bf16.msra.mxu0 %v188
  %235 = vmatpush.bf16.msra.mxu0 %v184
  %236 = vmatpush.bf16.msra.mxu0 %v180
  %237 = vmatpush.bf16.msra.mxu0 %v176
  %238 = vmatpush.bf16.msra.mxu0 %v172
  %239 = vmatpush.bf16.msra.mxu0 %v168
  %240 = vmatmul.bf16.gmra.mxu0 %v68
  %v241 = vpop.f32.mrf.mxu0
  %v242 = vadd.f32 %v52, %v241
  %v243 = vpop.f32.mrf.mxu0
  %v244 = vadd.f32 %v52, %v243
  %245 = vmatmul.bf16.gmra.mxu0 %v69
  %v246 = vpop.f32.mrf.mxu0
  %v247 = vadd.f32 %v52, %v246
  %v248 = vpop.f32.mrf.mxu0
  %v249 = vadd.f32 %v52, %v248
  %250 = vdwg.mxu0
  %251 = vmatpush.bf16.msra.mxu0 %v197
  %252 = vmatpush.bf16.msra.mxu0 %v193
  %253 = vmatpush.bf16.msra.mxu0 %v189
  %254 = vmatpush.bf16.msra.mxu0 %v185
  %255 = vmatpush.bf16.msra.mxu0 %v181
  %256 = vmatpush.bf16.msra.mxu0 %v177
  %257 = vmatpush.bf16.msra.mxu0 %v173
  %258 = vmatpush.bf16.msra.mxu0 %v169
  %259 = vmatmul.bf16.gmra.mxu0 %v68
  %v260 = vpop.f32.mrf.mxu0
  %v261 = vadd.f32 %v53, %v260
  %v262 = vpop.f32.mrf.mxu0
  %v263 = vadd.f32 %v53, %v262
  %264 = vmatmul.bf16.gmra.mxu0 %v69
  %v265 = vpop.f32.mrf.mxu0
  %v266 = vadd.f32 %v53, %v265
  %v267 = vpop.f32.mrf.mxu0
  %v268 = vadd.f32 %v53, %v267
  %269 = vdwg.mxu0
  %270 = vmatpush.bf16.msra.mxu0 %v198
  %271 = vmatpush.bf16.msra.mxu0 %v194
  %272 = vmatpush.bf16.msra.mxu0 %v190
  %273 = vmatpush.bf16.msra.mxu0 %v186
  %274 = vmatpush.bf16.msra.mxu0 %v182
  %275 = vmatpush.bf16.msra.mxu0 %v178
  %276 = vmatpush.bf16.msra.mxu0 %v174
  %277 = vmatpush.bf16.msra.mxu0 %v170
  %278 = vmatmul.bf16.gmra.mxu0 %v68
  %v279 = vpop.f32.mrf.mxu0
  %v280 = vadd.f32 %v54, %v279
  %v281 = vpop.f32.mrf.mxu0
  %v282 = vadd.f32 %v54, %v281
  %283 = vmatmul.bf16.gmra.mxu0 %v69
  %v284 = vpop.f32.mrf.mxu0
  %v285 = vadd.f32 %v54, %v284
  %v286 = vpop.f32.mrf.mxu0
  %v287 = vadd.f32 %v54, %v286
  %288 = vdwg.mxu0
  %289 = vmatpush.bf16.msra.mxu0 %v199
  %290 = vmatpush.bf16.msra.mxu0 %v195
  %291 = vmatpush.bf16.msra.mxu0 %v191
  %292 = vmatpush.bf16.msra.mxu0 %v187
  %293 = vmatpush.bf16.msra.mxu0 %v183
  %294 = vmatpush.bf16.msra.mxu0 %v179
  %295 = vmatpush.bf16.msra.mxu0 %v175
  %296 = vmatpush.bf16.msra.mxu0 %v171
  %297 = vmatmul.bf16.gmra.mxu0 %v68
  %v298 = vpop.f32.mrf.mxu0
  %v299 = vadd.f32 %v55, %v298
  %v300 = vpop.f32.mrf.mxu0
  %v301 = vadd.f32 %v55, %v300
  %302 = vmatmul.bf16.gmra.mxu0 %v69
  %v303 = vpop.f32.mrf.mxu0
  %v304 = vadd.f32 %v55, %v303
  %v305 = vpop.f32.mrf.mxu0
  %v306 = vadd.f32 %v55, %v305
  %307 = vdwg.mxu0
  %v308 = vmul.f32 %v242, %v242
  %v309 = vmul.f32 %v261, %v261
  %v310 = vmul.f32 %v280, %v280
  %v311 = vmul.f32 %v299, %v299
  %v312 = vmul.f32 %v244, %v244
  %v313 = vmul.f32 %v263, %v263
  %v314 = vmul.f32 %v282, %v282
  %v315 = vmul.f32 %v301, %v301
  %v316 = vmul.f32 %v247, %v247
  %v317 = vmul.f32 %v266, %v266
  %v318 = vmul.f32 %v285, %v285
  %v319 = vmul.f32 %v304, %v304
  %v320 = vmul.f32 %v249, %v249
  %v321 = vmul.f32 %v268, %v268
  %v322 = vmul.f32 %v287, %v287
  %v323 = vmul.f32 %v306, %v306
  %v324 = vmul.f32 %v242, %v308
  %v325 = vmul.f32 %v261, %v309
  %v326 = vmul.f32 %v280, %v310
  %v327 = vmul.f32 %v299, %v311
  %v328 = vmul.f32 %v244, %v312
  %v329 = vmul.f32 %v263, %v313
  %v330 = vmul.f32 %v282, %v314
  %v331 = vmul.f32 %v301, %v315
  %v332 = vmul.f32 %v247, %v316
  %v333 = vmul.f32 %v266, %v317
  %v334 = vmul.f32 %v285, %v318
  %v335 = vmul.f32 %v304, %v319
  %v336 = vmul.f32 %v249, %v320
  %v337 = vmul.f32 %v268, %v321
  %v338 = vmul.f32 %v287, %v322
  %v339 = vmul.f32 %v306, %v323
  %v340 = vmul.f32 %v324, 0.044715
  %v341 = vmul.f32 %v325, 0.044715
  %v342 = vmul.f32 %v326, 0.044715
  %v343 = vmul.f32 %v327, 0.044715
  %v344 = vmul.f32 %v328, 0.044715
  %v345 = vmul.f32 %v329, 0.044715
  %v346 = vmul.f32 %v330, 0.044715
  %v347 = vmul.f32 %v331, 0.044715
  %v348 = vmul.f32 %v332, 0.044715
  %v349 = vmul.f32 %v333, 0.044715
  %v350 = vmul.f32 %v334, 0.044715
  %v351 = vmul.f32 %v335, 0.044715
  %v352 = vmul.f32 %v336, 0.044715
  %v353 = vmul.f32 %v337, 0.044715
  %v354 = vmul.f32 %v338, 0.044715
  %v355 = vmul.f32 %v339, 0.044715
  %v356 = vadd.f32 %v242, %v340
  %v357 = vadd.f32 %v261, %v341
  %v358 = vadd.f32 %v280, %v342
  %v359 = vadd.f32 %v299, %v343
  %v360 = vadd.f32 %v244, %v344
  %v361 = vadd.f32 %v263, %v345
  %v362 = vadd.f32 %v282, %v346
  %v363 = vadd.f32 %v301, %v347
  %v364 = vadd.f32 %v247, %v348
  %v365 = vadd.f32 %v266, %v349
  %v366 = vadd.f32 %v285, %v350
  %v367 = vadd.f32 %v304, %v351
  %v368 = vadd.f32 %v249, %v352
  %v369 = vadd.f32 %v268, %v353
  %v370 = vadd.f32 %v287, %v354
  %v371 = vadd.f32 %v306, %v355
  %v372 = vmul.f32 %v356, 0.7978846
  %v373 = vmul.f32 %v357, 0.7978846
  %v374 = vmul.f32 %v358, 0.7978846
  %v375 = vmul.f32 %v359, 0.7978846
  %v376 = vmul.f32 %v360, 0.7978846
  %v377 = vmul.f32 %v361, 0.7978846
  %v378 = vmul.f32 %v362, 0.7978846
  %v379 = vmul.f32 %v363, 0.7978846
  %v380 = vmul.f32 %v364, 0.7978846
  %v381 = vmul.f32 %v365, 0.7978846
  %v382 = vmul.f32 %v366, 0.7978846
  %v383 = vmul.f32 %v367, 0.7978846
  %v384 = vmul.f32 %v368, 0.7978846
  %v385 = vmul.f32 %v369, 0.7978846
  %v386 = vmul.f32 %v370, 0.7978846
  %v387 = vmul.f32 %v371, 0.7978846
  %v388 = vtanh.pop %v372
  %v389 = vtanh.pop %v373
  %v390 = vtanh.pop %v374
  %v391 = vtanh.pop %v375
  %v392 = vtanh.pop %v376
  %v393 = vtanh.pop %v377
  %v394 = vtanh.pop %v378
  %v395 = vtanh.pop %v379
  %v396 = vtanh.pop %v380
  %v397 = vtanh.pop %v381
  %v398 = vtanh.pop %v382
  %v399 = vtanh.pop %v383
  %v400 = vtanh.pop %v384
  %v401 = vtanh.pop %v385
  %v402 = vtanh.pop %v386
  %v403 = vtanh.pop %v387
  %v404 = vadd.f32 %v388, 1.0
  %v405 = vadd.f32 %v389, 1.0
  %v406 = vadd.f32 %v390, 1.0
  %v407 = vadd.f32 %v391, 1.0
  %v408 = vadd.f32 %v392, 1.0
  %v409 = vadd.f32 %v393, 1.0
  %v410 = vadd.f32 %v394, 1.0
  %v411 = vadd.f32 %v395, 1.0
  %v412 = vadd.f32 %v396, 1.0
  %v413 = vadd.f32 %v397, 1.0
  %v414 = vadd.f32 %v398, 1.0
  %v415 = vadd.f32 %v399, 1.0
  %v416 = vadd.f32 %v400, 1.0
  %v417 = vadd.f32 %v401, 1.0
  %v418 = vadd.f32 %v402, 1.0
  %v419 = vadd.f32 %v403, 1.0
  %v420 = vmul.f32 %v404, 0.5
  %v421 = vmul.f32 %v405, 0.5
  %v422 = vmul.f32 %v406, 0.5
  %v423 = vmul.f32 %v407, 0.5
  %v424 = vmul.f32 %v408, 0.5
  %v425 = vmul.f32 %v409, 0.5
  %v426 = vmul.f32 %v410, 0.5
  %v427 = vmul.f32 %v411, 0.5
  %v428 = vmul.f32 %v412, 0.5
  %v429 = vmul.f32 %v413, 0.5
  %v430 = vmul.f32 %v414, 0.5
  %v431 = vmul.f32 %v415, 0.5
  %v432 = vmul.f32 %v416, 0.5
  %v433 = vmul.f32 %v417, 0.5
  %v434 = vmul.f32 %v418, 0.5
  %v435 = vmul.f32 %v419, 0.5
  %v436 = vmul.f32 %v242, %v420
  %v437 = vmul.f32 %v261, %v421
  %v438 = vmul.f32 %v280, %v422
  %v439 = vmul.f32 %v299, %v423
  %v440 = vmul.f32 %v244, %v424
  %v441 = vmul.f32 %v263, %v425
  %v442 = vmul.f32 %v282, %v426
  %v443 = vmul.f32 %v301, %v427
  %v444 = vmul.f32 %v247, %v428
  %v445 = vmul.f32 %v266, %v429
  %v446 = vmul.f32 %v285, %v430
  %v447 = vmul.f32 %v304, %v431
  %v448 = vmul.f32 %v249, %v432
  %v449 = vmul.f32 %v268, %v433
  %v450 = vmul.f32 %v287, %v434
  %v451 = vmul.f32 %v306, %v435
  %v452 = vpack.c.bf16 %v437, %v436
  %v453 = vpack.c.bf16 %v439, %v438
  %v454 = vpack.c.bf16 %v441, %v440
  %v455 = vpack.c.bf16 %v443, %v442
  %v456 = vpack.c.bf16 %v445, %v444
  %v457 = vpack.c.bf16 %v447, %v446
  %v458 = vpack.c.bf16 %v449, %v448
  %v459 = vpack.c.bf16 %v451, %v450
  %460 = vst [vmem:[%s3] sm:$0xff] %v452
  %461 = vst [vmem:[%s3 + $0x8] sm:$0xff] %v453
  %462 = vst [vmem:[%s3 + $0x10] sm:$0xff] %v454
  %463 = vst [vmem:[%s3 + $0x18] sm:$0xff] %v455
  %464 = vst [vmem:[%s3 + $0x20] sm:$0xff] %v456
  %465 = vst [vmem:[%s3 + $0x28] sm:$0xff] %v457
  %466 = vst [vmem:[%s3 + $0x30] sm:$0xff] %v458
  %467 = vst [vmem:[%s3 + $0x38] sm:$0xff] %v459
  // Predicated region
  $region14: #{text_decoder_forward.36} parent=0 // pred_check
    _
  $region15: #{text_decoder_forward.36} parent=0 // pred_check_branch
    %469 = sbr.rel (0) target = $region17
  $region16: #{text_decoder_forward.36} parent=0 // pred_region
    _
  $region17: #{text_decoder_forward.36} parent=0 // pred_fallthru
    _
  // Predicated region
  $region18: #{text_decoder_forward.36} parent=0 // pred_check
    _
  $region19: #{text_decoder_forward.36} parent=0 // pred_check_branch
    %471 = sbr.rel (0) target = $region21
  $region20: #{text_decoder_forward.36} parent=0 // pred_region
    _
  $region21: #{text_decoder_forward.36} parent=0 // pred_fallthru
    _

// kernel: text_decoder_forward.41
$region0: #{text_decoder_forward.41}
  #allocation0 [shape = 'u32[]', space=smem, size = 0x4, offset = 0x4, fixed_abs, tag = 'smem constant byte address 0x4 - core index']
  #allocation1 [shape = 'u32[72,128]{1,0:T(1,128)}', space=vmem, size = 0x9000, scoped, tag = 'internal scratch']
  %s0 = inlined_call_operand.vmem [shape: bf16[32,128], index: 0, kind: input, shape index: {}]
  %s1 = inlined_call_operand.hbm [shape: bf16[128,128], index: 1, kind: input, shape index: {}]
  %s2 = inlined_call_operand.vmem [shape: f32[1,128], index: 2, kind: input, shape index: {}]
  %s3 = inlined_call_operand.vmem [shape: f32[32,128], index: 3, kind: input, shape index: {}]
  %s4 = inlined_call_operand.vmem [shape: f32[32,128], index: 4, kind: output, shape index: {}]
  %s5 = sld [smem:[#allocation0]]
  $region30: #{text_decoder_forward.41} parent=0
    _
  %s7 = ssub.s32 1, %s5
  %s8 = scalar_select 0, %s7, %s5
  $region1: #{text_decoder_forward.41} parent=0
    #allocation2 [shape = 'u8[32768]{0}', space=vmem, size = 0x8000, scoped, tag = 'input window, operand 1, single buffered']
    #allocation3 [shape = 's32[1]{0}', space=sflag, size = 0x4, scoped, tag = 'scoped memory for text_decoder_forward.41']
    %9 = vsyncpa [#allocation3], 0
    // Predicated region
    $region2: #{text_decoder_forward.41} parent=1 // pred_check
      _
    $region3: #{text_decoder_forward.41} parent=1 // pred_check_branch
      %11 = sbr.rel (0) target = $region5
    $region4: #{text_decoder_forward.41} parent=1 // pred_region
      _
    $region5: #{text_decoder_forward.41} parent=1 // pred_fallthru
      _
    // Predicated region
    $region6: #{text_decoder_forward.41} parent=1 // pred_check
      _
    $region7: #{text_decoder_forward.41} parent=1 // pred_check_branch
      %13 = sbr.rel (0) target = $region9
    $region8: #{text_decoder_forward.41} parent=1 // pred_region
      %15 = vsyncadd [#allocation3], 0
      %s16 = sshll.u32 %s1, 4
      %s17 = int_to_ptr.hbm [resolvable:$true] %s16
      %s18 = sshll.u32 [#allocation2], 4
      %s19 = int_to_ptr.vmem [resolvable:$true] %s18
      %24 = dma.hbm_to_vmem [thread:$0]  %s17, 1024, %s19, [#allocation3], 64, 64, 4
    $region9: #{text_decoder_forward.41} parent=1 // pred_fallthru
      _
    // Predicated region
    $region10: #{text_decoder_forward.41} parent=1 // pred_check
      _
    $region11: #{text_decoder_forward.41} parent=1 // pred_check_branch
      %26 = sbr.rel (0) target = $region13
    $region12: #{text_decoder_forward.41} parent=1 // pred_region
      _
    $region13: #{text_decoder_forward.41} parent=1 // pred_fallthru
      _
    // Predicated region
    $region14: #{text_decoder_forward.41} parent=1 // pred_check
      _
    $region15: #{text_decoder_forward.41} parent=1 // pred_check_branch
      %28 = sbr.rel (0) target = $region17
    $region16: #{text_decoder_forward.41} parent=1 // pred_region
      _
    $region17: #{text_decoder_forward.41} parent=1 // pred_fallthru
      _
    // Predicated region
    $region18: #{text_decoder_forward.41} parent=1 // pred_check
      _
    $region19: #{text_decoder_forward.41} parent=1 // pred_check_branch
      %30 = sbr.rel (0) target = $region21
    $region20: #{text_decoder_forward.41} parent=1 // pred_region
      %32 = dma.done [#allocation3], 1024
    $region21: #{text_decoder_forward.41} parent=1 // pred_fallthru
      _
    %v33 = vld [vmem:[%s0] sm:$0xf]
    %v34 = vld [vmem:[%s0 + $0x4] sm:$0xf]
    %v35 = vld [vmem:[%s0 + $0x8] sm:$0xf]
    %v36 = vld [vmem:[%s0 + $0xc] sm:$0xf]
    %v37 = vld [vmem:[#allocation2] sm:$0xf]
    %v38 = vld [vmem:[#allocation2 + $0x4] sm:$0xf]
    %v39 = vld [vmem:[#allocation2 + $0x8] sm:$0xf]
    %v40 = vld [vmem:[#allocation2 + $0xc] sm:$0xf]
    %v41 = vld [vmem:[#allocation2 + $0x10] sm:$0xf]
    %v42 = vld [vmem:[#allocation2 + $0x14] sm:$0xf]
    %v43 = vld [vmem:[#allocation2 + $0x18] sm:$0xf]
    %v44 = vld [vmem:[#allocation2 + $0x1c] sm:$0xf]
    %v45 = vld [vmem:[#allocation2 + $0x20] sm:$0xf]
    %v46 = vld [vmem:[#allocation2 + $0x24] sm:$0xf]
    %v47 = vld [vmem:[#allocation2 + $0x28] sm:$0xf]
    %v48 = vld [vmem:[#allocation2 + $0x2c] sm:$0xf]
    %v49 = vld [vmem:[#allocation2 + $0x30] sm:$0xf]
    %v50 = vld [vmem:[#allocation2 + $0x34] sm:$0xf]
    %v51 = vld [vmem:[#allocation2 + $0x38] sm:$0xf]
    %v52 = vld [vmem:[#allocation2 + $0x3c] sm:$0xf]
    %v53 = vld [vmem:[%s2] sm:$0x1]
    %v55 = vperm.slane %v53, 0
    %v61 = vunpack.c.l.b16 %v33
    %v62 = vunpack.c.l.b16 %v34
    %v63 = vunpack.c.l.b16 %v35
    %v64 = vunpack.c.l.b16 %v36
    %v65 = vpack.c.b16 %v62, %v61
    %v66 = vpack.c.b16 %v64, %v63
    %v85 = vunpack.c.l.b16 %v37
    %v86 = vunpack.c.l.b16 %v38
    %v87 = vunpack.c.l.b16 %v39
    %v88 = vunpack.c.l.b16 %v40
    %v89 = vunpack.c.l.b16 %v41
    %v90 = vunpack.c.l.b16 %v42
    %v91 = vunpack.c.l.b16 %v43
    %v92 = vunpack.c.l.b16 %v44
    %v93 = vunpack.c.l.b16 %v45
    %v94 = vunpack.c.l.b16 %v46
    %v95 = vunpack.c.l.b16 %v47
    %v96 = vunpack.c.l.b16 %v48
    %v97 = vunpack.c.l.b16 %v49
    %v98 = vunpack.c.l.b16 %v50
    %v99 = vunpack.c.l.b16 %v51
    %v100 = vunpack.c.l.b16 %v52
    %v101 = vpack.c.b16 %v86, %v85
    %v102 = vpack.c.b16 %v88, %v87
    %v103 = vpack.c.b16 %v90, %v89
    %v104 = vpack.c.b16 %v92, %v91
    %v105 = vpack.c.b16 %v94, %v93
    %v106 = vpack.c.b16 %v96, %v95
    %v107 = vpack.c.b16 %v98, %v97
    %v108 = vpack.c.b16 %v100, %v99
    %117 = vmatpush.bf16.msra.mxu0 %v108
    %118 = vmatpush.bf16.msra.mxu0 %v107
    %119 = vmatpush.bf16.msra.mxu0 %v106
    %120 = vmatpush.bf16.msra.mxu0 %v105
    %121 = vmatpush.bf16.msra.mxu0 %v104
    %122 = vmatpush.bf16.msra.mxu0 %v103
    %123 = vmatpush.bf16.msra.mxu0 %v102
    %124 = vmatpush.bf16.msra.mxu0 %v101
    %125 = vmatmul.bf16.gmra.mxu0 %v65
    %v126 = vpop.f32.mrf.mxu0
    %v127 = vadd.f32 %v55, %v126
    %v128 = vpop.f32.mrf.mxu0
    %v129 = vadd.f32 %v55, %v128
    %130 = vmatmul.bf16.gmra.mxu0 %v66
    %v131 = vpop.f32.mrf.mxu0
    %v132 = vadd.f32 %v55, %v131
    %v133 = vpop.f32.mrf.mxu0
    %v134 = vadd.f32 %v55, %v133
    %135 = vdwg.mxu0
    %v136 = vld [vmem:[%s3] sm:$0xff]
    %v137 = vld [vmem:[%s3 + $0x8] sm:$0xff]
    %v138 = vld [vmem:[%s3 + $0x10] sm:$0xff]
    %v139 = vld [vmem:[%s3 + $0x18] sm:$0xff]
    %v140 = vadd.f32 %v127, %v136
    %v141 = vadd.f32 %v129, %v137
    %v142 = vadd.f32 %v132, %v138
    %v143 = vadd.f32 %v134, %v139
    %144 = vst [vmem:[%s4] sm:$0xff] %v140
    %145 = vst [vmem:[%s4 + $0x8] sm:$0xff] %v141
    %146 = vst [vmem:[%s4 + $0x10] sm:$0xff] %v142
    %147 = vst [vmem:[%s4 + $0x18] sm:$0xff] %v143
    // Predicated region
    $region22: #{text_decoder_forward.41} parent=1 // pred_check
      _
    $region23: #{text_decoder_forward.41} parent=1 // pred_check_branch
      %149 = sbr.rel (0) target = $region25
    $region24: #{text_decoder_forward.41} parent=1 // pred_region
      _
    $region25: #{text_decoder_forward.41} parent=1 // pred_fallthru
      _
    // Predicated region
    $region26: #{text_decoder_forward.41} parent=1 // pred_check
      _
    $region27: #{text_decoder_forward.41} parent=1 // pred_check_branch
      %151 = sbr.rel (0) target = $region29
    $region28: #{text_decoder_forward.41} parent=1 // pred_region
      _
    $region29: #{text_decoder_forward.41} parent=1 // pred_fallthru
      _
    %152 = vsyncpa [#allocation3], 1

// kernel: text_decoder_forward.37
$region0: #{text_decoder_forward.37}
  #allocation0 [shape = 'u32[]', space=smem, size = 0x4, offset = 0x4, fixed_abs, tag = 'smem constant byte address 0x4 - core index']
  #allocation1 [shape = 'u32[72,128]{1,0:T(1,128)}', space=vmem, size = 0x9000, scoped, tag = 'internal scratch']
  %s0 = inlined_call_operand.vmem [shape: bf16[32,512], index: 0, kind: input, shape index: {}]
  %s1 = inlined_call_operand.hbm [shape: bf16[512,128], index: 1, kind: input, shape index: {}]
  %s2 = inlined_call_operand.vmem [shape: f32[1,128], index: 2, kind: input, shape index: {}]
  %s3 = inlined_call_operand.vmem [shape: f32[32,128], index: 3, kind: input, shape index: {}]
  %s4 = inlined_call_operand.vmem [shape: f32[32,128], index: 4, kind: output, shape index: {}]
  %s5 = sld [smem:[#allocation0]]
  $region30: #{text_decoder_forward.37} parent=0
    _
  %s7 = ssub.s32 1, %s5
  %s8 = scalar_select 0, %s7, %s5
  $region1: #{text_decoder_forward.37} parent=0
    #allocation2 [shape = 'u8[131072]{0}', space=vmem, size = 0x20000, scoped, tag = 'input window, operand 1, single buffered']
    #allocation3 [shape = 's32[1]{0}', space=sflag, size = 0x4, scoped, tag = 'scoped memory for text_decoder_forward.37']
    %9 = vsyncpa [#allocation3], 0
    // Predicated region
    $region2: #{text_decoder_forward.37} parent=1 // pred_check
      _
    $region3: #{text_decoder_forward.37} parent=1 // pred_check_branch
      %11 = sbr.rel (0) target = $region5
    $region4: #{text_decoder_forward.37} parent=1 // pred_region
      _
    $region5: #{text_decoder_forward.37} parent=1 // pred_fallthru
      _
    // Predicated region
    $region6: #{text_decoder_forward.37} parent=1 // pred_check
      _
    $region7: #{text_decoder_forward.37} parent=1 // pred_check_branch
      %13 = sbr.rel (0) target = $region9
    $region8: #{text_decoder_forward.37} parent=1 // pred_region
      %15 = vsyncadd [#allocation3], 0
      %s16 = sshll.u32 %s1, 4
      %s17 = int_to_ptr.hbm [resolvable:$true] %s16
      %s18 = sshll.u32 [#allocation2], 4
      %s19 = int_to_ptr.vmem [resolvable:$true] %s18
      %24 = dma.hbm_to_vmem [thread:$0]  %s17, 4096, %s19, [#allocation3], 64, 64, 4
    $region9: #{text_decoder_forward.37} parent=1 // pred_fallthru
      _
    // Predicated region
    $region10: #{text_decoder_forward.37} parent=1 // pred_check
      _
    $region11: #{text_decoder_forward.37} parent=1 // pred_check_branch
      %26 = sbr.rel (0) target = $region13
    $region12: #{text_decoder_forward.37} parent=1 // pred_region
      _
    $region13: #{text_decoder_forward.37} parent=1 // pred_fallthru
      _
    // Predicated region
    $region14: #{text_decoder_forward.37} parent=1 // pred_check
      _
    $region15: #{text_decoder_forward.37} parent=1 // pred_check_branch
      %28 = sbr.rel (0) target = $region17
    $region16: #{text_decoder_forward.37} parent=1 // pred_region
      _
    $region17: #{text_decoder_forward.37} parent=1 // pred_fallthru
      _
    // Predicated region
    $region18: #{text_decoder_forward.37} parent=1 // pred_check
      _
    $region19: #{text_decoder_forward.37} parent=1 // pred_check_branch
      %30 = sbr.rel (0) target = $region21
    $region20: #{text_decoder_forward.37} parent=1 // pred_region
      %32 = dma.done [#allocation3], 4096
    $region21: #{text_decoder_forward.37} parent=1 // pred_fallthru
      _
    %v33 = vld [vmem:[%s0] sm:$0xff]
    %v34 = vld [vmem:[%s0 + $0x8] sm:$0xff]
    %v35 = vld [vmem:[%s0 + $0x10] sm:$0xff]
    %v36 = vld [vmem:[%s0 + $0x18] sm:$0xff]
    %v37 = vld [vmem:[%s0 + $0x20] sm:$0xff]
    %v38 = vld [vmem:[%s0 + $0x28] sm:$0xff]
    %v39 = vld [vmem:[%s0 + $0x30] sm:$0xff]
    %v40 = vld [vmem:[%s0 + $0x38] sm:$0xff]
    %v41 = vld [vmem:[#allocation2] sm:$0xf]
    %v42 = vld [vmem:[#allocation2 + $0x4] sm:$0xf]
    %v43 = vld [vmem:[#allocation2 + $0x8] sm:$0xf]
    %v44 = vld [vmem:[#allocation2 + $0xc] sm:$0xf]
    %v45 = vld [vmem:[#allocation2 + $0x10] sm:$0xf]
    %v46 = vld [vmem:[#allocation2 + $0x14] sm:$0xf]
    %v47 = vld [vmem:[#allocation2 + $0x18] sm:$0xf]
    %v48 = vld [vmem:[#allocation2 + $0x1c] sm:$0xf]
    %v49 = vld [vmem:[#allocation2 + $0x20] sm:$0xf]
    %v50 = vld [vmem:[#allocation2 + $0x24] sm:$0xf]
    %v51 = vld [vmem:[#allocation2 + $0x28] sm:$0xf]
    %v52 = vld [vmem:[#allocation2 + $0x2c] sm:$0xf]
    %v53 = vld [vmem:[#allocation2 + $0x30] sm:$0xf]
    %v54 = vld [vmem:[#allocation2 + $0x34] sm:$0xf]
    %v55 = vld [vmem:[#allocation2 + $0x38] sm:$0xf]
    %v56 = vld [vmem:[#allocation2 + $0x3c] sm:$0xf]
    %v57 = vld [vmem:[#allocation2 + $0x40] sm:$0xf]
    %v58 = vld [vmem:[#allocation2 + $0x44] sm:$0xf]
    %v59 = vld [vmem:[#allocation2 + $0x48] sm:$0xf]
    %v60 = vld [vmem:[#allocation2 + $0x4c] sm:$0xf]
    %v61 = vld [vmem:[#allocation2 + $0x50] sm:$0xf]
    %v62 = vld [vmem:[#allocation2 + $0x54] sm:$0xf]
    %v63 = vld [vmem:[#allocation2 + $0x58] sm:$0xf]
    %v64 = vld [vmem:[#allocation2 + $0x5c] sm:$0xf]
    %v65 = vld [vmem:[#allocation2 + $0x60] sm:$0xf]
    %v66 = vld [vmem:[#allocation2 + $0x64] sm:$0xf]
    %v67 = vld [vmem:[#allocation2 + $0x68] sm:$0xf]
    %v68 = vld [vmem:[#allocation2 + $0x6c] sm:$0xf]
    %v69 = vld [vmem:[#allocation2 + $0x70] sm:$0xf]
    %v70 = vld [vmem:[#allocation2 + $0x74] sm:$0xf]
    %v71 = vld [vmem:[#allocation2 + $0x78] sm:$0xf]
    %v72 = vld [vmem:[#allocation2 + $0x7c] sm:$0xf]
    %v73 = vld [vmem:[#allocation2 + $0x80] sm:$0xf]
    %v74 = vld [vmem:[#allocation2 + $0x84] sm:$0xf]
    %v75 = vld [vmem:[#allocation2 + $0x88] sm:$0xf]
    %v76 = vld [vmem:[#allocation2 + $0x8c] sm:$0xf]
    %v77 = vld [vmem:[#allocation2 + $0x90] sm:$0xf]
    %v78 = vld [vmem:[#allocation2 + $0x94] sm:$0xf]
    %v79 = vld [vmem:[#allocation2 + $0x98] sm:$0xf]
    %v80 = vld [vmem:[#allocation2 + $0x9c] sm:$0xf]
    %v81 = vld [vmem:[#allocation2 + $0xa0] sm:$0xf]
    %v82 = vld [vmem:[#allocation2 + $0xa4] sm:$0xf]
    %v83 = vld [vmem:[#allocation2 + $0xa8] sm:$0xf]
    %v84 = vld [vmem:[#allocation2 + $0xac] sm:$0xf]
    %v85 = vld [vmem:[#allocation2 + $0xb0] sm:$0xf]
    %v86 = vld [vmem:[#allocation2 + $0xb4] sm:$0xf]
    %v87 = vld [vmem:[#allocation2 + $0xb8] sm:$0xf]
    %v88 = vld [vmem:[#allocation2 + $0xbc] sm:$0xf]
    %v89 = vld [vmem:[#allocation2 + $0xc0] sm:$0xf]
    %v90 = vld [vmem:[#allocation2 + $0xc4] sm:$0xf]
    %v91 = vld [vmem:[#allocation2 + $0xc8] sm:$0xf]
    %v92 = vld [vmem:[#allocation2 + $0xcc] sm:$0xf]
    %v93 = vld [vmem:[#allocation2 + $0xd0] sm:$0xf]
    %v94 = vld [vmem:[#allocation2 + $0xd4] sm:$0xf]
    %v95 = vld [vmem:[#allocation2 + $0xd8] sm:$0xf]
    %v96 = vld [vmem:[#allocation2 + $0xdc] sm:$0xf]
    %v97 = vld [vmem:[#allocation2 + $0xe0] sm:$0xf]
    %v98 = vld [vmem:[#allocation2 + $0xe4] sm:$0xf]
    %v99 = vld [vmem:[#allocation2 + $0xe8] sm:$0xf]
    %v100 = vld [vmem:[#allocation2 + $0xec] sm:$0xf]
    %v101 = vld [vmem:[#allocation2 + $0xf0] sm:$0xf]
    %v102 = vld [vmem:[#allocation2 + $0xf4] sm:$0xf]
    %v103 = vld [vmem:[#allocation2 + $0xf8] sm:$0xf]
    %v104 = vld [vmem:[#allocation2 + $0xfc] sm:$0xf]
    %v105 = vld [vmem:[%s2] sm:$0x1]
    %v107 = vperm.slane %v105, 0
    %v117 = vunpack.c.l.b16 %v33
    %v118 = vunpack.c.h.b16 %v33
    %v119 = vunpack.c.l.b16 %v34
    %v120 = vunpack.c.h.b16 %v34
    %v121 = vunpack.c.l.b16 %v35
    %v122 = vunpack.c.h.b16 %v35
    %v123 = vunpack.c.l.b16 %v36
    %v124 = vunpack.c.h.b16 %v36
    %v125 = vunpack.c.l.b16 %v37
    %v126 = vunpack.c.h.b16 %v37
    %v127 = vunpack.c.l.b16 %v38
    %v128 = vunpack.c.h.b16 %v38
    %v129 = vunpack.c.l.b16 %v39
    %v130 = vunpack.c.h.b16 %v39
    %v131 = vunpack.c.l.b16 %v40
    %v132 = vunpack.c.h.b16 %v40
    %v133 = vpack.c.b16 %v121, %v117
    %v134 = vpack.c.b16 %v122, %v118
    %v135 = vpack.c.b16 %v123, %v119
    %v136 = vpack.c.b16 %v124, %v120
    %v137 = vpack.c.b16 %v129, %v125
    %v138 = vpack.c.b16 %v130, %v126
    %v139 = vpack.c.b16 %v131, %v127
    %v140 = vpack.c.b16 %v132, %v128
    %v213 = vunpack.c.l.b16 %v41
    %v214 = vunpack.c.l.b16 %v42
    %v215 = vunpack.c.l.b16 %v43
    %v216 = vunpack.c.l.b16 %v44
    %v217 = vunpack.c.l.b16 %v45
    %v218 = vunpack.c.l.b16 %v46
    %v219 = vunpack.c.l.b16 %v47
    %v220 = vunpack.c.l.b16 %v48
    %v221 = vunpack.c.l.b16 %v49
    %v222 = vunpack.c.l.b16 %v50
    %v223 = vunpack.c.l.b16 %v51
    %v224 = vunpack.c.l.b16 %v52
    %v225 = vunpack.c.l.b16 %v53
    %v226 = vunpack.c.l.b16 %v54
    %v227 = vunpack.c.l.b16 %v55
    %v228 = vunpack.c.l.b16 %v56
    %v229 = vunpack.c.l.b16 %v57
    %v230 = vunpack.c.l.b16 %v58
    %v231 = vunpack.c.l.b16 %v59
    %v232 = vunpack.c.l.b16 %v60
    %v233 = vunpack.c.l.b16 %v61
    %v234 = vunpack.c.l.b16 %v62
    %v235 = vunpack.c.l.b16 %v63
    %v236 = vunpack.c.l.b16 %v64
    %v237 = vunpack.c.l.b16 %v65
    %v238 = vunpack.c.l.b16 %v66
    %v239 = vunpack.c.l.b16 %v67
    %v240 = vunpack.c.l.b16 %v68
    %v241 = vunpack.c.l.b16 %v69
    %v242 = vunpack.c.l.b16 %v70
    %v243 = vunpack.c.l.b16 %v71
    %v244 = vunpack.c.l.b16 %v72
    %v245 = vunpack.c.l.b16 %v73
    %v246 = vunpack.c.l.b16 %v74
    %v247 = vunpack.c.l.b16 %v75
    %v248 = vunpack.c.l.b16 %v76
    %v249 = vunpack.c.l.b16 %v77
    %v250 = vunpack.c.l.b16 %v78
    %v251 = vunpack.c.l.b16 %v79
    %v252 = vunpack.c.l.b16 %v80
    %v253 = vunpack.c.l.b16 %v81
    %v254 = vunpack.c.l.b16 %v82
    %v255 = vunpack.c.l.b16 %v83
    %v256 = vunpack.c.l.b16 %v84
    %v257 = vunpack.c.l.b16 %v85
    %v258 = vunpack.c.l.b16 %v86
    %v259 = vunpack.c.l.b16 %v87
    %v260 = vunpack.c.l.b16 %v88
    %v261 = vunpack.c.l.b16 %v89
    %v262 = vunpack.c.l.b16 %v90
    %v263 = vunpack.c.l.b16 %v91
    %v264 = vunpack.c.l.b16 %v92
    %v265 = vunpack.c.l.b16 %v93
    %v266 = vunpack.c.l.b16 %v94
    %v267 = vunpack.c.l.b16 %v95
    %v268 = vunpack.c.l.b16 %v96
    %v269 = vunpack.c.l.b16 %v97
    %v270 = vunpack.c.l.b16 %v98
    %v271 = vunpack.c.l.b16 %v99
    %v272 = vunpack.c.l.b16 %v100
    %v273 = vunpack.c.l.b16 %v101
    %v274 = vunpack.c.l.b16 %v102
    %v275 = vunpack.c.l.b16 %v103
    %v276 = vunpack.c.l.b16 %v104
    %v277 = vpack.c.b16 %v214, %v213
    %v278 = vpack.c.b16 %v216, %v215
    %v279 = vpack.c.b16 %v218, %v217
    %v280 = vpack.c.b16 %v220, %v219
    %v281 = vpack.c.b16 %v222, %v221
    %v282 = vpack.c.b16 %v224, %v223
    %v283 = vpack.c.b16 %v226, %v225
    %v284 = vpack.c.b16 %v228, %v227
    %v285 = vpack.c.b16 %v230, %v229
    %v286 = vpack.c.b16 %v232, %v231
    %v287 = vpack.c.b16 %v234, %v233
    %v288 = vpack.c.b16 %v236, %v235
    %v289 = vpack.c.b16 %v238, %v237
    %v290 = vpack.c.b16 %v240, %v239
    %v291 = vpack.c.b16 %v242, %v241
    %v292 = vpack.c.b16 %v244, %v243
    %v293 = vpack.c.b16 %v246, %v245
    %v294 = vpack.c.b16 %v248, %v247
    %v295 = vpack.c.b16 %v250, %v249
    %v296 = vpack.c.b16 %v252, %v251
    %v297 = vpack.c.b16 %v254, %v253
    %v298 = vpack.c.b16 %v256, %v255
    %v299 = vpack.c.b16 %v258, %v257
    %v300 = vpack.c.b16 %v260, %v259
    %v301 = vpack.c.b16 %v262, %v261
    %v302 = vpack.c.b16 %v264, %v263
    %v303 = vpack.c.b16 %v266, %v265
    %v304 = vpack.c.b16 %v268, %v267
    %v305 = vpack.c.b16 %v270, %v269
    %v306 = vpack.c.b16 %v272, %v271
    %v307 = vpack.c.b16 %v274, %v273
    %v308 = vpack.c.b16 %v276, %v275
    %341 = vmatpush.bf16.msra.mxu0 %v284
    %342 = vmatpush.bf16.msra.mxu0 %v283
    %343 = vmatpush.bf16.msra.mxu0 %v282
    %344 = vmatpush.bf16.msra.mxu0 %v281
    %345 = vmatpush.bf16.msra.mxu0 %v280
    %346 = vmatpush.bf16.msra.mxu0 %v279
    %347 = vmatpush.bf16.msra.mxu0 %v278
    %348 = vmatpush.bf16.msra.mxu0 %v277
    %349 = vmatmul.bf16.gmra.mxu0 %v133
    %v350 = vpop.f32.mrf.mxu0
    %v351 = vadd.f32 %v107, %v350
    %v352 = vpop.f32.mrf.mxu0
    %v353 = vadd.f32 %v107, %v352
    %354 = vmatmul.bf16.gmra.mxu0 %v137
    %v355 = vpop.f32.mrf.mxu0
    %v356 = vadd.f32 %v107, %v355
    %v357 = vpop.f32.mrf.mxu0
    %v358 = vadd.f32 %v107, %v357
    %359 = vdwg.mxu0
    %360 = vmatpush.bf16.msra.mxu0 %v292
    %361 = vmatpush.bf16.msra.mxu0 %v291
    %362 = vmatpush.bf16.msra.mxu0 %v290
    %363 = vmatpush.bf16.msra.mxu0 %v289
    %364 = vmatpush.bf16.msra.mxu0 %v288
    %365 = vmatpush.bf16.msra.mxu0 %v287
    %366 = vmatpush.bf16.msra.mxu0 %v286
    %367 = vmatpush.bf16.msra.mxu0 %v285
    %368 = vmatmul.bf16.gmra.mxu0 %v134
    %v369 = vpop.f32.mrf.mxu0
    %v370 = vadd.f32 %v351, %v369
    %v371 = vpop.f32.mrf.mxu0
    %v372 = vadd.f32 %v353, %v371
    %373 = vmatmul.bf16.gmra.mxu0 %v138
    %v374 = vpop.f32.mrf.mxu0
    %v375 = vadd.f32 %v356, %v374
    %v376 = vpop.f32.mrf.mxu0
    %v377 = vadd.f32 %v358, %v376
    %378 = vdwg.mxu0
    %379 = vmatpush.bf16.msra.mxu0 %v300
    %380 = vmatpush.bf16.msra.mxu0 %v299
    %381 = vmatpush.bf16.msra.mxu0 %v298
    %382 = vmatpush.bf16.msra.mxu0 %v297
    %383 = vmatpush.bf16.msra.mxu0 %v296
    %384 = vmatpush.bf16.msra.mxu0 %v295
    %385 = vmatpush.bf16.msra.mxu0 %v294
    %386 = vmatpush.bf16.msra.mxu0 %v293
    %387 = vmatmul.bf16.gmra.mxu0 %v135
    %v388 = vpop.f32.mrf.mxu0
    %v389 = vadd.f32 %v370, %v388
    %v390 = vpop.f32.mrf.mxu0
    %v391 = vadd.f32 %v372, %v390
    %392 = vmatmul.bf16.gmra.mxu0 %v139
    %v393 = vpop.f32.mrf.mxu0
    %v394 = vadd.f32 %v375, %v393
    %v395 = vpop.f32.mrf.mxu0
    %v396 = vadd.f32 %v377, %v395
    %397 = vdwg.mxu0
    %398 = vmatpush.bf16.msra.mxu0 %v308
    %399 = vmatpush.bf16.msra.mxu0 %v307
    %400 = vmatpush.bf16.msra.mxu0 %v306
    %401 = vmatpush.bf16.msra.mxu0 %v305
    %402 = vmatpush.bf16.msra.mxu0 %v304
    %403 = vmatpush.bf16.msra.mxu0 %v303
    %404 = vmatpush.bf16.msra.mxu0 %v302
    %405 = vmatpush.bf16.msra.mxu0 %v301
    %406 = vmatmul.bf16.gmra.mxu0 %v136
    %v407 = vpop.f32.mrf.mxu0
    %v408 = vadd.f32 %v389, %v407
    %v409 = vpop.f32.mrf.mxu0
    %v410 = vadd.f32 %v391, %v409
    %411 = vmatmul.bf16.gmra.mxu0 %v140
    %v412 = vpop.f32.mrf.mxu0
    %v413 = vadd.f32 %v394, %v412
    %v414 = vpop.f32.mrf.mxu0
    %v415 = vadd.f32 %v396, %v414
    %416 = vdwg.mxu0
    %v417 = vld [vmem:[%s3] sm:$0xff]
    %v418 = vld [vmem:[%s3 + $0x8] sm:$0xff]
    %v419 = vld [vmem:[%s3 + $0x10] sm:$0xff]
    %v420 = vld [vmem:[%s3 + $0x18] sm:$0xff]
    %v421 = vadd.f32 %v408, %v417
    %v422 = vadd.f32 %v410, %v418
    %v423 = vadd.f32 %v413, %v419
    %v424 = vadd.f32 %v415, %v420
    %425 = vst [vmem:[%s4] sm:$0xff] %v421
    %426 = vst [vmem:[%s4 + $0x8] sm:$0xff] %v422
    %427 = vst [vmem:[%s4 + $0x10] sm:$0xff] %v423
    %428 = vst [vmem:[%s4 + $0x18] sm:$0xff] %v424
    // Predicated region
    $region22: #{text_decoder_forward.37} parent=1 // pred_check
      _
    $region23: #{text_decoder_forward.37} parent=1 // pred_check_branch
      %430 = sbr.rel (0) target = $region25
    $region24: #{text_decoder_forward.37} parent=1 // pred_region
      _
    $region25: #{text_decoder_forward.37} parent=1 // pred_fallthru
      _
    // Predicated region
    $region26: #{text_decoder_forward.37} parent=1 // pred_check
      _
    $region27: #{text_decoder_forward.37} parent=1 // pred_check_branch
      %432 = sbr.rel (0) target = $region29
    $region28: #{text_decoder_forward.37} parent=1 // pred_region
      _
    $region29: #{text_decoder_forward.37} parent=1 // pred_fallthru
      _
    %433 = vsyncpa [#allocation3], 1

// kernel: text_decoder_forward.48
$region0: #{text_decoder_forward.48}
  #allocation0 [shape = 'u32[]', space=smem, size = 0x4, offset = 0x4, fixed_abs, tag = 'smem constant byte address 0x4 - core index']
  #allocation1 [shape = 'u32[72,128]{1,0:T(1,128)}', space=vmem, size = 0x9000, scoped, tag = 'internal scratch']
  %s0 = inlined_call_operand.vmem [shape: bf16[32,128], index: 0, kind: input, shape index: {}]
  %s1 = inlined_call_operand.hbm [shape: bf16[128,512], index: 1, kind: input, shape index: {}]
  %s2 = inlined_call_operand.vmem [shape: f32[1,512], index: 2, kind: input, shape index: {}]
  %s3 = inlined_call_operand.vmem [shape: bf16[32,512], index: 3, kind: output, shape index: {}]
  %s4 = sld [smem:[#allocation0]]
  $region26: #{text_decoder_forward.48} parent=0
    _
  %s6 = ssub.s32 1, %s4
  %s7 = scalar_select 0, %s6, %s4
  $region1: #{text_decoder_forward.48} parent=0
    #allocation2 [shape = 'u8[131072]{0}', space=vmem, size = 0x20000, scoped, tag = 'input window, operand 1, single buffered']
    #allocation3 [shape = 's32[1]{0}', space=sflag, size = 0x4, scoped, tag = 'scoped memory for text_decoder_forward.48']
    %8 = vsyncpa [#allocation3], 0
    // Predicated region
    $region2: #{text_decoder_forward.48} parent=1 // pred_check
      _
    $region3: #{text_decoder_forward.48} parent=1 // pred_check_branch
      %10 = sbr.rel (0) target = $region5
    $region4: #{text_decoder_forward.48} parent=1 // pred_region
      _
    $region5: #{text_decoder_forward.48} parent=1 // pred_fallthru
      _
    // Predicated region
    $region6: #{text_decoder_forward.48} parent=1 // pred_check
      _
    $region7: #{text_decoder_forward.48} parent=1 // pred_check_branch
      %12 = sbr.rel (0) target = $region9
    $region8: #{text_decoder_forward.48} parent=1 // pred_region
      %14 = vsyncadd [#allocation3], 0
      %s15 = sshll.u32 %s1, 4
      %s16 = int_to_ptr.hbm [resolvable:$true] %s15
      %s17 = sshll.u32 [#allocation2], 4
      %s18 = int_to_ptr.vmem [resolvable:$true] %s17
      %23 = dma.hbm_to_vmem [thread:$0]  %s16, 4096, %s18, [#allocation3], 256, 256, 16
    $region9: #{text_decoder_forward.48} parent=1 // pred_fallthru
      _
    // Predicated region
    $region10: #{text_decoder_forward.48} parent=1 // pred_check
      _
    $region11: #{text_decoder_forward.48} parent=1 // pred_check_branch
      %25 = sbr.rel (0) target = $region13
    $region12: #{text_decoder_forward.48} parent=1 // pred_region
      _
    $region13: #{text_decoder_forward.48} parent=1 // pred_fallthru
      _
    // Predicated region
    $region14: #{text_decoder_forward.48} parent=1 // pred_check
      _
    $region15: #{text_decoder_forward.48} parent=1 // pred_check_branch
      %27 = sbr.rel (0) target = $region17
    $region16: #{text_decoder_forward.48} parent=1 // pred_region
      %29 = dma.done [#allocation3], 4096
    $region17: #{text_decoder_forward.48} parent=1 // pred_fallthru
      _
    %v30 = vld [vmem:[%s0] sm:$0xf]
    %v31 = vld [vmem:[%s0 + $0x4] sm:$0xf]
    %v32 = vld [vmem:[%s0 + $0x8] sm:$0xf]
    %v33 = vld [vmem:[%s0 + $0xc] sm:$0xf]
    %v34 = vld [vmem:[#allocation2] sm:$0xff]
    %v35 = vld [vmem:[#allocation2 + $0x8] sm:$0xff]
    %v36 = vld [vmem:[#allocation2 + $0x10] sm:$0xff]
    %v37 = vld [vmem:[#allocation2 + $0x18] sm:$0xff]
    %v38 = vld [vmem:[#allocation2 + $0x20] sm:$0xff]
    %v39 = vld [vmem:[#allocation2 + $0x28] sm:$0xff]
    %v40 = vld [vmem:[#allocation2 + $0x30] sm:$0xff]
    %v41 = vld [vmem:[#allocation2 + $0x38] sm:$0xff]
    %v42 = vld [vmem:[#allocation2 + $0x40] sm:$0xff]
    %v43 = vld [vmem:[#allocation2 + $0x48] sm:$0xff]
    %v44 = vld [vmem:[#allocation2 + $0x50] sm:$0xff]
    %v45 = vld [vmem:[#allocation2 + $0x58] sm:$0xff]
    %v46 = vld [vmem:[#allocation2 + $0x60] sm:$0xff]
    %v47 = vld [vmem:[#allocation2 + $0x68] sm:$0xff]
    %v48 = vld [vmem:[#allocation2 + $0x70] sm:$0xff]
    %v49 = vld [vmem:[#allocation2 + $0x78] sm:$0xff]
    %v50 = vld [vmem:[#allocation2 + $0x80] sm:$0xff]
    %v51 = vld [vmem:[#allocation2 + $0x88] sm:$0xff]
    %v52 = vld [vmem:[#allocation2 + $0x90] sm:$0xff]
    %v53 = vld [vmem:[#allocation2 + $0x98] sm:$0xff]
    %v54 = vld [vmem:[#allocation2 + $0xa0] sm:$0xff]
    %v55 = vld [vmem:[#allocation2 + $0xa8] sm:$0xff]
    %v56 = vld [vmem:[#allocation2 + $0xb0] sm:$0xff]
    %v57 = vld [vmem:[#allocation2 + $0xb8] sm:$0xff]
    %v58 = vld [vmem:[#allocation2 + $0xc0] sm:$0xff]
    %v59 = vld [vmem:[#allocation2 + $0xc8] sm:$0xff]
    %v60 = vld [vmem:[#allocation2 + $0xd0] sm:$0xff]
    %v61 = vld [vmem:[#allocation2 + $0xd8] sm:$0xff]
    %v62 = vld [vmem:[#allocation2 + $0xe0] sm:$0xff]
    %v63 = vld [vmem:[#allocation2 + $0xe8] sm:$0xff]
    %v64 = vld [vmem:[#allocation2 + $0xf0] sm:$0xff]
    %v65 = vld [vmem:[#allocation2 + $0xf8] sm:$0xff]
    %v66 = vld [vmem:[%s2] sm:$0xf]
    %v68 = vperm.slane %v66, 0
    %v69 = vperm.slane %v66, 1
    %v70 = vperm.slane %v66, 2
    %v71 = vperm.slane %v66, 3
    %v80 = vunpack.c.l.b16 %v30
    %v81 = vunpack.c.l.b16 %v31
    %v82 = vunpack.c.l.b16 %v32
    %v83 = vunpack.c.l.b16 %v33
    %v84 = vpack.c.b16 %v81, %v80
    %v85 = vpack.c.b16 %v83, %v82
    %v120 = vunpack.c.l.b16 %v34
    %v121 = vunpack.c.h.b16 %v34
    %v122 = vunpack.c.l.b16 %v35
    %v123 = vunpack.c.h.b16 %v35
    %v124 = vunpack.c.l.b16 %v36
    %v125 = vunpack.c.h.b16 %v36
    %v126 = vunpack.c.l.b16 %v37
    %v127 = vunpack.c.h.b16 %v37
    %v128 = vunpack.c.l.b16 %v38
    %v129 = vunpack.c.h.b16 %v38
    %v130 = vunpack.c.l.b16 %v39
    %v131 = vunpack.c.h.b16 %v39
    %v132 = vunpack.c.l.b16 %v40
    %v133 = vunpack.c.h.b16 %v40
    %v134 = vunpack.c.l.b16 %v41
    %v135 = vunpack.c.h.b16 %v41
    %v136 = vunpack.c.l.b16 %v42
    %v137 = vunpack.c.h.b16 %v42
    %v138 = vunpack.c.l.b16 %v43
    %v139 = vunpack.c.h.b16 %v43
    %v140 = vunpack.c.l.b16 %v44
    %v141 = vunpack.c.h.b16 %v44
    %v142 = vunpack.c.l.b16 %v45
    %v143 = vunpack.c.h.b16 %v45
    %v144 = vunpack.c.l.b16 %v46
    %v145 = vunpack.c.h.b16 %v46
    %v146 = vunpack.c.l.b16 %v47
    %v147 = vunpack.c.h.b16 %v47
    %v148 = vunpack.c.l.b16 %v48
    %v149 = vunpack.c.h.b16 %v48
    %v150 = vunpack.c.l.b16 %v49
    %v151 = vunpack.c.h.b16 %v49
    %v152 = vunpack.c.l.b16 %v50
    %v153 = vunpack.c.h.b16 %v50
    %v154 = vunpack.c.l.b16 %v51
    %v155 = vunpack.c.h.b16 %v51
    %v156 = vunpack.c.l.b16 %v52
    %v157 = vunpack.c.h.b16 %v52
    %v158 = vunpack.c.l.b16 %v53
    %v159 = vunpack.c.h.b16 %v53
    %v160 = vunpack.c.l.b16 %v54
    %v161 = vunpack.c.h.b16 %v54
    %v162 = vunpack.c.l.b16 %v55
    %v163 = vunpack.c.h.b16 %v55
    %v164 = vunpack.c.l.b16 %v56
    %v165 = vunpack.c.h.b16 %v56
    %v166 = vunpack.c.l.b16 %v57
    %v167 = vunpack.c.h.b16 %v57
    %v168 = vunpack.c.l.b16 %v58
    %v169 = vunpack.c.h.b16 %v58
    %v170 = vunpack.c.l.b16 %v59
    %v171 = vunpack.c.h.b16 %v59
    %v172 = vunpack.c.l.b16 %v60
    %v173 = vunpack.c.h.b16 %v60
    %v174 = vunpack.c.l.b16 %v61
    %v175 = vunpack.c.h.b16 %v61
    %v176 = vunpack.c.l.b16 %v62
    %v177 = vunpack.c.h.b16 %v62
    %v178 = vunpack.c.l.b16 %v63
    %v179 = vunpack.c.h.b16 %v63
    %v180 = vunpack.c.l.b16 %v64
    %v181 = vunpack.c.h.b16 %v64
    %v182 = vunpack.c.l.b16 %v65
    %v183 = vunpack.c.h.b16 %v65
    %v184 = vpack.c.b16 %v124, %v120
    %v185 = vpack.c.b16 %v125, %v121
    %v186 = vpack.c.b16 %v126, %v122
    %v187 = vpack.c.b16 %v127, %v123
    %v188 = vpack.c.b16 %v132, %v128
    %v189 = vpack.c.b16 %v133, %v129
    %v190 = vpack.c.b16 %v134, %v130
    %v191 = vpack.c.b16 %v135, %v131
    %v192 = vpack.c.b16 %v140, %v136
    %v193 = vpack.c.b16 %v141, %v137
    %v194 = vpack.c.b16 %v142, %v138
    %v195 = vpack.c.b16 %v143, %v139
    %v196 = vpack.c.b16 %v148, %v144
    %v197 = vpack.c.b16 %v149, %v145
    %v198 = vpack.c.b16 %v150, %v146
    %v199 = vpack.c.b16 %v151, %v147
    %v200 = vpack.c.b16 %v156, %v152
    %v201 = vpack.c.b16 %v157, %v153
    %v202 = vpack.c.b16 %v158, %v154
    %v203 = vpack.c.b16 %v159, %v155
    %v204 = vpack.c.b16 %v164, %v160
    %v205 = vpack.c.b16 %v165, %v161
    %v206 = vpack.c.b16 %v166, %v162
    %v207 = vpack.c.b16 %v167, %v163
    %v208 = vpack.c.b16 %v172, %v168
    %v209 = vpack.c.b16 %v173, %v169
    %v210 = vpack.c.b16 %v174, %v170
    %v211 = vpack.c.b16 %v175, %v171
    %v212 = vpack.c.b16 %v180, %v176
    %v213 = vpack.c.b16 %v181, %v177
    %v214 = vpack.c.b16 %v182, %v178
    %v215 = vpack.c.b16 %v183, %v179
    %248 = vmatpush.bf16.msra.mxu0 %v212
    %249 = vmatpush.bf16.msra.mxu0 %v208
    %250 = vmatpush.bf16.msra.mxu0 %v204
    %251 = vmatpush.bf16.msra.mxu0 %v200
    %252 = vmatpush.bf16.msra.mxu0 %v196
    %253 = vmatpush.bf16.msra.mxu0 %v192
    %254 = vmatpush.bf16.msra.mxu0 %v188
    %255 = vmatpush.bf16.msra.mxu0 %v184
    %256 = vmatmul.bf16.gmra.mxu0 %v84
    %v257 = vpop.f32.mrf.mxu0
    %v258 = vadd.f32 %v68, %v257
    %v259 = vpop.f32.mrf.mxu0
    %v260 = vadd.f32 %v68, %v259
    %261 = vmatmul.bf16.gmra.mxu0 %v85
    %v262 = vpop.f32.mrf.mxu0
    %v263 = vadd.f32 %v68, %v262
    %v264 = vpop.f32.mrf.mxu0
    %v265 = vadd.f32 %v68, %v264
    %266 = vdwg.mxu0
    %267 = vmatpush.bf16.msra.mxu0 %v213
    %268 = vmatpush.bf16.msra.mxu0 %v209
    %269 = vmatpush.bf16.msra.mxu0 %v205
    %270 = vmatpush.bf16.msra.mxu0 %v201
    %271 = vmatpush.bf16.msra.mxu0 %v197
    %272 = vmatpush.bf16.msra.mxu0 %v193
    %273 = vmatpush.bf16.msra.mxu0 %v189
    %274 = vmatpush.bf16.msra.mxu0 %v185
    %275 = vmatmul.bf16.gmra.mxu0 %v84
    %v276 = vpop.f32.mrf.mxu0
    %v277 = vadd.f32 %v69, %v276
    %v278 = vpop.f32.mrf.mxu0
    %v279 = vadd.f32 %v69, %v278
    %280 = vmatmul.bf16.gmra.mxu0 %v85
    %v281 = vpop.f32.mrf.mxu0
    %v282 = vadd.f32 %v69, %v281
    %v283 = vpop.f32.mrf.mxu0
    %v284 = vadd.f32 %v69, %v283
    %285 = vdwg.mxu0
    %286 = vmatpush.bf16.msra.mxu0 %v214
    %287 = vmatpush.bf16.msra.mxu0 %v210
    %288 = vmatpush.bf16.msra.mxu0 %v206
    %289 = vmatpush.bf16.msra.mxu0 %v202
    %290 = vmatpush.bf16.msra.mxu0 %v198
    %291 = vmatpush.bf16.msra.mxu0 %v194
    %292 = vmatpush.bf16.msra.mxu0 %v190
    %293 = vmatpush.bf16.msra.mxu0 %v186
    %294 = vmatmul.bf16.gmra.mxu0 %v84
    %v295 = vpop.f32.mrf.mxu0
    %v296 = vadd.f32 %v70, %v295
    %v297 = vpop.f32.mrf.mxu0
    %v298 = vadd.f32 %v70, %v297
    %299 = vmatmul.bf16.gmra.mxu0 %v85
    %v300 = vpop.f32.mrf.mxu0
    %v301 = vadd.f32 %v70, %v300
    %v302 = vpop.f32.mrf.mxu0
    %v303 = vadd.f32 %v70, %v302
    %304 = vdwg.mxu0
    %305 = vmatpush.bf16.msra.mxu0 %v215
    %306 = vmatpush.bf16.msra.mxu0 %v211
    %307 = vmatpush.bf16.msra.mxu0 %v207
    %308 = vmatpush.bf16.msra.mxu0 %v203
    %309 = vmatpush.bf16.msra.mxu0 %v199
    %310 = vmatpush.bf16.msra.mxu0 %v195
    %311 = vmatpush.bf16.msra.mxu0 %v191
    %312 = vmatpush.bf16.msra.mxu0 %v187
    %313 = vmatmul.bf16.gmra.mxu0 %v84
    %v314 = vpop.f32.mrf.mxu0
    %v315 = vadd.f32 %v71, %v314
    %v316 = vpop.f32.mrf.mxu0
    %v317 = vadd.f32 %v71, %v316
    %318 = vmatmul.bf16.gmra.mxu0 %v85
    %v319 = vpop.f32.mrf.mxu0
    %v320 = vadd.f32 %v71, %v319
    %v321 = vpop.f32.mrf.mxu0
    %v322 = vadd.f32 %v71, %v321
    %323 = vdwg.mxu0
    %v324 = vmul.f32 %v258, %v258
    %v325 = vmul.f32 %v277, %v277
    %v326 = vmul.f32 %v296, %v296
    %v327 = vmul.f32 %v315, %v315
    %v328 = vmul.f32 %v260, %v260
    %v329 = vmul.f32 %v279, %v279
    %v330 = vmul.f32 %v298, %v298
    %v331 = vmul.f32 %v317, %v317
    %v332 = vmul.f32 %v263, %v263
    %v333 = vmul.f32 %v282, %v282
    %v334 = vmul.f32 %v301, %v301
    %v335 = vmul.f32 %v320, %v320
    %v336 = vmul.f32 %v265, %v265
    %v337 = vmul.f32 %v284, %v284
    %v338 = vmul.f32 %v303, %v303
    %v339 = vmul.f32 %v322, %v322
    %v340 = vmul.f32 %v258, %v324
    %v341 = vmul.f32 %v277, %v325
    %v342 = vmul.f32 %v296, %v326
    %v343 = vmul.f32 %v315, %v327
    %v344 = vmul.f32 %v260, %v328
    %v345 = vmul.f32 %v279, %v329
    %v346 = vmul.f32 %v298, %v330
    %v347 = vmul.f32 %v317, %v331
    %v348 = vmul.f32 %v263, %v332
    %v349 = vmul.f32 %v282, %v333
    %v350 = vmul.f32 %v301, %v334
    %v351 = vmul.f32 %v320, %v335
    %v352 = vmul.f32 %v265, %v336
    %v353 = vmul.f32 %v284, %v337
    %v354 = vmul.f32 %v303, %v338
    %v355 = vmul.f32 %v322, %v339
    %v356 = vmul.f32 %v340, 0.044715
    %v357 = vmul.f32 %v341, 0.044715
    %v358 = vmul.f32 %v342, 0.044715
    %v359 = vmul.f32 %v343, 0.044715
    %v360 = vmul.f32 %v344, 0.044715
    %v361 = vmul.f32 %v345, 0.044715
    %v362 = vmul.f32 %v346, 0.044715
    %v363 = vmul.f32 %v347, 0.044715
    %v364 = vmul.f32 %v348, 0.044715
    %v365 = vmul.f32 %v349, 0.044715
    %v366 = vmul.f32 %v350, 0.044715
    %v367 = vmul.f32 %v351, 0.044715
    %v368 = vmul.f32 %v352, 0.044715
    %v369 = vmul.f32 %v353, 0.044715
    %v370 = vmul.f32 %v354, 0.044715
    %v371 = vmul.f32 %v355, 0.044715
    %v372 = vadd.f32 %v258, %v356
    %v373 = vadd.f32 %v277, %v357
    %v374 = vadd.f32 %v296, %v358
    %v375 = vadd.f32 %v315, %v359
    %v376 = vadd.f32 %v260, %v360
    %v377 = vadd.f32 %v279, %v361
    %v378 = vadd.f32 %v298, %v362
    %v379 = vadd.f32 %v317, %v363
    %v380 = vadd.f32 %v263, %v364
    %v381 = vadd.f32 %v282, %v365
    %v382 = vadd.f32 %v301, %v366
    %v383 = vadd.f32 %v320, %v367
    %v384 = vadd.f32 %v265, %v368
    %v385 = vadd.f32 %v284, %v369
    %v386 = vadd.f32 %v303, %v370
    %v387 = vadd.f32 %v322, %v371
    %v388 = vmul.f32 %v372, 0.7978846
    %v389 = vmul.f32 %v373, 0.7978846
    %v390 = vmul.f32 %v374, 0.7978846
    %v391 = vmul.f32 %v375, 0.7978846
    %v392 = vmul.f32 %v376, 0.7978846
    %v393 = vmul.f32 %v377, 0.7978846
    %v394 = vmul.f32 %v378, 0.7978846
    %v395 = vmul.f32 %v379, 0.7978846
    %v396 = vmul.f32 %v380, 0.7978846
    %v397 = vmul.f32 %v381, 0.7978846
    %v398 = vmul.f32 %v382, 0.7978846
    %v399 = vmul.f32 %v383, 0.7978846
    %v400 = vmul.f32 %v384, 0.7978846
    %v401 = vmul.f32 %v385, 0.7978846
    %v402 = vmul.f32 %v386, 0.7978846
    %v403 = vmul.f32 %v387, 0.7978846
    %v404 = vtanh.pop %v388
    %v405 = vtanh.pop %v389
    %v406 = vtanh.pop %v390
    %v407 = vtanh.pop %v391
    %v408 = vtanh.pop %v392
    %v409 = vtanh.pop %v393
    %v410 = vtanh.pop %v394
    %v411 = vtanh.pop %v395
    %v412 = vtanh.pop %v396
    %v413 = vtanh.pop %v397
    %v414 = vtanh.pop %v398
    %v415 = vtanh.pop %v399
    %v416 = vtanh.pop %v400
    %v417 = vtanh.pop %v401
    %v418 = vtanh.pop %v402
    %v419 = vtanh.pop %v403
    %v420 = vadd.f32 %v404, 1.0
    %v421 = vadd.f32 %v405, 1.0
    %v422 = vadd.f32 %v406, 1.0
    %v423 = vadd.f32 %v407, 1.0
    %v424 = vadd.f32 %v408, 1.0
    %v425 = vadd.f32 %v409, 1.0
    %v426 = vadd.f32 %v410, 1.0
    %v427 = vadd.f32 %v411, 1.0
    %v428 = vadd.f32 %v412, 1.0
    %v429 = vadd.f32 %v413, 1.0
    %v430 = vadd.f32 %v414, 1.0
    %v431 = vadd.f32 %v415, 1.0
    %v432 = vadd.f32 %v416, 1.0
    %v433 = vadd.f32 %v417, 1.0
    %v434 = vadd.f32 %v418, 1.0
    %v435 = vadd.f32 %v419, 1.0
    %v436 = vmul.f32 %v420, 0.5
    %v437 = vmul.f32 %v421, 0.5
    %v438 = vmul.f32 %v422, 0.5
    %v439 = vmul.f32 %v423, 0.5
    %v440 = vmul.f32 %v424, 0.5
    %v441 = vmul.f32 %v425, 0.5
    %v442 = vmul.f32 %v426, 0.5
    %v443 = vmul.f32 %v427, 0.5
    %v444 = vmul.f32 %v428, 0.5
    %v445 = vmul.f32 %v429, 0.5
    %v446 = vmul.f32 %v430, 0.5
    %v447 = vmul.f32 %v431, 0.5
    %v448 = vmul.f32 %v432, 0.5
    %v449 = vmul.f32 %v433, 0.5
    %v450 = vmul.f32 %v434, 0.5
    %v451 = vmul.f32 %v435, 0.5
    %v452 = vmul.f32 %v258, %v436
    %v453 = vmul.f32 %v277, %v437
    %v454 = vmul.f32 %v296, %v438
    %v455 = vmul.f32 %v315, %v439
    %v456 = vmul.f32 %v260, %v440
    %v457 = vmul.f32 %v279, %v441
    %v458 = vmul.f32 %v298, %v442
    %v459 = vmul.f32 %v317, %v443
    %v460 = vmul.f32 %v263, %v444
    %v461 = vmul.f32 %v282, %v445
    %v462 = vmul.f32 %v301, %v446
    %v463 = vmul.f32 %v320, %v447
    %v464 = vmul.f32 %v265, %v448
    %v465 = vmul.f32 %v284, %v449
    %v466 = vmul.f32 %v303, %v450
    %v467 = vmul.f32 %v322, %v451
    %v468 = vpack.c.bf16 %v453, %v452
    %v469 = vpack.c.bf16 %v455, %v454
    %v470 = vpack.c.bf16 %v457, %v456
    %v471 = vpack.c.bf16 %v459, %v458
    %v472 = vpack.c.bf16 %v461, %v460
    %v473 = vpack.c.bf16 %v463, %v462
    %v474 = vpack.c.bf16 %v465, %v464
    %v475 = vpack.c.bf16 %v467, %v466
    %476 = vst [vmem:[%s3] sm:$0xff] %v468
    %477 = vst [vmem:[%s3 + $0x8] sm:$0xff] %v469
    %478 = vst [vmem:[%s3 + $0x10] sm:$0xff] %v470
    %479 = vst [vmem:[%s3 + $0x18] sm:$0xff] %v471
    %480 = vst [vmem:[%s3 + $0x20] sm:$0xff] %v472
    %481 = vst [vmem:[%s3 + $0x28] sm:$0xff] %v473
    %482 = vst [vmem:[%s3 + $0x30] sm:$0xff] %v474
    %483 = vst [vmem:[%s3 + $0x38] sm:$0xff] %v475
    // Predicated region
    $region18: #{text_decoder_forward.48} parent=1 // pred_check
      _
    $region19: #{text_decoder_forward.48} parent=1 // pred_check_branch
      %485 = sbr.rel (0) target = $region21
    $region20: #{text_decoder_forward.48} parent=1 // pred_region
      _
    $region21: #{text_decoder_forward.48} parent=1 // pred_fallthru
      _
    // Predicated region
    $region22: #{text_decoder_forward.48} parent=1 // pred_check
      _
    $region23: #{text_decoder_forward.48} parent=1 // pred_check_branch
      %487 = sbr.rel (0) target = $region25
    $region24: #{text_decoder_forward.48} parent=1 // pred_region
      _
    $region25: #{text_decoder_forward.48} parent=1 // pred_fallthru
      _
    %488 = vsyncpa [#allocation3], 1

// kernel: text_decoder_forward.51
$region0: #{text_decoder_forward.51}
  #allocation0 [shape = 'u32[]', space=smem, size = 0x4, offset = 0x4, fixed_abs, tag = 'smem constant byte address 0x4 - core index']
  #allocation1 [shape = 'u32[72,128]{1,0:T(1,128)}', space=vmem, size = 0x9000, scoped, tag = 'internal scratch']
  %s0 = inlined_call_operand.vmem [shape: bf16[32,128], index: 0, kind: input, shape index: {}]
  %s1 = inlined_call_operand.hbm [shape: bf16[128,1024], index: 1, kind: input, shape index: {}]
  %s2 = inlined_call_operand.hbm [shape: f32[32,1024], index: 2, kind: output, shape index: {}]
  %s3 = sld [smem:[#allocation0]]
  $region22: #{text_decoder_forward.51} parent=0
    _
  %s5 = ssub.s32 1, %s3
  %s6 = scalar_select 0, %s5, %s3
  $region1: #{text_decoder_forward.51} parent=0
    #allocation2 [shape = 'u8[262144]{0}', space=vmem, size = 0x40000, scoped, tag = 'input window, operand 1, single buffered']
    #allocation3 [shape = 's32[1]{0}', space=sflag, size = 0x4, scoped, tag = 'scoped memory for text_decoder_forward.51']
    #allocation4 [shape = 's32[1]{0}', space=sflag, size = 0x4, scoped, tag = 'scoped memory for text_decoder_forward.51']
    #allocation5 [shape = 'u8[131072]{0}', space=vmem, size = 0x20000, scoped, tag = 'output window, operand 0, single buffered']
    %7 = vsyncpa [#allocation3], 0
    %8 = vsyncpa [#allocation4], 0
    // Predicated region
    $region2: #{text_decoder_forward.51} parent=1 // pred_check
      _
    $region3: #{text_decoder_forward.51} parent=1 // pred_check_branch
      %10 = sbr.rel (0) target = $region5
    $region4: #{text_decoder_forward.51} parent=1 // pred_region
      _
    $region5: #{text_decoder_forward.51} parent=1 // pred_fallthru
      _
    // Predicated region
    $region6: #{text_decoder_forward.51} parent=1 // pred_check
      _
    $region7: #{text_decoder_forward.51} parent=1 // pred_check_branch
      %12 = sbr.rel (0) target = $region9
    $region8: #{text_decoder_forward.51} parent=1 // pred_region
      %14 = vsyncadd [#allocation3], 0
      %s15 = sshll.u32 %s1, 4
      %s16 = int_to_ptr.hbm [resolvable:$true] %s15
      %s17 = sshll.u32 [#allocation2], 4
      %s18 = int_to_ptr.vmem [resolvable:$true] %s17
      %23 = dma.hbm_to_vmem [thread:$0]  %s16, 8192, %s18, [#allocation3], 512, 512, 32
    $region9: #{text_decoder_forward.51} parent=1 // pred_fallthru
      _
    // Predicated region
    $region10: #{text_decoder_forward.51} parent=1 // pred_check
      _
    $region11: #{text_decoder_forward.51} parent=1 // pred_check_branch
      %25 = sbr.rel (0) target = $region13
    $region12: #{text_decoder_forward.51} parent=1 // pred_region
      %27 = dma.done [#allocation3], 8192
    $region13: #{text_decoder_forward.51} parent=1 // pred_fallthru
      _
    %v28 = vld [vmem:[%s0] sm:$0xf]
    %v29 = vld [vmem:[%s0 + $0x4] sm:$0xf]
    %v30 = vld [vmem:[%s0 + $0x8] sm:$0xf]
    %v31 = vld [vmem:[%s0 + $0xc] sm:$0xf]
    %v32 = vld [vmem:[#allocation2] sm:$0xff]
    %v33 = vld [vmem:[#allocation2 + $0x8] sm:$0xff]
    %v34 = vld [vmem:[#allocation2 + $0x10] sm:$0xff]
    %v35 = vld [vmem:[#allocation2 + $0x18] sm:$0xff]
    %v36 = vld [vmem:[#allocation2 + $0x20] sm:$0xff]
    %v37 = vld [vmem:[#allocation2 + $0x28] sm:$0xff]
    %v38 = vld [vmem:[#allocation2 + $0x30] sm:$0xff]
    %v39 = vld [vmem:[#allocation2 + $0x38] sm:$0xff]
    %v40 = vld [vmem:[#allocation2 + $0x40] sm:$0xff]
    %v41 = vld [vmem:[#allocation2 + $0x48] sm:$0xff]
    %v42 = vld [vmem:[#allocation2 + $0x50] sm:$0xff]
    %v43 = vld [vmem:[#allocation2 + $0x58] sm:$0xff]
    %v44 = vld [vmem:[#allocation2 + $0x60] sm:$0xff]
    %v45 = vld [vmem:[#allocation2 + $0x68] sm:$0xff]
    %v46 = vld [vmem:[#allocation2 + $0x70] sm:$0xff]
    %v47 = vld [vmem:[#allocation2 + $0x78] sm:$0xff]
    %v48 = vld [vmem:[#allocation2 + $0x80] sm:$0xff]
    %v49 = vld [vmem:[#allocation2 + $0x88] sm:$0xff]
    %v50 = vld [vmem:[#allocation2 + $0x90] sm:$0xff]
    %v51 = vld [vmem:[#allocation2 + $0x98] sm:$0xff]
    %v52 = vld [vmem:[#allocation2 + $0xa0] sm:$0xff]
    %v53 = vld [vmem:[#allocation2 + $0xa8] sm:$0xff]
    %v54 = vld [vmem:[#allocation2 + $0xb0] sm:$0xff]
    %v55 = vld [vmem:[#allocation2 + $0xb8] sm:$0xff]
    %v56 = vld [vmem:[#allocation2 + $0xc0] sm:$0xff]
    %v57 = vld [vmem:[#allocation2 + $0xc8] sm:$0xff]
    %v58 = vld [vmem:[#allocation2 + $0xd0] sm:$0xff]
    %v59 = vld [vmem:[#allocation2 + $0xd8] sm:$0xff]
    %v60 = vld [vmem:[#allocation2 + $0xe0] sm:$0xff]
    %v61 = vld [vmem:[#allocation2 + $0xe8] sm:$0xff]
    %v62 = vld [vmem:[#allocation2 + $0xf0] sm:$0xff]
    %v63 = vld [vmem:[#allocation2 + $0xf8] sm:$0xff]
    %v64 = vld [vmem:[#allocation2 + $0x100] sm:$0xff]
    %v65 = vld [vmem:[#allocation2 + $0x108] sm:$0xff]
    %v66 = vld [vmem:[#allocation2 + $0x110] sm:$0xff]
    %v67 = vld [vmem:[#allocation2 + $0x118] sm:$0xff]
    %v68 = vld [vmem:[#allocation2 + $0x120] sm:$0xff]
    %v69 = vld [vmem:[#allocation2 + $0x128] sm:$0xff]
    %v70 = vld [vmem:[#allocation2 + $0x130] sm:$0xff]
    %v71 = vld [vmem:[#allocation2 + $0x138] sm:$0xff]
    %v72 = vld [vmem:[#allocation2 + $0x140] sm:$0xff]
    %v73 = vld [vmem:[#allocation2 + $0x148] sm:$0xff]
    %v74 = vld [vmem:[#allocation2 + $0x150] sm:$0xff]
    %v75 = vld [vmem:[#allocation2 + $0x158] sm:$0xff]
    %v76 = vld [vmem:[#allocation2 + $0x160] sm:$0xff]
    %v77 = vld [vmem:[#allocation2 + $0x168] sm:$0xff]
    %v78 = vld [vmem:[#allocation2 + $0x170] sm:$0xff]
    %v79 = vld [vmem:[#allocation2 + $0x178] sm:$0xff]
    %v80 = vld [vmem:[#allocation2 + $0x180] sm:$0xff]
    %v81 = vld [vmem:[#allocation2 + $0x188] sm:$0xff]
    %v82 = vld [vmem:[#allocation2 + $0x190] sm:$0xff]
    %v83 = vld [vmem:[#allocation2 + $0x198] sm:$0xff]
    %v84 = vld [vmem:[#allocation2 + $0x1a0] sm:$0xff]
    %v85 = vld [vmem:[#allocation2 + $0x1a8] sm:$0xff]
    %v86 = vld [vmem:[#allocation2 + $0x1b0] sm:$0xff]
    %v87 = vld [vmem:[#allocation2 + $0x1b8] sm:$0xff]
    %v88 = vld [vmem:[#allocation2 + $0x1c0] sm:$0xff]
    %v89 = vld [vmem:[#allocation2 + $0x1c8] sm:$0xff]
    %v90 = vld [vmem:[#allocation2 + $0x1d0] sm:$0xff]
    %v91 = vld [vmem:[#allocation2 + $0x1d8] sm:$0xff]
    %v92 = vld [vmem:[#allocation2 + $0x1e0] sm:$0xff]
    %v93 = vld [vmem:[#allocation2 + $0x1e8] sm:$0xff]
    %v94 = vld [vmem:[#allocation2 + $0x1f0] sm:$0xff]
    %v95 = vld [vmem:[#allocation2 + $0x1f8] sm:$0xff]
    %v100 = vunpack.c.l.b16 %v28
    %v101 = vunpack.c.l.b16 %v29
    %v102 = vunpack.c.l.b16 %v30
    %v103 = vunpack.c.l.b16 %v31
    %v104 = vpack.c.b16 %v101, %v100
    %v105 = vpack.c.b16 %v103, %v102
    %v172 = vunpack.c.l.b16 %v32
    %v173 = vunpack.c.h.b16 %v32
    %v174 = vunpack.c.l.b16 %v33
    %v175 = vunpack.c.h.b16 %v33
    %v176 = vunpack.c.l.b16 %v34
    %v177 = vunpack.c.h.b16 %v34
    %v178 = vunpack.c.l.b16 %v35
    %v179 = vunpack.c.h.b16 %v35
    %v180 = vunpack.c.l.b16 %v36
    %v181 = vunpack.c.h.b16 %v36
    %v182 = vunpack.c.l.b16 %v37
    %v183 = vunpack.c.h.b16 %v37
    %v184 = vunpack.c.l.b16 %v38
    %v185 = vunpack.c.h.b16 %v38
    %v186 = vunpack.c.l.b16 %v39
    %v187 = vunpack.c.h.b16 %v39
    %v188 = vunpack.c.l.b16 %v40
    %v189 = vunpack.c.h.b16 %v40
    %v190 = vunpack.c.l.b16 %v41
    %v191 = vunpack.c.h.b16 %v41
    %v192 = vunpack.c.l.b16 %v42
    %v193 = vunpack.c.h.b16 %v42
    %v194 = vunpack.c.l.b16 %v43
    %v195 = vunpack.c.h.b16 %v43
    %v196 = vunpack.c.l.b16 %v44
    %v197 = vunpack.c.h.b16 %v44
    %v198 = vunpack.c.l.b16 %v45
    %v199 = vunpack.c.h.b16 %v45
    %v200 = vunpack.c.l.b16 %v46
    %v201 = vunpack.c.h.b16 %v46
    %v202 = vunpack.c.l.b16 %v47
    %v203 = vunpack.c.h.b16 %v47
    %v204 = vunpack.c.l.b16 %v48
    %v205 = vunpack.c.h.b16 %v48
    %v206 = vunpack.c.l.b16 %v49
    %v207 = vunpack.c.h.b16 %v49
    %v208 = vunpack.c.l.b16 %v50
    %v209 = vunpack.c.h.b16 %v50
    %v210 = vunpack.c.l.b16 %v51
    %v211 = vunpack.c.h.b16 %v51
    %v212 = vunpack.c.l.b16 %v52
    %v213 = vunpack.c.h.b16 %v52
    %v214 = vunpack.c.l.b16 %v53
    %v215 = vunpack.c.h.b16 %v53
    %v216 = vunpack.c.l.b16 %v54
    %v217 = vunpack.c.h.b16 %v54
    %v218 = vunpack.c.l.b16 %v55
    %v219 = vunpack.c.h.b16 %v55
    %v220 = vunpack.c.l.b16 %v56
    %v221 = vunpack.c.h.b16 %v56
    %v222 = vunpack.c.l.b16 %v57
    %v223 = vunpack.c.h.b16 %v57
    %v224 = vunpack.c.l.b16 %v58
    %v225 = vunpack.c.h.b16 %v58
    %v226 = vunpack.c.l.b16 %v59
    %v227 = vunpack.c.h.b16 %v59
    %v228 = vunpack.c.l.b16 %v60
    %v229 = vunpack.c.h.b16 %v60
    %v230 = vunpack.c.l.b16 %v61
    %v231 = vunpack.c.h.b16 %v61
    %v232 = vunpack.c.l.b16 %v62
    %v233 = vunpack.c.h.b16 %v62
    %v234 = vunpack.c.l.b16 %v63
    %v235 = vunpack.c.h.b16 %v63
    %v236 = vunpack.c.l.b16 %v64
    %v237 = vunpack.c.h.b16 %v64
    %v238 = vunpack.c.l.b16 %v65
    %v239 = vunpack.c.h.b16 %v65
    %v240 = vunpack.c.l.b16 %v66
    %v241 = vunpack.c.h.b16 %v66
    %v242 = vunpack.c.l.b16 %v67
    %v243 = vunpack.c.h.b16 %v67
    %v244 = vunpack.c.l.b16 %v68
    %v245 = vunpack.c.h.b16 %v68
    %v246 = vunpack.c.l.b16 %v69
    %v247 = vunpack.c.h.b16 %v69
    %v248 = vunpack.c.l.b16 %v70
    %v249 = vunpack.c.h.b16 %v70
    %v250 = vunpack.c.l.b16 %v71
    %v251 = vunpack.c.h.b16 %v71
    %v252 = vunpack.c.l.b16 %v72
    %v253 = vunpack.c.h.b16 %v72
    %v254 = vunpack.c.l.b16 %v73
    %v255 = vunpack.c.h.b16 %v73
    %v256 = vunpack.c.l.b16 %v74
    %v257 = vunpack.c.h.b16 %v74
    %v258 = vunpack.c.l.b16 %v75
    %v259 = vunpack.c.h.b16 %v75
    %v260 = vunpack.c.l.b16 %v76
    %v261 = vunpack.c.h.b16 %v76
    %v262 = vunpack.c.l.b16 %v77
    %v263 = vunpack.c.h.b16 %v77
    %v264 = vunpack.c.l.b16 %v78
    %v265 = vunpack.c.h.b16 %v78
    %v266 = vunpack.c.l.b16 %v79
    %v267 = vunpack.c.h.b16 %v79
    %v268 = vunpack.c.l.b16 %v80
    %v269 = vunpack.c.h.b16 %v80
    %v270 = vunpack.c.l.b16 %v81
    %v271 = vunpack.c.h.b16 %v81
    %v272 = vunpack.c.l.b16 %v82
    %v273 = vunpack.c.h.b16 %v82
    %v274 = vunpack.c.l.b16 %v83
    %v275 = vunpack.c.h.b16 %v83
    %v276 = vunpack.c.l.b16 %v84
    %v277 = vunpack.c.h.b16 %v84
    %v278 = vunpack.c.l.b16 %v85
    %v279 = vunpack.c.h.b16 %v85
    %v280 = vunpack.c.l.b16 %v86
    %v281 = vunpack.c.h.b16 %v86
    %v282 = vunpack.c.l.b16 %v87
    %v283 = vunpack.c.h.b16 %v87
    %v284 = vunpack.c.l.b16 %v88
    %v285 = vunpack.c.h.b16 %v88
    %v286 = vunpack.c.l.b16 %v89
    %v287 = vunpack.c.h.b16 %v89
    %v288 = vunpack.c.l.b16 %v90
    %v289 = vunpack.c.h.b16 %v90
    %v290 = vunpack.c.l.b16 %v91
    %v291 = vunpack.c.h.b16 %v91
    %v292 = vunpack.c.l.b16 %v92
    %v293 = vunpack.c.h.b16 %v92
    %v294 = vunpack.c.l.b16 %v93
    %v295 = vunpack.c.h.b16 %v93
    %v296 = vunpack.c.l.b16 %v94
    %v297 = vunpack.c.h.b16 %v94
    %v298 = vunpack.c.l.b16 %v95
    %v299 = vunpack.c.h.b16 %v95
    %v300 = vpack.c.b16 %v180, %v172
    %v301 = vpack.c.b16 %v181, %v173
    %v302 = vpack.c.b16 %v182, %v174
    %v303 = vpack.c.b16 %v183, %v175
    %v304 = vpack.c.b16 %v184, %v176
    %v305 = vpack.c.b16 %v185, %v177
    %v306 = vpack.c.b16 %v186, %v178
    %v307 = vpack.c.b16 %v187, %v179
    %v308 = vpack.c.b16 %v196, %v188
    %v309 = vpack.c.b16 %v197, %v189
    %v310 = vpack.c.b16 %v198, %v190
    %v311 = vpack.c.b16 %v199, %v191
    %v312 = vpack.c.b16 %v200, %v192
    %v313 = vpack.c.b16 %v201, %v193
    %v314 = vpack.c.b16 %v202, %v194
    %v315 = vpack.c.b16 %v203, %v195
    %v316 = vpack.c.b16 %v212, %v204
    %v317 = vpack.c.b16 %v213, %v205
    %v318 = vpack.c.b16 %v214, %v206
    %v319 = vpack.c.b16 %v215, %v207
    %v320 = vpack.c.b16 %v216, %v208
    %v321 = vpack.c.b16 %v217, %v209
    %v322 = vpack.c.b16 %v218, %v210
    %v323 = vpack.c.b16 %v219, %v211
    %v324 = vpack.c.b16 %v228, %v220
    %v325 = vpack.c.b16 %v229, %v221
    %v326 = vpack.c.b16 %v230, %v222
    %v327 = vpack.c.b16 %v231, %v223
    %v328 = vpack.c.b16 %v232, %v224
    %v329 = vpack.c.b16 %v233, %v225
    %v330 = vpack.c.b16 %v234, %v226
    %v331 = vpack.c.b16 %v235, %v227
    %v332 = vpack.c.b16 %v244, %v236
    %v333 = vpack.c.b16 %v245, %v237
    %v334 = vpack.c.b16 %v246, %v238
    %v335 = vpack.c.b16 %v247, %v239
    %v336 = vpack.c.b16 %v248, %v240
    %v337 = vpack.c.b16 %v249, %v241
    %v338 = vpack.c.b16 %v250, %v242
    %v339 = vpack.c.b16 %v251, %v243
    %v340 = vpack.c.b16 %v260, %v252
    %v341 = vpack.c.b16 %v261, %v253
    %v342 = vpack.c.b16 %v262, %v254
    %v343 = vpack.c.b16 %v263, %v255
    %v344 = vpack.c.b16 %v264, %v256
    %v345 = vpack.c.b16 %v265, %v257
    %v346 = vpack.c.b16 %v266, %v258
    %v347 = vpack.c.b16 %v267, %v259
    %v348 = vpack.c.b16 %v276, %v268
    %v349 = vpack.c.b16 %v277, %v269
    %v350 = vpack.c.b16 %v278, %v270
    %v351 = vpack.c.b16 %v279, %v271
    %v352 = vpack.c.b16 %v280, %v272
    %v353 = vpack.c.b16 %v281, %v273
    %v354 = vpack.c.b16 %v282, %v274
    %v355 = vpack.c.b16 %v283, %v275
    %v356 = vpack.c.b16 %v292, %v284
    %v357 = vpack.c.b16 %v293, %v285
    %v358 = vpack.c.b16 %v294, %v286
    %v359 = vpack.c.b16 %v295, %v287
    %v360 = vpack.c.b16 %v296, %v288
    %v361 = vpack.c.b16 %v297, %v289
    %v362 = vpack.c.b16 %v298, %v290
    %v363 = vpack.c.b16 %v299, %v291
    %428 = vmatpush.bf16.msra.mxu0 %v356
    %429 = vmatpush.bf16.msra.mxu0 %v348
    %430 = vmatpush.bf16.msra.mxu0 %v340
    %431 = vmatpush.bf16.msra.mxu0 %v332
    %432 = vmatpush.bf16.msra.mxu0 %v324
    %433 = vmatpush.bf16.msra.mxu0 %v316
    %434 = vmatpush.bf16.msra.mxu0 %v308
    %435 = vmatpush.bf16.msra.mxu0 %v300
    %436 = vmatmul.bf16.gmra.mxu0 %v104
    %v437 = vpop.f32.mrf.mxu0
    %v438 = vadd.f32 0.0, %v437
    %v439 = vpop.f32.mrf.mxu0
    %v440 = vadd.f32 0.0, %v439
    %441 = vmatmul.bf16.gmra.mxu0 %v105
    %v442 = vpop.f32.mrf.mxu0
    %v443 = vadd.f32 0.0, %v442
    %v444 = vpop.f32.mrf.mxu0
    %v445 = vadd.f32 0.0, %v444
    %446 = vdwg.mxu0
    %447 = vmatpush.bf16.msra.mxu0 %v357
    %448 = vmatpush.bf16.msra.mxu0 %v349
    %449 = vmatpush.bf16.msra.mxu0 %v341
    %450 = vmatpush.bf16.msra.mxu0 %v333
    %451 = vmatpush.bf16.msra.mxu0 %v325
    %452 = vmatpush.bf16.msra.mxu0 %v317
    %453 = vmatpush.bf16.msra.mxu0 %v309
    %454 = vmatpush.bf16.msra.mxu0 %v301
    %455 = vmatmul.bf16.gmra.mxu0 %v104
    %v456 = vpop.f32.mrf.mxu0
    %v457 = vadd.f32 0.0, %v456
    %v458 = vpop.f32.mrf.mxu0
    %v459 = vadd.f32 0.0, %v458
    %460 = vmatmul.bf16.gmra.mxu0 %v105
    %v461 = vpop.f32.mrf.mxu0
    %v462 = vadd.f32 0.0, %v461
    %v463 = vpop.f32.mrf.mxu0
    %v464 = vadd.f32 0.0, %v463
    %465 = vdwg.mxu0
    %466 = vmatpush.bf16.msra.mxu0 %v358
    %467 = vmatpush.bf16.msra.mxu0 %v350
    %468 = vmatpush.bf16.msra.mxu0 %v342
    %469 = vmatpush.bf16.msra.mxu0 %v334
    %470 = vmatpush.bf16.msra.mxu0 %v326
    %471 = vmatpush.bf16.msra.mxu0 %v318
    %472 = vmatpush.bf16.msra.mxu0 %v310
    %473 = vmatpush.bf16.msra.mxu0 %v302
    %474 = vmatmul.bf16.gmra.mxu0 %v104
    %v475 = vpop.f32.mrf.mxu0
    %v476 = vadd.f32 0.0, %v475
    %v477 = vpop.f32.mrf.mxu0
    %v478 = vadd.f32 0.0, %v477
    %479 = vmatmul.bf16.gmra.mxu0 %v105
    %v480 = vpop.f32.mrf.mxu0
    %v481 = vadd.f32 0.0, %v480
    %v482 = vpop.f32.mrf.mxu0
    %v483 = vadd.f32 0.0, %v482
    %484 = vdwg.mxu0
    %485 = vmatpush.bf16.msra.mxu0 %v359
    %486 = vmatpush.bf16.msra.mxu0 %v351
    %487 = vmatpush.bf16.msra.mxu0 %v343
    %488 = vmatpush.bf16.msra.mxu0 %v335
    %489 = vmatpush.bf16.msra.mxu0 %v327
    %490 = vmatpush.bf16.msra.mxu0 %v319
    %491 = vmatpush.bf16.msra.mxu0 %v311
    %492 = vmatpush.bf16.msra.mxu0 %v303
    %493 = vmatmul.bf16.gmra.mxu0 %v104
    %v494 = vpop.f32.mrf.mxu0
    %v495 = vadd.f32 0.0, %v494
    %v496 = vpop.f32.mrf.mxu0
    %v497 = vadd.f32 0.0, %v496
    %498 = vmatmul.bf16.gmra.mxu0 %v105
    %v499 = vpop.f32.mrf.mxu0
    %v500 = vadd.f32 0.0, %v499
    %v501 = vpop.f32.mrf.mxu0
    %v502 = vadd.f32 0.0, %v501
    %503 = vdwg.mxu0
    %504 = vmatpush.bf16.msra.mxu0 %v360
    %505 = vmatpush.bf16.msra.mxu0 %v352
    %506 = vmatpush.bf16.msra.mxu0 %v344
    %507 = vmatpush.bf16.msra.mxu0 %v336
    %508 = vmatpush.bf16.msra.mxu0 %v328
    %509 = vmatpush.bf16.msra.mxu0 %v320
    %510 = vmatpush.bf16.msra.mxu0 %v312
    %511 = vmatpush.bf16.msra.mxu0 %v304
    %512 = vmatmul.bf16.gmra.mxu0 %v104
    %v513 = vpop.f32.mrf.mxu0
    %v514 = vadd.f32 0.0, %v513
    %v515 = vpop.f32.mrf.mxu0
    %v516 = vadd.f32 0.0, %v515
    %517 = vmatmul.bf16.gmra.mxu0 %v105
    %v518 = vpop.f32.mrf.mxu0
    %v519 = vadd.f32 0.0, %v518
    %v520 = vpop.f32.mrf.mxu0
    %v521 = vadd.f32 0.0, %v520
    %522 = vdwg.mxu0
    %523 = vmatpush.bf16.msra.mxu0 %v361
    %524 = vmatpush.bf16.msra.mxu0 %v353
    %525 = vmatpush.bf16.msra.mxu0 %v345
    %526 = vmatpush.bf16.msra.mxu0 %v337
    %527 = vmatpush.bf16.msra.mxu0 %v329
    %528 = vmatpush.bf16.msra.mxu0 %v321
    %529 = vmatpush.bf16.msra.mxu0 %v313
    %530 = vmatpush.bf16.msra.mxu0 %v305
    %531 = vmatmul.bf16.gmra.mxu0 %v104
    %v532 = vpop.f32.mrf.mxu0
    %v533 = vadd.f32 0.0, %v532
    %v534 = vpop.f32.mrf.mxu0
    %v535 = vadd.f32 0.0, %v534
    %536 = vmatmul.bf16.gmra.mxu0 %v105
    %v537 = vpop.f32.mrf.mxu0
    %v538 = vadd.f32 0.0, %v537
    %v539 = vpop.f32.mrf.mxu0
    %v540 = vadd.f32 0.0, %v539
    %541 = vdwg.mxu0
    %542 = vmatpush.bf16.msra.mxu0 %v362
    %543 = vmatpush.bf16.msra.mxu0 %v354
    %544 = vmatpush.bf16.msra.mxu0 %v346
    %545 = vmatpush.bf16.msra.mxu0 %v338
    %546 = vmatpush.bf16.msra.mxu0 %v330
    %547 = vmatpush.bf16.msra.mxu0 %v322
    %548 = vmatpush.bf16.msra.mxu0 %v314
    %549 = vmatpush.bf16.msra.mxu0 %v306
    %550 = vmatmul.bf16.gmra.mxu0 %v104
    %v551 = vpop.f32.mrf.mxu0
    %v552 = vadd.f32 0.0, %v551
    %v553 = vpop.f32.mrf.mxu0
    %v554 = vadd.f32 0.0, %v553
    %555 = vmatmul.bf16.gmra.mxu0 %v105
    %v556 = vpop.f32.mrf.mxu0
    %v557 = vadd.f32 0.0, %v556
    %v558 = vpop.f32.mrf.mxu0
    %v559 = vadd.f32 0.0, %v558
    %560 = vdwg.mxu0
    %561 = vmatpush.bf16.msra.mxu0 %v363
    %562 = vmatpush.bf16.msra.mxu0 %v355
    %563 = vmatpush.bf16.msra.mxu0 %v347
    %564 = vmatpush.bf16.msra.mxu0 %v339
    %565 = vmatpush.bf16.msra.mxu0 %v331
    %566 = vmatpush.bf16.msra.mxu0 %v323
    %567 = vmatpush.bf16.msra.mxu0 %v315
    %568 = vmatpush.bf16.msra.mxu0 %v307
    %569 = vmatmul.bf16.gmra.mxu0 %v104
    %v570 = vpop.f32.mrf.mxu0
    %v571 = vadd.f32 0.0, %v570
    %v572 = vpop.f32.mrf.mxu0
    %v573 = vadd.f32 0.0, %v572
    %574 = vmatmul.bf16.gmra.mxu0 %v105
    %v575 = vpop.f32.mrf.mxu0
    %v576 = vadd.f32 0.0, %v575
    %v577 = vpop.f32.mrf.mxu0
    %v578 = vadd.f32 0.0, %v577
    %579 = vdwg.mxu0
    %580 = vst [vmem:[#allocation5] sm:$0xff] %v438
    %581 = vst [vmem:[#allocation5 + $0x8] sm:$0xff] %v457
    %582 = vst [vmem:[#allocation5 + $0x10] sm:$0xff] %v476
    %583 = vst [vmem:[#allocation5 + $0x18] sm:$0xff] %v495
    %584 = vst [vmem:[#allocation5 + $0x20] sm:$0xff] %v514
    %585 = vst [vmem:[#allocation5 + $0x28] sm:$0xff] %v533
    %586 = vst [vmem:[#allocation5 + $0x30] sm:$0xff] %v552
    %587 = vst [vmem:[#allocation5 + $0x38] sm:$0xff] %v571
    %588 = vst [vmem:[#allocation5 + $0x40] sm:$0xff] %v440
    %589 = vst [vmem:[#allocation5 + $0x48] sm:$0xff] %v459
    %590 = vst [vmem:[#allocation5 + $0x50] sm:$0xff] %v478
    %591 = vst [vmem:[#allocation5 + $0x58] sm:$0xff] %v497
    %592 = vst [vmem:[#allocation5 + $0x60] sm:$0xff] %v516
    %593 = vst [vmem:[#allocation5 + $0x68] sm:$0xff] %v535
    %594 = vst [vmem:[#allocation5 + $0x70] sm:$0xff] %v554
    %595 = vst [vmem:[#allocation5 + $0x78] sm:$0xff] %v573
    %596 = vst [vmem:[#allocation5 + $0x80] sm:$0xff] %v443
    %597 = vst [vmem:[#allocation5 + $0x88] sm:$0xff] %v462
    %598 = vst [vmem:[#allocation5 + $0x90] sm:$0xff] %v481
    %599 = vst [vmem:[#allocation5 + $0x98] sm:$0xff] %v500
    %600 = vst [vmem:[#allocation5 + $0xa0] sm:$0xff] %v519
    %601 = vst [vmem:[#allocation5 + $0xa8] sm:$0xff] %v538
    %602 = vst [vmem:[#allocation5 + $0xb0] sm:$0xff] %v557
    %603 = vst [vmem:[#allocation5 + $0xb8] sm:$0xff] %v576
    %604 = vst [vmem:[#allocation5 + $0xc0] sm:$0xff] %v445
    %605 = vst [vmem:[#allocation5 + $0xc8] sm:$0xff] %v464
    %606 = vst [vmem:[#allocation5 + $0xd0] sm:$0xff] %v483
    %607 = vst [vmem:[#allocation5 + $0xd8] sm:$0xff] %v502
    %608 = vst [vmem:[#allocation5 + $0xe0] sm:$0xff] %v521
    %609 = vst [vmem:[#allocation5 + $0xe8] sm:$0xff] %v540
    %610 = vst [vmem:[#allocation5 + $0xf0] sm:$0xff] %v559
    %611 = vst [vmem:[#allocation5 + $0xf8] sm:$0xff] %v578
    // Predicated region
    $region14: #{text_decoder_forward.51} parent=1 // pred_check
      _
    $region15: #{text_decoder_forward.51} parent=1 // pred_check_branch
      %613 = sbr.rel (0) target = $region17
    $region16: #{text_decoder_forward.51} parent=1 // pred_region
      %615 = vsyncadd [#allocation4], 0
      %s616 = sshll.u32 [#allocation5], 4
      %s617 = int_to_ptr.vmem [resolvable:$true] %s616
      %s618 = sshll.u32 %s2, 4
      %s619 = int_to_ptr.hbm [resolvable:$true] %s618
      %624 = dma.vmem_to_hbm [thread:$0]  %s617, 4096, %s619, [#allocation4], 1024, 1024, 64
    $region17: #{text_decoder_forward.51} parent=1 // pred_fallthru
      _
    // Predicated region
    $region18: #{text_decoder_forward.51} parent=1 // pred_check
      _
    $region19: #{text_decoder_forward.51} parent=1 // pred_check_branch
      %626 = sbr.rel (0) target = $region21
    $region20: #{text_decoder_forward.51} parent=1 // pred_region
      %628 = dma.done [#allocation4], 4096
    $region21: #{text_decoder_forward.51} parent=1 // pred_fallthru
      _
    %629 = vsyncpa [#allocation3], 1
    %630 = vsyncpa [#allocation4], 1

</llo_original>
